<compile_context>
chip_gen: v7x
topology: tpu7x:2x2x1
jax: 0.10.0
libtpu: 0.0.40
codegen_flags: <defaults>
</compile_context>

<pallas_src>
import math
from functools import partial
from math import gcd

import numpy as np

import jax
import jax.numpy as jnp
from jax.experimental import pallas as pl
from jax.experimental.pallas import tpu as pltpu


def _freq_kernel(x_ref, s_ref, o_ref):
    # x_ref : (bm, g*D + 1)        packed rows, last column is constant 1
    # s_ref : (g*D + 1, g*out_dim) block-diag freq expansion + phase row
    # o_ref : (bm, g*out_dim)
    pre = jnp.dot(x_ref[...], s_ref[...],
                  preferred_element_type=jnp.float32,
                  precision=jax.lax.Precision.HIGHEST)
    o_ref[...] = jnp.sin(pre).astype(o_ref.dtype)


def make_frequency_matrix(input_dim: int, n_frequencies: int, group: int):
    """Block-diagonal 'expand * frequency' matrix with the sin/cos phase folded
    in as an extra contraction row (numpy -> constant-folded under jit)."""
    D, F, g = input_dim, n_frequencies, group
    out_dim = D * 2 * F

    freqs = math.pi * (2.0 ** np.linspace(0.0, F - 1, F))          # (F,)
    j = np.arange(out_dim)
    d_of_j = j // (2 * F)                                          # source input dim
    k_of_j = j % (2 * F)                                           # feature index within dim
    freq_of_j = freqs[k_of_j % F]                                  # frequency per column

    # S1[d, j] = freq_of_j[j] if d == d_of_j[j] else 0
    S1 = np.where(np.arange(D)[:, None] == d_of_j[None, :],
                  freq_of_j[None, :], 0.0)                          # (D, out_dim)
    # cos(x) == sin(x + pi/2): phase = 0 for sin cols, pi/2 for cos cols.
    phase1 = np.where(k_of_j < F, 0.0, 0.5 * np.pi)                 # (out_dim,)

    S = np.kron(np.eye(g), S1)                                      # (g*D, g*out_dim)
    phase = np.tile(phase1, g)[None, :]                             # (1, g*out_dim)
    S_aug = np.concatenate([S, phase], axis=0)                      # (g*D+1, g*out_dim)
    return jnp.asarray(S_aug, dtype=jnp.float32)


def _pick_group(out_dim: int, input_dim: int, lane_align: int,
                max_s_bytes: int = 8 << 20) -> int:
    """Smallest g with g*out_dim % lane_align == 0, capped so S stays small."""
    g = lane_align // gcd(out_dim, lane_align)
    while g > 1 and (g * input_dim + 1) * (g * out_dim) * 4 > max_s_bytes:
        g //= 2
    return max(g, 1)


def _default_lane_align() -> int:
    """256-lane MXU on v6e / v7x; 128 on v5e and older."""
    try:
        kind = jax.devices()[0].device_kind.lower()
    except Exception:
        return 128
    return 128 if any(t in kind for t in ("v2", "v3", "v4", "v5")) else 256


def frequency_ref(x, n_frequencies: int = 7):
    """Pure-JAX reference matching the PyTorch forward exactly."""
    F = n_frequencies
    freqs = math.pi * (2.0 ** jnp.linspace(0.0, F - 1, F))
    xe = x[..., None] * freqs                                       # (..., D, F)
    cat = jnp.concatenate([jnp.sin(xe), jnp.cos(xe)], axis=-1)      # (..., D, 2F)
    return cat.reshape(*x.shape[:-1], x.shape[-1] * 2 * F)


@partial(jax.jit,
         static_argnames=("n_frequencies", "block_rows", "lane_align", "out_dtype"))
def _frequency_forward_impl(x, n_frequencies, block_rows, lane_align, out_dtype):
    orig_shape = x.shape
    D = orig_shape[-1]
    F = n_frequencies
    out_dim = D * 2 * F

    x_flat = x.reshape(-1, D).astype(jnp.float32)
    N = x_flat.shape[0]

    g = _pick_group(out_dim, D, lane_align)
    n_main = (N // g) * g                    # rows routed through the kernel
    r = N - n_main                           # <= g-1 leftover rows (pure JAX)

    outs = []
    if n_main > 0:
        Nr = n_main // g
        # Pack g logical rows along the lane axis; append a constant-1 column so
        # the cos phase is applied by the matmul itself (no separate broadcast add).
        x_packed = x_flat[:n_main].reshape(Nr, g * D)
        x_packed = jnp.pad(x_packed, ((0, 0), (0, 1)), constant_values=1.0)

        S = make_frequency_matrix(D, F, g)

        # Balanced, large row blocks: even block count (v7x's two TensorCores),
        # last block nearly full instead of a near-empty ragged tail.
        nblocks = -(-Nr // block_rows)
        if nblocks > 1 and nblocks % 2:
            nblocks += 1
        bm = max(8, ((-(-Nr // nblocks) + 7) // 8) * 8)
        grid = (-(-Nr // bm),)

        # NOTE: S's index map is constant; single-buffering it (pl.Buffered(1))
        # would shave ~1 MiB of VMEM but is not needed at these tile sizes.
        out_packed = pl.pallas_call(
            _freq_kernel,
            out_shape=jax.ShapeDtypeStruct((Nr, g * out_dim), out_dtype),
            grid_spec=pltpu.PrefetchScalarGridSpec(
                num_scalar_prefetch=0,
                grid=grid,
                in_specs=[
                    pl.BlockSpec((bm, g * D + 1), lambda i: (i, 0)),
                    pl.BlockSpec((g * D + 1, g * out_dim), lambda i: (0, 0)),
                ],
                out_specs=pl.BlockSpec((bm, g * out_dim), lambda i: (i, 0)),
            ),
            compiler_params=pltpu.CompilerParams(
                dimension_semantics=("parallel",),
                vmem_limit_bytes=32 << 20,
            ),
        )(x_packed, S)
        # Row-major bitcast back to logical rows -- no HBM copy.
        outs.append(out_packed.reshape(n_main, out_dim))

    if r > 0:
        # Tiny tail (< g rows): pure-JAX path avoids re-copying the whole kernel
        # output through a [:N] slice when padding would have been needed.
        outs.append(frequency_ref(x_flat[n_main:], F).astype(out_dtype))

    out = outs[0] if len(outs) == 1 else jnp.concatenate(outs, axis=0)
    return out.reshape(*orig_shape[:-1], out_dim)


def frequency_forward(x, n_frequencies: int = 7, block_rows: int = 1024,
                      lane_align: int | None = None, out_dtype=jnp.float32):
    """x: (..., D) float array -> (..., D * 2 * n_frequencies).

    `out_dtype=jnp.bfloat16` halves the dominant HBM write stream (useful on
    bandwidth-starved v5e) at ~4e-3 absolute error; default keeps float32.
    """
    # TODO(synk): for very large input_dim the block-diagonal-matmul formulation
    # wastes MXU/VMEM on zeros; a VPU broadcast-multiply path would be better there.
    if lane_align is None:
        lane_align = _default_lane_align()
    return _frequency_forward_impl(x, n_frequencies, block_rows, lane_align, out_dtype)


if __name__ == "__main__":
    key = jax.random.PRNGKey(0)
    n_frequencies = 7
    input_dim = 4

    # Small test (shapes consistent with the module's pointwise usage).
    batch, seq = 2, 16            # N = 32 rows: exercises the kernel for g in {16, 32}
    x = jax.random.normal(key, (batch, seq, input_dim), dtype=jnp.float32)
    out = jax.block_until_ready(frequency_forward(x, n_frequencies=n_frequencies))
    ref = frequency_ref(x, n_frequencies=n_frequencies)
    assert out.shape == (batch, seq, input_dim * n_frequencies * 2), out.shape
    assert jnp.allclose(out, ref, atol=1e-4, rtol=1e-4), "mismatch vs reference (small)"

    # Larger ragged test: multi-block balanced grid, packing tail path, and both
    # lane alignments (v5e-style 128 and v6e/v7x-style 256).
    key2 = jax.random.PRNGKey(1)
    x2 = jax.random.normal(key2, (4, 16401, input_dim), dtype=jnp.float32)
    ref2 = frequency_ref(x2, n_frequencies=n_frequencies)
    for lane_align in (128, 256):
        out2 = jax.block_until_ready(
            frequency_forward(x2, n_frequencies=n_frequencies, lane_align=lane_align))
        assert out2.shape == (4, 16401, input_dim * n_frequencies * 2), out2.shape
        assert jnp.allclose(out2, ref2, atol=1e-4, rtol=1e-4), \
            f"mismatch vs reference (large, lane_align={lane_align})"

    print("KERNEL_OK")
</pallas_src>

<mosaic_0001>
module attributes {stable_mosaic.version = 11 : i64} {
  func.func @_freq_kernel(%arg0: i32, %arg1: memref<8x129xf32, #tpu.memory_space<vmem>>, %arg2: memref<129x1792xf32, #tpu.memory_space<vmem>>, %arg3: memref<8x1792xf32, #tpu.memory_space<vmem>>) attributes {dimension_semantics = [#tpu.dimension_semantics<parallel>], iteration_bounds = array<i64: 1>, scalar_prefetch = 0 : i64, scratch_operands = 0 : i64, tpu.core_type = #tpu.core_type<tc>, window_params = [{transform_indices = @transform_0, window_bounds = array<i64: 8, 129>}, {pipeline_mode = #tpu.pipeline_mode<synchronous>, transform_indices = @transform_1, window_bounds = array<i64: 129, 1792>}, {transform_indices = @transform_2, window_bounds = array<i64: 8, 1792>}]} {
    %c0 = arith.constant 0 : index
    %c0_0 = arith.constant 0 : index
    %0 = vector.load %arg1[%c0, %c0_0] : memref<8x129xf32, #tpu.memory_space<vmem>>, vector<8x129xf32>
    %c0_1 = arith.constant 0 : index
    %c0_2 = arith.constant 0 : index
    %1 = vector.load %arg2[%c0_1, %c0_2] : memref<129x1792xf32, #tpu.memory_space<vmem>>, vector<129x1792xf32>
    %cst = arith.constant dense<0.000000e+00> : vector<8x1792xf32>
    %2 = tpu.matmul %0, %1, %cst {dimension_numbers = #tpu.dot_dimension_numbers<[1], [0], [0], [1], [0, 0, 1, 1], [], []>, precision = #tpu.contract_precision<fp32>} : vector<8x129xf32>, vector<129x1792xf32>, vector<8x1792xf32> -> vector<8x1792xf32>
    %3 = math.sin %2 : vector<8x1792xf32>
    %c0_3 = arith.constant 0 : index
    %c0_4 = arith.constant 0 : index
    %4 = vector.load %arg3[%c0_3, %c0_4] : memref<8x1792xf32, #tpu.memory_space<vmem>>, vector<8x1792xf32>
    tpu.vector_store %arg3[%c0_3, %c0_4], %3 {strides = array<i32>} : memref<8x1792xf32, #tpu.memory_space<vmem>>, vector<8x1792xf32>,
    return
  }
  func.func @transform_0(%arg0: i32) -> (i32, i32) {
    %c0_i32 = arith.constant 0 : i32
    %c0_i32_0 = arith.constant 0 : i32
    return %arg0, %c0_i32 : i32, i32
  }
  func.func @transform_1(%arg0: i32) -> (i32, i32) {
    %c0_i32 = arith.constant 0 : i32
    %c0_i32_0 = arith.constant 0 : i32
    %c0_i32_1 = arith.constant 0 : i32
    return %c0_i32, %c0_i32_0 : i32, i32
  }
  func.func @transform_2(%arg0: i32) -> (i32, i32) {
    %c0_i32 = arith.constant 0 : i32
    %c0_i32_0 = arith.constant 0 : i32
    return %arg0, %c0_i32 : i32, i32
  }
}

</mosaic_0001>

<llo_original>
// kernel: _frequency_forward_impl.1
$region0: #{_frequency_forward_impl.1}
  #allocation0 [shape = 'u32[]', space=smem, size = 0x4, offset = 0x4, fixed_abs, tag = 'smem constant byte address 0x4 - core index']
  #allocation1 [shape = 'u32[144,128]{1,0:T(1,128)}', space=vmem, size = 0x12000, scoped, tag = 'internal scratch']
  %s0 = inlined_call_operand.vmem [shape: f32[1,129], index: 0, kind: input, shape index: {}]
  %s1 = inlined_call_operand.hbm [shape: f32[129,1792], index: 1, kind: input, shape index: {}]
  %s2 = inlined_call_operand.vmem [shape: f32[1,1792], index: 2, kind: output, shape index: {}]
  %s3 = sld [smem:[#allocation0]]
  $region44: #{_frequency_forward_impl.1} parent=0
    _
  %s5 = ssub.s32 1, %s3
  %s6 = scalar_select 0, %s5, %s3
  $region1: #{_frequency_forward_impl.1} parent=0
    #allocation2 [shape = 'u8[974848]{0}', space=vmem, size = 0xee000, scoped, tag = 'input window, operand 1, single buffered']
    #allocation3 [shape = 's32[1]{0}', space=sflag, size = 0x4, scoped, tag = 'scoped memory for _frequency_forward_impl.1']
    #allocation4 [shape = 'u8[57344]{0}', space=vmem, size = 0xe000, scoped, tag = 'output window, operand 0, single buffered']
    %7 = vsyncpa [#allocation3], 0
    // Predicated region
    $region2: #{_frequency_forward_impl.1} parent=1 // pred_check
      _
    $region3: #{_frequency_forward_impl.1} parent=1 // pred_check_branch
      %9 = sbr.rel (0) target = $region5
    $region4: #{_frequency_forward_impl.1} parent=1 // pred_region
      _
    $region5: #{_frequency_forward_impl.1} parent=1 // pred_fallthru
      _
    // Predicated region
    $region6: #{_frequency_forward_impl.1} parent=1 // pred_check
      _
    $region7: #{_frequency_forward_impl.1} parent=1 // pred_check_branch
      %11 = sbr.rel (0) target = $region9
    $region8: #{_frequency_forward_impl.1} parent=1 // pred_region
      %s13 = ssub.s32 30464, 30464
      %14 = vsyncadd [#allocation3], %s13
      %s15 = sshll.u32 [#allocation2], 4
      %s16 = int_to_ptr.vmem [resolvable:$true] %s15
      %21 = dma.hbm_to_vmem [thread:$0]  %s1, 30464, %s16, [#allocation3], 1792, 1792, 112
    $region9: #{_frequency_forward_impl.1} parent=1 // pred_fallthru
      _
    // Predicated region
    $region10: #{_frequency_forward_impl.1} parent=1 // pred_check
      _
    $region11: #{_frequency_forward_impl.1} parent=1 // pred_check_branch
      %23 = sbr.rel (0) target = $region13
    $region12: #{_frequency_forward_impl.1} parent=1 // pred_region
      %24 = dma.done [#allocation3], 30464
    $region13: #{_frequency_forward_impl.1} parent=1 // pred_fallthru
      _
    %v25 = vld [vmem:[%s0] sm:$0x3]
    %v26 = vld [vmem:[%s0 + $0x2] sm:$0x3]
    %v27 = vld [vmem:[%s0 + $0x4] sm:$0x3]
    %v28 = vld [vmem:[%s0 + $0x6] sm:$0x3]
    %v29 = vld [vmem:[%s0 + $0x8] sm:$0x3]
    %v30 = vld [vmem:[%s0 + $0xa] sm:$0x3]
    %v31 = vld [vmem:[%s0 + $0xc] sm:$0x3]
    %v32 = vld [vmem:[%s0 + $0xe] sm:$0x3]
    %v33 = vld [vmem:[#allocation2] sm:$0xff]
    %v34 = vld [vmem:[#allocation2 + $0x8] sm:$0xff]
    %v35 = vld [vmem:[#allocation2 + $0x10] sm:$0xff]
    %v36 = vld [vmem:[#allocation2 + $0x18] sm:$0xff]
    %v37 = vld [vmem:[#allocation2 + $0x20] sm:$0xff]
    %v38 = vld [vmem:[#allocation2 + $0x28] sm:$0xff]
    %v39 = vld [vmem:[#allocation2 + $0x30] sm:$0xff]
    %v40 = vld [vmem:[#allocation2 + $0x38] sm:$0xff]
    %v41 = vld [vmem:[#allocation2 + $0x40] sm:$0xff]
    %v42 = vld [vmem:[#allocation2 + $0x48] sm:$0xff]
    %v43 = vld [vmem:[#allocation2 + $0x50] sm:$0xff]
    %v44 = vld [vmem:[#allocation2 + $0x58] sm:$0xff]
    %v45 = vld [vmem:[#allocation2 + $0x60] sm:$0xff]
    %v46 = vld [vmem:[#allocation2 + $0x68] sm:$0xff]
    %v47 = vld [vmem:[#allocation2 + $0x70] sm:$0xff]
    %v48 = vld [vmem:[#allocation2 + $0x78] sm:$0xff]
    %v49 = vld [vmem:[#allocation2 + $0x80] sm:$0xff]
    %v50 = vld [vmem:[#allocation2 + $0x88] sm:$0xff]
    %v51 = vld [vmem:[#allocation2 + $0x90] sm:$0xff]
    %v52 = vld [vmem:[#allocation2 + $0x98] sm:$0xff]
    %v53 = vld [vmem:[#allocation2 + $0xa0] sm:$0xff]
    %v54 = vld [vmem:[#allocation2 + $0xa8] sm:$0xff]
    %v55 = vld [vmem:[#allocation2 + $0xb0] sm:$0xff]
    %v56 = vld [vmem:[#allocation2 + $0xb8] sm:$0xff]
    %v57 = vld [vmem:[#allocation2 + $0xc0] sm:$0xff]
    %v58 = vld [vmem:[#allocation2 + $0xc8] sm:$0xff]
    %v59 = vld [vmem:[#allocation2 + $0xd0] sm:$0xff]
    %v60 = vld [vmem:[#allocation2 + $0xd8] sm:$0xff]
    %v61 = vld [vmem:[#allocation2 + $0xe0] sm:$0xff]
    %v62 = vld [vmem:[#allocation2 + $0xe8] sm:$0xff]
    %v63 = vld [vmem:[#allocation2 + $0xf0] sm:$0xff]
    %v64 = vld [vmem:[#allocation2 + $0xf8] sm:$0xff]
    %v65 = vld [vmem:[#allocation2 + $0x100] sm:$0xff]
    %v66 = vld [vmem:[#allocation2 + $0x108] sm:$0xff]
    %v67 = vld [vmem:[#allocation2 + $0x110] sm:$0xff]
    %v68 = vld [vmem:[#allocation2 + $0x118] sm:$0xff]
    %v69 = vld [vmem:[#allocation2 + $0x120] sm:$0xff]
    %v70 = vld [vmem:[#allocation2 + $0x128] sm:$0xff]
    %v71 = vld [vmem:[#allocation2 + $0x130] sm:$0xff]
    %v72 = vld [vmem:[#allocation2 + $0x138] sm:$0xff]
    %v73 = vld [vmem:[#allocation2 + $0x140] sm:$0xff]
    %v74 = vld [vmem:[#allocation2 + $0x148] sm:$0xff]
    %v75 = vld [vmem:[#allocation2 + $0x150] sm:$0xff]
    %v76 = vld [vmem:[#allocation2 + $0x158] sm:$0xff]
    %v77 = vld [vmem:[#allocation2 + $0x160] sm:$0xff]
    %v78 = vld [vmem:[#allocation2 + $0x168] sm:$0xff]
    %v79 = vld [vmem:[#allocation2 + $0x170] sm:$0xff]
    %v80 = vld [vmem:[#allocation2 + $0x178] sm:$0xff]
    %v81 = vld [vmem:[#allocation2 + $0x180] sm:$0xff]
    %v82 = vld [vmem:[#allocation2 + $0x188] sm:$0xff]
    %v83 = vld [vmem:[#allocation2 + $0x190] sm:$0xff]
    %v84 = vld [vmem:[#allocation2 + $0x198] sm:$0xff]
    %v85 = vld [vmem:[#allocation2 + $0x1a0] sm:$0xff]
    %v86 = vld [vmem:[#allocation2 + $0x1a8] sm:$0xff]
    %v87 = vld [vmem:[#allocation2 + $0x1b0] sm:$0xff]
    %v88 = vld [vmem:[#allocation2 + $0x1b8] sm:$0xff]
    %v89 = vld [vmem:[#allocation2 + $0x1c0] sm:$0xff]
    %v90 = vld [vmem:[#allocation2 + $0x1c8] sm:$0xff]
    %v91 = vld [vmem:[#allocation2 + $0x1d0] sm:$0xff]
    %v92 = vld [vmem:[#allocation2 + $0x1d8] sm:$0xff]
    %v93 = vld [vmem:[#allocation2 + $0x1e0] sm:$0xff]
    %v94 = vld [vmem:[#allocation2 + $0x1e8] sm:$0xff]
    %v95 = vld [vmem:[#allocation2 + $0x1f0] sm:$0xff]
    %v96 = vld [vmem:[#allocation2 + $0x1f8] sm:$0xff]
    %v97 = vld [vmem:[#allocation2 + $0x200] sm:$0xff]
    %v98 = vld [vmem:[#allocation2 + $0x208] sm:$0xff]
    %v99 = vld [vmem:[#allocation2 + $0x210] sm:$0xff]
    %v100 = vld [vmem:[#allocation2 + $0x218] sm:$0xff]
    %v101 = vld [vmem:[#allocation2 + $0x220] sm:$0xff]
    %v102 = vld [vmem:[#allocation2 + $0x228] sm:$0xff]
    %v103 = vld [vmem:[#allocation2 + $0x230] sm:$0xff]
    %v104 = vld [vmem:[#allocation2 + $0x238] sm:$0xff]
    %v105 = vld [vmem:[#allocation2 + $0x240] sm:$0xff]
    %v106 = vld [vmem:[#allocation2 + $0x248] sm:$0xff]
    %v107 = vld [vmem:[#allocation2 + $0x250] sm:$0xff]
    %v108 = vld [vmem:[#allocation2 + $0x258] sm:$0xff]
    %v109 = vld [vmem:[#allocation2 + $0x260] sm:$0xff]
    %v110 = vld [vmem:[#allocation2 + $0x268] sm:$0xff]
    %v111 = vld [vmem:[#allocation2 + $0x270] sm:$0xff]
    %v112 = vld [vmem:[#allocation2 + $0x278] sm:$0xff]
    %v113 = vld [vmem:[#allocation2 + $0x280] sm:$0xff]
    %v114 = vld [vmem:[#allocation2 + $0x288] sm:$0xff]
    %v115 = vld [vmem:[#allocation2 + $0x290] sm:$0xff]
    %v116 = vld [vmem:[#allocation2 + $0x298] sm:$0xff]
    %v117 = vld [vmem:[#allocation2 + $0x2a0] sm:$0xff]
    %v118 = vld [vmem:[#allocation2 + $0x2a8] sm:$0xff]
    %v119 = vld [vmem:[#allocation2 + $0x2b0] sm:$0xff]
    %v120 = vld [vmem:[#allocation2 + $0x2b8] sm:$0xff]
    %v121 = vld [vmem:[#allocation2 + $0x2c0] sm:$0xff]
    %v122 = vld [vmem:[#allocation2 + $0x2c8] sm:$0xff]
    %v123 = vld [vmem:[#allocation2 + $0x2d0] sm:$0xff]
    %v124 = vld [vmem:[#allocation2 + $0x2d8] sm:$0xff]
    %v125 = vld [vmem:[#allocation2 + $0x2e0] sm:$0xff]
    %v126 = vld [vmem:[#allocation2 + $0x2e8] sm:$0xff]
    %v127 = vld [vmem:[#allocation2 + $0x2f0] sm:$0xff]
    %v128 = vld [vmem:[#allocation2 + $0x2f8] sm:$0xff]
    %v129 = vld [vmem:[#allocation2 + $0x300] sm:$0xff]
    %v130 = vld [vmem:[#allocation2 + $0x308] sm:$0xff]
    %v131 = vld [vmem:[#allocation2 + $0x310] sm:$0xff]
    %v132 = vld [vmem:[#allocation2 + $0x318] sm:$0xff]
    %v133 = vld [vmem:[#allocation2 + $0x320] sm:$0xff]
    %v134 = vld [vmem:[#allocation2 + $0x328] sm:$0xff]
    %v135 = vld [vmem:[#allocation2 + $0x330] sm:$0xff]
    %v136 = vld [vmem:[#allocation2 + $0x338] sm:$0xff]
    %v137 = vld [vmem:[#allocation2 + $0x340] sm:$0xff]
    %v138 = vld [vmem:[#allocation2 + $0x348] sm:$0xff]
    %v139 = vld [vmem:[#allocation2 + $0x350] sm:$0xff]
    %v140 = vld [vmem:[#allocation2 + $0x358] sm:$0xff]
    %v141 = vld [vmem:[#allocation2 + $0x360] sm:$0xff]
    %v142 = vld [vmem:[#allocation2 + $0x368] sm:$0xff]
    %v143 = vld [vmem:[#allocation2 + $0x370] sm:$0xff]
    %v144 = vld [vmem:[#allocation2 + $0x378] sm:$0xff]
    %v145 = vld [vmem:[#allocation2 + $0x380] sm:$0xff]
    %v146 = vld [vmem:[#allocation2 + $0x388] sm:$0xff]
    %v147 = vld [vmem:[#allocation2 + $0x390] sm:$0xff]
    %v148 = vld [vmem:[#allocation2 + $0x398] sm:$0xff]
    %v149 = vld [vmem:[#allocation2 + $0x3a0] sm:$0xff]
    %v150 = vld [vmem:[#allocation2 + $0x3a8] sm:$0xff]
    %v151 = vld [vmem:[#allocation2 + $0x3b0] sm:$0xff]
    %v152 = vld [vmem:[#allocation2 + $0x3b8] sm:$0xff]
    %v153 = vld [vmem:[#allocation2 + $0x3c0] sm:$0xff]
    %v154 = vld [vmem:[#allocation2 + $0x3c8] sm:$0xff]
    %v155 = vld [vmem:[#allocation2 + $0x3d0] sm:$0xff]
    %v156 = vld [vmem:[#allocation2 + $0x3d8] sm:$0xff]
    %v157 = vld [vmem:[#allocation2 + $0x3e0] sm:$0xff]
    %v158 = vld [vmem:[#allocation2 + $0x3e8] sm:$0xff]
    %v159 = vld [vmem:[#allocation2 + $0x3f0] sm:$0xff]
    %v160 = vld [vmem:[#allocation2 + $0x3f8] sm:$0xff]
    %v161 = vld [vmem:[#allocation2 + $0x400] sm:$0xff]
    %v162 = vld [vmem:[#allocation2 + $0x408] sm:$0xff]
    %v163 = vld [vmem:[#allocation2 + $0x410] sm:$0xff]
    %v164 = vld [vmem:[#allocation2 + $0x418] sm:$0xff]
    %v165 = vld [vmem:[#allocation2 + $0x420] sm:$0xff]
    %v166 = vld [vmem:[#allocation2 + $0x428] sm:$0xff]
    %v167 = vld [vmem:[#allocation2 + $0x430] sm:$0xff]
    %v168 = vld [vmem:[#allocation2 + $0x438] sm:$0xff]
    %v169 = vld [vmem:[#allocation2 + $0x440] sm:$0xff]
    %v170 = vld [vmem:[#allocation2 + $0x448] sm:$0xff]
    %v171 = vld [vmem:[#allocation2 + $0x450] sm:$0xff]
    %v172 = vld [vmem:[#allocation2 + $0x458] sm:$0xff]
    %v173 = vld [vmem:[#allocation2 + $0x460] sm:$0xff]
    %v174 = vld [vmem:[#allocation2 + $0x468] sm:$0xff]
    %v175 = vld [vmem:[#allocation2 + $0x470] sm:$0xff]
    %v176 = vld [vmem:[#allocation2 + $0x478] sm:$0xff]
    %v177 = vld [vmem:[#allocation2 + $0x480] sm:$0xff]
    %v178 = vld [vmem:[#allocation2 + $0x488] sm:$0xff]
    %v179 = vld [vmem:[#allocation2 + $0x490] sm:$0xff]
    %v180 = vld [vmem:[#allocation2 + $0x498] sm:$0xff]
    %v181 = vld [vmem:[#allocation2 + $0x4a0] sm:$0xff]
    %v182 = vld [vmem:[#allocation2 + $0x4a8] sm:$0xff]
    %v183 = vld [vmem:[#allocation2 + $0x4b0] sm:$0xff]
    %v184 = vld [vmem:[#allocation2 + $0x4b8] sm:$0xff]
    %v185 = vld [vmem:[#allocation2 + $0x4c0] sm:$0xff]
    %v186 = vld [vmem:[#allocation2 + $0x4c8] sm:$0xff]
    %v187 = vld [vmem:[#allocation2 + $0x4d0] sm:$0xff]
    %v188 = vld [vmem:[#allocation2 + $0x4d8] sm:$0xff]
    %v189 = vld [vmem:[#allocation2 + $0x4e0] sm:$0xff]
    %v190 = vld [vmem:[#allocation2 + $0x4e8] sm:$0xff]
    %v191 = vld [vmem:[#allocation2 + $0x4f0] sm:$0xff]
    %v192 = vld [vmem:[#allocation2 + $0x4f8] sm:$0xff]
    %v193 = vld [vmem:[#allocation2 + $0x500] sm:$0xff]
    %v194 = vld [vmem:[#allocation2 + $0x508] sm:$0xff]
    %v195 = vld [vmem:[#allocation2 + $0x510] sm:$0xff]
    %v196 = vld [vmem:[#allocation2 + $0x518] sm:$0xff]
    %v197 = vld [vmem:[#allocation2 + $0x520] sm:$0xff]
    %v198 = vld [vmem:[#allocation2 + $0x528] sm:$0xff]
    %v199 = vld [vmem:[#allocation2 + $0x530] sm:$0xff]
    %v200 = vld [vmem:[#allocation2 + $0x538] sm:$0xff]
    %v201 = vld [vmem:[#allocation2 + $0x540] sm:$0xff]
    %v202 = vld [vmem:[#allocation2 + $0x548] sm:$0xff]
    %v203 = vld [vmem:[#allocation2 + $0x550] sm:$0xff]
    %v204 = vld [vmem:[#allocation2 + $0x558] sm:$0xff]
    %v205 = vld [vmem:[#allocation2 + $0x560] sm:$0xff]
    %v206 = vld [vmem:[#allocation2 + $0x568] sm:$0xff]
    %v207 = vld [vmem:[#allocation2 + $0x570] sm:$0xff]
    %v208 = vld [vmem:[#allocation2 + $0x578] sm:$0xff]
    %v209 = vld [vmem:[#allocation2 + $0x580] sm:$0xff]
    %v210 = vld [vmem:[#allocation2 + $0x588] sm:$0xff]
    %v211 = vld [vmem:[#allocation2 + $0x590] sm:$0xff]
    %v212 = vld [vmem:[#allocation2 + $0x598] sm:$0xff]
    %v213 = vld [vmem:[#allocation2 + $0x5a0] sm:$0xff]
    %v214 = vld [vmem:[#allocation2 + $0x5a8] sm:$0xff]
    %v215 = vld [vmem:[#allocation2 + $0x5b0] sm:$0xff]
    %v216 = vld [vmem:[#allocation2 + $0x5b8] sm:$0xff]
    %v217 = vld [vmem:[#allocation2 + $0x5c0] sm:$0xff]
    %v218 = vld [vmem:[#allocation2 + $0x5c8] sm:$0xff]
    %v219 = vld [vmem:[#allocation2 + $0x5d0] sm:$0xff]
    %v220 = vld [vmem:[#allocation2 + $0x5d8] sm:$0xff]
    %v221 = vld [vmem:[#allocation2 + $0x5e0] sm:$0xff]
    %v222 = vld [vmem:[#allocation2 + $0x5e8] sm:$0xff]
    %v223 = vld [vmem:[#allocation2 + $0x5f0] sm:$0xff]
    %v224 = vld [vmem:[#allocation2 + $0x5f8] sm:$0xff]
    %v225 = vld [vmem:[#allocation2 + $0x600] sm:$0xff]
    %v226 = vld [vmem:[#allocation2 + $0x608] sm:$0xff]
    %v227 = vld [vmem:[#allocation2 + $0x610] sm:$0xff]
    %v228 = vld [vmem:[#allocation2 + $0x618] sm:$0xff]
    %v229 = vld [vmem:[#allocation2 + $0x620] sm:$0xff]
    %v230 = vld [vmem:[#allocation2 + $0x628] sm:$0xff]
    %v231 = vld [vmem:[#allocation2 + $0x630] sm:$0xff]
    %v232 = vld [vmem:[#allocation2 + $0x638] sm:$0xff]
    %v233 = vld [vmem:[#allocation2 + $0x640] sm:$0xff]
    %v234 = vld [vmem:[#allocation2 + $0x648] sm:$0xff]
    %v235 = vld [vmem:[#allocation2 + $0x650] sm:$0xff]
    %v236 = vld [vmem:[#allocation2 + $0x658] sm:$0xff]
    %v237 = vld [vmem:[#allocation2 + $0x660] sm:$0xff]
    %v238 = vld [vmem:[#allocation2 + $0x668] sm:$0xff]
    %v239 = vld [vmem:[#allocation2 + $0x670] sm:$0xff]
    %v240 = vld [vmem:[#allocation2 + $0x678] sm:$0xff]
    %v241 = vld [vmem:[#allocation2 + $0x680] sm:$0xff]
    %v242 = vld [vmem:[#allocation2 + $0x688] sm:$0xff]
    %v243 = vld [vmem:[#allocation2 + $0x690] sm:$0xff]
    %v244 = vld [vmem:[#allocation2 + $0x698] sm:$0xff]
    %v245 = vld [vmem:[#allocation2 + $0x6a0] sm:$0xff]
    %v246 = vld [vmem:[#allocation2 + $0x6a8] sm:$0xff]
    %v247 = vld [vmem:[#allocation2 + $0x6b0] sm:$0xff]
    %v248 = vld [vmem:[#allocation2 + $0x6b8] sm:$0xff]
    %v249 = vld [vmem:[#allocation2 + $0x6c0] sm:$0xff]
    %v250 = vld [vmem:[#allocation2 + $0x6c8] sm:$0xff]
    %v251 = vld [vmem:[#allocation2 + $0x6d0] sm:$0xff]
    %v252 = vld [vmem:[#allocation2 + $0x6d8] sm:$0xff]
    %v253 = vld [vmem:[#allocation2 + $0x6e0] sm:$0xff]
    %v254 = vld [vmem:[#allocation2 + $0x6e8] sm:$0xff]
    %v255 = vld [vmem:[#allocation2 + $0x6f0] sm:$0xff]
    %v256 = vld [vmem:[#allocation2 + $0x6f8] sm:$0xff]
    %v257 = vld [vmem:[#allocation2 + $0x700] sm:$0x1]
    %v258 = vld [vmem:[#allocation2 + $0x708] sm:$0x1]
    %v259 = vld [vmem:[#allocation2 + $0x710] sm:$0x1]
    %v260 = vld [vmem:[#allocation2 + $0x718] sm:$0x1]
    %v261 = vld [vmem:[#allocation2 + $0x720] sm:$0x1]
    %v262 = vld [vmem:[#allocation2 + $0x728] sm:$0x1]
    %v263 = vld [vmem:[#allocation2 + $0x730] sm:$0x1]
    %v264 = vld [vmem:[#allocation2 + $0x738] sm:$0x1]
    %v265 = vld [vmem:[#allocation2 + $0x740] sm:$0x1]
    %v266 = vld [vmem:[#allocation2 + $0x748] sm:$0x1]
    %v267 = vld [vmem:[#allocation2 + $0x750] sm:$0x1]
    %v268 = vld [vmem:[#allocation2 + $0x758] sm:$0x1]
    %v269 = vld [vmem:[#allocation2 + $0x760] sm:$0x1]
    %v270 = vld [vmem:[#allocation2 + $0x768] sm:$0x1]
    %v279 = vcombine.low %v25, %v26
    %v280 = vcombine.low %v27, %v28
    %v281 = vcombine.low %v29, %v30
    %v282 = vcombine.low %v31, %v32
    %v284 = vunpack.c.l.s4 1966171168
    %v285 = vunpack.c.0.s8 %v284
    %v286 = vlaneseq
    %v287 = vshrl.u32 %v286, 7
    %v288 = vsub.s32 %v285, %v287
    %v289 = vrot.slane %v279, %v288
    %v291 = vunpack.c.l.s4 1966171168
    %v292 = vunpack.c.0.s8 %v291
    %v293 = vlaneseq
    %v294 = vshrl.u32 %v293, 7
    %v295 = vsub.s32 %v292, %v294
    %v296 = vrot.slane %v280, %v295
    %v298 = vunpack.c.l.s4 1966171168
    %v299 = vunpack.c.0.s8 %v298
    %v300 = vlaneseq
    %v301 = vshrl.u32 %v300, 7
    %v302 = vsub.s32 %v299, %v301
    %v303 = vrot.slane %v281, %v302
    %v305 = vunpack.c.l.s4 1966171168
    %v306 = vunpack.c.0.s8 %v305
    %v307 = vlaneseq
    %v308 = vshrl.u32 %v307, 7
    %v309 = vsub.s32 %v306, %v308
    %v310 = vrot.slane %v282, %v309
    %v311 = vcombine.low %v289, %v296
    %v312 = vcombine.high %v289, %v296
    %v313 = vcombine.low %v303, %v310
    %v314 = vcombine.high %v303, %v310
    %v316 = vunpack.c.l.s4 1966171168
    %v317 = vunpack.c.0.s8 %v316
    %v318 = vlaneseq
    %v319 = vshrl.u32 %v318, 7
    %v320 = vsub.s32 %v317, %v319
    %v321 = vrot.slane %v311, %v320
    %v323 = vunpack.c.l.s4 1966171168
    %v324 = vunpack.c.0.s8 %v323
    %v325 = vlaneseq
    %v326 = vshrl.u32 %v325, 7
    %v327 = vsub.s32 %v324, %v326
    %v328 = vrot.slane %v312, %v327
    %v330 = vunpack.c.l.s4 1966171168
    %v331 = vunpack.c.0.s8 %v330
    %v332 = vlaneseq
    %v333 = vshrl.u32 %v332, 7
    %v334 = vsub.s32 %v331, %v333
    %v335 = vrot.slane %v313, %v334
    %v337 = vunpack.c.l.s4 1966171168
    %v338 = vunpack.c.0.s8 %v337
    %v339 = vlaneseq
    %v340 = vshrl.u32 %v339, 7
    %v341 = vsub.s32 %v338, %v340
    %v342 = vrot.slane %v314, %v341
    %v343 = vcombine.low %v321, %v335
    %v344 = vcombine.low %v328, %v342
    %vm346 = vcmask 7168
    %v347 = vsel %vm346, %v344, 0
    %vm349 = vcmask 1040384
    %v351 = vsel %vm349, %v257, 0
    %v354 = vsel %vm349, %v258, 0
    %v357 = vsel %vm349, %v259, 0
    %v360 = vsel %vm349, %v260, 0
    %v363 = vsel %vm349, %v261, 0
    %v366 = vsel %vm349, %v262, 0
    %v369 = vsel %vm349, %v263, 0
    %v372 = vsel %vm349, %v264, 0
    %v375 = vsel %vm349, %v265, 0
    %v378 = vsel %vm349, %v266, 0
    %v381 = vsel %vm349, %v267, 0
    %v384 = vsel %vm349, %v268, 0
    %v387 = vsel %vm349, %v269, 0
    %v390 = vsel %vm349, %v270, 0
    %v392 = vand.u32 %v34, 4294901760
    %393 = vmatprep.subr.mxu0 %v392
    %v394 = vand.u32 %v33, 4294901760
    %395 = vmatpush1.msra.mxu0 %v394
    %v396 = vand.u32 %v48, 4294901760
    %397 = vmatprep.subr.mxu0 %v396
    %v398 = vand.u32 %v47, 4294901760
    %399 = vmatpush1.msra.mxu0 %v398
    %v400 = vand.u32 %v62, 4294901760
    %401 = vmatprep.subr.mxu0 %v400
    %v402 = vand.u32 %v61, 4294901760
    %403 = vmatpush1.msra.mxu0 %v402
    %v404 = vand.u32 %v76, 4294901760
    %405 = vmatprep.subr.mxu0 %v404
    %v406 = vand.u32 %v75, 4294901760
    %407 = vmatpush1.msra.mxu0 %v406
    %v408 = vand.u32 %v90, 4294901760
    %409 = vmatprep.subr.mxu0 %v408
    %v410 = vand.u32 %v89, 4294901760
    %411 = vmatpush1.msra.mxu0 %v410
    %v412 = vand.u32 %v104, 4294901760
    %413 = vmatprep.subr.mxu0 %v412
    %v414 = vand.u32 %v103, 4294901760
    %415 = vmatpush1.msra.mxu0 %v414
    %v416 = vand.u32 %v118, 4294901760
    %417 = vmatprep.subr.mxu0 %v416
    %v418 = vand.u32 %v117, 4294901760
    %419 = vmatpush1.msra.mxu0 %v418
    %v420 = vand.u32 %v132, 4294901760
    %421 = vmatprep.subr.mxu0 %v420
    %v422 = vand.u32 %v131, 4294901760
    %423 = vmatpush1.msra.mxu0 %v422
    %v424 = vand.u32 %v146, 4294901760
    %425 = vmatprep.subr.mxu0 %v424
    %v426 = vand.u32 %v145, 4294901760
    %427 = vmatpush1.msra.mxu0 %v426
    %v428 = vand.u32 %v160, 4294901760
    %429 = vmatprep.subr.mxu0 %v428
    %v430 = vand.u32 %v159, 4294901760
    %431 = vmatpush1.msra.mxu0 %v430
    %v432 = vand.u32 %v174, 4294901760
    %433 = vmatprep.subr.mxu0 %v432
    %v434 = vand.u32 %v173, 4294901760
    %435 = vmatpush1.msra.mxu0 %v434
    %v436 = vand.u32 %v188, 4294901760
    %437 = vmatprep.subr.mxu0 %v436
    %v438 = vand.u32 %v187, 4294901760
    %439 = vmatpush1.msra.mxu0 %v438
    %v440 = vand.u32 %v202, 4294901760
    %441 = vmatprep.subr.mxu0 %v440
    %v442 = vand.u32 %v201, 4294901760
    %443 = vmatpush1.msra.mxu0 %v442
    %v444 = vand.u32 %v216, 4294901760
    %445 = vmatprep.subr.mxu0 %v444
    %v446 = vand.u32 %v215, 4294901760
    %447 = vmatpush1.msra.mxu0 %v446
    %v448 = vand.u32 %v230, 4294901760
    %449 = vmatprep.subr.mxu0 %v448
    %v450 = vand.u32 %v229, 4294901760
    %451 = vmatpush1.msra.mxu0 %v450
    %v452 = vand.u32 %v244, 4294901760
    %453 = vmatprep.subr.mxu0 %v452
    %v454 = vand.u32 %v243, 4294901760
    %455 = vmatpush1.msra.mxu0 %v454
    %v456 = vand.u32 %v354, 4294901760
    %457 = vmatprep.subr.mxu0 %v456
    %v458 = vand.u32 %v351, 4294901760
    %459 = vmatpush1.msra.mxu0 %v458
    %460 = vmatprep.subr.mxu0 0.0
    %461 = vmatpush1.msra.mxu0 0.0
    %462 = vmatprep.subr.mxu0 0.0
    %463 = vmatpush1.msra.mxu0 0.0
    %464 = vmatprep.subr.mxu0 0.0
    %465 = vmatpush1.msra.mxu0 0.0
    %466 = vmatprep.subr.mxu0 0.0
    %467 = vmatpush1.msra.mxu0 0.0
    %468 = vmatprep.subr.mxu0 0.0
    %469 = vmatpush1.msra.mxu0 0.0
    %470 = vmatprep.subr.mxu0 0.0
    %471 = vmatpush1.msra.mxu0 0.0
    %472 = vmatprep.subr.mxu0 0.0
    %473 = vmatpush1.msra.mxu0 0.0
    %474 = vmatprep.subr.mxu0 0.0
    %475 = vmatpush1.msra.mxu0 0.0
    %476 = vmatprep.subr.mxu0 0.0
    %477 = vmatpush1.msra.mxu0 0.0
    %478 = vmatprep.subr.mxu0 0.0
    %479 = vmatpush1.msra.mxu0 0.0
    %480 = vmatprep.subr.mxu0 0.0
    %481 = vmatpush1.msra.mxu0 0.0
    %482 = vmatprep.subr.mxu0 0.0
    %483 = vmatpush1.msra.mxu0 0.0
    %484 = vmatprep.subr.mxu0 0.0
    %485 = vmatpush1.msra.mxu0 0.0
    %486 = vmatprep.subr.mxu0 0.0
    %487 = vmatpush1.msra.mxu0 0.0
    %488 = vmatprep.subr.mxu0 0.0
    %489 = vmatpush1.msra.mxu0 0.0
    %v490 = vand.u32 %v347, 4294901760
    %v491 = vsub.f32 %v347, %v490
    %v492 = vand.u32 %v491, 4294901760
    %v493 = vsub.f32 %v491, %v492
    %v494 = vand.u32 %v493, 4294901760
    %495 = vmatprep.mubr.f32.mxu0 %v494
    %v496 = vand.u32 %v343, 4294901760
    %v497 = vsub.f32 %v343, %v496
    %v498 = vand.u32 %v497, 4294901760
    %v499 = vsub.f32 %v497, %v498
    %v500 = vand.u32 %v499, 4294901760
    %501 = vmatmul.mubr.f32.gmra.mrb[0].mxu0 %v500
    %v502 = vpop.f32.mrb[0].mxu0
    %v503 = vadd.f32 0.0, %v502
    %v504 = vpop.f32.mrb[0].mxu0
    %v505 = vadd.f32 0.0, %v504
    %506 = vdwg.mxu0
    %v507 = vand.u32 %v34, 4294901760
    %v508 = vsub.f32 %v34, %v507
    %v509 = vand.u32 %v508, 4294901760
    %v510 = vsub.f32 %v508, %v509
    %v511 = vand.u32 %v510, 4294901760
    %512 = vmatprep.subr.mxu0 %v511
    %v513 = vand.u32 %v33, 4294901760
    %v514 = vsub.f32 %v33, %v513
    %v515 = vand.u32 %v514, 4294901760
    %v516 = vsub.f32 %v514, %v515
    %v517 = vand.u32 %v516, 4294901760
    %518 = vmatpush1.msra.mxu0 %v517
    %v519 = vand.u32 %v48, 4294901760
    %v520 = vsub.f32 %v48, %v519
    %v521 = vand.u32 %v520, 4294901760
    %v522 = vsub.f32 %v520, %v521
    %v523 = vand.u32 %v522, 4294901760
    %524 = vmatprep.subr.mxu0 %v523
    %v525 = vand.u32 %v47, 4294901760
    %v526 = vsub.f32 %v47, %v525
    %v527 = vand.u32 %v526, 4294901760
    %v528 = vsub.f32 %v526, %v527
    %v529 = vand.u32 %v528, 4294901760
    %530 = vmatpush1.msra.mxu0 %v529
    %v531 = vand.u32 %v62, 4294901760
    %v532 = vsub.f32 %v62, %v531
    %v533 = vand.u32 %v532, 4294901760
    %v534 = vsub.f32 %v532, %v533
    %v535 = vand.u32 %v534, 4294901760
    %536 = vmatprep.subr.mxu0 %v535
    %v537 = vand.u32 %v61, 4294901760
    %v538 = vsub.f32 %v61, %v537
    %v539 = vand.u32 %v538, 4294901760
    %v540 = vsub.f32 %v538, %v539
    %v541 = vand.u32 %v540, 4294901760
    %542 = vmatpush1.msra.mxu0 %v541
    %v543 = vand.u32 %v76, 4294901760
    %v544 = vsub.f32 %v76, %v543
    %v545 = vand.u32 %v544, 4294901760
    %v546 = vsub.f32 %v544, %v545
    %v547 = vand.u32 %v546, 4294901760
    %548 = vmatprep.subr.mxu0 %v547
    %v549 = vand.u32 %v75, 4294901760
    %v550 = vsub.f32 %v75, %v549
    %v551 = vand.u32 %v550, 4294901760
    %v552 = vsub.f32 %v550, %v551
    %v553 = vand.u32 %v552, 4294901760
    %554 = vmatpush1.msra.mxu0 %v553
    %v555 = vand.u32 %v90, 4294901760
    %v556 = vsub.f32 %v90, %v555
    %v557 = vand.u32 %v556, 4294901760
    %v558 = vsub.f32 %v556, %v557
    %v559 = vand.u32 %v558, 4294901760
    %560 = vmatprep.subr.mxu0 %v559
    %v561 = vand.u32 %v89, 4294901760
    %v562 = vsub.f32 %v89, %v561
    %v563 = vand.u32 %v562, 4294901760
    %v564 = vsub.f32 %v562, %v563
    %v565 = vand.u32 %v564, 4294901760
    %566 = vmatpush1.msra.mxu0 %v565
    %v567 = vand.u32 %v104, 4294901760
    %v568 = vsub.f32 %v104, %v567
    %v569 = vand.u32 %v568, 4294901760
    %v570 = vsub.f32 %v568, %v569
    %v571 = vand.u32 %v570, 4294901760
    %572 = vmatprep.subr.mxu0 %v571
    %v573 = vand.u32 %v103, 4294901760
    %v574 = vsub.f32 %v103, %v573
    %v575 = vand.u32 %v574, 4294901760
    %v576 = vsub.f32 %v574, %v575
    %v577 = vand.u32 %v576, 4294901760
    %578 = vmatpush1.msra.mxu0 %v577
    %v579 = vand.u32 %v118, 4294901760
    %v580 = vsub.f32 %v118, %v579
    %v581 = vand.u32 %v580, 4294901760
    %v582 = vsub.f32 %v580, %v581
    %v583 = vand.u32 %v582, 4294901760
    %584 = vmatprep.subr.mxu0 %v583
    %v585 = vand.u32 %v117, 4294901760
    %v586 = vsub.f32 %v117, %v585
    %v587 = vand.u32 %v586, 4294901760
    %v588 = vsub.f32 %v586, %v587
    %v589 = vand.u32 %v588, 4294901760
    %590 = vmatpush1.msra.mxu0 %v589
    %v591 = vand.u32 %v132, 4294901760
    %v592 = vsub.f32 %v132, %v591
    %v593 = vand.u32 %v592, 4294901760
    %v594 = vsub.f32 %v592, %v593
    %v595 = vand.u32 %v594, 4294901760
    %596 = vmatprep.subr.mxu0 %v595
    %v597 = vand.u32 %v131, 4294901760
    %v598 = vsub.f32 %v131, %v597
    %v599 = vand.u32 %v598, 4294901760
    %v600 = vsub.f32 %v598, %v599
    %v601 = vand.u32 %v600, 4294901760
    %602 = vmatpush1.msra.mxu0 %v601
    %v603 = vand.u32 %v146, 4294901760
    %v604 = vsub.f32 %v146, %v603
    %v605 = vand.u32 %v604, 4294901760
    %v606 = vsub.f32 %v604, %v605
    %v607 = vand.u32 %v606, 4294901760
    %608 = vmatprep.subr.mxu0 %v607
    %v609 = vand.u32 %v145, 4294901760
    %v610 = vsub.f32 %v145, %v609
    %v611 = vand.u32 %v610, 4294901760
    %v612 = vsub.f32 %v610, %v611
    %v613 = vand.u32 %v612, 4294901760
    %614 = vmatpush1.msra.mxu0 %v613
    %v615 = vand.u32 %v160, 4294901760
    %v616 = vsub.f32 %v160, %v615
    %v617 = vand.u32 %v616, 4294901760
    %v618 = vsub.f32 %v616, %v617
    %v619 = vand.u32 %v618, 4294901760
    %620 = vmatprep.subr.mxu0 %v619
    %v621 = vand.u32 %v159, 4294901760
    %v622 = vsub.f32 %v159, %v621
    %v623 = vand.u32 %v622, 4294901760
    %v624 = vsub.f32 %v622, %v623
    %v625 = vand.u32 %v624, 4294901760
    %626 = vmatpush1.msra.mxu0 %v625
    %v627 = vand.u32 %v174, 4294901760
    %v628 = vsub.f32 %v174, %v627
    %v629 = vand.u32 %v628, 4294901760
    %v630 = vsub.f32 %v628, %v629
    %v631 = vand.u32 %v630, 4294901760
    %632 = vmatprep.subr.mxu0 %v631
    %v633 = vand.u32 %v173, 4294901760
    %v634 = vsub.f32 %v173, %v633
    %v635 = vand.u32 %v634, 4294901760
    %v636 = vsub.f32 %v634, %v635
    %v637 = vand.u32 %v636, 4294901760
    %638 = vmatpush1.msra.mxu0 %v637
    %v639 = vand.u32 %v188, 4294901760
    %v640 = vsub.f32 %v188, %v639
    %v641 = vand.u32 %v640, 4294901760
    %v642 = vsub.f32 %v640, %v641
    %v643 = vand.u32 %v642, 4294901760
    %644 = vmatprep.subr.mxu0 %v643
    %v645 = vand.u32 %v187, 4294901760
    %v646 = vsub.f32 %v187, %v645
    %v647 = vand.u32 %v646, 4294901760
    %v648 = vsub.f32 %v646, %v647
    %v649 = vand.u32 %v648, 4294901760
    %650 = vmatpush1.msra.mxu0 %v649
    %v651 = vand.u32 %v202, 4294901760
    %v652 = vsub.f32 %v202, %v651
    %v653 = vand.u32 %v652, 4294901760
    %v654 = vsub.f32 %v652, %v653
    %v655 = vand.u32 %v654, 4294901760
    %656 = vmatprep.subr.mxu0 %v655
    %v657 = vand.u32 %v201, 4294901760
    %v658 = vsub.f32 %v201, %v657
    %v659 = vand.u32 %v658, 4294901760
    %v660 = vsub.f32 %v658, %v659
    %v661 = vand.u32 %v660, 4294901760
    %662 = vmatpush1.msra.mxu0 %v661
    %v663 = vand.u32 %v216, 4294901760
    %v664 = vsub.f32 %v216, %v663
    %v665 = vand.u32 %v664, 4294901760
    %v666 = vsub.f32 %v664, %v665
    %v667 = vand.u32 %v666, 4294901760
    %668 = vmatprep.subr.mxu0 %v667
    %v669 = vand.u32 %v215, 4294901760
    %v670 = vsub.f32 %v215, %v669
    %v671 = vand.u32 %v670, 4294901760
    %v672 = vsub.f32 %v670, %v671
    %v673 = vand.u32 %v672, 4294901760
    %674 = vmatpush1.msra.mxu0 %v673
    %v675 = vand.u32 %v230, 4294901760
    %v676 = vsub.f32 %v230, %v675
    %v677 = vand.u32 %v676, 4294901760
    %v678 = vsub.f32 %v676, %v677
    %v679 = vand.u32 %v678, 4294901760
    %680 = vmatprep.subr.mxu0 %v679
    %v681 = vand.u32 %v229, 4294901760
    %v682 = vsub.f32 %v229, %v681
    %v683 = vand.u32 %v682, 4294901760
    %v684 = vsub.f32 %v682, %v683
    %v685 = vand.u32 %v684, 4294901760
    %686 = vmatpush1.msra.mxu0 %v685
    %v687 = vand.u32 %v244, 4294901760
    %v688 = vsub.f32 %v244, %v687
    %v689 = vand.u32 %v688, 4294901760
    %v690 = vsub.f32 %v688, %v689
    %v691 = vand.u32 %v690, 4294901760
    %692 = vmatprep.subr.mxu0 %v691
    %v693 = vand.u32 %v243, 4294901760
    %v694 = vsub.f32 %v243, %v693
    %v695 = vand.u32 %v694, 4294901760
    %v696 = vsub.f32 %v694, %v695
    %v697 = vand.u32 %v696, 4294901760
    %698 = vmatpush1.msra.mxu0 %v697
    %v699 = vand.u32 %v354, 4294901760
    %v700 = vsub.f32 %v354, %v699
    %v701 = vand.u32 %v700, 4294901760
    %v702 = vsub.f32 %v700, %v701
    %v703 = vand.u32 %v702, 4294901760
    %704 = vmatprep.subr.mxu0 %v703
    %v705 = vand.u32 %v351, 4294901760
    %v706 = vsub.f32 %v351, %v705
    %v707 = vand.u32 %v706, 4294901760
    %v708 = vsub.f32 %v706, %v707
    %v709 = vand.u32 %v708, 4294901760
    %710 = vmatpush1.msra.mxu0 %v709
    %711 = vmatprep.subr.mxu0 0.0
    %712 = vmatpush1.msra.mxu0 0.0
    %713 = vmatprep.subr.mxu0 0.0
    %714 = vmatpush1.msra.mxu0 0.0
    %715 = vmatprep.subr.mxu0 0.0
    %716 = vmatpush1.msra.mxu0 0.0
    %717 = vmatprep.subr.mxu0 0.0
    %718 = vmatpush1.msra.mxu0 0.0
    %719 = vmatprep.subr.mxu0 0.0
    %720 = vmatpush1.msra.mxu0 0.0
    %721 = vmatprep.subr.mxu0 0.0
    %722 = vmatpush1.msra.mxu0 0.0
    %723 = vmatprep.subr.mxu0 0.0
    %724 = vmatpush1.msra.mxu0 0.0
    %725 = vmatprep.subr.mxu0 0.0
    %726 = vmatpush1.msra.mxu0 0.0
    %727 = vmatprep.subr.mxu0 0.0
    %728 = vmatpush1.msra.mxu0 0.0
    %729 = vmatprep.subr.mxu0 0.0
    %730 = vmatpush1.msra.mxu0 0.0
    %731 = vmatprep.subr.mxu0 0.0
    %732 = vmatpush1.msra.mxu0 0.0
    %733 = vmatprep.subr.mxu0 0.0
    %734 = vmatpush1.msra.mxu0 0.0
    %735 = vmatprep.subr.mxu0 0.0
    %736 = vmatpush1.msra.mxu0 0.0
    %737 = vmatprep.subr.mxu0 0.0
    %738 = vmatpush1.msra.mxu0 0.0
    %739 = vmatprep.subr.mxu0 0.0
    %740 = vmatpush1.msra.mxu0 0.0
    %v741 = vand.u32 %v347, 4294901760
    %742 = vmatprep.mubr.f32.mxu0 %v741
    %v743 = vand.u32 %v343, 4294901760
    %744 = vmatmul.mubr.f32.gmra.mrb[0].mxu0 %v743
    %v745 = vpop.f32.mrb[0].mxu0
    %v746 = vadd.f32 %v503, %v745
    %v747 = vpop.f32.mrb[0].mxu0
    %v748 = vadd.f32 %v505, %v747
    %749 = vdwg.mxu0
    %v750 = vand.u32 %v34, 4294901760
    %v751 = vsub.f32 %v34, %v750
    %752 = vmatprep.subr.mxu0 %v751
    %v753 = vand.u32 %v33, 4294901760
    %v754 = vsub.f32 %v33, %v753
    %755 = vmatpush1.msra.mxu0 %v754
    %v756 = vand.u32 %v48, 4294901760
    %v757 = vsub.f32 %v48, %v756
    %758 = vmatprep.subr.mxu0 %v757
    %v759 = vand.u32 %v47, 4294901760
    %v760 = vsub.f32 %v47, %v759
    %761 = vmatpush1.msra.mxu0 %v760
    %v762 = vand.u32 %v62, 4294901760
    %v763 = vsub.f32 %v62, %v762
    %764 = vmatprep.subr.mxu0 %v763
    %v765 = vand.u32 %v61, 4294901760
    %v766 = vsub.f32 %v61, %v765
    %767 = vmatpush1.msra.mxu0 %v766
    %v768 = vand.u32 %v76, 4294901760
    %v769 = vsub.f32 %v76, %v768
    %770 = vmatprep.subr.mxu0 %v769
    %v771 = vand.u32 %v75, 4294901760
    %v772 = vsub.f32 %v75, %v771
    %773 = vmatpush1.msra.mxu0 %v772
    %v774 = vand.u32 %v90, 4294901760
    %v775 = vsub.f32 %v90, %v774
    %776 = vmatprep.subr.mxu0 %v775
    %v777 = vand.u32 %v89, 4294901760
    %v778 = vsub.f32 %v89, %v777
    %779 = vmatpush1.msra.mxu0 %v778
    %v780 = vand.u32 %v104, 4294901760
    %v781 = vsub.f32 %v104, %v780
    %782 = vmatprep.subr.mxu0 %v781
    %v783 = vand.u32 %v103, 4294901760
    %v784 = vsub.f32 %v103, %v783
    %785 = vmatpush1.msra.mxu0 %v784
    %v786 = vand.u32 %v118, 4294901760
    %v787 = vsub.f32 %v118, %v786
    %788 = vmatprep.subr.mxu0 %v787
    %v789 = vand.u32 %v117, 4294901760
    %v790 = vsub.f32 %v117, %v789
    %791 = vmatpush1.msra.mxu0 %v790
    %v792 = vand.u32 %v132, 4294901760
    %v793 = vsub.f32 %v132, %v792
    %794 = vmatprep.subr.mxu0 %v793
    %v795 = vand.u32 %v131, 4294901760
    %v796 = vsub.f32 %v131, %v795
    %797 = vmatpush1.msra.mxu0 %v796
    %v798 = vand.u32 %v146, 4294901760
    %v799 = vsub.f32 %v146, %v798
    %800 = vmatprep.subr.mxu0 %v799
    %v801 = vand.u32 %v145, 4294901760
    %v802 = vsub.f32 %v145, %v801
    %803 = vmatpush1.msra.mxu0 %v802
    %v804 = vand.u32 %v160, 4294901760
    %v805 = vsub.f32 %v160, %v804
    %806 = vmatprep.subr.mxu0 %v805
    %v807 = vand.u32 %v159, 4294901760
    %v808 = vsub.f32 %v159, %v807
    %809 = vmatpush1.msra.mxu0 %v808
    %v810 = vand.u32 %v174, 4294901760
    %v811 = vsub.f32 %v174, %v810
    %812 = vmatprep.subr.mxu0 %v811
    %v813 = vand.u32 %v173, 4294901760
    %v814 = vsub.f32 %v173, %v813
    %815 = vmatpush1.msra.mxu0 %v814
    %v816 = vand.u32 %v188, 4294901760
    %v817 = vsub.f32 %v188, %v816
    %818 = vmatprep.subr.mxu0 %v817
    %v819 = vand.u32 %v187, 4294901760
    %v820 = vsub.f32 %v187, %v819
    %821 = vmatpush1.msra.mxu0 %v820
    %v822 = vand.u32 %v202, 4294901760
    %v823 = vsub.f32 %v202, %v822
    %824 = vmatprep.subr.mxu0 %v823
    %v825 = vand.u32 %v201, 4294901760
    %v826 = vsub.f32 %v201, %v825
    %827 = vmatpush1.msra.mxu0 %v826
    %v828 = vand.u32 %v216, 4294901760
    %v829 = vsub.f32 %v216, %v828
    %830 = vmatprep.subr.mxu0 %v829
    %v831 = vand.u32 %v215, 4294901760
    %v832 = vsub.f32 %v215, %v831
    %833 = vmatpush1.msra.mxu0 %v832
    %v834 = vand.u32 %v230, 4294901760
    %v835 = vsub.f32 %v230, %v834
    %836 = vmatprep.subr.mxu0 %v835
    %v837 = vand.u32 %v229, 4294901760
    %v838 = vsub.f32 %v229, %v837
    %839 = vmatpush1.msra.mxu0 %v838
    %v840 = vand.u32 %v244, 4294901760
    %v841 = vsub.f32 %v244, %v840
    %842 = vmatprep.subr.mxu0 %v841
    %v843 = vand.u32 %v243, 4294901760
    %v844 = vsub.f32 %v243, %v843
    %845 = vmatpush1.msra.mxu0 %v844
    %v846 = vand.u32 %v354, 4294901760
    %v847 = vsub.f32 %v354, %v846
    %848 = vmatprep.subr.mxu0 %v847
    %v849 = vand.u32 %v351, 4294901760
    %v850 = vsub.f32 %v351, %v849
    %851 = vmatpush1.msra.mxu0 %v850
    %852 = vmatprep.subr.mxu0 0.0
    %853 = vmatpush1.msra.mxu0 0.0
    %854 = vmatprep.subr.mxu0 0.0
    %855 = vmatpush1.msra.mxu0 0.0
    %856 = vmatprep.subr.mxu0 0.0
    %857 = vmatpush1.msra.mxu0 0.0
    %858 = vmatprep.subr.mxu0 0.0
    %859 = vmatpush1.msra.mxu0 0.0
    %860 = vmatprep.subr.mxu0 0.0
    %861 = vmatpush1.msra.mxu0 0.0
    %862 = vmatprep.subr.mxu0 0.0
    %863 = vmatpush1.msra.mxu0 0.0
    %864 = vmatprep.subr.mxu0 0.0
    %865 = vmatpush1.msra.mxu0 0.0
    %866 = vmatprep.subr.mxu0 0.0
    %867 = vmatpush1.msra.mxu0 0.0
    %868 = vmatprep.subr.mxu0 0.0
    %869 = vmatpush1.msra.mxu0 0.0
    %870 = vmatprep.subr.mxu0 0.0
    %871 = vmatpush1.msra.mxu0 0.0
    %872 = vmatprep.subr.mxu0 0.0
    %873 = vmatpush1.msra.mxu0 0.0
    %874 = vmatprep.subr.mxu0 0.0
    %875 = vmatpush1.msra.mxu0 0.0
    %876 = vmatprep.subr.mxu0 0.0
    %877 = vmatpush1.msra.mxu0 0.0
    %878 = vmatprep.subr.mxu0 0.0
    %879 = vmatpush1.msra.mxu0 0.0
    %880 = vmatprep.subr.mxu0 0.0
    %881 = vmatpush1.msra.mxu0 0.0
    %v882 = vand.u32 %v347, 4294901760
    %v883 = vsub.f32 %v347, %v882
    %884 = vmatprep.mubr.f32.mxu0 %v883
    %v885 = vand.u32 %v343, 4294901760
    %v886 = vsub.f32 %v343, %v885
    %887 = vmatmul.mubr.f32.gmra.mrb[0].mxu0 %v886
    %v888 = vpop.f32.mrb[0].mxu0
    %v889 = vadd.f32 %v746, %v888
    %v890 = vpop.f32.mrb[0].mxu0
    %v891 = vadd.f32 %v748, %v890
    %892 = vdwg.mxu0
    %v893 = vand.u32 %v34, 4294901760
    %894 = vmatprep.subr.mxu0 %v893
    %v895 = vand.u32 %v33, 4294901760
    %896 = vmatpush1.msra.mxu0 %v895
    %v897 = vand.u32 %v48, 4294901760
    %898 = vmatprep.subr.mxu0 %v897
    %v899 = vand.u32 %v47, 4294901760
    %900 = vmatpush1.msra.mxu0 %v899
    %v901 = vand.u32 %v62, 4294901760
    %902 = vmatprep.subr.mxu0 %v901
    %v903 = vand.u32 %v61, 4294901760
    %904 = vmatpush1.msra.mxu0 %v903
    %v905 = vand.u32 %v76, 4294901760
    %906 = vmatprep.subr.mxu0 %v905
    %v907 = vand.u32 %v75, 4294901760
    %908 = vmatpush1.msra.mxu0 %v907
    %v909 = vand.u32 %v90, 4294901760
    %910 = vmatprep.subr.mxu0 %v909
    %v911 = vand.u32 %v89, 4294901760
    %912 = vmatpush1.msra.mxu0 %v911
    %v913 = vand.u32 %v104, 4294901760
    %914 = vmatprep.subr.mxu0 %v913
    %v915 = vand.u32 %v103, 4294901760
    %916 = vmatpush1.msra.mxu0 %v915
    %v917 = vand.u32 %v118, 4294901760
    %918 = vmatprep.subr.mxu0 %v917
    %v919 = vand.u32 %v117, 4294901760
    %920 = vmatpush1.msra.mxu0 %v919
    %v921 = vand.u32 %v132, 4294901760
    %922 = vmatprep.subr.mxu0 %v921
    %v923 = vand.u32 %v131, 4294901760
    %924 = vmatpush1.msra.mxu0 %v923
    %v925 = vand.u32 %v146, 4294901760
    %926 = vmatprep.subr.mxu0 %v925
    %v927 = vand.u32 %v145, 4294901760
    %928 = vmatpush1.msra.mxu0 %v927
    %v929 = vand.u32 %v160, 4294901760
    %930 = vmatprep.subr.mxu0 %v929
    %v931 = vand.u32 %v159, 4294901760
    %932 = vmatpush1.msra.mxu0 %v931
    %v933 = vand.u32 %v174, 4294901760
    %934 = vmatprep.subr.mxu0 %v933
    %v935 = vand.u32 %v173, 4294901760
    %936 = vmatpush1.msra.mxu0 %v935
    %v937 = vand.u32 %v188, 4294901760
    %938 = vmatprep.subr.mxu0 %v937
    %v939 = vand.u32 %v187, 4294901760
    %940 = vmatpush1.msra.mxu0 %v939
    %v941 = vand.u32 %v202, 4294901760
    %942 = vmatprep.subr.mxu0 %v941
    %v943 = vand.u32 %v201, 4294901760
    %944 = vmatpush1.msra.mxu0 %v943
    %v945 = vand.u32 %v216, 4294901760
    %946 = vmatprep.subr.mxu0 %v945
    %v947 = vand.u32 %v215, 4294901760
    %948 = vmatpush1.msra.mxu0 %v947
    %v949 = vand.u32 %v230, 4294901760
    %950 = vmatprep.subr.mxu0 %v949
    %v951 = vand.u32 %v229, 4294901760
    %952 = vmatpush1.msra.mxu0 %v951
    %v953 = vand.u32 %v244, 4294901760
    %954 = vmatprep.subr.mxu0 %v953
    %v955 = vand.u32 %v243, 4294901760
    %956 = vmatpush1.msra.mxu0 %v955
    %v957 = vand.u32 %v354, 4294901760
    %958 = vmatprep.subr.mxu0 %v957
    %v959 = vand.u32 %v351, 4294901760
    %960 = vmatpush1.msra.mxu0 %v959
    %961 = vmatprep.subr.mxu0 0.0
    %962 = vmatpush1.msra.mxu0 0.0
    %963 = vmatprep.subr.mxu0 0.0
    %964 = vmatpush1.msra.mxu0 0.0
    %965 = vmatprep.subr.mxu0 0.0
    %966 = vmatpush1.msra.mxu0 0.0
    %967 = vmatprep.subr.mxu0 0.0
    %968 = vmatpush1.msra.mxu0 0.0
    %969 = vmatprep.subr.mxu0 0.0
    %970 = vmatpush1.msra.mxu0 0.0
    %971 = vmatprep.subr.mxu0 0.0
    %972 = vmatpush1.msra.mxu0 0.0
    %973 = vmatprep.subr.mxu0 0.0
    %974 = vmatpush1.msra.mxu0 0.0
    %975 = vmatprep.subr.mxu0 0.0
    %976 = vmatpush1.msra.mxu0 0.0
    %977 = vmatprep.subr.mxu0 0.0
    %978 = vmatpush1.msra.mxu0 0.0
    %979 = vmatprep.subr.mxu0 0.0
    %980 = vmatpush1.msra.mxu0 0.0
    %981 = vmatprep.subr.mxu0 0.0
    %982 = vmatpush1.msra.mxu0 0.0
    %983 = vmatprep.subr.mxu0 0.0
    %984 = vmatpush1.msra.mxu0 0.0
    %985 = vmatprep.subr.mxu0 0.0
    %986 = vmatpush1.msra.mxu0 0.0
    %987 = vmatprep.subr.mxu0 0.0
    %988 = vmatpush1.msra.mxu0 0.0
    %989 = vmatprep.subr.mxu0 0.0
    %990 = vmatpush1.msra.mxu0 0.0
    %v991 = vand.u32 %v347, 4294901760
    %v992 = vsub.f32 %v347, %v991
    %v993 = vand.u32 %v992, 4294901760
    %994 = vmatprep.mubr.f32.mxu0 %v993
    %v995 = vand.u32 %v343, 4294901760
    %v996 = vsub.f32 %v343, %v995
    %v997 = vand.u32 %v996, 4294901760
    %998 = vmatmul.mubr.f32.gmra.mrb[0].mxu0 %v997
    %v999 = vpop.f32.mrb[0].mxu0
    %v1000 = vadd.f32 %v889, %v999
    %v1001 = vpop.f32.mrb[0].mxu0
    %v1002 = vadd.f32 %v891, %v1001
    %1003 = vdwg.mxu0
    %v1004 = vand.u32 %v34, 4294901760
    %v1005 = vsub.f32 %v34, %v1004
    %v1006 = vand.u32 %v1005, 4294901760
    %1007 = vmatprep.subr.mxu0 %v1006
    %v1008 = vand.u32 %v33, 4294901760
    %v1009 = vsub.f32 %v33, %v1008
    %v1010 = vand.u32 %v1009, 4294901760
    %1011 = vmatpush1.msra.mxu0 %v1010
    %v1012 = vand.u32 %v48, 4294901760
    %v1013 = vsub.f32 %v48, %v1012
    %v1014 = vand.u32 %v1013, 4294901760
    %1015 = vmatprep.subr.mxu0 %v1014
    %v1016 = vand.u32 %v47, 4294901760
    %v1017 = vsub.f32 %v47, %v1016
    %v1018 = vand.u32 %v1017, 4294901760
    %1019 = vmatpush1.msra.mxu0 %v1018
    %v1020 = vand.u32 %v62, 4294901760
    %v1021 = vsub.f32 %v62, %v1020
    %v1022 = vand.u32 %v1021, 4294901760
    %1023 = vmatprep.subr.mxu0 %v1022
    %v1024 = vand.u32 %v61, 4294901760
    %v1025 = vsub.f32 %v61, %v1024
    %v1026 = vand.u32 %v1025, 4294901760
    %1027 = vmatpush1.msra.mxu0 %v1026
    %v1028 = vand.u32 %v76, 4294901760
    %v1029 = vsub.f32 %v76, %v1028
    %v1030 = vand.u32 %v1029, 4294901760
    %1031 = vmatprep.subr.mxu0 %v1030
    %v1032 = vand.u32 %v75, 4294901760
    %v1033 = vsub.f32 %v75, %v1032
    %v1034 = vand.u32 %v1033, 4294901760
    %1035 = vmatpush1.msra.mxu0 %v1034
    %v1036 = vand.u32 %v90, 4294901760
    %v1037 = vsub.f32 %v90, %v1036
    %v1038 = vand.u32 %v1037, 4294901760
    %1039 = vmatprep.subr.mxu0 %v1038
    %v1040 = vand.u32 %v89, 4294901760
    %v1041 = vsub.f32 %v89, %v1040
    %v1042 = vand.u32 %v1041, 4294901760
    %1043 = vmatpush1.msra.mxu0 %v1042
    %v1044 = vand.u32 %v104, 4294901760
    %v1045 = vsub.f32 %v104, %v1044
    %v1046 = vand.u32 %v1045, 4294901760
    %1047 = vmatprep.subr.mxu0 %v1046
    %v1048 = vand.u32 %v103, 4294901760
    %v1049 = vsub.f32 %v103, %v1048
    %v1050 = vand.u32 %v1049, 4294901760
    %1051 = vmatpush1.msra.mxu0 %v1050
    %v1052 = vand.u32 %v118, 4294901760
    %v1053 = vsub.f32 %v118, %v1052
    %v1054 = vand.u32 %v1053, 4294901760
    %1055 = vmatprep.subr.mxu0 %v1054
    %v1056 = vand.u32 %v117, 4294901760
    %v1057 = vsub.f32 %v117, %v1056
    %v1058 = vand.u32 %v1057, 4294901760
    %1059 = vmatpush1.msra.mxu0 %v1058
    %v1060 = vand.u32 %v132, 4294901760
    %v1061 = vsub.f32 %v132, %v1060
    %v1062 = vand.u32 %v1061, 4294901760
    %1063 = vmatprep.subr.mxu0 %v1062
    %v1064 = vand.u32 %v131, 4294901760
    %v1065 = vsub.f32 %v131, %v1064
    %v1066 = vand.u32 %v1065, 4294901760
    %1067 = vmatpush1.msra.mxu0 %v1066
    %v1068 = vand.u32 %v146, 4294901760
    %v1069 = vsub.f32 %v146, %v1068
    %v1070 = vand.u32 %v1069, 4294901760
    %1071 = vmatprep.subr.mxu0 %v1070
    %v1072 = vand.u32 %v145, 4294901760
    %v1073 = vsub.f32 %v145, %v1072
    %v1074 = vand.u32 %v1073, 4294901760
    %1075 = vmatpush1.msra.mxu0 %v1074
    %v1076 = vand.u32 %v160, 4294901760
    %v1077 = vsub.f32 %v160, %v1076
    %v1078 = vand.u32 %v1077, 4294901760
    %1079 = vmatprep.subr.mxu0 %v1078
    %v1080 = vand.u32 %v159, 4294901760
    %v1081 = vsub.f32 %v159, %v1080
    %v1082 = vand.u32 %v1081, 4294901760
    %1083 = vmatpush1.msra.mxu0 %v1082
    %v1084 = vand.u32 %v174, 4294901760
    %v1085 = vsub.f32 %v174, %v1084
    %v1086 = vand.u32 %v1085, 4294901760
    %1087 = vmatprep.subr.mxu0 %v1086
    %v1088 = vand.u32 %v173, 4294901760
    %v1089 = vsub.f32 %v173, %v1088
    %v1090 = vand.u32 %v1089, 4294901760
    %1091 = vmatpush1.msra.mxu0 %v1090
    %v1092 = vand.u32 %v188, 4294901760
    %v1093 = vsub.f32 %v188, %v1092
    %v1094 = vand.u32 %v1093, 4294901760
    %1095 = vmatprep.subr.mxu0 %v1094
    %v1096 = vand.u32 %v187, 4294901760
    %v1097 = vsub.f32 %v187, %v1096
    %v1098 = vand.u32 %v1097, 4294901760
    %1099 = vmatpush1.msra.mxu0 %v1098
    %v1100 = vand.u32 %v202, 4294901760
    %v1101 = vsub.f32 %v202, %v1100
    %v1102 = vand.u32 %v1101, 4294901760
    %1103 = vmatprep.subr.mxu0 %v1102
    %v1104 = vand.u32 %v201, 4294901760
    %v1105 = vsub.f32 %v201, %v1104
    %v1106 = vand.u32 %v1105, 4294901760
    %1107 = vmatpush1.msra.mxu0 %v1106
    %v1108 = vand.u32 %v216, 4294901760
    %v1109 = vsub.f32 %v216, %v1108
    %v1110 = vand.u32 %v1109, 4294901760
    %1111 = vmatprep.subr.mxu0 %v1110
    %v1112 = vand.u32 %v215, 4294901760
    %v1113 = vsub.f32 %v215, %v1112
    %v1114 = vand.u32 %v1113, 4294901760
    %1115 = vmatpush1.msra.mxu0 %v1114
    %v1116 = vand.u32 %v230, 4294901760
    %v1117 = vsub.f32 %v230, %v1116
    %v1118 = vand.u32 %v1117, 4294901760
    %1119 = vmatprep.subr.mxu0 %v1118
    %v1120 = vand.u32 %v229, 4294901760
    %v1121 = vsub.f32 %v229, %v1120
    %v1122 = vand.u32 %v1121, 4294901760
    %1123 = vmatpush1.msra.mxu0 %v1122
    %v1124 = vand.u32 %v244, 4294901760
    %v1125 = vsub.f32 %v244, %v1124
    %v1126 = vand.u32 %v1125, 4294901760
    %1127 = vmatprep.subr.mxu0 %v1126
    %v1128 = vand.u32 %v243, 4294901760
    %v1129 = vsub.f32 %v243, %v1128
    %v1130 = vand.u32 %v1129, 4294901760
    %1131 = vmatpush1.msra.mxu0 %v1130
    %v1132 = vand.u32 %v354, 4294901760
    %v1133 = vsub.f32 %v354, %v1132
    %v1134 = vand.u32 %v1133, 4294901760
    %1135 = vmatprep.subr.mxu0 %v1134
    %v1136 = vand.u32 %v351, 4294901760
    %v1137 = vsub.f32 %v351, %v1136
    %v1138 = vand.u32 %v1137, 4294901760
    %1139 = vmatpush1.msra.mxu0 %v1138
    %1140 = vmatprep.subr.mxu0 0.0
    %1141 = vmatpush1.msra.mxu0 0.0
    %1142 = vmatprep.subr.mxu0 0.0
    %1143 = vmatpush1.msra.mxu0 0.0
    %1144 = vmatprep.subr.mxu0 0.0
    %1145 = vmatpush1.msra.mxu0 0.0
    %1146 = vmatprep.subr.mxu0 0.0
    %1147 = vmatpush1.msra.mxu0 0.0
    %1148 = vmatprep.subr.mxu0 0.0
    %1149 = vmatpush1.msra.mxu0 0.0
    %1150 = vmatprep.subr.mxu0 0.0
    %1151 = vmatpush1.msra.mxu0 0.0
    %1152 = vmatprep.subr.mxu0 0.0
    %1153 = vmatpush1.msra.mxu0 0.0
    %1154 = vmatprep.subr.mxu0 0.0
    %1155 = vmatpush1.msra.mxu0 0.0
    %1156 = vmatprep.subr.mxu0 0.0
    %1157 = vmatpush1.msra.mxu0 0.0
    %1158 = vmatprep.subr.mxu0 0.0
    %1159 = vmatpush1.msra.mxu0 0.0
    %1160 = vmatprep.subr.mxu0 0.0
    %1161 = vmatpush1.msra.mxu0 0.0
    %1162 = vmatprep.subr.mxu0 0.0
    %1163 = vmatpush1.msra.mxu0 0.0
    %1164 = vmatprep.subr.mxu0 0.0
    %1165 = vmatpush1.msra.mxu0 0.0
    %1166 = vmatprep.subr.mxu0 0.0
    %1167 = vmatpush1.msra.mxu0 0.0
    %1168 = vmatprep.subr.mxu0 0.0
    %1169 = vmatpush1.msra.mxu0 0.0
    %v1170 = vand.u32 %v347, 4294901760
    %1171 = vmatprep.mubr.f32.mxu0 %v1170
    %v1172 = vand.u32 %v343, 4294901760
    %1173 = vmatmul.mubr.f32.gmra.mrb[0].mxu0 %v1172
    %v1174 = vpop.f32.mrb[0].mxu0
    %v1175 = vadd.f32 %v1000, %v1174
    %v1176 = vpop.f32.mrb[0].mxu0
    %v1177 = vadd.f32 %v1002, %v1176
    %1178 = vdwg.mxu0
    %v1179 = vand.u32 %v34, 4294901760
    %1180 = vmatprep.subr.mxu0 %v1179
    %v1181 = vand.u32 %v33, 4294901760
    %1182 = vmatpush1.msra.mxu0 %v1181
    %v1183 = vand.u32 %v48, 4294901760
    %1184 = vmatprep.subr.mxu0 %v1183
    %v1185 = vand.u32 %v47, 4294901760
    %1186 = vmatpush1.msra.mxu0 %v1185
    %v1187 = vand.u32 %v62, 4294901760
    %1188 = vmatprep.subr.mxu0 %v1187
    %v1189 = vand.u32 %v61, 4294901760
    %1190 = vmatpush1.msra.mxu0 %v1189
    %v1191 = vand.u32 %v76, 4294901760
    %1192 = vmatprep.subr.mxu0 %v1191
    %v1193 = vand.u32 %v75, 4294901760
    %1194 = vmatpush1.msra.mxu0 %v1193
    %v1195 = vand.u32 %v90, 4294901760
    %1196 = vmatprep.subr.mxu0 %v1195
    %v1197 = vand.u32 %v89, 4294901760
    %1198 = vmatpush1.msra.mxu0 %v1197
    %v1199 = vand.u32 %v104, 4294901760
    %1200 = vmatprep.subr.mxu0 %v1199
    %v1201 = vand.u32 %v103, 4294901760
    %1202 = vmatpush1.msra.mxu0 %v1201
    %v1203 = vand.u32 %v118, 4294901760
    %1204 = vmatprep.subr.mxu0 %v1203
    %v1205 = vand.u32 %v117, 4294901760
    %1206 = vmatpush1.msra.mxu0 %v1205
    %v1207 = vand.u32 %v132, 4294901760
    %1208 = vmatprep.subr.mxu0 %v1207
    %v1209 = vand.u32 %v131, 4294901760
    %1210 = vmatpush1.msra.mxu0 %v1209
    %v1211 = vand.u32 %v146, 4294901760
    %1212 = vmatprep.subr.mxu0 %v1211
    %v1213 = vand.u32 %v145, 4294901760
    %1214 = vmatpush1.msra.mxu0 %v1213
    %v1215 = vand.u32 %v160, 4294901760
    %1216 = vmatprep.subr.mxu0 %v1215
    %v1217 = vand.u32 %v159, 4294901760
    %1218 = vmatpush1.msra.mxu0 %v1217
    %v1219 = vand.u32 %v174, 4294901760
    %1220 = vmatprep.subr.mxu0 %v1219
    %v1221 = vand.u32 %v173, 4294901760
    %1222 = vmatpush1.msra.mxu0 %v1221
    %v1223 = vand.u32 %v188, 4294901760
    %1224 = vmatprep.subr.mxu0 %v1223
    %v1225 = vand.u32 %v187, 4294901760
    %1226 = vmatpush1.msra.mxu0 %v1225
    %v1227 = vand.u32 %v202, 4294901760
    %1228 = vmatprep.subr.mxu0 %v1227
    %v1229 = vand.u32 %v201, 4294901760
    %1230 = vmatpush1.msra.mxu0 %v1229
    %v1231 = vand.u32 %v216, 4294901760
    %1232 = vmatprep.subr.mxu0 %v1231
    %v1233 = vand.u32 %v215, 4294901760
    %1234 = vmatpush1.msra.mxu0 %v1233
    %v1235 = vand.u32 %v230, 4294901760
    %1236 = vmatprep.subr.mxu0 %v1235
    %v1237 = vand.u32 %v229, 4294901760
    %1238 = vmatpush1.msra.mxu0 %v1237
    %v1239 = vand.u32 %v244, 4294901760
    %1240 = vmatprep.subr.mxu0 %v1239
    %v1241 = vand.u32 %v243, 4294901760
    %1242 = vmatpush1.msra.mxu0 %v1241
    %v1243 = vand.u32 %v354, 4294901760
    %1244 = vmatprep.subr.mxu0 %v1243
    %v1245 = vand.u32 %v351, 4294901760
    %1246 = vmatpush1.msra.mxu0 %v1245
    %1247 = vmatprep.subr.mxu0 0.0
    %1248 = vmatpush1.msra.mxu0 0.0
    %1249 = vmatprep.subr.mxu0 0.0
    %1250 = vmatpush1.msra.mxu0 0.0
    %1251 = vmatprep.subr.mxu0 0.0
    %1252 = vmatpush1.msra.mxu0 0.0
    %1253 = vmatprep.subr.mxu0 0.0
    %1254 = vmatpush1.msra.mxu0 0.0
    %1255 = vmatprep.subr.mxu0 0.0
    %1256 = vmatpush1.msra.mxu0 0.0
    %1257 = vmatprep.subr.mxu0 0.0
    %1258 = vmatpush1.msra.mxu0 0.0
    %1259 = vmatprep.subr.mxu0 0.0
    %1260 = vmatpush1.msra.mxu0 0.0
    %1261 = vmatprep.subr.mxu0 0.0
    %1262 = vmatpush1.msra.mxu0 0.0
    %1263 = vmatprep.subr.mxu0 0.0
    %1264 = vmatpush1.msra.mxu0 0.0
    %1265 = vmatprep.subr.mxu0 0.0
    %1266 = vmatpush1.msra.mxu0 0.0
    %1267 = vmatprep.subr.mxu0 0.0
    %1268 = vmatpush1.msra.mxu0 0.0
    %1269 = vmatprep.subr.mxu0 0.0
    %1270 = vmatpush1.msra.mxu0 0.0
    %1271 = vmatprep.subr.mxu0 0.0
    %1272 = vmatpush1.msra.mxu0 0.0
    %1273 = vmatprep.subr.mxu0 0.0
    %1274 = vmatpush1.msra.mxu0 0.0
    %1275 = vmatprep.subr.mxu0 0.0
    %1276 = vmatpush1.msra.mxu0 0.0
    %v1277 = vand.u32 %v347, 4294901760
    %1278 = vmatprep.mubr.f32.mxu0 %v1277
    %v1279 = vand.u32 %v343, 4294901760
    %1280 = vmatmul.mubr.f32.gmra.mrb[0].mxu0 %v1279
    %v1281 = vpop.f32.mrb[0].mxu0
    %v1282 = vadd.f32 %v1175, %v1281
    %v1283 = vpop.f32.mrb[0].mxu0
    %v1284 = vadd.f32 %v1177, %v1283
    %1285 = vdwg.mxu0
    %v1286 = vand.u32 %v36, 4294901760
    %1287 = vmatprep.subr.mxu0 %v1286
    %v1288 = vand.u32 %v35, 4294901760
    %1289 = vmatpush1.msra.mxu0 %v1288
    %v1290 = vand.u32 %v50, 4294901760
    %1291 = vmatprep.subr.mxu0 %v1290
    %v1292 = vand.u32 %v49, 4294901760
    %1293 = vmatpush1.msra.mxu0 %v1292
    %v1294 = vand.u32 %v64, 4294901760
    %1295 = vmatprep.subr.mxu0 %v1294
    %v1296 = vand.u32 %v63, 4294901760
    %1297 = vmatpush1.msra.mxu0 %v1296
    %v1298 = vand.u32 %v78, 4294901760
    %1299 = vmatprep.subr.mxu0 %v1298
    %v1300 = vand.u32 %v77, 4294901760
    %1301 = vmatpush1.msra.mxu0 %v1300
    %v1302 = vand.u32 %v92, 4294901760
    %1303 = vmatprep.subr.mxu0 %v1302
    %v1304 = vand.u32 %v91, 4294901760
    %1305 = vmatpush1.msra.mxu0 %v1304
    %v1306 = vand.u32 %v106, 4294901760
    %1307 = vmatprep.subr.mxu0 %v1306
    %v1308 = vand.u32 %v105, 4294901760
    %1309 = vmatpush1.msra.mxu0 %v1308
    %v1310 = vand.u32 %v120, 4294901760
    %1311 = vmatprep.subr.mxu0 %v1310
    %v1312 = vand.u32 %v119, 4294901760
    %1313 = vmatpush1.msra.mxu0 %v1312
    %v1314 = vand.u32 %v134, 4294901760
    %1315 = vmatprep.subr.mxu0 %v1314
    %v1316 = vand.u32 %v133, 4294901760
    %1317 = vmatpush1.msra.mxu0 %v1316
    %v1318 = vand.u32 %v148, 4294901760
    %1319 = vmatprep.subr.mxu0 %v1318
    %v1320 = vand.u32 %v147, 4294901760
    %1321 = vmatpush1.msra.mxu0 %v1320
    %v1322 = vand.u32 %v162, 4294901760
    %1323 = vmatprep.subr.mxu0 %v1322
    %v1324 = vand.u32 %v161, 4294901760
    %1325 = vmatpush1.msra.mxu0 %v1324
    %v1326 = vand.u32 %v176, 4294901760
    %1327 = vmatprep.subr.mxu0 %v1326
    %v1328 = vand.u32 %v175, 4294901760
    %1329 = vmatpush1.msra.mxu0 %v1328
    %v1330 = vand.u32 %v190, 4294901760
    %1331 = vmatprep.subr.mxu0 %v1330
    %v1332 = vand.u32 %v189, 4294901760
    %1333 = vmatpush1.msra.mxu0 %v1332
    %v1334 = vand.u32 %v204, 4294901760
    %1335 = vmatprep.subr.mxu0 %v1334
    %v1336 = vand.u32 %v203, 4294901760
    %1337 = vmatpush1.msra.mxu0 %v1336
    %v1338 = vand.u32 %v218, 4294901760
    %1339 = vmatprep.subr.mxu0 %v1338
    %v1340 = vand.u32 %v217, 4294901760
    %1341 = vmatpush1.msra.mxu0 %v1340
    %v1342 = vand.u32 %v232, 4294901760
    %1343 = vmatprep.subr.mxu0 %v1342
    %v1344 = vand.u32 %v231, 4294901760
    %1345 = vmatpush1.msra.mxu0 %v1344
    %v1346 = vand.u32 %v246, 4294901760
    %1347 = vmatprep.subr.mxu0 %v1346
    %v1348 = vand.u32 %v245, 4294901760
    %1349 = vmatpush1.msra.mxu0 %v1348
    %v1350 = vand.u32 %v360, 4294901760
    %1351 = vmatprep.subr.mxu0 %v1350
    %v1352 = vand.u32 %v357, 4294901760
    %1353 = vmatpush1.msra.mxu0 %v1352
    %1354 = vmatprep.subr.mxu0 0.0
    %1355 = vmatpush1.msra.mxu0 0.0
    %1356 = vmatprep.subr.mxu0 0.0
    %1357 = vmatpush1.msra.mxu0 0.0
    %1358 = vmatprep.subr.mxu0 0.0
    %1359 = vmatpush1.msra.mxu0 0.0
    %1360 = vmatprep.subr.mxu0 0.0
    %1361 = vmatpush1.msra.mxu0 0.0
    %1362 = vmatprep.subr.mxu0 0.0
    %1363 = vmatpush1.msra.mxu0 0.0
    %1364 = vmatprep.subr.mxu0 0.0
    %1365 = vmatpush1.msra.mxu0 0.0
    %1366 = vmatprep.subr.mxu0 0.0
    %1367 = vmatpush1.msra.mxu0 0.0
    %1368 = vmatprep.subr.mxu0 0.0
    %1369 = vmatpush1.msra.mxu0 0.0
    %1370 = vmatprep.subr.mxu0 0.0
    %1371 = vmatpush1.msra.mxu0 0.0
    %1372 = vmatprep.subr.mxu0 0.0
    %1373 = vmatpush1.msra.mxu0 0.0
    %1374 = vmatprep.subr.mxu0 0.0
    %1375 = vmatpush1.msra.mxu0 0.0
    %1376 = vmatprep.subr.mxu0 0.0
    %1377 = vmatpush1.msra.mxu0 0.0
    %1378 = vmatprep.subr.mxu0 0.0
    %1379 = vmatpush1.msra.mxu0 0.0
    %1380 = vmatprep.subr.mxu0 0.0
    %1381 = vmatpush1.msra.mxu0 0.0
    %1382 = vmatprep.subr.mxu0 0.0
    %1383 = vmatpush1.msra.mxu0 0.0
    %v1384 = vand.u32 %v347, 4294901760
    %v1385 = vsub.f32 %v347, %v1384
    %v1386 = vand.u32 %v1385, 4294901760
    %v1387 = vsub.f32 %v1385, %v1386
    %v1388 = vand.u32 %v1387, 4294901760
    %1389 = vmatprep.mubr.f32.mxu0 %v1388
    %v1390 = vand.u32 %v343, 4294901760
    %v1391 = vsub.f32 %v343, %v1390
    %v1392 = vand.u32 %v1391, 4294901760
    %v1393 = vsub.f32 %v1391, %v1392
    %v1394 = vand.u32 %v1393, 4294901760
    %1395 = vmatmul.mubr.f32.gmra.mrb[0].mxu0 %v1394
    %v1396 = vpop.f32.mrb[0].mxu0
    %v1397 = vadd.f32 0.0, %v1396
    %v1398 = vpop.f32.mrb[0].mxu0
    %v1399 = vadd.f32 0.0, %v1398
    %1400 = vdwg.mxu0
    %v1401 = vand.u32 %v36, 4294901760
    %v1402 = vsub.f32 %v36, %v1401
    %v1403 = vand.u32 %v1402, 4294901760
    %v1404 = vsub.f32 %v1402, %v1403
    %v1405 = vand.u32 %v1404, 4294901760
    %1406 = vmatprep.subr.mxu0 %v1405
    %v1407 = vand.u32 %v35, 4294901760
    %v1408 = vsub.f32 %v35, %v1407
    %v1409 = vand.u32 %v1408, 4294901760
    %v1410 = vsub.f32 %v1408, %v1409
    %v1411 = vand.u32 %v1410, 4294901760
    %1412 = vmatpush1.msra.mxu0 %v1411
    %v1413 = vand.u32 %v50, 4294901760
    %v1414 = vsub.f32 %v50, %v1413
    %v1415 = vand.u32 %v1414, 4294901760
    %v1416 = vsub.f32 %v1414, %v1415
    %v1417 = vand.u32 %v1416, 4294901760
    %1418 = vmatprep.subr.mxu0 %v1417
    %v1419 = vand.u32 %v49, 4294901760
    %v1420 = vsub.f32 %v49, %v1419
    %v1421 = vand.u32 %v1420, 4294901760
    %v1422 = vsub.f32 %v1420, %v1421
    %v1423 = vand.u32 %v1422, 4294901760
    %1424 = vmatpush1.msra.mxu0 %v1423
    %v1425 = vand.u32 %v64, 4294901760
    %v1426 = vsub.f32 %v64, %v1425
    %v1427 = vand.u32 %v1426, 4294901760
    %v1428 = vsub.f32 %v1426, %v1427
    %v1429 = vand.u32 %v1428, 4294901760
    %1430 = vmatprep.subr.mxu0 %v1429
    %v1431 = vand.u32 %v63, 4294901760
    %v1432 = vsub.f32 %v63, %v1431
    %v1433 = vand.u32 %v1432, 4294901760
    %v1434 = vsub.f32 %v1432, %v1433
    %v1435 = vand.u32 %v1434, 4294901760
    %1436 = vmatpush1.msra.mxu0 %v1435
    %v1437 = vand.u32 %v78, 4294901760
    %v1438 = vsub.f32 %v78, %v1437
    %v1439 = vand.u32 %v1438, 4294901760
    %v1440 = vsub.f32 %v1438, %v1439
    %v1441 = vand.u32 %v1440, 4294901760
    %1442 = vmatprep.subr.mxu0 %v1441
    %v1443 = vand.u32 %v77, 4294901760
    %v1444 = vsub.f32 %v77, %v1443
    %v1445 = vand.u32 %v1444, 4294901760
    %v1446 = vsub.f32 %v1444, %v1445
    %v1447 = vand.u32 %v1446, 4294901760
    %1448 = vmatpush1.msra.mxu0 %v1447
    %v1449 = vand.u32 %v92, 4294901760
    %v1450 = vsub.f32 %v92, %v1449
    %v1451 = vand.u32 %v1450, 4294901760
    %v1452 = vsub.f32 %v1450, %v1451
    %v1453 = vand.u32 %v1452, 4294901760
    %1454 = vmatprep.subr.mxu0 %v1453
    %v1455 = vand.u32 %v91, 4294901760
    %v1456 = vsub.f32 %v91, %v1455
    %v1457 = vand.u32 %v1456, 4294901760
    %v1458 = vsub.f32 %v1456, %v1457
    %v1459 = vand.u32 %v1458, 4294901760
    %1460 = vmatpush1.msra.mxu0 %v1459
    %v1461 = vand.u32 %v106, 4294901760
    %v1462 = vsub.f32 %v106, %v1461
    %v1463 = vand.u32 %v1462, 4294901760
    %v1464 = vsub.f32 %v1462, %v1463
    %v1465 = vand.u32 %v1464, 4294901760
    %1466 = vmatprep.subr.mxu0 %v1465
    %v1467 = vand.u32 %v105, 4294901760
    %v1468 = vsub.f32 %v105, %v1467
    %v1469 = vand.u32 %v1468, 4294901760
    %v1470 = vsub.f32 %v1468, %v1469
    %v1471 = vand.u32 %v1470, 4294901760
    %1472 = vmatpush1.msra.mxu0 %v1471
    %v1473 = vand.u32 %v120, 4294901760
    %v1474 = vsub.f32 %v120, %v1473
    %v1475 = vand.u32 %v1474, 4294901760
    %v1476 = vsub.f32 %v1474, %v1475
    %v1477 = vand.u32 %v1476, 4294901760
    %1478 = vmatprep.subr.mxu0 %v1477
    %v1479 = vand.u32 %v119, 4294901760
    %v1480 = vsub.f32 %v119, %v1479
    %v1481 = vand.u32 %v1480, 4294901760
    %v1482 = vsub.f32 %v1480, %v1481
    %v1483 = vand.u32 %v1482, 4294901760
    %1484 = vmatpush1.msra.mxu0 %v1483
    %v1485 = vand.u32 %v134, 4294901760
    %v1486 = vsub.f32 %v134, %v1485
    %v1487 = vand.u32 %v1486, 4294901760
    %v1488 = vsub.f32 %v1486, %v1487
    %v1489 = vand.u32 %v1488, 4294901760
    %1490 = vmatprep.subr.mxu0 %v1489
    %v1491 = vand.u32 %v133, 4294901760
    %v1492 = vsub.f32 %v133, %v1491
    %v1493 = vand.u32 %v1492, 4294901760
    %v1494 = vsub.f32 %v1492, %v1493
    %v1495 = vand.u32 %v1494, 4294901760
    %1496 = vmatpush1.msra.mxu0 %v1495
    %v1497 = vand.u32 %v148, 4294901760
    %v1498 = vsub.f32 %v148, %v1497
    %v1499 = vand.u32 %v1498, 4294901760
    %v1500 = vsub.f32 %v1498, %v1499
    %v1501 = vand.u32 %v1500, 4294901760
    %1502 = vmatprep.subr.mxu0 %v1501
    %v1503 = vand.u32 %v147, 4294901760
    %v1504 = vsub.f32 %v147, %v1503
    %v1505 = vand.u32 %v1504, 4294901760
    %v1506 = vsub.f32 %v1504, %v1505
    %v1507 = vand.u32 %v1506, 4294901760
    %1508 = vmatpush1.msra.mxu0 %v1507
    %v1509 = vand.u32 %v162, 4294901760
    %v1510 = vsub.f32 %v162, %v1509
    %v1511 = vand.u32 %v1510, 4294901760
    %v1512 = vsub.f32 %v1510, %v1511
    %v1513 = vand.u32 %v1512, 4294901760
    %1514 = vmatprep.subr.mxu0 %v1513
    %v1515 = vand.u32 %v161, 4294901760
    %v1516 = vsub.f32 %v161, %v1515
    %v1517 = vand.u32 %v1516, 4294901760
    %v1518 = vsub.f32 %v1516, %v1517
    %v1519 = vand.u32 %v1518, 4294901760
    %1520 = vmatpush1.msra.mxu0 %v1519
    %v1521 = vand.u32 %v176, 4294901760
    %v1522 = vsub.f32 %v176, %v1521
    %v1523 = vand.u32 %v1522, 4294901760
    %v1524 = vsub.f32 %v1522, %v1523
    %v1525 = vand.u32 %v1524, 4294901760
    %1526 = vmatprep.subr.mxu0 %v1525
    %v1527 = vand.u32 %v175, 4294901760
    %v1528 = vsub.f32 %v175, %v1527
    %v1529 = vand.u32 %v1528, 4294901760
    %v1530 = vsub.f32 %v1528, %v1529
    %v1531 = vand.u32 %v1530, 4294901760
    %1532 = vmatpush1.msra.mxu0 %v1531
    %v1533 = vand.u32 %v190, 4294901760
    %v1534 = vsub.f32 %v190, %v1533
    %v1535 = vand.u32 %v1534, 4294901760
    %v1536 = vsub.f32 %v1534, %v1535
    %v1537 = vand.u32 %v1536, 4294901760
    %1538 = vmatprep.subr.mxu0 %v1537
    %v1539 = vand.u32 %v189, 4294901760
    %v1540 = vsub.f32 %v189, %v1539
    %v1541 = vand.u32 %v1540, 4294901760
    %v1542 = vsub.f32 %v1540, %v1541
    %v1543 = vand.u32 %v1542, 4294901760
    %1544 = vmatpush1.msra.mxu0 %v1543
    %v1545 = vand.u32 %v204, 4294901760
    %v1546 = vsub.f32 %v204, %v1545
    %v1547 = vand.u32 %v1546, 4294901760
    %v1548 = vsub.f32 %v1546, %v1547
    %v1549 = vand.u32 %v1548, 4294901760
    %1550 = vmatprep.subr.mxu0 %v1549
    %v1551 = vand.u32 %v203, 4294901760
    %v1552 = vsub.f32 %v203, %v1551
    %v1553 = vand.u32 %v1552, 4294901760
    %v1554 = vsub.f32 %v1552, %v1553
    %v1555 = vand.u32 %v1554, 4294901760
    %1556 = vmatpush1.msra.mxu0 %v1555
    %v1557 = vand.u32 %v218, 4294901760
    %v1558 = vsub.f32 %v218, %v1557
    %v1559 = vand.u32 %v1558, 4294901760
    %v1560 = vsub.f32 %v1558, %v1559
    %v1561 = vand.u32 %v1560, 4294901760
    %1562 = vmatprep.subr.mxu0 %v1561
    %v1563 = vand.u32 %v217, 4294901760
    %v1564 = vsub.f32 %v217, %v1563
    %v1565 = vand.u32 %v1564, 4294901760
    %v1566 = vsub.f32 %v1564, %v1565
    %v1567 = vand.u32 %v1566, 4294901760
    %1568 = vmatpush1.msra.mxu0 %v1567
    %v1569 = vand.u32 %v232, 4294901760
    %v1570 = vsub.f32 %v232, %v1569
    %v1571 = vand.u32 %v1570, 4294901760
    %v1572 = vsub.f32 %v1570, %v1571
    %v1573 = vand.u32 %v1572, 4294901760
    %1574 = vmatprep.subr.mxu0 %v1573
    %v1575 = vand.u32 %v231, 4294901760
    %v1576 = vsub.f32 %v231, %v1575
    %v1577 = vand.u32 %v1576, 4294901760
    %v1578 = vsub.f32 %v1576, %v1577
    %v1579 = vand.u32 %v1578, 4294901760
    %1580 = vmatpush1.msra.mxu0 %v1579
    %v1581 = vand.u32 %v246, 4294901760
    %v1582 = vsub.f32 %v246, %v1581
    %v1583 = vand.u32 %v1582, 4294901760
    %v1584 = vsub.f32 %v1582, %v1583
    %v1585 = vand.u32 %v1584, 4294901760
    %1586 = vmatprep.subr.mxu0 %v1585
    %v1587 = vand.u32 %v245, 4294901760
    %v1588 = vsub.f32 %v245, %v1587
    %v1589 = vand.u32 %v1588, 4294901760
    %v1590 = vsub.f32 %v1588, %v1589
    %v1591 = vand.u32 %v1590, 4294901760
    %1592 = vmatpush1.msra.mxu0 %v1591
    %v1593 = vand.u32 %v360, 4294901760
    %v1594 = vsub.f32 %v360, %v1593
    %v1595 = vand.u32 %v1594, 4294901760
    %v1596 = vsub.f32 %v1594, %v1595
    %v1597 = vand.u32 %v1596, 4294901760
    %1598 = vmatprep.subr.mxu0 %v1597
    %v1599 = vand.u32 %v357, 4294901760
    %v1600 = vsub.f32 %v357, %v1599
    %v1601 = vand.u32 %v1600, 4294901760
    %v1602 = vsub.f32 %v1600, %v1601
    %v1603 = vand.u32 %v1602, 4294901760
    %1604 = vmatpush1.msra.mxu0 %v1603
    %1605 = vmatprep.subr.mxu0 0.0
    %1606 = vmatpush1.msra.mxu0 0.0
    %1607 = vmatprep.subr.mxu0 0.0
    %1608 = vmatpush1.msra.mxu0 0.0
    %1609 = vmatprep.subr.mxu0 0.0
    %1610 = vmatpush1.msra.mxu0 0.0
    %1611 = vmatprep.subr.mxu0 0.0
    %1612 = vmatpush1.msra.mxu0 0.0
    %1613 = vmatprep.subr.mxu0 0.0
    %1614 = vmatpush1.msra.mxu0 0.0
    %1615 = vmatprep.subr.mxu0 0.0
    %1616 = vmatpush1.msra.mxu0 0.0
    %1617 = vmatprep.subr.mxu0 0.0
    %1618 = vmatpush1.msra.mxu0 0.0
    %1619 = vmatprep.subr.mxu0 0.0
    %1620 = vmatpush1.msra.mxu0 0.0
    %1621 = vmatprep.subr.mxu0 0.0
    %1622 = vmatpush1.msra.mxu0 0.0
    %1623 = vmatprep.subr.mxu0 0.0
    %1624 = vmatpush1.msra.mxu0 0.0
    %1625 = vmatprep.subr.mxu0 0.0
    %1626 = vmatpush1.msra.mxu0 0.0
    %1627 = vmatprep.subr.mxu0 0.0
    %1628 = vmatpush1.msra.mxu0 0.0
    %1629 = vmatprep.subr.mxu0 0.0
    %1630 = vmatpush1.msra.mxu0 0.0
    %1631 = vmatprep.subr.mxu0 0.0
    %1632 = vmatpush1.msra.mxu0 0.0
    %1633 = vmatprep.subr.mxu0 0.0
    %1634 = vmatpush1.msra.mxu0 0.0
    %v1635 = vand.u32 %v347, 4294901760
    %1636 = vmatprep.mubr.f32.mxu0 %v1635
    %v1637 = vand.u32 %v343, 4294901760
    %1638 = vmatmul.mubr.f32.gmra.mrb[0].mxu0 %v1637
    %v1639 = vpop.f32.mrb[0].mxu0
    %v1640 = vadd.f32 %v1397, %v1639
    %v1641 = vpop.f32.mrb[0].mxu0
    %v1642 = vadd.f32 %v1399, %v1641
    %1643 = vdwg.mxu0
    %v1644 = vand.u32 %v36, 4294901760
    %v1645 = vsub.f32 %v36, %v1644
    %1646 = vmatprep.subr.mxu0 %v1645
    %v1647 = vand.u32 %v35, 4294901760
    %v1648 = vsub.f32 %v35, %v1647
    %1649 = vmatpush1.msra.mxu0 %v1648
    %v1650 = vand.u32 %v50, 4294901760
    %v1651 = vsub.f32 %v50, %v1650
    %1652 = vmatprep.subr.mxu0 %v1651
    %v1653 = vand.u32 %v49, 4294901760
    %v1654 = vsub.f32 %v49, %v1653
    %1655 = vmatpush1.msra.mxu0 %v1654
    %v1656 = vand.u32 %v64, 4294901760
    %v1657 = vsub.f32 %v64, %v1656
    %1658 = vmatprep.subr.mxu0 %v1657
    %v1659 = vand.u32 %v63, 4294901760
    %v1660 = vsub.f32 %v63, %v1659
    %1661 = vmatpush1.msra.mxu0 %v1660
    %v1662 = vand.u32 %v78, 4294901760
    %v1663 = vsub.f32 %v78, %v1662
    %1664 = vmatprep.subr.mxu0 %v1663
    %v1665 = vand.u32 %v77, 4294901760
    %v1666 = vsub.f32 %v77, %v1665
    %1667 = vmatpush1.msra.mxu0 %v1666
    %v1668 = vand.u32 %v92, 4294901760
    %v1669 = vsub.f32 %v92, %v1668
    %1670 = vmatprep.subr.mxu0 %v1669
    %v1671 = vand.u32 %v91, 4294901760
    %v1672 = vsub.f32 %v91, %v1671
    %1673 = vmatpush1.msra.mxu0 %v1672
    %v1674 = vand.u32 %v106, 4294901760
    %v1675 = vsub.f32 %v106, %v1674
    %1676 = vmatprep.subr.mxu0 %v1675
    %v1677 = vand.u32 %v105, 4294901760
    %v1678 = vsub.f32 %v105, %v1677
    %1679 = vmatpush1.msra.mxu0 %v1678
    %v1680 = vand.u32 %v120, 4294901760
    %v1681 = vsub.f32 %v120, %v1680
    %1682 = vmatprep.subr.mxu0 %v1681
    %v1683 = vand.u32 %v119, 4294901760
    %v1684 = vsub.f32 %v119, %v1683
    %1685 = vmatpush1.msra.mxu0 %v1684
    %v1686 = vand.u32 %v134, 4294901760
    %v1687 = vsub.f32 %v134, %v1686
    %1688 = vmatprep.subr.mxu0 %v1687
    %v1689 = vand.u32 %v133, 4294901760
    %v1690 = vsub.f32 %v133, %v1689
    %1691 = vmatpush1.msra.mxu0 %v1690
    %v1692 = vand.u32 %v148, 4294901760
    %v1693 = vsub.f32 %v148, %v1692
    %1694 = vmatprep.subr.mxu0 %v1693
    %v1695 = vand.u32 %v147, 4294901760
    %v1696 = vsub.f32 %v147, %v1695
    %1697 = vmatpush1.msra.mxu0 %v1696
    %v1698 = vand.u32 %v162, 4294901760
    %v1699 = vsub.f32 %v162, %v1698
    %1700 = vmatprep.subr.mxu0 %v1699
    %v1701 = vand.u32 %v161, 4294901760
    %v1702 = vsub.f32 %v161, %v1701
    %1703 = vmatpush1.msra.mxu0 %v1702
    %v1704 = vand.u32 %v176, 4294901760
    %v1705 = vsub.f32 %v176, %v1704
    %1706 = vmatprep.subr.mxu0 %v1705
    %v1707 = vand.u32 %v175, 4294901760
    %v1708 = vsub.f32 %v175, %v1707
    %1709 = vmatpush1.msra.mxu0 %v1708
    %v1710 = vand.u32 %v190, 4294901760
    %v1711 = vsub.f32 %v190, %v1710
    %1712 = vmatprep.subr.mxu0 %v1711
    %v1713 = vand.u32 %v189, 4294901760
    %v1714 = vsub.f32 %v189, %v1713
    %1715 = vmatpush1.msra.mxu0 %v1714
    %v1716 = vand.u32 %v204, 4294901760
    %v1717 = vsub.f32 %v204, %v1716
    %1718 = vmatprep.subr.mxu0 %v1717
    %v1719 = vand.u32 %v203, 4294901760
    %v1720 = vsub.f32 %v203, %v1719
    %1721 = vmatpush1.msra.mxu0 %v1720
    %v1722 = vand.u32 %v218, 4294901760
    %v1723 = vsub.f32 %v218, %v1722
    %1724 = vmatprep.subr.mxu0 %v1723
    %v1725 = vand.u32 %v217, 4294901760
    %v1726 = vsub.f32 %v217, %v1725
    %1727 = vmatpush1.msra.mxu0 %v1726
    %v1728 = vand.u32 %v232, 4294901760
    %v1729 = vsub.f32 %v232, %v1728
    %1730 = vmatprep.subr.mxu0 %v1729
    %v1731 = vand.u32 %v231, 4294901760
    %v1732 = vsub.f32 %v231, %v1731
    %1733 = vmatpush1.msra.mxu0 %v1732
    %v1734 = vand.u32 %v246, 4294901760
    %v1735 = vsub.f32 %v246, %v1734
    %1736 = vmatprep.subr.mxu0 %v1735
    %v1737 = vand.u32 %v245, 4294901760
    %v1738 = vsub.f32 %v245, %v1737
    %1739 = vmatpush1.msra.mxu0 %v1738
    %v1740 = vand.u32 %v360, 4294901760
    %v1741 = vsub.f32 %v360, %v1740
    %1742 = vmatprep.subr.mxu0 %v1741
    %v1743 = vand.u32 %v357, 4294901760
    %v1744 = vsub.f32 %v357, %v1743
    %1745 = vmatpush1.msra.mxu0 %v1744
    %1746 = vmatprep.subr.mxu0 0.0
    %1747 = vmatpush1.msra.mxu0 0.0
    %1748 = vmatprep.subr.mxu0 0.0
    %1749 = vmatpush1.msra.mxu0 0.0
    %1750 = vmatprep.subr.mxu0 0.0
    %1751 = vmatpush1.msra.mxu0 0.0
    %1752 = vmatprep.subr.mxu0 0.0
    %1753 = vmatpush1.msra.mxu0 0.0
    %1754 = vmatprep.subr.mxu0 0.0
    %1755 = vmatpush1.msra.mxu0 0.0
    %1756 = vmatprep.subr.mxu0 0.0
    %1757 = vmatpush1.msra.mxu0 0.0
    %1758 = vmatprep.subr.mxu0 0.0
    %1759 = vmatpush1.msra.mxu0 0.0
    %1760 = vmatprep.subr.mxu0 0.0
    %1761 = vmatpush1.msra.mxu0 0.0
    %1762 = vmatprep.subr.mxu0 0.0
    %1763 = vmatpush1.msra.mxu0 0.0
    %1764 = vmatprep.subr.mxu0 0.0
    %1765 = vmatpush1.msra.mxu0 0.0
    %1766 = vmatprep.subr.mxu0 0.0
    %1767 = vmatpush1.msra.mxu0 0.0
    %1768 = vmatprep.subr.mxu0 0.0
    %1769 = vmatpush1.msra.mxu0 0.0
    %1770 = vmatprep.subr.mxu0 0.0
    %1771 = vmatpush1.msra.mxu0 0.0
    %1772 = vmatprep.subr.mxu0 0.0
    %1773 = vmatpush1.msra.mxu0 0.0
    %1774 = vmatprep.subr.mxu0 0.0
    %1775 = vmatpush1.msra.mxu0 0.0
    %v1776 = vand.u32 %v347, 4294901760
    %v1777 = vsub.f32 %v347, %v1776
    %1778 = vmatprep.mubr.f32.mxu0 %v1777
    %v1779 = vand.u32 %v343, 4294901760
    %v1780 = vsub.f32 %v343, %v1779
    %1781 = vmatmul.mubr.f32.gmra.mrb[0].mxu0 %v1780
    %v1782 = vpop.f32.mrb[0].mxu0
    %v1783 = vadd.f32 %v1640, %v1782
    %v1784 = vpop.f32.mrb[0].mxu0
    %v1785 = vadd.f32 %v1642, %v1784
    %1786 = vdwg.mxu0
    %v1787 = vand.u32 %v36, 4294901760
    %1788 = vmatprep.subr.mxu0 %v1787
    %v1789 = vand.u32 %v35, 4294901760
    %1790 = vmatpush1.msra.mxu0 %v1789
    %v1791 = vand.u32 %v50, 4294901760
    %1792 = vmatprep.subr.mxu0 %v1791
    %v1793 = vand.u32 %v49, 4294901760
    %1794 = vmatpush1.msra.mxu0 %v1793
    %v1795 = vand.u32 %v64, 4294901760
    %1796 = vmatprep.subr.mxu0 %v1795
    %v1797 = vand.u32 %v63, 4294901760
    %1798 = vmatpush1.msra.mxu0 %v1797
    %v1799 = vand.u32 %v78, 4294901760
    %1800 = vmatprep.subr.mxu0 %v1799
    %v1801 = vand.u32 %v77, 4294901760
    %1802 = vmatpush1.msra.mxu0 %v1801
    %v1803 = vand.u32 %v92, 4294901760
    %1804 = vmatprep.subr.mxu0 %v1803
    %v1805 = vand.u32 %v91, 4294901760
    %1806 = vmatpush1.msra.mxu0 %v1805
    %v1807 = vand.u32 %v106, 4294901760
    %1808 = vmatprep.subr.mxu0 %v1807
    %v1809 = vand.u32 %v105, 4294901760
    %1810 = vmatpush1.msra.mxu0 %v1809
    %v1811 = vand.u32 %v120, 4294901760
    %1812 = vmatprep.subr.mxu0 %v1811
    %v1813 = vand.u32 %v119, 4294901760
    %1814 = vmatpush1.msra.mxu0 %v1813
    %v1815 = vand.u32 %v134, 4294901760
    %1816 = vmatprep.subr.mxu0 %v1815
    %v1817 = vand.u32 %v133, 4294901760
    %1818 = vmatpush1.msra.mxu0 %v1817
    %v1819 = vand.u32 %v148, 4294901760
    %1820 = vmatprep.subr.mxu0 %v1819
    %v1821 = vand.u32 %v147, 4294901760
    %1822 = vmatpush1.msra.mxu0 %v1821
    %v1823 = vand.u32 %v162, 4294901760
    %1824 = vmatprep.subr.mxu0 %v1823
    %v1825 = vand.u32 %v161, 4294901760
    %1826 = vmatpush1.msra.mxu0 %v1825
    %v1827 = vand.u32 %v176, 4294901760
    %1828 = vmatprep.subr.mxu0 %v1827
    %v1829 = vand.u32 %v175, 4294901760
    %1830 = vmatpush1.msra.mxu0 %v1829
    %v1831 = vand.u32 %v190, 4294901760
    %1832 = vmatprep.subr.mxu0 %v1831
    %v1833 = vand.u32 %v189, 4294901760
    %1834 = vmatpush1.msra.mxu0 %v1833
    %v1835 = vand.u32 %v204, 4294901760
    %1836 = vmatprep.subr.mxu0 %v1835
    %v1837 = vand.u32 %v203, 4294901760
    %1838 = vmatpush1.msra.mxu0 %v1837
    %v1839 = vand.u32 %v218, 4294901760
    %1840 = vmatprep.subr.mxu0 %v1839
    %v1841 = vand.u32 %v217, 4294901760
    %1842 = vmatpush1.msra.mxu0 %v1841
    %v1843 = vand.u32 %v232, 4294901760
    %1844 = vmatprep.subr.mxu0 %v1843
    %v1845 = vand.u32 %v231, 4294901760
    %1846 = vmatpush1.msra.mxu0 %v1845
    %v1847 = vand.u32 %v246, 4294901760
    %1848 = vmatprep.subr.mxu0 %v1847
    %v1849 = vand.u32 %v245, 4294901760
    %1850 = vmatpush1.msra.mxu0 %v1849
    %v1851 = vand.u32 %v360, 4294901760
    %1852 = vmatprep.subr.mxu0 %v1851
    %v1853 = vand.u32 %v357, 4294901760
    %1854 = vmatpush1.msra.mxu0 %v1853
    %1855 = vmatprep.subr.mxu0 0.0
    %1856 = vmatpush1.msra.mxu0 0.0
    %1857 = vmatprep.subr.mxu0 0.0
    %1858 = vmatpush1.msra.mxu0 0.0
    %1859 = vmatprep.subr.mxu0 0.0
    %1860 = vmatpush1.msra.mxu0 0.0
    %1861 = vmatprep.subr.mxu0 0.0
    %1862 = vmatpush1.msra.mxu0 0.0
    %1863 = vmatprep.subr.mxu0 0.0
    %1864 = vmatpush1.msra.mxu0 0.0
    %1865 = vmatprep.subr.mxu0 0.0
    %1866 = vmatpush1.msra.mxu0 0.0
    %1867 = vmatprep.subr.mxu0 0.0
    %1868 = vmatpush1.msra.mxu0 0.0
    %1869 = vmatprep.subr.mxu0 0.0
    %1870 = vmatpush1.msra.mxu0 0.0
    %1871 = vmatprep.subr.mxu0 0.0
    %1872 = vmatpush1.msra.mxu0 0.0
    %1873 = vmatprep.subr.mxu0 0.0
    %1874 = vmatpush1.msra.mxu0 0.0
    %1875 = vmatprep.subr.mxu0 0.0
    %1876 = vmatpush1.msra.mxu0 0.0
    %1877 = vmatprep.subr.mxu0 0.0
    %1878 = vmatpush1.msra.mxu0 0.0
    %1879 = vmatprep.subr.mxu0 0.0
    %1880 = vmatpush1.msra.mxu0 0.0
    %1881 = vmatprep.subr.mxu0 0.0
    %1882 = vmatpush1.msra.mxu0 0.0
    %1883 = vmatprep.subr.mxu0 0.0
    %1884 = vmatpush1.msra.mxu0 0.0
    %v1885 = vand.u32 %v347, 4294901760
    %v1886 = vsub.f32 %v347, %v1885
    %v1887 = vand.u32 %v1886, 4294901760
    %1888 = vmatprep.mubr.f32.mxu0 %v1887
    %v1889 = vand.u32 %v343, 4294901760
    %v1890 = vsub.f32 %v343, %v1889
    %v1891 = vand.u32 %v1890, 4294901760
    %1892 = vmatmul.mubr.f32.gmra.mrb[0].mxu0 %v1891
    %v1893 = vpop.f32.mrb[0].mxu0
    %v1894 = vadd.f32 %v1783, %v1893
    %v1895 = vpop.f32.mrb[0].mxu0
    %v1896 = vadd.f32 %v1785, %v1895
    %1897 = vdwg.mxu0
    %v1898 = vand.u32 %v36, 4294901760
    %v1899 = vsub.f32 %v36, %v1898
    %v1900 = vand.u32 %v1899, 4294901760
    %1901 = vmatprep.subr.mxu0 %v1900
    %v1902 = vand.u32 %v35, 4294901760
    %v1903 = vsub.f32 %v35, %v1902
    %v1904 = vand.u32 %v1903, 4294901760
    %1905 = vmatpush1.msra.mxu0 %v1904
    %v1906 = vand.u32 %v50, 4294901760
    %v1907 = vsub.f32 %v50, %v1906
    %v1908 = vand.u32 %v1907, 4294901760
    %1909 = vmatprep.subr.mxu0 %v1908
    %v1910 = vand.u32 %v49, 4294901760
    %v1911 = vsub.f32 %v49, %v1910
    %v1912 = vand.u32 %v1911, 4294901760
    %1913 = vmatpush1.msra.mxu0 %v1912
    %v1914 = vand.u32 %v64, 4294901760
    %v1915 = vsub.f32 %v64, %v1914
    %v1916 = vand.u32 %v1915, 4294901760
    %1917 = vmatprep.subr.mxu0 %v1916
    %v1918 = vand.u32 %v63, 4294901760
    %v1919 = vsub.f32 %v63, %v1918
    %v1920 = vand.u32 %v1919, 4294901760
    %1921 = vmatpush1.msra.mxu0 %v1920
    %v1922 = vand.u32 %v78, 4294901760
    %v1923 = vsub.f32 %v78, %v1922
    %v1924 = vand.u32 %v1923, 4294901760
    %1925 = vmatprep.subr.mxu0 %v1924
    %v1926 = vand.u32 %v77, 4294901760
    %v1927 = vsub.f32 %v77, %v1926
    %v1928 = vand.u32 %v1927, 4294901760
    %1929 = vmatpush1.msra.mxu0 %v1928
    %v1930 = vand.u32 %v92, 4294901760
    %v1931 = vsub.f32 %v92, %v1930
    %v1932 = vand.u32 %v1931, 4294901760
    %1933 = vmatprep.subr.mxu0 %v1932
    %v1934 = vand.u32 %v91, 4294901760
    %v1935 = vsub.f32 %v91, %v1934
    %v1936 = vand.u32 %v1935, 4294901760
    %1937 = vmatpush1.msra.mxu0 %v1936
    %v1938 = vand.u32 %v106, 4294901760
    %v1939 = vsub.f32 %v106, %v1938
    %v1940 = vand.u32 %v1939, 4294901760
    %1941 = vmatprep.subr.mxu0 %v1940
    %v1942 = vand.u32 %v105, 4294901760
    %v1943 = vsub.f32 %v105, %v1942
    %v1944 = vand.u32 %v1943, 4294901760
    %1945 = vmatpush1.msra.mxu0 %v1944
    %v1946 = vand.u32 %v120, 4294901760
    %v1947 = vsub.f32 %v120, %v1946
    %v1948 = vand.u32 %v1947, 4294901760
    %1949 = vmatprep.subr.mxu0 %v1948
    %v1950 = vand.u32 %v119, 4294901760
    %v1951 = vsub.f32 %v119, %v1950
    %v1952 = vand.u32 %v1951, 4294901760
    %1953 = vmatpush1.msra.mxu0 %v1952
    %v1954 = vand.u32 %v134, 4294901760
    %v1955 = vsub.f32 %v134, %v1954
    %v1956 = vand.u32 %v1955, 4294901760
    %1957 = vmatprep.subr.mxu0 %v1956
    %v1958 = vand.u32 %v133, 4294901760
    %v1959 = vsub.f32 %v133, %v1958
    %v1960 = vand.u32 %v1959, 4294901760
    %1961 = vmatpush1.msra.mxu0 %v1960
    %v1962 = vand.u32 %v148, 4294901760
    %v1963 = vsub.f32 %v148, %v1962
    %v1964 = vand.u32 %v1963, 4294901760
    %1965 = vmatprep.subr.mxu0 %v1964
    %v1966 = vand.u32 %v147, 4294901760
    %v1967 = vsub.f32 %v147, %v1966
    %v1968 = vand.u32 %v1967, 4294901760
    %1969 = vmatpush1.msra.mxu0 %v1968
    %v1970 = vand.u32 %v162, 4294901760
    %v1971 = vsub.f32 %v162, %v1970
    %v1972 = vand.u32 %v1971, 4294901760
    %1973 = vmatprep.subr.mxu0 %v1972
    %v1974 = vand.u32 %v161, 4294901760
    %v1975 = vsub.f32 %v161, %v1974
    %v1976 = vand.u32 %v1975, 4294901760
    %1977 = vmatpush1.msra.mxu0 %v1976
    %v1978 = vand.u32 %v176, 4294901760
    %v1979 = vsub.f32 %v176, %v1978
    %v1980 = vand.u32 %v1979, 4294901760
    %1981 = vmatprep.subr.mxu0 %v1980
    %v1982 = vand.u32 %v175, 4294901760
    %v1983 = vsub.f32 %v175, %v1982
    %v1984 = vand.u32 %v1983, 4294901760
    %1985 = vmatpush1.msra.mxu0 %v1984
    %v1986 = vand.u32 %v190, 4294901760
    %v1987 = vsub.f32 %v190, %v1986
    %v1988 = vand.u32 %v1987, 4294901760
    %1989 = vmatprep.subr.mxu0 %v1988
    %v1990 = vand.u32 %v189, 4294901760
    %v1991 = vsub.f32 %v189, %v1990
    %v1992 = vand.u32 %v1991, 4294901760
    %1993 = vmatpush1.msra.mxu0 %v1992
    %v1994 = vand.u32 %v204, 4294901760
    %v1995 = vsub.f32 %v204, %v1994
    %v1996 = vand.u32 %v1995, 4294901760
    %1997 = vmatprep.subr.mxu0 %v1996
    %v1998 = vand.u32 %v203, 4294901760
    %v1999 = vsub.f32 %v203, %v1998
    %v2000 = vand.u32 %v1999, 4294901760
    %2001 = vmatpush1.msra.mxu0 %v2000
    %v2002 = vand.u32 %v218, 4294901760
    %v2003 = vsub.f32 %v218, %v2002
    %v2004 = vand.u32 %v2003, 4294901760
    %2005 = vmatprep.subr.mxu0 %v2004
    %v2006 = vand.u32 %v217, 4294901760
    %v2007 = vsub.f32 %v217, %v2006
    %v2008 = vand.u32 %v2007, 4294901760
    %2009 = vmatpush1.msra.mxu0 %v2008
    %v2010 = vand.u32 %v232, 4294901760
    %v2011 = vsub.f32 %v232, %v2010
    %v2012 = vand.u32 %v2011, 4294901760
    %2013 = vmatprep.subr.mxu0 %v2012
    %v2014 = vand.u32 %v231, 4294901760
    %v2015 = vsub.f32 %v231, %v2014
    %v2016 = vand.u32 %v2015, 4294901760
    %2017 = vmatpush1.msra.mxu0 %v2016
    %v2018 = vand.u32 %v246, 4294901760
    %v2019 = vsub.f32 %v246, %v2018
    %v2020 = vand.u32 %v2019, 4294901760
    %2021 = vmatprep.subr.mxu0 %v2020
    %v2022 = vand.u32 %v245, 4294901760
    %v2023 = vsub.f32 %v245, %v2022
    %v2024 = vand.u32 %v2023, 4294901760
    %2025 = vmatpush1.msra.mxu0 %v2024
    %v2026 = vand.u32 %v360, 4294901760
    %v2027 = vsub.f32 %v360, %v2026
    %v2028 = vand.u32 %v2027, 4294901760
    %2029 = vmatprep.subr.mxu0 %v2028
    %v2030 = vand.u32 %v357, 4294901760
    %v2031 = vsub.f32 %v357, %v2030
    %v2032 = vand.u32 %v2031, 4294901760
    %2033 = vmatpush1.msra.mxu0 %v2032
    %2034 = vmatprep.subr.mxu0 0.0
    %2035 = vmatpush1.msra.mxu0 0.0
    %2036 = vmatprep.subr.mxu0 0.0
    %2037 = vmatpush1.msra.mxu0 0.0
    %2038 = vmatprep.subr.mxu0 0.0
    %2039 = vmatpush1.msra.mxu0 0.0
    %2040 = vmatprep.subr.mxu0 0.0
    %2041 = vmatpush1.msra.mxu0 0.0
    %2042 = vmatprep.subr.mxu0 0.0
    %2043 = vmatpush1.msra.mxu0 0.0
    %2044 = vmatprep.subr.mxu0 0.0
    %2045 = vmatpush1.msra.mxu0 0.0
    %2046 = vmatprep.subr.mxu0 0.0
    %2047 = vmatpush1.msra.mxu0 0.0
    %2048 = vmatprep.subr.mxu0 0.0
    %2049 = vmatpush1.msra.mxu0 0.0
    %2050 = vmatprep.subr.mxu0 0.0
    %2051 = vmatpush1.msra.mxu0 0.0
    %2052 = vmatprep.subr.mxu0 0.0
    %2053 = vmatpush1.msra.mxu0 0.0
    %2054 = vmatprep.subr.mxu0 0.0
    %2055 = vmatpush1.msra.mxu0 0.0
    %2056 = vmatprep.subr.mxu0 0.0
    %2057 = vmatpush1.msra.mxu0 0.0
    %2058 = vmatprep.subr.mxu0 0.0
    %2059 = vmatpush1.msra.mxu0 0.0
    %2060 = vmatprep.subr.mxu0 0.0
    %2061 = vmatpush1.msra.mxu0 0.0
    %2062 = vmatprep.subr.mxu0 0.0
    %2063 = vmatpush1.msra.mxu0 0.0
    %v2064 = vand.u32 %v347, 4294901760
    %2065 = vmatprep.mubr.f32.mxu0 %v2064
    %v2066 = vand.u32 %v343, 4294901760
    %2067 = vmatmul.mubr.f32.gmra.mrb[0].mxu0 %v2066
    %v2068 = vpop.f32.mrb[0].mxu0
    %v2069 = vadd.f32 %v1894, %v2068
    %v2070 = vpop.f32.mrb[0].mxu0
    %v2071 = vadd.f32 %v1896, %v2070
    %2072 = vdwg.mxu0
    %v2073 = vand.u32 %v36, 4294901760
    %2074 = vmatprep.subr.mxu0 %v2073
    %v2075 = vand.u32 %v35, 4294901760
    %2076 = vmatpush1.msra.mxu0 %v2075
    %v2077 = vand.u32 %v50, 4294901760
    %2078 = vmatprep.subr.mxu0 %v2077
    %v2079 = vand.u32 %v49, 4294901760
    %2080 = vmatpush1.msra.mxu0 %v2079
    %v2081 = vand.u32 %v64, 4294901760
    %2082 = vmatprep.subr.mxu0 %v2081
    %v2083 = vand.u32 %v63, 4294901760
    %2084 = vmatpush1.msra.mxu0 %v2083
    %v2085 = vand.u32 %v78, 4294901760
    %2086 = vmatprep.subr.mxu0 %v2085
    %v2087 = vand.u32 %v77, 4294901760
    %2088 = vmatpush1.msra.mxu0 %v2087
    %v2089 = vand.u32 %v92, 4294901760
    %2090 = vmatprep.subr.mxu0 %v2089
    %v2091 = vand.u32 %v91, 4294901760
    %2092 = vmatpush1.msra.mxu0 %v2091
    %v2093 = vand.u32 %v106, 4294901760
    %2094 = vmatprep.subr.mxu0 %v2093
    %v2095 = vand.u32 %v105, 4294901760
    %2096 = vmatpush1.msra.mxu0 %v2095
    %v2097 = vand.u32 %v120, 4294901760
    %2098 = vmatprep.subr.mxu0 %v2097
    %v2099 = vand.u32 %v119, 4294901760
    %2100 = vmatpush1.msra.mxu0 %v2099
    %v2101 = vand.u32 %v134, 4294901760
    %2102 = vmatprep.subr.mxu0 %v2101
    %v2103 = vand.u32 %v133, 4294901760
    %2104 = vmatpush1.msra.mxu0 %v2103
    %v2105 = vand.u32 %v148, 4294901760
    %2106 = vmatprep.subr.mxu0 %v2105
    %v2107 = vand.u32 %v147, 4294901760
    %2108 = vmatpush1.msra.mxu0 %v2107
    %v2109 = vand.u32 %v162, 4294901760
    %2110 = vmatprep.subr.mxu0 %v2109
    %v2111 = vand.u32 %v161, 4294901760
    %2112 = vmatpush1.msra.mxu0 %v2111
    %v2113 = vand.u32 %v176, 4294901760
    %2114 = vmatprep.subr.mxu0 %v2113
    %v2115 = vand.u32 %v175, 4294901760
    %2116 = vmatpush1.msra.mxu0 %v2115
    %v2117 = vand.u32 %v190, 4294901760
    %2118 = vmatprep.subr.mxu0 %v2117
    %v2119 = vand.u32 %v189, 4294901760
    %2120 = vmatpush1.msra.mxu0 %v2119
    %v2121 = vand.u32 %v204, 4294901760
    %2122 = vmatprep.subr.mxu0 %v2121
    %v2123 = vand.u32 %v203, 4294901760
    %2124 = vmatpush1.msra.mxu0 %v2123
    %v2125 = vand.u32 %v218, 4294901760
    %2126 = vmatprep.subr.mxu0 %v2125
    %v2127 = vand.u32 %v217, 4294901760
    %2128 = vmatpush1.msra.mxu0 %v2127
    %v2129 = vand.u32 %v232, 4294901760
    %2130 = vmatprep.subr.mxu0 %v2129
    %v2131 = vand.u32 %v231, 4294901760
    %2132 = vmatpush1.msra.mxu0 %v2131
    %v2133 = vand.u32 %v246, 4294901760
    %2134 = vmatprep.subr.mxu0 %v2133
    %v2135 = vand.u32 %v245, 4294901760
    %2136 = vmatpush1.msra.mxu0 %v2135
    %v2137 = vand.u32 %v360, 4294901760
    %2138 = vmatprep.subr.mxu0 %v2137
    %v2139 = vand.u32 %v357, 4294901760
    %2140 = vmatpush1.msra.mxu0 %v2139
    %2141 = vmatprep.subr.mxu0 0.0
    %2142 = vmatpush1.msra.mxu0 0.0
    %2143 = vmatprep.subr.mxu0 0.0
    %2144 = vmatpush1.msra.mxu0 0.0
    %2145 = vmatprep.subr.mxu0 0.0
    %2146 = vmatpush1.msra.mxu0 0.0
    %2147 = vmatprep.subr.mxu0 0.0
    %2148 = vmatpush1.msra.mxu0 0.0
    %2149 = vmatprep.subr.mxu0 0.0
    %2150 = vmatpush1.msra.mxu0 0.0
    %2151 = vmatprep.subr.mxu0 0.0
    %2152 = vmatpush1.msra.mxu0 0.0
    %2153 = vmatprep.subr.mxu0 0.0
    %2154 = vmatpush1.msra.mxu0 0.0
    %2155 = vmatprep.subr.mxu0 0.0
    %2156 = vmatpush1.msra.mxu0 0.0
    %2157 = vmatprep.subr.mxu0 0.0
    %2158 = vmatpush1.msra.mxu0 0.0
    %2159 = vmatprep.subr.mxu0 0.0
    %2160 = vmatpush1.msra.mxu0 0.0
    %2161 = vmatprep.subr.mxu0 0.0
    %2162 = vmatpush1.msra.mxu0 0.0
    %2163 = vmatprep.subr.mxu0 0.0
    %2164 = vmatpush1.msra.mxu0 0.0
    %2165 = vmatprep.subr.mxu0 0.0
    %2166 = vmatpush1.msra.mxu0 0.0
    %2167 = vmatprep.subr.mxu0 0.0
    %2168 = vmatpush1.msra.mxu0 0.0
    %2169 = vmatprep.subr.mxu0 0.0
    %2170 = vmatpush1.msra.mxu0 0.0
    %v2171 = vand.u32 %v347, 4294901760
    %2172 = vmatprep.mubr.f32.mxu0 %v2171
    %v2173 = vand.u32 %v343, 4294901760
    %2174 = vmatmul.mubr.f32.gmra.mrb[0].mxu0 %v2173
    %v2175 = vpop.f32.mrb[0].mxu0
    %v2176 = vadd.f32 %v2069, %v2175
    %v2177 = vpop.f32.mrb[0].mxu0
    %v2178 = vadd.f32 %v2071, %v2177
    %2179 = vdwg.mxu0
    %v2180 = vand.u32 %v38, 4294901760
    %2181 = vmatprep.subr.mxu0 %v2180
    %v2182 = vand.u32 %v37, 4294901760
    %2183 = vmatpush1.msra.mxu0 %v2182
    %v2184 = vand.u32 %v52, 4294901760
    %2185 = vmatprep.subr.mxu0 %v2184
    %v2186 = vand.u32 %v51, 4294901760
    %2187 = vmatpush1.msra.mxu0 %v2186
    %v2188 = vand.u32 %v66, 4294901760
    %2189 = vmatprep.subr.mxu0 %v2188
    %v2190 = vand.u32 %v65, 4294901760
    %2191 = vmatpush1.msra.mxu0 %v2190
    %v2192 = vand.u32 %v80, 4294901760
    %2193 = vmatprep.subr.mxu0 %v2192
    %v2194 = vand.u32 %v79, 4294901760
    %2195 = vmatpush1.msra.mxu0 %v2194
    %v2196 = vand.u32 %v94, 4294901760
    %2197 = vmatprep.subr.mxu0 %v2196
    %v2198 = vand.u32 %v93, 4294901760
    %2199 = vmatpush1.msra.mxu0 %v2198
    %v2200 = vand.u32 %v108, 4294901760
    %2201 = vmatprep.subr.mxu0 %v2200
    %v2202 = vand.u32 %v107, 4294901760
    %2203 = vmatpush1.msra.mxu0 %v2202
    %v2204 = vand.u32 %v122, 4294901760
    %2205 = vmatprep.subr.mxu0 %v2204
    %v2206 = vand.u32 %v121, 4294901760
    %2207 = vmatpush1.msra.mxu0 %v2206
    %v2208 = vand.u32 %v136, 4294901760
    %2209 = vmatprep.subr.mxu0 %v2208
    %v2210 = vand.u32 %v135, 4294901760
    %2211 = vmatpush1.msra.mxu0 %v2210
    %v2212 = vand.u32 %v150, 4294901760
    %2213 = vmatprep.subr.mxu0 %v2212
    %v2214 = vand.u32 %v149, 4294901760
    %2215 = vmatpush1.msra.mxu0 %v2214
    %v2216 = vand.u32 %v164, 4294901760
    %2217 = vmatprep.subr.mxu0 %v2216
    %v2218 = vand.u32 %v163, 4294901760
    %2219 = vmatpush1.msra.mxu0 %v2218
    %v2220 = vand.u32 %v178, 4294901760
    %2221 = vmatprep.subr.mxu0 %v2220
    %v2222 = vand.u32 %v177, 4294901760
    %2223 = vmatpush1.msra.mxu0 %v2222
    %v2224 = vand.u32 %v192, 4294901760
    %2225 = vmatprep.subr.mxu0 %v2224
    %v2226 = vand.u32 %v191, 4294901760
    %2227 = vmatpush1.msra.mxu0 %v2226
    %v2228 = vand.u32 %v206, 4294901760
    %2229 = vmatprep.subr.mxu0 %v2228
    %v2230 = vand.u32 %v205, 4294901760
    %2231 = vmatpush1.msra.mxu0 %v2230
    %v2232 = vand.u32 %v220, 4294901760
    %2233 = vmatprep.subr.mxu0 %v2232
    %v2234 = vand.u32 %v219, 4294901760
    %2235 = vmatpush1.msra.mxu0 %v2234
    %v2236 = vand.u32 %v234, 4294901760
    %2237 = vmatprep.subr.mxu0 %v2236
    %v2238 = vand.u32 %v233, 4294901760
    %2239 = vmatpush1.msra.mxu0 %v2238
    %v2240 = vand.u32 %v248, 4294901760
    %2241 = vmatprep.subr.mxu0 %v2240
    %v2242 = vand.u32 %v247, 4294901760
    %2243 = vmatpush1.msra.mxu0 %v2242
    %v2244 = vand.u32 %v366, 4294901760
    %2245 = vmatprep.subr.mxu0 %v2244
    %v2246 = vand.u32 %v363, 4294901760
    %2247 = vmatpush1.msra.mxu0 %v2246
    %2248 = vmatprep.subr.mxu0 0.0
    %2249 = vmatpush1.msra.mxu0 0.0
    %2250 = vmatprep.subr.mxu0 0.0
    %2251 = vmatpush1.msra.mxu0 0.0
    %2252 = vmatprep.subr.mxu0 0.0
    %2253 = vmatpush1.msra.mxu0 0.0
    %2254 = vmatprep.subr.mxu0 0.0
    %2255 = vmatpush1.msra.mxu0 0.0
    %2256 = vmatprep.subr.mxu0 0.0
    %2257 = vmatpush1.msra.mxu0 0.0
    %2258 = vmatprep.subr.mxu0 0.0
    %2259 = vmatpush1.msra.mxu0 0.0
    %2260 = vmatprep.subr.mxu0 0.0
    %2261 = vmatpush1.msra.mxu0 0.0
    %2262 = vmatprep.subr.mxu0 0.0
    %2263 = vmatpush1.msra.mxu0 0.0
    %2264 = vmatprep.subr.mxu0 0.0
    %2265 = vmatpush1.msra.mxu0 0.0
    %2266 = vmatprep.subr.mxu0 0.0
    %2267 = vmatpush1.msra.mxu0 0.0
    %2268 = vmatprep.subr.mxu0 0.0
    %2269 = vmatpush1.msra.mxu0 0.0
    %2270 = vmatprep.subr.mxu0 0.0
    %2271 = vmatpush1.msra.mxu0 0.0
    %2272 = vmatprep.subr.mxu0 0.0
    %2273 = vmatpush1.msra.mxu0 0.0
    %2274 = vmatprep.subr.mxu0 0.0
    %2275 = vmatpush1.msra.mxu0 0.0
    %2276 = vmatprep.subr.mxu0 0.0
    %2277 = vmatpush1.msra.mxu0 0.0
    %v2278 = vand.u32 %v347, 4294901760
    %v2279 = vsub.f32 %v347, %v2278
    %v2280 = vand.u32 %v2279, 4294901760
    %v2281 = vsub.f32 %v2279, %v2280
    %v2282 = vand.u32 %v2281, 4294901760
    %2283 = vmatprep.mubr.f32.mxu0 %v2282
    %v2284 = vand.u32 %v343, 4294901760
    %v2285 = vsub.f32 %v343, %v2284
    %v2286 = vand.u32 %v2285, 4294901760
    %v2287 = vsub.f32 %v2285, %v2286
    %v2288 = vand.u32 %v2287, 4294901760
    %2289 = vmatmul.mubr.f32.gmra.mrb[0].mxu0 %v2288
    %v2290 = vpop.f32.mrb[0].mxu0
    %v2291 = vadd.f32 0.0, %v2290
    %v2292 = vpop.f32.mrb[0].mxu0
    %v2293 = vadd.f32 0.0, %v2292
    %2294 = vdwg.mxu0
    %v2295 = vand.u32 %v38, 4294901760
    %v2296 = vsub.f32 %v38, %v2295
    %v2297 = vand.u32 %v2296, 4294901760
    %v2298 = vsub.f32 %v2296, %v2297
    %v2299 = vand.u32 %v2298, 4294901760
    %2300 = vmatprep.subr.mxu0 %v2299
    %v2301 = vand.u32 %v37, 4294901760
    %v2302 = vsub.f32 %v37, %v2301
    %v2303 = vand.u32 %v2302, 4294901760
    %v2304 = vsub.f32 %v2302, %v2303
    %v2305 = vand.u32 %v2304, 4294901760
    %2306 = vmatpush1.msra.mxu0 %v2305
    %v2307 = vand.u32 %v52, 4294901760
    %v2308 = vsub.f32 %v52, %v2307
    %v2309 = vand.u32 %v2308, 4294901760
    %v2310 = vsub.f32 %v2308, %v2309
    %v2311 = vand.u32 %v2310, 4294901760
    %2312 = vmatprep.subr.mxu0 %v2311
    %v2313 = vand.u32 %v51, 4294901760
    %v2314 = vsub.f32 %v51, %v2313
    %v2315 = vand.u32 %v2314, 4294901760
    %v2316 = vsub.f32 %v2314, %v2315
    %v2317 = vand.u32 %v2316, 4294901760
    %2318 = vmatpush1.msra.mxu0 %v2317
    %v2319 = vand.u32 %v66, 4294901760
    %v2320 = vsub.f32 %v66, %v2319
    %v2321 = vand.u32 %v2320, 4294901760
    %v2322 = vsub.f32 %v2320, %v2321
    %v2323 = vand.u32 %v2322, 4294901760
    %2324 = vmatprep.subr.mxu0 %v2323
    %v2325 = vand.u32 %v65, 4294901760
    %v2326 = vsub.f32 %v65, %v2325
    %v2327 = vand.u32 %v2326, 4294901760
    %v2328 = vsub.f32 %v2326, %v2327
    %v2329 = vand.u32 %v2328, 4294901760
    %2330 = vmatpush1.msra.mxu0 %v2329
    %v2331 = vand.u32 %v80, 4294901760
    %v2332 = vsub.f32 %v80, %v2331
    %v2333 = vand.u32 %v2332, 4294901760
    %v2334 = vsub.f32 %v2332, %v2333
    %v2335 = vand.u32 %v2334, 4294901760
    %2336 = vmatprep.subr.mxu0 %v2335
    %v2337 = vand.u32 %v79, 4294901760
    %v2338 = vsub.f32 %v79, %v2337
    %v2339 = vand.u32 %v2338, 4294901760
    %v2340 = vsub.f32 %v2338, %v2339
    %v2341 = vand.u32 %v2340, 4294901760
    %2342 = vmatpush1.msra.mxu0 %v2341
    %v2343 = vand.u32 %v94, 4294901760
    %v2344 = vsub.f32 %v94, %v2343
    %v2345 = vand.u32 %v2344, 4294901760
    %v2346 = vsub.f32 %v2344, %v2345
    %v2347 = vand.u32 %v2346, 4294901760
    %2348 = vmatprep.subr.mxu0 %v2347
    %v2349 = vand.u32 %v93, 4294901760
    %v2350 = vsub.f32 %v93, %v2349
    %v2351 = vand.u32 %v2350, 4294901760
    %v2352 = vsub.f32 %v2350, %v2351
    %v2353 = vand.u32 %v2352, 4294901760
    %2354 = vmatpush1.msra.mxu0 %v2353
    %v2355 = vand.u32 %v108, 4294901760
    %v2356 = vsub.f32 %v108, %v2355
    %v2357 = vand.u32 %v2356, 4294901760
    %v2358 = vsub.f32 %v2356, %v2357
    %v2359 = vand.u32 %v2358, 4294901760
    %2360 = vmatprep.subr.mxu0 %v2359
    %v2361 = vand.u32 %v107, 4294901760
    %v2362 = vsub.f32 %v107, %v2361
    %v2363 = vand.u32 %v2362, 4294901760
    %v2364 = vsub.f32 %v2362, %v2363
    %v2365 = vand.u32 %v2364, 4294901760
    %2366 = vmatpush1.msra.mxu0 %v2365
    %v2367 = vand.u32 %v122, 4294901760
    %v2368 = vsub.f32 %v122, %v2367
    %v2369 = vand.u32 %v2368, 4294901760
    %v2370 = vsub.f32 %v2368, %v2369
    %v2371 = vand.u32 %v2370, 4294901760
    %2372 = vmatprep.subr.mxu0 %v2371
    %v2373 = vand.u32 %v121, 4294901760
    %v2374 = vsub.f32 %v121, %v2373
    %v2375 = vand.u32 %v2374, 4294901760
    %v2376 = vsub.f32 %v2374, %v2375
    %v2377 = vand.u32 %v2376, 4294901760
    %2378 = vmatpush1.msra.mxu0 %v2377
    %v2379 = vand.u32 %v136, 4294901760
    %v2380 = vsub.f32 %v136, %v2379
    %v2381 = vand.u32 %v2380, 4294901760
    %v2382 = vsub.f32 %v2380, %v2381
    %v2383 = vand.u32 %v2382, 4294901760
    %2384 = vmatprep.subr.mxu0 %v2383
    %v2385 = vand.u32 %v135, 4294901760
    %v2386 = vsub.f32 %v135, %v2385
    %v2387 = vand.u32 %v2386, 4294901760
    %v2388 = vsub.f32 %v2386, %v2387
    %v2389 = vand.u32 %v2388, 4294901760
    %2390 = vmatpush1.msra.mxu0 %v2389
    %v2391 = vand.u32 %v150, 4294901760
    %v2392 = vsub.f32 %v150, %v2391
    %v2393 = vand.u32 %v2392, 4294901760
    %v2394 = vsub.f32 %v2392, %v2393
    %v2395 = vand.u32 %v2394, 4294901760
    %2396 = vmatprep.subr.mxu0 %v2395
    %v2397 = vand.u32 %v149, 4294901760
    %v2398 = vsub.f32 %v149, %v2397
    %v2399 = vand.u32 %v2398, 4294901760
    %v2400 = vsub.f32 %v2398, %v2399
    %v2401 = vand.u32 %v2400, 4294901760
    %2402 = vmatpush1.msra.mxu0 %v2401
    %v2403 = vand.u32 %v164, 4294901760
    %v2404 = vsub.f32 %v164, %v2403
    %v2405 = vand.u32 %v2404, 4294901760
    %v2406 = vsub.f32 %v2404, %v2405
    %v2407 = vand.u32 %v2406, 4294901760
    %2408 = vmatprep.subr.mxu0 %v2407
    %v2409 = vand.u32 %v163, 4294901760
    %v2410 = vsub.f32 %v163, %v2409
    %v2411 = vand.u32 %v2410, 4294901760
    %v2412 = vsub.f32 %v2410, %v2411
    %v2413 = vand.u32 %v2412, 4294901760
    %2414 = vmatpush1.msra.mxu0 %v2413
    %v2415 = vand.u32 %v178, 4294901760
    %v2416 = vsub.f32 %v178, %v2415
    %v2417 = vand.u32 %v2416, 4294901760
    %v2418 = vsub.f32 %v2416, %v2417
    %v2419 = vand.u32 %v2418, 4294901760
    %2420 = vmatprep.subr.mxu0 %v2419
    %v2421 = vand.u32 %v177, 4294901760
    %v2422 = vsub.f32 %v177, %v2421
    %v2423 = vand.u32 %v2422, 4294901760
    %v2424 = vsub.f32 %v2422, %v2423
    %v2425 = vand.u32 %v2424, 4294901760
    %2426 = vmatpush1.msra.mxu0 %v2425
    %v2427 = vand.u32 %v192, 4294901760
    %v2428 = vsub.f32 %v192, %v2427
    %v2429 = vand.u32 %v2428, 4294901760
    %v2430 = vsub.f32 %v2428, %v2429
    %v2431 = vand.u32 %v2430, 4294901760
    %2432 = vmatprep.subr.mxu0 %v2431
    %v2433 = vand.u32 %v191, 4294901760
    %v2434 = vsub.f32 %v191, %v2433
    %v2435 = vand.u32 %v2434, 4294901760
    %v2436 = vsub.f32 %v2434, %v2435
    %v2437 = vand.u32 %v2436, 4294901760
    %2438 = vmatpush1.msra.mxu0 %v2437
    %v2439 = vand.u32 %v206, 4294901760
    %v2440 = vsub.f32 %v206, %v2439
    %v2441 = vand.u32 %v2440, 4294901760
    %v2442 = vsub.f32 %v2440, %v2441
    %v2443 = vand.u32 %v2442, 4294901760
    %2444 = vmatprep.subr.mxu0 %v2443
    %v2445 = vand.u32 %v205, 4294901760
    %v2446 = vsub.f32 %v205, %v2445
    %v2447 = vand.u32 %v2446, 4294901760
    %v2448 = vsub.f32 %v2446, %v2447
    %v2449 = vand.u32 %v2448, 4294901760
    %2450 = vmatpush1.msra.mxu0 %v2449
    %v2451 = vand.u32 %v220, 4294901760
    %v2452 = vsub.f32 %v220, %v2451
    %v2453 = vand.u32 %v2452, 4294901760
    %v2454 = vsub.f32 %v2452, %v2453
    %v2455 = vand.u32 %v2454, 4294901760
    %2456 = vmatprep.subr.mxu0 %v2455
    %v2457 = vand.u32 %v219, 4294901760
    %v2458 = vsub.f32 %v219, %v2457
    %v2459 = vand.u32 %v2458, 4294901760
    %v2460 = vsub.f32 %v2458, %v2459
    %v2461 = vand.u32 %v2460, 4294901760
    %2462 = vmatpush1.msra.mxu0 %v2461
    %v2463 = vand.u32 %v234, 4294901760
    %v2464 = vsub.f32 %v234, %v2463
    %v2465 = vand.u32 %v2464, 4294901760
    %v2466 = vsub.f32 %v2464, %v2465
    %v2467 = vand.u32 %v2466, 4294901760
    %2468 = vmatprep.subr.mxu0 %v2467
    %v2469 = vand.u32 %v233, 4294901760
    %v2470 = vsub.f32 %v233, %v2469
    %v2471 = vand.u32 %v2470, 4294901760
    %v2472 = vsub.f32 %v2470, %v2471
    %v2473 = vand.u32 %v2472, 4294901760
    %2474 = vmatpush1.msra.mxu0 %v2473
    %v2475 = vand.u32 %v248, 4294901760
    %v2476 = vsub.f32 %v248, %v2475
    %v2477 = vand.u32 %v2476, 4294901760
    %v2478 = vsub.f32 %v2476, %v2477
    %v2479 = vand.u32 %v2478, 4294901760
    %2480 = vmatprep.subr.mxu0 %v2479
    %v2481 = vand.u32 %v247, 4294901760
    %v2482 = vsub.f32 %v247, %v2481
    %v2483 = vand.u32 %v2482, 4294901760
    %v2484 = vsub.f32 %v2482, %v2483
    %v2485 = vand.u32 %v2484, 4294901760
    %2486 = vmatpush1.msra.mxu0 %v2485
    %v2487 = vand.u32 %v366, 4294901760
    %v2488 = vsub.f32 %v366, %v2487
    %v2489 = vand.u32 %v2488, 4294901760
    %v2490 = vsub.f32 %v2488, %v2489
    %v2491 = vand.u32 %v2490, 4294901760
    %2492 = vmatprep.subr.mxu0 %v2491
    %v2493 = vand.u32 %v363, 4294901760
    %v2494 = vsub.f32 %v363, %v2493
    %v2495 = vand.u32 %v2494, 4294901760
    %v2496 = vsub.f32 %v2494, %v2495
    %v2497 = vand.u32 %v2496, 4294901760
    %2498 = vmatpush1.msra.mxu0 %v2497
    %2499 = vmatprep.subr.mxu0 0.0
    %2500 = vmatpush1.msra.mxu0 0.0
    %2501 = vmatprep.subr.mxu0 0.0
    %2502 = vmatpush1.msra.mxu0 0.0
    %2503 = vmatprep.subr.mxu0 0.0
    %2504 = vmatpush1.msra.mxu0 0.0
    %2505 = vmatprep.subr.mxu0 0.0
    %2506 = vmatpush1.msra.mxu0 0.0
    %2507 = vmatprep.subr.mxu0 0.0
    %2508 = vmatpush1.msra.mxu0 0.0
    %2509 = vmatprep.subr.mxu0 0.0
    %2510 = vmatpush1.msra.mxu0 0.0
    %2511 = vmatprep.subr.mxu0 0.0
    %2512 = vmatpush1.msra.mxu0 0.0
    %2513 = vmatprep.subr.mxu0 0.0
    %2514 = vmatpush1.msra.mxu0 0.0
    %2515 = vmatprep.subr.mxu0 0.0
    %2516 = vmatpush1.msra.mxu0 0.0
    %2517 = vmatprep.subr.mxu0 0.0
    %2518 = vmatpush1.msra.mxu0 0.0
    %2519 = vmatprep.subr.mxu0 0.0
    %2520 = vmatpush1.msra.mxu0 0.0
    %2521 = vmatprep.subr.mxu0 0.0
    %2522 = vmatpush1.msra.mxu0 0.0
    %2523 = vmatprep.subr.mxu0 0.0
    %2524 = vmatpush1.msra.mxu0 0.0
    %2525 = vmatprep.subr.mxu0 0.0
    %2526 = vmatpush1.msra.mxu0 0.0
    %2527 = vmatprep.subr.mxu0 0.0
    %2528 = vmatpush1.msra.mxu0 0.0
    %v2529 = vand.u32 %v347, 4294901760
    %2530 = vmatprep.mubr.f32.mxu0 %v2529
    %v2531 = vand.u32 %v343, 4294901760
    %2532 = vmatmul.mubr.f32.gmra.mrb[0].mxu0 %v2531
    %v2533 = vpop.f32.mrb[0].mxu0
    %v2534 = vadd.f32 %v2291, %v2533
    %v2535 = vpop.f32.mrb[0].mxu0
    %v2536 = vadd.f32 %v2293, %v2535
    %2537 = vdwg.mxu0
    %v2538 = vand.u32 %v38, 4294901760
    %v2539 = vsub.f32 %v38, %v2538
    %2540 = vmatprep.subr.mxu0 %v2539
    %v2541 = vand.u32 %v37, 4294901760
    %v2542 = vsub.f32 %v37, %v2541
    %2543 = vmatpush1.msra.mxu0 %v2542
    %v2544 = vand.u32 %v52, 4294901760
    %v2545 = vsub.f32 %v52, %v2544
    %2546 = vmatprep.subr.mxu0 %v2545
    %v2547 = vand.u32 %v51, 4294901760
    %v2548 = vsub.f32 %v51, %v2547
    %2549 = vmatpush1.msra.mxu0 %v2548
    %v2550 = vand.u32 %v66, 4294901760
    %v2551 = vsub.f32 %v66, %v2550
    %2552 = vmatprep.subr.mxu0 %v2551
    %v2553 = vand.u32 %v65, 4294901760
    %v2554 = vsub.f32 %v65, %v2553
    %2555 = vmatpush1.msra.mxu0 %v2554
    %v2556 = vand.u32 %v80, 4294901760
    %v2557 = vsub.f32 %v80, %v2556
    %2558 = vmatprep.subr.mxu0 %v2557
    %v2559 = vand.u32 %v79, 4294901760
    %v2560 = vsub.f32 %v79, %v2559
    %2561 = vmatpush1.msra.mxu0 %v2560
    %v2562 = vand.u32 %v94, 4294901760
    %v2563 = vsub.f32 %v94, %v2562
    %2564 = vmatprep.subr.mxu0 %v2563
    %v2565 = vand.u32 %v93, 4294901760
    %v2566 = vsub.f32 %v93, %v2565
    %2567 = vmatpush1.msra.mxu0 %v2566
    %v2568 = vand.u32 %v108, 4294901760
    %v2569 = vsub.f32 %v108, %v2568
    %2570 = vmatprep.subr.mxu0 %v2569
    %v2571 = vand.u32 %v107, 4294901760
    %v2572 = vsub.f32 %v107, %v2571
    %2573 = vmatpush1.msra.mxu0 %v2572
    %v2574 = vand.u32 %v122, 4294901760
    %v2575 = vsub.f32 %v122, %v2574
    %2576 = vmatprep.subr.mxu0 %v2575
    %v2577 = vand.u32 %v121, 4294901760
    %v2578 = vsub.f32 %v121, %v2577
    %2579 = vmatpush1.msra.mxu0 %v2578
    %v2580 = vand.u32 %v136, 4294901760
    %v2581 = vsub.f32 %v136, %v2580
    %2582 = vmatprep.subr.mxu0 %v2581
    %v2583 = vand.u32 %v135, 4294901760
    %v2584 = vsub.f32 %v135, %v2583
    %2585 = vmatpush1.msra.mxu0 %v2584
    %v2586 = vand.u32 %v150, 4294901760
    %v2587 = vsub.f32 %v150, %v2586
    %2588 = vmatprep.subr.mxu0 %v2587
    %v2589 = vand.u32 %v149, 4294901760
    %v2590 = vsub.f32 %v149, %v2589
    %2591 = vmatpush1.msra.mxu0 %v2590
    %v2592 = vand.u32 %v164, 4294901760
    %v2593 = vsub.f32 %v164, %v2592
    %2594 = vmatprep.subr.mxu0 %v2593
    %v2595 = vand.u32 %v163, 4294901760
    %v2596 = vsub.f32 %v163, %v2595
    %2597 = vmatpush1.msra.mxu0 %v2596
    %v2598 = vand.u32 %v178, 4294901760
    %v2599 = vsub.f32 %v178, %v2598
    %2600 = vmatprep.subr.mxu0 %v2599
    %v2601 = vand.u32 %v177, 4294901760
    %v2602 = vsub.f32 %v177, %v2601
    %2603 = vmatpush1.msra.mxu0 %v2602
    %v2604 = vand.u32 %v192, 4294901760
    %v2605 = vsub.f32 %v192, %v2604
    %2606 = vmatprep.subr.mxu0 %v2605
    %v2607 = vand.u32 %v191, 4294901760
    %v2608 = vsub.f32 %v191, %v2607
    %2609 = vmatpush1.msra.mxu0 %v2608
    %v2610 = vand.u32 %v206, 4294901760
    %v2611 = vsub.f32 %v206, %v2610
    %2612 = vmatprep.subr.mxu0 %v2611
    %v2613 = vand.u32 %v205, 4294901760
    %v2614 = vsub.f32 %v205, %v2613
    %2615 = vmatpush1.msra.mxu0 %v2614
    %v2616 = vand.u32 %v220, 4294901760
    %v2617 = vsub.f32 %v220, %v2616
    %2618 = vmatprep.subr.mxu0 %v2617
    %v2619 = vand.u32 %v219, 4294901760
    %v2620 = vsub.f32 %v219, %v2619
    %2621 = vmatpush1.msra.mxu0 %v2620
    %v2622 = vand.u32 %v234, 4294901760
    %v2623 = vsub.f32 %v234, %v2622
    %2624 = vmatprep.subr.mxu0 %v2623
    %v2625 = vand.u32 %v233, 4294901760
    %v2626 = vsub.f32 %v233, %v2625
    %2627 = vmatpush1.msra.mxu0 %v2626
    %v2628 = vand.u32 %v248, 4294901760
    %v2629 = vsub.f32 %v248, %v2628
    %2630 = vmatprep.subr.mxu0 %v2629
    %v2631 = vand.u32 %v247, 4294901760
    %v2632 = vsub.f32 %v247, %v2631
    %2633 = vmatpush1.msra.mxu0 %v2632
    %v2634 = vand.u32 %v366, 4294901760
    %v2635 = vsub.f32 %v366, %v2634
    %2636 = vmatprep.subr.mxu0 %v2635
    %v2637 = vand.u32 %v363, 4294901760
    %v2638 = vsub.f32 %v363, %v2637
    %2639 = vmatpush1.msra.mxu0 %v2638
    %2640 = vmatprep.subr.mxu0 0.0
    %2641 = vmatpush1.msra.mxu0 0.0
    %2642 = vmatprep.subr.mxu0 0.0
    %2643 = vmatpush1.msra.mxu0 0.0
    %2644 = vmatprep.subr.mxu0 0.0
    %2645 = vmatpush1.msra.mxu0 0.0
    %2646 = vmatprep.subr.mxu0 0.0
    %2647 = vmatpush1.msra.mxu0 0.0
    %2648 = vmatprep.subr.mxu0 0.0
    %2649 = vmatpush1.msra.mxu0 0.0
    %2650 = vmatprep.subr.mxu0 0.0
    %2651 = vmatpush1.msra.mxu0 0.0
    %2652 = vmatprep.subr.mxu0 0.0
    %2653 = vmatpush1.msra.mxu0 0.0
    %2654 = vmatprep.subr.mxu0 0.0
    %2655 = vmatpush1.msra.mxu0 0.0
    %2656 = vmatprep.subr.mxu0 0.0
    %2657 = vmatpush1.msra.mxu0 0.0
    %2658 = vmatprep.subr.mxu0 0.0
    %2659 = vmatpush1.msra.mxu0 0.0
    %2660 = vmatprep.subr.mxu0 0.0
    %2661 = vmatpush1.msra.mxu0 0.0
    %2662 = vmatprep.subr.mxu0 0.0
    %2663 = vmatpush1.msra.mxu0 0.0
    %2664 = vmatprep.subr.mxu0 0.0
    %2665 = vmatpush1.msra.mxu0 0.0
    %2666 = vmatprep.subr.mxu0 0.0
    %2667 = vmatpush1.msra.mxu0 0.0
    %2668 = vmatprep.subr.mxu0 0.0
    %2669 = vmatpush1.msra.mxu0 0.0
    %v2670 = vand.u32 %v347, 4294901760
    %v2671 = vsub.f32 %v347, %v2670
    %2672 = vmatprep.mubr.f32.mxu0 %v2671
    %v2673 = vand.u32 %v343, 4294901760
    %v2674 = vsub.f32 %v343, %v2673
    %2675 = vmatmul.mubr.f32.gmra.mrb[0].mxu0 %v2674
    %v2676 = vpop.f32.mrb[0].mxu0
    %v2677 = vadd.f32 %v2534, %v2676
    %v2678 = vpop.f32.mrb[0].mxu0
    %v2679 = vadd.f32 %v2536, %v2678
    %2680 = vdwg.mxu0
    %v2681 = vand.u32 %v38, 4294901760
    %2682 = vmatprep.subr.mxu0 %v2681
    %v2683 = vand.u32 %v37, 4294901760
    %2684 = vmatpush1.msra.mxu0 %v2683
    %v2685 = vand.u32 %v52, 4294901760
    %2686 = vmatprep.subr.mxu0 %v2685
    %v2687 = vand.u32 %v51, 4294901760
    %2688 = vmatpush1.msra.mxu0 %v2687
    %v2689 = vand.u32 %v66, 4294901760
    %2690 = vmatprep.subr.mxu0 %v2689
    %v2691 = vand.u32 %v65, 4294901760
    %2692 = vmatpush1.msra.mxu0 %v2691
    %v2693 = vand.u32 %v80, 4294901760
    %2694 = vmatprep.subr.mxu0 %v2693
    %v2695 = vand.u32 %v79, 4294901760
    %2696 = vmatpush1.msra.mxu0 %v2695
    %v2697 = vand.u32 %v94, 4294901760
    %2698 = vmatprep.subr.mxu0 %v2697
    %v2699 = vand.u32 %v93, 4294901760
    %2700 = vmatpush1.msra.mxu0 %v2699
    %v2701 = vand.u32 %v108, 4294901760
    %2702 = vmatprep.subr.mxu0 %v2701
    %v2703 = vand.u32 %v107, 4294901760
    %2704 = vmatpush1.msra.mxu0 %v2703
    %v2705 = vand.u32 %v122, 4294901760
    %2706 = vmatprep.subr.mxu0 %v2705
    %v2707 = vand.u32 %v121, 4294901760
    %2708 = vmatpush1.msra.mxu0 %v2707
    %v2709 = vand.u32 %v136, 4294901760
    %2710 = vmatprep.subr.mxu0 %v2709
    %v2711 = vand.u32 %v135, 4294901760
    %2712 = vmatpush1.msra.mxu0 %v2711
    %v2713 = vand.u32 %v150, 4294901760
    %2714 = vmatprep.subr.mxu0 %v2713
    %v2715 = vand.u32 %v149, 4294901760
    %2716 = vmatpush1.msra.mxu0 %v2715
    %v2717 = vand.u32 %v164, 4294901760
    %2718 = vmatprep.subr.mxu0 %v2717
    %v2719 = vand.u32 %v163, 4294901760
    %2720 = vmatpush1.msra.mxu0 %v2719
    %v2721 = vand.u32 %v178, 4294901760
    %2722 = vmatprep.subr.mxu0 %v2721
    %v2723 = vand.u32 %v177, 4294901760
    %2724 = vmatpush1.msra.mxu0 %v2723
    %v2725 = vand.u32 %v192, 4294901760
    %2726 = vmatprep.subr.mxu0 %v2725
    %v2727 = vand.u32 %v191, 4294901760
    %2728 = vmatpush1.msra.mxu0 %v2727
    %v2729 = vand.u32 %v206, 4294901760
    %2730 = vmatprep.subr.mxu0 %v2729
    %v2731 = vand.u32 %v205, 4294901760
    %2732 = vmatpush1.msra.mxu0 %v2731
    %v2733 = vand.u32 %v220, 4294901760
    %2734 = vmatprep.subr.mxu0 %v2733
    %v2735 = vand.u32 %v219, 4294901760
    %2736 = vmatpush1.msra.mxu0 %v2735
    %v2737 = vand.u32 %v234, 4294901760
    %2738 = vmatprep.subr.mxu0 %v2737
    %v2739 = vand.u32 %v233, 4294901760
    %2740 = vmatpush1.msra.mxu0 %v2739
    %v2741 = vand.u32 %v248, 4294901760
    %2742 = vmatprep.subr.mxu0 %v2741
    %v2743 = vand.u32 %v247, 4294901760
    %2744 = vmatpush1.msra.mxu0 %v2743
    %v2745 = vand.u32 %v366, 4294901760
    %2746 = vmatprep.subr.mxu0 %v2745
    %v2747 = vand.u32 %v363, 4294901760
    %2748 = vmatpush1.msra.mxu0 %v2747
    %2749 = vmatprep.subr.mxu0 0.0
    %2750 = vmatpush1.msra.mxu0 0.0
    %2751 = vmatprep.subr.mxu0 0.0
    %2752 = vmatpush1.msra.mxu0 0.0
    %2753 = vmatprep.subr.mxu0 0.0
    %2754 = vmatpush1.msra.mxu0 0.0
    %2755 = vmatprep.subr.mxu0 0.0
    %2756 = vmatpush1.msra.mxu0 0.0
    %2757 = vmatprep.subr.mxu0 0.0
    %2758 = vmatpush1.msra.mxu0 0.0
    %2759 = vmatprep.subr.mxu0 0.0
    %2760 = vmatpush1.msra.mxu0 0.0
    %2761 = vmatprep.subr.mxu0 0.0
    %2762 = vmatpush1.msra.mxu0 0.0
    %2763 = vmatprep.subr.mxu0 0.0
    %2764 = vmatpush1.msra.mxu0 0.0
    %2765 = vmatprep.subr.mxu0 0.0
    %2766 = vmatpush1.msra.mxu0 0.0
    %2767 = vmatprep.subr.mxu0 0.0
    %2768 = vmatpush1.msra.mxu0 0.0
    %2769 = vmatprep.subr.mxu0 0.0
    %2770 = vmatpush1.msra.mxu0 0.0
    %2771 = vmatprep.subr.mxu0 0.0
    %2772 = vmatpush1.msra.mxu0 0.0
    %2773 = vmatprep.subr.mxu0 0.0
    %2774 = vmatpush1.msra.mxu0 0.0
    %2775 = vmatprep.subr.mxu0 0.0
    %2776 = vmatpush1.msra.mxu0 0.0
    %2777 = vmatprep.subr.mxu0 0.0
    %2778 = vmatpush1.msra.mxu0 0.0
    %v2779 = vand.u32 %v347, 4294901760
    %v2780 = vsub.f32 %v347, %v2779
    %v2781 = vand.u32 %v2780, 4294901760
    %2782 = vmatprep.mubr.f32.mxu0 %v2781
    %v2783 = vand.u32 %v343, 4294901760
    %v2784 = vsub.f32 %v343, %v2783
    %v2785 = vand.u32 %v2784, 4294901760
    %2786 = vmatmul.mubr.f32.gmra.mrb[0].mxu0 %v2785
    %v2787 = vpop.f32.mrb[0].mxu0
    %v2788 = vadd.f32 %v2677, %v2787
    %v2789 = vpop.f32.mrb[0].mxu0
    %v2790 = vadd.f32 %v2679, %v2789
    %2791 = vdwg.mxu0
    %v2792 = vand.u32 %v38, 4294901760
    %v2793 = vsub.f32 %v38, %v2792
    %v2794 = vand.u32 %v2793, 4294901760
    %2795 = vmatprep.subr.mxu0 %v2794
    %v2796 = vand.u32 %v37, 4294901760
    %v2797 = vsub.f32 %v37, %v2796
    %v2798 = vand.u32 %v2797, 4294901760
    %2799 = vmatpush1.msra.mxu0 %v2798
    %v2800 = vand.u32 %v52, 4294901760
    %v2801 = vsub.f32 %v52, %v2800
    %v2802 = vand.u32 %v2801, 4294901760
    %2803 = vmatprep.subr.mxu0 %v2802
    %v2804 = vand.u32 %v51, 4294901760
    %v2805 = vsub.f32 %v51, %v2804
    %v2806 = vand.u32 %v2805, 4294901760
    %2807 = vmatpush1.msra.mxu0 %v2806
    %v2808 = vand.u32 %v66, 4294901760
    %v2809 = vsub.f32 %v66, %v2808
    %v2810 = vand.u32 %v2809, 4294901760
    %2811 = vmatprep.subr.mxu0 %v2810
    %v2812 = vand.u32 %v65, 4294901760
    %v2813 = vsub.f32 %v65, %v2812
    %v2814 = vand.u32 %v2813, 4294901760
    %2815 = vmatpush1.msra.mxu0 %v2814
    %v2816 = vand.u32 %v80, 4294901760
    %v2817 = vsub.f32 %v80, %v2816
    %v2818 = vand.u32 %v2817, 4294901760
    %2819 = vmatprep.subr.mxu0 %v2818
    %v2820 = vand.u32 %v79, 4294901760
    %v2821 = vsub.f32 %v79, %v2820
    %v2822 = vand.u32 %v2821, 4294901760
    %2823 = vmatpush1.msra.mxu0 %v2822
    %v2824 = vand.u32 %v94, 4294901760
    %v2825 = vsub.f32 %v94, %v2824
    %v2826 = vand.u32 %v2825, 4294901760
    %2827 = vmatprep.subr.mxu0 %v2826
    %v2828 = vand.u32 %v93, 4294901760
    %v2829 = vsub.f32 %v93, %v2828
    %v2830 = vand.u32 %v2829, 4294901760
    %2831 = vmatpush1.msra.mxu0 %v2830
    %v2832 = vand.u32 %v108, 4294901760
    %v2833 = vsub.f32 %v108, %v2832
    %v2834 = vand.u32 %v2833, 4294901760
    %2835 = vmatprep.subr.mxu0 %v2834
    %v2836 = vand.u32 %v107, 4294901760
    %v2837 = vsub.f32 %v107, %v2836
    %v2838 = vand.u32 %v2837, 4294901760
    %2839 = vmatpush1.msra.mxu0 %v2838
    %v2840 = vand.u32 %v122, 4294901760
    %v2841 = vsub.f32 %v122, %v2840
    %v2842 = vand.u32 %v2841, 4294901760
    %2843 = vmatprep.subr.mxu0 %v2842
    %v2844 = vand.u32 %v121, 4294901760
    %v2845 = vsub.f32 %v121, %v2844
    %v2846 = vand.u32 %v2845, 4294901760
    %2847 = vmatpush1.msra.mxu0 %v2846
    %v2848 = vand.u32 %v136, 4294901760
    %v2849 = vsub.f32 %v136, %v2848
    %v2850 = vand.u32 %v2849, 4294901760
    %2851 = vmatprep.subr.mxu0 %v2850
    %v2852 = vand.u32 %v135, 4294901760
    %v2853 = vsub.f32 %v135, %v2852
    %v2854 = vand.u32 %v2853, 4294901760
    %2855 = vmatpush1.msra.mxu0 %v2854
    %v2856 = vand.u32 %v150, 4294901760
    %v2857 = vsub.f32 %v150, %v2856
    %v2858 = vand.u32 %v2857, 4294901760
    %2859 = vmatprep.subr.mxu0 %v2858
    %v2860 = vand.u32 %v149, 4294901760
    %v2861 = vsub.f32 %v149, %v2860
    %v2862 = vand.u32 %v2861, 4294901760
    %2863 = vmatpush1.msra.mxu0 %v2862
    %v2864 = vand.u32 %v164, 4294901760
    %v2865 = vsub.f32 %v164, %v2864
    %v2866 = vand.u32 %v2865, 4294901760
    %2867 = vmatprep.subr.mxu0 %v2866
    %v2868 = vand.u32 %v163, 4294901760
    %v2869 = vsub.f32 %v163, %v2868
    %v2870 = vand.u32 %v2869, 4294901760
    %2871 = vmatpush1.msra.mxu0 %v2870
    %v2872 = vand.u32 %v178, 4294901760
    %v2873 = vsub.f32 %v178, %v2872
    %v2874 = vand.u32 %v2873, 4294901760
    %2875 = vmatprep.subr.mxu0 %v2874
    %v2876 = vand.u32 %v177, 4294901760
    %v2877 = vsub.f32 %v177, %v2876
    %v2878 = vand.u32 %v2877, 4294901760
    %2879 = vmatpush1.msra.mxu0 %v2878
    %v2880 = vand.u32 %v192, 4294901760
    %v2881 = vsub.f32 %v192, %v2880
    %v2882 = vand.u32 %v2881, 4294901760
    %2883 = vmatprep.subr.mxu0 %v2882
    %v2884 = vand.u32 %v191, 4294901760
    %v2885 = vsub.f32 %v191, %v2884
    %v2886 = vand.u32 %v2885, 4294901760
    %2887 = vmatpush1.msra.mxu0 %v2886
    %v2888 = vand.u32 %v206, 4294901760
    %v2889 = vsub.f32 %v206, %v2888
    %v2890 = vand.u32 %v2889, 4294901760
    %2891 = vmatprep.subr.mxu0 %v2890
    %v2892 = vand.u32 %v205, 4294901760
    %v2893 = vsub.f32 %v205, %v2892
    %v2894 = vand.u32 %v2893, 4294901760
    %2895 = vmatpush1.msra.mxu0 %v2894
    %v2896 = vand.u32 %v220, 4294901760
    %v2897 = vsub.f32 %v220, %v2896
    %v2898 = vand.u32 %v2897, 4294901760
    %2899 = vmatprep.subr.mxu0 %v2898
    %v2900 = vand.u32 %v219, 4294901760
    %v2901 = vsub.f32 %v219, %v2900
    %v2902 = vand.u32 %v2901, 4294901760
    %2903 = vmatpush1.msra.mxu0 %v2902
    %v2904 = vand.u32 %v234, 4294901760
    %v2905 = vsub.f32 %v234, %v2904
    %v2906 = vand.u32 %v2905, 4294901760
    %2907 = vmatprep.subr.mxu0 %v2906
    %v2908 = vand.u32 %v233, 4294901760
    %v2909 = vsub.f32 %v233, %v2908
    %v2910 = vand.u32 %v2909, 4294901760
    %2911 = vmatpush1.msra.mxu0 %v2910
    %v2912 = vand.u32 %v248, 4294901760
    %v2913 = vsub.f32 %v248, %v2912
    %v2914 = vand.u32 %v2913, 4294901760
    %2915 = vmatprep.subr.mxu0 %v2914
    %v2916 = vand.u32 %v247, 4294901760
    %v2917 = vsub.f32 %v247, %v2916
    %v2918 = vand.u32 %v2917, 4294901760
    %2919 = vmatpush1.msra.mxu0 %v2918
    %v2920 = vand.u32 %v366, 4294901760
    %v2921 = vsub.f32 %v366, %v2920
    %v2922 = vand.u32 %v2921, 4294901760
    %2923 = vmatprep.subr.mxu0 %v2922
    %v2924 = vand.u32 %v363, 4294901760
    %v2925 = vsub.f32 %v363, %v2924
    %v2926 = vand.u32 %v2925, 4294901760
    %2927 = vmatpush1.msra.mxu0 %v2926
    %2928 = vmatprep.subr.mxu0 0.0
    %2929 = vmatpush1.msra.mxu0 0.0
    %2930 = vmatprep.subr.mxu0 0.0
    %2931 = vmatpush1.msra.mxu0 0.0
    %2932 = vmatprep.subr.mxu0 0.0
    %2933 = vmatpush1.msra.mxu0 0.0
    %2934 = vmatprep.subr.mxu0 0.0
    %2935 = vmatpush1.msra.mxu0 0.0
    %2936 = vmatprep.subr.mxu0 0.0
    %2937 = vmatpush1.msra.mxu0 0.0
    %2938 = vmatprep.subr.mxu0 0.0
    %2939 = vmatpush1.msra.mxu0 0.0
    %2940 = vmatprep.subr.mxu0 0.0
    %2941 = vmatpush1.msra.mxu0 0.0
    %2942 = vmatprep.subr.mxu0 0.0
    %2943 = vmatpush1.msra.mxu0 0.0
    %2944 = vmatprep.subr.mxu0 0.0
    %2945 = vmatpush1.msra.mxu0 0.0
    %2946 = vmatprep.subr.mxu0 0.0
    %2947 = vmatpush1.msra.mxu0 0.0
    %2948 = vmatprep.subr.mxu0 0.0
    %2949 = vmatpush1.msra.mxu0 0.0
    %2950 = vmatprep.subr.mxu0 0.0
    %2951 = vmatpush1.msra.mxu0 0.0
    %2952 = vmatprep.subr.mxu0 0.0
    %2953 = vmatpush1.msra.mxu0 0.0
    %2954 = vmatprep.subr.mxu0 0.0
    %2955 = vmatpush1.msra.mxu0 0.0
    %2956 = vmatprep.subr.mxu0 0.0
    %2957 = vmatpush1.msra.mxu0 0.0
    %v2958 = vand.u32 %v347, 4294901760
    %2959 = vmatprep.mubr.f32.mxu0 %v2958
    %v2960 = vand.u32 %v343, 4294901760
    %2961 = vmatmul.mubr.f32.gmra.mrb[0].mxu0 %v2960
    %v2962 = vpop.f32.mrb[0].mxu0
    %v2963 = vadd.f32 %v2788, %v2962
    %v2964 = vpop.f32.mrb[0].mxu0
    %v2965 = vadd.f32 %v2790, %v2964
    %2966 = vdwg.mxu0
    %v2967 = vand.u32 %v38, 4294901760
    %2968 = vmatprep.subr.mxu0 %v2967
    %v2969 = vand.u32 %v37, 4294901760
    %2970 = vmatpush1.msra.mxu0 %v2969
    %v2971 = vand.u32 %v52, 4294901760
    %2972 = vmatprep.subr.mxu0 %v2971
    %v2973 = vand.u32 %v51, 4294901760
    %2974 = vmatpush1.msra.mxu0 %v2973
    %v2975 = vand.u32 %v66, 4294901760
    %2976 = vmatprep.subr.mxu0 %v2975
    %v2977 = vand.u32 %v65, 4294901760
    %2978 = vmatpush1.msra.mxu0 %v2977
    %v2979 = vand.u32 %v80, 4294901760
    %2980 = vmatprep.subr.mxu0 %v2979
    %v2981 = vand.u32 %v79, 4294901760
    %2982 = vmatpush1.msra.mxu0 %v2981
    %v2983 = vand.u32 %v94, 4294901760
    %2984 = vmatprep.subr.mxu0 %v2983
    %v2985 = vand.u32 %v93, 4294901760
    %2986 = vmatpush1.msra.mxu0 %v2985
    %v2987 = vand.u32 %v108, 4294901760
    %2988 = vmatprep.subr.mxu0 %v2987
    %v2989 = vand.u32 %v107, 4294901760
    %2990 = vmatpush1.msra.mxu0 %v2989
    %v2991 = vand.u32 %v122, 4294901760
    %2992 = vmatprep.subr.mxu0 %v2991
    %v2993 = vand.u32 %v121, 4294901760
    %2994 = vmatpush1.msra.mxu0 %v2993
    %v2995 = vand.u32 %v136, 4294901760
    %2996 = vmatprep.subr.mxu0 %v2995
    %v2997 = vand.u32 %v135, 4294901760
    %2998 = vmatpush1.msra.mxu0 %v2997
    %v2999 = vand.u32 %v150, 4294901760
    %3000 = vmatprep.subr.mxu0 %v2999
    %v3001 = vand.u32 %v149, 4294901760
    %3002 = vmatpush1.msra.mxu0 %v3001
    %v3003 = vand.u32 %v164, 4294901760
    %3004 = vmatprep.subr.mxu0 %v3003
    %v3005 = vand.u32 %v163, 4294901760
    %3006 = vmatpush1.msra.mxu0 %v3005
    %v3007 = vand.u32 %v178, 4294901760
    %3008 = vmatprep.subr.mxu0 %v3007
    %v3009 = vand.u32 %v177, 4294901760
    %3010 = vmatpush1.msra.mxu0 %v3009
    %v3011 = vand.u32 %v192, 4294901760
    %3012 = vmatprep.subr.mxu0 %v3011
    %v3013 = vand.u32 %v191, 4294901760
    %3014 = vmatpush1.msra.mxu0 %v3013
    %v3015 = vand.u32 %v206, 4294901760
    %3016 = vmatprep.subr.mxu0 %v3015
    %v3017 = vand.u32 %v205, 4294901760
    %3018 = vmatpush1.msra.mxu0 %v3017
    %v3019 = vand.u32 %v220, 4294901760
    %3020 = vmatprep.subr.mxu0 %v3019
    %v3021 = vand.u32 %v219, 4294901760
    %3022 = vmatpush1.msra.mxu0 %v3021
    %v3023 = vand.u32 %v234, 4294901760
    %3024 = vmatprep.subr.mxu0 %v3023
    %v3025 = vand.u32 %v233, 4294901760
    %3026 = vmatpush1.msra.mxu0 %v3025
    %v3027 = vand.u32 %v248, 4294901760
    %3028 = vmatprep.subr.mxu0 %v3027
    %v3029 = vand.u32 %v247, 4294901760
    %3030 = vmatpush1.msra.mxu0 %v3029
    %v3031 = vand.u32 %v366, 4294901760
    %3032 = vmatprep.subr.mxu0 %v3031
    %v3033 = vand.u32 %v363, 4294901760
    %3034 = vmatpush1.msra.mxu0 %v3033
    %3035 = vmatprep.subr.mxu0 0.0
    %3036 = vmatpush1.msra.mxu0 0.0
    %3037 = vmatprep.subr.mxu0 0.0
    %3038 = vmatpush1.msra.mxu0 0.0
    %3039 = vmatprep.subr.mxu0 0.0
    %3040 = vmatpush1.msra.mxu0 0.0
    %3041 = vmatprep.subr.mxu0 0.0
    %3042 = vmatpush1.msra.mxu0 0.0
    %3043 = vmatprep.subr.mxu0 0.0
    %3044 = vmatpush1.msra.mxu0 0.0
    %3045 = vmatprep.subr.mxu0 0.0
    %3046 = vmatpush1.msra.mxu0 0.0
    %3047 = vmatprep.subr.mxu0 0.0
    %3048 = vmatpush1.msra.mxu0 0.0
    %3049 = vmatprep.subr.mxu0 0.0
    %3050 = vmatpush1.msra.mxu0 0.0
    %3051 = vmatprep.subr.mxu0 0.0
    %3052 = vmatpush1.msra.mxu0 0.0
    %3053 = vmatprep.subr.mxu0 0.0
    %3054 = vmatpush1.msra.mxu0 0.0
    %3055 = vmatprep.subr.mxu0 0.0
    %3056 = vmatpush1.msra.mxu0 0.0
    %3057 = vmatprep.subr.mxu0 0.0
    %3058 = vmatpush1.msra.mxu0 0.0
    %3059 = vmatprep.subr.mxu0 0.0
    %3060 = vmatpush1.msra.mxu0 0.0
    %3061 = vmatprep.subr.mxu0 0.0
    %3062 = vmatpush1.msra.mxu0 0.0
    %3063 = vmatprep.subr.mxu0 0.0
    %3064 = vmatpush1.msra.mxu0 0.0
    %v3065 = vand.u32 %v347, 4294901760
    %3066 = vmatprep.mubr.f32.mxu0 %v3065
    %v3067 = vand.u32 %v343, 4294901760
    %3068 = vmatmul.mubr.f32.gmra.mrb[0].mxu0 %v3067
    %v3069 = vpop.f32.mrb[0].mxu0
    %v3070 = vadd.f32 %v2963, %v3069
    %v3071 = vpop.f32.mrb[0].mxu0
    %v3072 = vadd.f32 %v2965, %v3071
    %3073 = vdwg.mxu0
    %v3074 = vand.u32 %v40, 4294901760
    %3075 = vmatprep.subr.mxu0 %v3074
    %v3076 = vand.u32 %v39, 4294901760
    %3077 = vmatpush1.msra.mxu0 %v3076
    %v3078 = vand.u32 %v54, 4294901760
    %3079 = vmatprep.subr.mxu0 %v3078
    %v3080 = vand.u32 %v53, 4294901760
    %3081 = vmatpush1.msra.mxu0 %v3080
    %v3082 = vand.u32 %v68, 4294901760
    %3083 = vmatprep.subr.mxu0 %v3082
    %v3084 = vand.u32 %v67, 4294901760
    %3085 = vmatpush1.msra.mxu0 %v3084
    %v3086 = vand.u32 %v82, 4294901760
    %3087 = vmatprep.subr.mxu0 %v3086
    %v3088 = vand.u32 %v81, 4294901760
    %3089 = vmatpush1.msra.mxu0 %v3088
    %v3090 = vand.u32 %v96, 4294901760
    %3091 = vmatprep.subr.mxu0 %v3090
    %v3092 = vand.u32 %v95, 4294901760
    %3093 = vmatpush1.msra.mxu0 %v3092
    %v3094 = vand.u32 %v110, 4294901760
    %3095 = vmatprep.subr.mxu0 %v3094
    %v3096 = vand.u32 %v109, 4294901760
    %3097 = vmatpush1.msra.mxu0 %v3096
    %v3098 = vand.u32 %v124, 4294901760
    %3099 = vmatprep.subr.mxu0 %v3098
    %v3100 = vand.u32 %v123, 4294901760
    %3101 = vmatpush1.msra.mxu0 %v3100
    %v3102 = vand.u32 %v138, 4294901760
    %3103 = vmatprep.subr.mxu0 %v3102
    %v3104 = vand.u32 %v137, 4294901760
    %3105 = vmatpush1.msra.mxu0 %v3104
    %v3106 = vand.u32 %v152, 4294901760
    %3107 = vmatprep.subr.mxu0 %v3106
    %v3108 = vand.u32 %v151, 4294901760
    %3109 = vmatpush1.msra.mxu0 %v3108
    %v3110 = vand.u32 %v166, 4294901760
    %3111 = vmatprep.subr.mxu0 %v3110
    %v3112 = vand.u32 %v165, 4294901760
    %3113 = vmatpush1.msra.mxu0 %v3112
    %v3114 = vand.u32 %v180, 4294901760
    %3115 = vmatprep.subr.mxu0 %v3114
    %v3116 = vand.u32 %v179, 4294901760
    %3117 = vmatpush1.msra.mxu0 %v3116
    %v3118 = vand.u32 %v194, 4294901760
    %3119 = vmatprep.subr.mxu0 %v3118
    %v3120 = vand.u32 %v193, 4294901760
    %3121 = vmatpush1.msra.mxu0 %v3120
    %v3122 = vand.u32 %v208, 4294901760
    %3123 = vmatprep.subr.mxu0 %v3122
    %v3124 = vand.u32 %v207, 4294901760
    %3125 = vmatpush1.msra.mxu0 %v3124
    %v3126 = vand.u32 %v222, 4294901760
    %3127 = vmatprep.subr.mxu0 %v3126
    %v3128 = vand.u32 %v221, 4294901760
    %3129 = vmatpush1.msra.mxu0 %v3128
    %v3130 = vand.u32 %v236, 4294901760
    %3131 = vmatprep.subr.mxu0 %v3130
    %v3132 = vand.u32 %v235, 4294901760
    %3133 = vmatpush1.msra.mxu0 %v3132
    %v3134 = vand.u32 %v250, 4294901760
    %3135 = vmatprep.subr.mxu0 %v3134
    %v3136 = vand.u32 %v249, 4294901760
    %3137 = vmatpush1.msra.mxu0 %v3136
    %v3138 = vand.u32 %v372, 4294901760
    %3139 = vmatprep.subr.mxu0 %v3138
    %v3140 = vand.u32 %v369, 4294901760
    %3141 = vmatpush1.msra.mxu0 %v3140
    %3142 = vmatprep.subr.mxu0 0.0
    %3143 = vmatpush1.msra.mxu0 0.0
    %3144 = vmatprep.subr.mxu0 0.0
    %3145 = vmatpush1.msra.mxu0 0.0
    %3146 = vmatprep.subr.mxu0 0.0
    %3147 = vmatpush1.msra.mxu0 0.0
    %3148 = vmatprep.subr.mxu0 0.0
    %3149 = vmatpush1.msra.mxu0 0.0
    %3150 = vmatprep.subr.mxu0 0.0
    %3151 = vmatpush1.msra.mxu0 0.0
    %3152 = vmatprep.subr.mxu0 0.0
    %3153 = vmatpush1.msra.mxu0 0.0
    %3154 = vmatprep.subr.mxu0 0.0
    %3155 = vmatpush1.msra.mxu0 0.0
    %3156 = vmatprep.subr.mxu0 0.0
    %3157 = vmatpush1.msra.mxu0 0.0
    %3158 = vmatprep.subr.mxu0 0.0
    %3159 = vmatpush1.msra.mxu0 0.0
    %3160 = vmatprep.subr.mxu0 0.0
    %3161 = vmatpush1.msra.mxu0 0.0
    %3162 = vmatprep.subr.mxu0 0.0
    %3163 = vmatpush1.msra.mxu0 0.0
    %3164 = vmatprep.subr.mxu0 0.0
    %3165 = vmatpush1.msra.mxu0 0.0
    %3166 = vmatprep.subr.mxu0 0.0
    %3167 = vmatpush1.msra.mxu0 0.0
    %3168 = vmatprep.subr.mxu0 0.0
    %3169 = vmatpush1.msra.mxu0 0.0
    %3170 = vmatprep.subr.mxu0 0.0
    %3171 = vmatpush1.msra.mxu0 0.0
    %v3172 = vand.u32 %v347, 4294901760
    %v3173 = vsub.f32 %v347, %v3172
    %v3174 = vand.u32 %v3173, 4294901760
    %v3175 = vsub.f32 %v3173, %v3174
    %v3176 = vand.u32 %v3175, 4294901760
    %3177 = vmatprep.mubr.f32.mxu0 %v3176
    %v3178 = vand.u32 %v343, 4294901760
    %v3179 = vsub.f32 %v343, %v3178
    %v3180 = vand.u32 %v3179, 4294901760
    %v3181 = vsub.f32 %v3179, %v3180
    %v3182 = vand.u32 %v3181, 4294901760
    %3183 = vmatmul.mubr.f32.gmra.mrb[0].mxu0 %v3182
    %v3184 = vpop.f32.mrb[0].mxu0
    %v3185 = vadd.f32 0.0, %v3184
    %v3186 = vpop.f32.mrb[0].mxu0
    %v3187 = vadd.f32 0.0, %v3186
    %3188 = vdwg.mxu0
    %v3189 = vand.u32 %v40, 4294901760
    %v3190 = vsub.f32 %v40, %v3189
    %v3191 = vand.u32 %v3190, 4294901760
    %v3192 = vsub.f32 %v3190, %v3191
    %v3193 = vand.u32 %v3192, 4294901760
    %3194 = vmatprep.subr.mxu0 %v3193
    %v3195 = vand.u32 %v39, 4294901760
    %v3196 = vsub.f32 %v39, %v3195
    %v3197 = vand.u32 %v3196, 4294901760
    %v3198 = vsub.f32 %v3196, %v3197
    %v3199 = vand.u32 %v3198, 4294901760
    %3200 = vmatpush1.msra.mxu0 %v3199
    %v3201 = vand.u32 %v54, 4294901760
    %v3202 = vsub.f32 %v54, %v3201
    %v3203 = vand.u32 %v3202, 4294901760
    %v3204 = vsub.f32 %v3202, %v3203
    %v3205 = vand.u32 %v3204, 4294901760
    %3206 = vmatprep.subr.mxu0 %v3205
    %v3207 = vand.u32 %v53, 4294901760
    %v3208 = vsub.f32 %v53, %v3207
    %v3209 = vand.u32 %v3208, 4294901760
    %v3210 = vsub.f32 %v3208, %v3209
    %v3211 = vand.u32 %v3210, 4294901760
    %3212 = vmatpush1.msra.mxu0 %v3211
    %v3213 = vand.u32 %v68, 4294901760
    %v3214 = vsub.f32 %v68, %v3213
    %v3215 = vand.u32 %v3214, 4294901760
    %v3216 = vsub.f32 %v3214, %v3215
    %v3217 = vand.u32 %v3216, 4294901760
    %3218 = vmatprep.subr.mxu0 %v3217
    %v3219 = vand.u32 %v67, 4294901760
    %v3220 = vsub.f32 %v67, %v3219
    %v3221 = vand.u32 %v3220, 4294901760
    %v3222 = vsub.f32 %v3220, %v3221
    %v3223 = vand.u32 %v3222, 4294901760
    %3224 = vmatpush1.msra.mxu0 %v3223
    %v3225 = vand.u32 %v82, 4294901760
    %v3226 = vsub.f32 %v82, %v3225
    %v3227 = vand.u32 %v3226, 4294901760
    %v3228 = vsub.f32 %v3226, %v3227
    %v3229 = vand.u32 %v3228, 4294901760
    %3230 = vmatprep.subr.mxu0 %v3229
    %v3231 = vand.u32 %v81, 4294901760
    %v3232 = vsub.f32 %v81, %v3231
    %v3233 = vand.u32 %v3232, 4294901760
    %v3234 = vsub.f32 %v3232, %v3233
    %v3235 = vand.u32 %v3234, 4294901760
    %3236 = vmatpush1.msra.mxu0 %v3235
    %v3237 = vand.u32 %v96, 4294901760
    %v3238 = vsub.f32 %v96, %v3237
    %v3239 = vand.u32 %v3238, 4294901760
    %v3240 = vsub.f32 %v3238, %v3239
    %v3241 = vand.u32 %v3240, 4294901760
    %3242 = vmatprep.subr.mxu0 %v3241
    %v3243 = vand.u32 %v95, 4294901760
    %v3244 = vsub.f32 %v95, %v3243
    %v3245 = vand.u32 %v3244, 4294901760
    %v3246 = vsub.f32 %v3244, %v3245
    %v3247 = vand.u32 %v3246, 4294901760
    %3248 = vmatpush1.msra.mxu0 %v3247
    %v3249 = vand.u32 %v110, 4294901760
    %v3250 = vsub.f32 %v110, %v3249
    %v3251 = vand.u32 %v3250, 4294901760
    %v3252 = vsub.f32 %v3250, %v3251
    %v3253 = vand.u32 %v3252, 4294901760
    %3254 = vmatprep.subr.mxu0 %v3253
    %v3255 = vand.u32 %v109, 4294901760
    %v3256 = vsub.f32 %v109, %v3255
    %v3257 = vand.u32 %v3256, 4294901760
    %v3258 = vsub.f32 %v3256, %v3257
    %v3259 = vand.u32 %v3258, 4294901760
    %3260 = vmatpush1.msra.mxu0 %v3259
    %v3261 = vand.u32 %v124, 4294901760
    %v3262 = vsub.f32 %v124, %v3261
    %v3263 = vand.u32 %v3262, 4294901760
    %v3264 = vsub.f32 %v3262, %v3263
    %v3265 = vand.u32 %v3264, 4294901760
    %3266 = vmatprep.subr.mxu0 %v3265
    %v3267 = vand.u32 %v123, 4294901760
    %v3268 = vsub.f32 %v123, %v3267
    %v3269 = vand.u32 %v3268, 4294901760
    %v3270 = vsub.f32 %v3268, %v3269
    %v3271 = vand.u32 %v3270, 4294901760
    %3272 = vmatpush1.msra.mxu0 %v3271
    %v3273 = vand.u32 %v138, 4294901760
    %v3274 = vsub.f32 %v138, %v3273
    %v3275 = vand.u32 %v3274, 4294901760
    %v3276 = vsub.f32 %v3274, %v3275
    %v3277 = vand.u32 %v3276, 4294901760
    %3278 = vmatprep.subr.mxu0 %v3277
    %v3279 = vand.u32 %v137, 4294901760
    %v3280 = vsub.f32 %v137, %v3279
    %v3281 = vand.u32 %v3280, 4294901760
    %v3282 = vsub.f32 %v3280, %v3281
    %v3283 = vand.u32 %v3282, 4294901760
    %3284 = vmatpush1.msra.mxu0 %v3283
    %v3285 = vand.u32 %v152, 4294901760
    %v3286 = vsub.f32 %v152, %v3285
    %v3287 = vand.u32 %v3286, 4294901760
    %v3288 = vsub.f32 %v3286, %v3287
    %v3289 = vand.u32 %v3288, 4294901760
    %3290 = vmatprep.subr.mxu0 %v3289
    %v3291 = vand.u32 %v151, 4294901760
    %v3292 = vsub.f32 %v151, %v3291
    %v3293 = vand.u32 %v3292, 4294901760
    %v3294 = vsub.f32 %v3292, %v3293
    %v3295 = vand.u32 %v3294, 4294901760
    %3296 = vmatpush1.msra.mxu0 %v3295
    %v3297 = vand.u32 %v166, 4294901760
    %v3298 = vsub.f32 %v166, %v3297
    %v3299 = vand.u32 %v3298, 4294901760
    %v3300 = vsub.f32 %v3298, %v3299
    %v3301 = vand.u32 %v3300, 4294901760
    %3302 = vmatprep.subr.mxu0 %v3301
    %v3303 = vand.u32 %v165, 4294901760
    %v3304 = vsub.f32 %v165, %v3303
    %v3305 = vand.u32 %v3304, 4294901760
    %v3306 = vsub.f32 %v3304, %v3305
    %v3307 = vand.u32 %v3306, 4294901760
    %3308 = vmatpush1.msra.mxu0 %v3307
    %v3309 = vand.u32 %v180, 4294901760
    %v3310 = vsub.f32 %v180, %v3309
    %v3311 = vand.u32 %v3310, 4294901760
    %v3312 = vsub.f32 %v3310, %v3311
    %v3313 = vand.u32 %v3312, 4294901760
    %3314 = vmatprep.subr.mxu0 %v3313
    %v3315 = vand.u32 %v179, 4294901760
    %v3316 = vsub.f32 %v179, %v3315
    %v3317 = vand.u32 %v3316, 4294901760
    %v3318 = vsub.f32 %v3316, %v3317
    %v3319 = vand.u32 %v3318, 4294901760
    %3320 = vmatpush1.msra.mxu0 %v3319
    %v3321 = vand.u32 %v194, 4294901760
    %v3322 = vsub.f32 %v194, %v3321
    %v3323 = vand.u32 %v3322, 4294901760
    %v3324 = vsub.f32 %v3322, %v3323
    %v3325 = vand.u32 %v3324, 4294901760
    %3326 = vmatprep.subr.mxu0 %v3325
    %v3327 = vand.u32 %v193, 4294901760
    %v3328 = vsub.f32 %v193, %v3327
    %v3329 = vand.u32 %v3328, 4294901760
    %v3330 = vsub.f32 %v3328, %v3329
    %v3331 = vand.u32 %v3330, 4294901760
    %3332 = vmatpush1.msra.mxu0 %v3331
    %v3333 = vand.u32 %v208, 4294901760
    %v3334 = vsub.f32 %v208, %v3333
    %v3335 = vand.u32 %v3334, 4294901760
    %v3336 = vsub.f32 %v3334, %v3335
    %v3337 = vand.u32 %v3336, 4294901760
    %3338 = vmatprep.subr.mxu0 %v3337
    %v3339 = vand.u32 %v207, 4294901760
    %v3340 = vsub.f32 %v207, %v3339
    %v3341 = vand.u32 %v3340, 4294901760
    %v3342 = vsub.f32 %v3340, %v3341
    %v3343 = vand.u32 %v3342, 4294901760
    %3344 = vmatpush1.msra.mxu0 %v3343
    %v3345 = vand.u32 %v222, 4294901760
    %v3346 = vsub.f32 %v222, %v3345
    %v3347 = vand.u32 %v3346, 4294901760
    %v3348 = vsub.f32 %v3346, %v3347
    %v3349 = vand.u32 %v3348, 4294901760
    %3350 = vmatprep.subr.mxu0 %v3349
    %v3351 = vand.u32 %v221, 4294901760
    %v3352 = vsub.f32 %v221, %v3351
    %v3353 = vand.u32 %v3352, 4294901760
    %v3354 = vsub.f32 %v3352, %v3353
    %v3355 = vand.u32 %v3354, 4294901760
    %3356 = vmatpush1.msra.mxu0 %v3355
    %v3357 = vand.u32 %v236, 4294901760
    %v3358 = vsub.f32 %v236, %v3357
    %v3359 = vand.u32 %v3358, 4294901760
    %v3360 = vsub.f32 %v3358, %v3359
    %v3361 = vand.u32 %v3360, 4294901760
    %3362 = vmatprep.subr.mxu0 %v3361
    %v3363 = vand.u32 %v235, 4294901760
    %v3364 = vsub.f32 %v235, %v3363
    %v3365 = vand.u32 %v3364, 4294901760
    %v3366 = vsub.f32 %v3364, %v3365
    %v3367 = vand.u32 %v3366, 4294901760
    %3368 = vmatpush1.msra.mxu0 %v3367
    %v3369 = vand.u32 %v250, 4294901760
    %v3370 = vsub.f32 %v250, %v3369
    %v3371 = vand.u32 %v3370, 4294901760
    %v3372 = vsub.f32 %v3370, %v3371
    %v3373 = vand.u32 %v3372, 4294901760
    %3374 = vmatprep.subr.mxu0 %v3373
    %v3375 = vand.u32 %v249, 4294901760
    %v3376 = vsub.f32 %v249, %v3375
    %v3377 = vand.u32 %v3376, 4294901760
    %v3378 = vsub.f32 %v3376, %v3377
    %v3379 = vand.u32 %v3378, 4294901760
    %3380 = vmatpush1.msra.mxu0 %v3379
    %v3381 = vand.u32 %v372, 4294901760
    %v3382 = vsub.f32 %v372, %v3381
    %v3383 = vand.u32 %v3382, 4294901760
    %v3384 = vsub.f32 %v3382, %v3383
    %v3385 = vand.u32 %v3384, 4294901760
    %3386 = vmatprep.subr.mxu0 %v3385
    %v3387 = vand.u32 %v369, 4294901760
    %v3388 = vsub.f32 %v369, %v3387
    %v3389 = vand.u32 %v3388, 4294901760
    %v3390 = vsub.f32 %v3388, %v3389
    %v3391 = vand.u32 %v3390, 4294901760
    %3392 = vmatpush1.msra.mxu0 %v3391
    %3393 = vmatprep.subr.mxu0 0.0
    %3394 = vmatpush1.msra.mxu0 0.0
    %3395 = vmatprep.subr.mxu0 0.0
    %3396 = vmatpush1.msra.mxu0 0.0
    %3397 = vmatprep.subr.mxu0 0.0
    %3398 = vmatpush1.msra.mxu0 0.0
    %3399 = vmatprep.subr.mxu0 0.0
    %3400 = vmatpush1.msra.mxu0 0.0
    %3401 = vmatprep.subr.mxu0 0.0
    %3402 = vmatpush1.msra.mxu0 0.0
    %3403 = vmatprep.subr.mxu0 0.0
    %3404 = vmatpush1.msra.mxu0 0.0
    %3405 = vmatprep.subr.mxu0 0.0
    %3406 = vmatpush1.msra.mxu0 0.0
    %3407 = vmatprep.subr.mxu0 0.0
    %3408 = vmatpush1.msra.mxu0 0.0
    %3409 = vmatprep.subr.mxu0 0.0
    %3410 = vmatpush1.msra.mxu0 0.0
    %3411 = vmatprep.subr.mxu0 0.0
    %3412 = vmatpush1.msra.mxu0 0.0
    %3413 = vmatprep.subr.mxu0 0.0
    %3414 = vmatpush1.msra.mxu0 0.0
    %3415 = vmatprep.subr.mxu0 0.0
    %3416 = vmatpush1.msra.mxu0 0.0
    %3417 = vmatprep.subr.mxu0 0.0
    %3418 = vmatpush1.msra.mxu0 0.0
    %3419 = vmatprep.subr.mxu0 0.0
    %3420 = vmatpush1.msra.mxu0 0.0
    %3421 = vmatprep.subr.mxu0 0.0
    %3422 = vmatpush1.msra.mxu0 0.0
    %v3423 = vand.u32 %v347, 4294901760
    %3424 = vmatprep.mubr.f32.mxu0 %v3423
    %v3425 = vand.u32 %v343, 4294901760
    %3426 = vmatmul.mubr.f32.gmra.mrb[0].mxu0 %v3425
    %v3427 = vpop.f32.mrb[0].mxu0
    %v3428 = vadd.f32 %v3185, %v3427
    %v3429 = vpop.f32.mrb[0].mxu0
    %v3430 = vadd.f32 %v3187, %v3429
    %3431 = vdwg.mxu0
    %v3432 = vand.u32 %v40, 4294901760
    %v3433 = vsub.f32 %v40, %v3432
    %3434 = vmatprep.subr.mxu0 %v3433
    %v3435 = vand.u32 %v39, 4294901760
    %v3436 = vsub.f32 %v39, %v3435
    %3437 = vmatpush1.msra.mxu0 %v3436
    %v3438 = vand.u32 %v54, 4294901760
    %v3439 = vsub.f32 %v54, %v3438
    %3440 = vmatprep.subr.mxu0 %v3439
    %v3441 = vand.u32 %v53, 4294901760
    %v3442 = vsub.f32 %v53, %v3441
    %3443 = vmatpush1.msra.mxu0 %v3442
    %v3444 = vand.u32 %v68, 4294901760
    %v3445 = vsub.f32 %v68, %v3444
    %3446 = vmatprep.subr.mxu0 %v3445
    %v3447 = vand.u32 %v67, 4294901760
    %v3448 = vsub.f32 %v67, %v3447
    %3449 = vmatpush1.msra.mxu0 %v3448
    %v3450 = vand.u32 %v82, 4294901760
    %v3451 = vsub.f32 %v82, %v3450
    %3452 = vmatprep.subr.mxu0 %v3451
    %v3453 = vand.u32 %v81, 4294901760
    %v3454 = vsub.f32 %v81, %v3453
    %3455 = vmatpush1.msra.mxu0 %v3454
    %v3456 = vand.u32 %v96, 4294901760
    %v3457 = vsub.f32 %v96, %v3456
    %3458 = vmatprep.subr.mxu0 %v3457
    %v3459 = vand.u32 %v95, 4294901760
    %v3460 = vsub.f32 %v95, %v3459
    %3461 = vmatpush1.msra.mxu0 %v3460
    %v3462 = vand.u32 %v110, 4294901760
    %v3463 = vsub.f32 %v110, %v3462
    %3464 = vmatprep.subr.mxu0 %v3463
    %v3465 = vand.u32 %v109, 4294901760
    %v3466 = vsub.f32 %v109, %v3465
    %3467 = vmatpush1.msra.mxu0 %v3466
    %v3468 = vand.u32 %v124, 4294901760
    %v3469 = vsub.f32 %v124, %v3468
    %3470 = vmatprep.subr.mxu0 %v3469
    %v3471 = vand.u32 %v123, 4294901760
    %v3472 = vsub.f32 %v123, %v3471
    %3473 = vmatpush1.msra.mxu0 %v3472
    %v3474 = vand.u32 %v138, 4294901760
    %v3475 = vsub.f32 %v138, %v3474
    %3476 = vmatprep.subr.mxu0 %v3475
    %v3477 = vand.u32 %v137, 4294901760
    %v3478 = vsub.f32 %v137, %v3477
    %3479 = vmatpush1.msra.mxu0 %v3478
    %v3480 = vand.u32 %v152, 4294901760
    %v3481 = vsub.f32 %v152, %v3480
    %3482 = vmatprep.subr.mxu0 %v3481
    %v3483 = vand.u32 %v151, 4294901760
    %v3484 = vsub.f32 %v151, %v3483
    %3485 = vmatpush1.msra.mxu0 %v3484
    %v3486 = vand.u32 %v166, 4294901760
    %v3487 = vsub.f32 %v166, %v3486
    %3488 = vmatprep.subr.mxu0 %v3487
    %v3489 = vand.u32 %v165, 4294901760
    %v3490 = vsub.f32 %v165, %v3489
    %3491 = vmatpush1.msra.mxu0 %v3490
    %v3492 = vand.u32 %v180, 4294901760
    %v3493 = vsub.f32 %v180, %v3492
    %3494 = vmatprep.subr.mxu0 %v3493
    %v3495 = vand.u32 %v179, 4294901760
    %v3496 = vsub.f32 %v179, %v3495
    %3497 = vmatpush1.msra.mxu0 %v3496
    %v3498 = vand.u32 %v194, 4294901760
    %v3499 = vsub.f32 %v194, %v3498
    %3500 = vmatprep.subr.mxu0 %v3499
    %v3501 = vand.u32 %v193, 4294901760
    %v3502 = vsub.f32 %v193, %v3501
    %3503 = vmatpush1.msra.mxu0 %v3502
    %v3504 = vand.u32 %v208, 4294901760
    %v3505 = vsub.f32 %v208, %v3504
    %3506 = vmatprep.subr.mxu0 %v3505
    %v3507 = vand.u32 %v207, 4294901760
    %v3508 = vsub.f32 %v207, %v3507
    %3509 = vmatpush1.msra.mxu0 %v3508
    %v3510 = vand.u32 %v222, 4294901760
    %v3511 = vsub.f32 %v222, %v3510
    %3512 = vmatprep.subr.mxu0 %v3511
    %v3513 = vand.u32 %v221, 4294901760
    %v3514 = vsub.f32 %v221, %v3513
    %3515 = vmatpush1.msra.mxu0 %v3514
    %v3516 = vand.u32 %v236, 4294901760
    %v3517 = vsub.f32 %v236, %v3516
    %3518 = vmatprep.subr.mxu0 %v3517
    %v3519 = vand.u32 %v235, 4294901760
    %v3520 = vsub.f32 %v235, %v3519
    %3521 = vmatpush1.msra.mxu0 %v3520
    %v3522 = vand.u32 %v250, 4294901760
    %v3523 = vsub.f32 %v250, %v3522
    %3524 = vmatprep.subr.mxu0 %v3523
    %v3525 = vand.u32 %v249, 4294901760
    %v3526 = vsub.f32 %v249, %v3525
    %3527 = vmatpush1.msra.mxu0 %v3526
    %v3528 = vand.u32 %v372, 4294901760
    %v3529 = vsub.f32 %v372, %v3528
    %3530 = vmatprep.subr.mxu0 %v3529
    %v3531 = vand.u32 %v369, 4294901760
    %v3532 = vsub.f32 %v369, %v3531
    %3533 = vmatpush1.msra.mxu0 %v3532
    %3534 = vmatprep.subr.mxu0 0.0
    %3535 = vmatpush1.msra.mxu0 0.0
    %3536 = vmatprep.subr.mxu0 0.0
    %3537 = vmatpush1.msra.mxu0 0.0
    %3538 = vmatprep.subr.mxu0 0.0
    %3539 = vmatpush1.msra.mxu0 0.0
    %3540 = vmatprep.subr.mxu0 0.0
    %3541 = vmatpush1.msra.mxu0 0.0
    %3542 = vmatprep.subr.mxu0 0.0
    %3543 = vmatpush1.msra.mxu0 0.0
    %3544 = vmatprep.subr.mxu0 0.0
    %3545 = vmatpush1.msra.mxu0 0.0
    %3546 = vmatprep.subr.mxu0 0.0
    %3547 = vmatpush1.msra.mxu0 0.0
    %3548 = vmatprep.subr.mxu0 0.0
    %3549 = vmatpush1.msra.mxu0 0.0
    %3550 = vmatprep.subr.mxu0 0.0
    %3551 = vmatpush1.msra.mxu0 0.0
    %3552 = vmatprep.subr.mxu0 0.0
    %3553 = vmatpush1.msra.mxu0 0.0
    %3554 = vmatprep.subr.mxu0 0.0
    %3555 = vmatpush1.msra.mxu0 0.0
    %3556 = vmatprep.subr.mxu0 0.0
    %3557 = vmatpush1.msra.mxu0 0.0
    %3558 = vmatprep.subr.mxu0 0.0
    %3559 = vmatpush1.msra.mxu0 0.0
    %3560 = vmatprep.subr.mxu0 0.0
    %3561 = vmatpush1.msra.mxu0 0.0
    %3562 = vmatprep.subr.mxu0 0.0
    %3563 = vmatpush1.msra.mxu0 0.0
    %v3564 = vand.u32 %v347, 4294901760
    %v3565 = vsub.f32 %v347, %v3564
    %3566 = vmatprep.mubr.f32.mxu0 %v3565
    %v3567 = vand.u32 %v343, 4294901760
    %v3568 = vsub.f32 %v343, %v3567
    %3569 = vmatmul.mubr.f32.gmra.mrb[0].mxu0 %v3568
    %v3570 = vpop.f32.mrb[0].mxu0
    %v3571 = vadd.f32 %v3428, %v3570
    %v3572 = vpop.f32.mrb[0].mxu0
    %v3573 = vadd.f32 %v3430, %v3572
    %3574 = vdwg.mxu0
    %v3575 = vand.u32 %v40, 4294901760
    %3576 = vmatprep.subr.mxu0 %v3575
    %v3577 = vand.u32 %v39, 4294901760
    %3578 = vmatpush1.msra.mxu0 %v3577
    %v3579 = vand.u32 %v54, 4294901760
    %3580 = vmatprep.subr.mxu0 %v3579
    %v3581 = vand.u32 %v53, 4294901760
    %3582 = vmatpush1.msra.mxu0 %v3581
    %v3583 = vand.u32 %v68, 4294901760
    %3584 = vmatprep.subr.mxu0 %v3583
    %v3585 = vand.u32 %v67, 4294901760
    %3586 = vmatpush1.msra.mxu0 %v3585
    %v3587 = vand.u32 %v82, 4294901760
    %3588 = vmatprep.subr.mxu0 %v3587
    %v3589 = vand.u32 %v81, 4294901760
    %3590 = vmatpush1.msra.mxu0 %v3589
    %v3591 = vand.u32 %v96, 4294901760
    %3592 = vmatprep.subr.mxu0 %v3591
    %v3593 = vand.u32 %v95, 4294901760
    %3594 = vmatpush1.msra.mxu0 %v3593
    %v3595 = vand.u32 %v110, 4294901760
    %3596 = vmatprep.subr.mxu0 %v3595
    %v3597 = vand.u32 %v109, 4294901760
    %3598 = vmatpush1.msra.mxu0 %v3597
    %v3599 = vand.u32 %v124, 4294901760
    %3600 = vmatprep.subr.mxu0 %v3599
    %v3601 = vand.u32 %v123, 4294901760
    %3602 = vmatpush1.msra.mxu0 %v3601
    %v3603 = vand.u32 %v138, 4294901760
    %3604 = vmatprep.subr.mxu0 %v3603
    %v3605 = vand.u32 %v137, 4294901760
    %3606 = vmatpush1.msra.mxu0 %v3605
    %v3607 = vand.u32 %v152, 4294901760
    %3608 = vmatprep.subr.mxu0 %v3607
    %v3609 = vand.u32 %v151, 4294901760
    %3610 = vmatpush1.msra.mxu0 %v3609
    %v3611 = vand.u32 %v166, 4294901760
    %3612 = vmatprep.subr.mxu0 %v3611
    %v3613 = vand.u32 %v165, 4294901760
    %3614 = vmatpush1.msra.mxu0 %v3613
    %v3615 = vand.u32 %v180, 4294901760
    %3616 = vmatprep.subr.mxu0 %v3615
    %v3617 = vand.u32 %v179, 4294901760
    %3618 = vmatpush1.msra.mxu0 %v3617
    %v3619 = vand.u32 %v194, 4294901760
    %3620 = vmatprep.subr.mxu0 %v3619
    %v3621 = vand.u32 %v193, 4294901760
    %3622 = vmatpush1.msra.mxu0 %v3621
    %v3623 = vand.u32 %v208, 4294901760
    %3624 = vmatprep.subr.mxu0 %v3623
    %v3625 = vand.u32 %v207, 4294901760
    %3626 = vmatpush1.msra.mxu0 %v3625
    %v3627 = vand.u32 %v222, 4294901760
    %3628 = vmatprep.subr.mxu0 %v3627
    %v3629 = vand.u32 %v221, 4294901760
    %3630 = vmatpush1.msra.mxu0 %v3629
    %v3631 = vand.u32 %v236, 4294901760
    %3632 = vmatprep.subr.mxu0 %v3631
    %v3633 = vand.u32 %v235, 4294901760
    %3634 = vmatpush1.msra.mxu0 %v3633
    %v3635 = vand.u32 %v250, 4294901760
    %3636 = vmatprep.subr.mxu0 %v3635
    %v3637 = vand.u32 %v249, 4294901760
    %3638 = vmatpush1.msra.mxu0 %v3637
    %v3639 = vand.u32 %v372, 4294901760
    %3640 = vmatprep.subr.mxu0 %v3639
    %v3641 = vand.u32 %v369, 4294901760
    %3642 = vmatpush1.msra.mxu0 %v3641
    %3643 = vmatprep.subr.mxu0 0.0
    %3644 = vmatpush1.msra.mxu0 0.0
    %3645 = vmatprep.subr.mxu0 0.0
    %3646 = vmatpush1.msra.mxu0 0.0
    %3647 = vmatprep.subr.mxu0 0.0
    %3648 = vmatpush1.msra.mxu0 0.0
    %3649 = vmatprep.subr.mxu0 0.0
    %3650 = vmatpush1.msra.mxu0 0.0
    %3651 = vmatprep.subr.mxu0 0.0
    %3652 = vmatpush1.msra.mxu0 0.0
    %3653 = vmatprep.subr.mxu0 0.0
    %3654 = vmatpush1.msra.mxu0 0.0
    %3655 = vmatprep.subr.mxu0 0.0
    %3656 = vmatpush1.msra.mxu0 0.0
    %3657 = vmatprep.subr.mxu0 0.0
    %3658 = vmatpush1.msra.mxu0 0.0
    %3659 = vmatprep.subr.mxu0 0.0
    %3660 = vmatpush1.msra.mxu0 0.0
    %3661 = vmatprep.subr.mxu0 0.0
    %3662 = vmatpush1.msra.mxu0 0.0
    %3663 = vmatprep.subr.mxu0 0.0
    %3664 = vmatpush1.msra.mxu0 0.0
    %3665 = vmatprep.subr.mxu0 0.0
    %3666 = vmatpush1.msra.mxu0 0.0
    %3667 = vmatprep.subr.mxu0 0.0
    %3668 = vmatpush1.msra.mxu0 0.0
    %3669 = vmatprep.subr.mxu0 0.0
    %3670 = vmatpush1.msra.mxu0 0.0
    %3671 = vmatprep.subr.mxu0 0.0
    %3672 = vmatpush1.msra.mxu0 0.0
    %v3673 = vand.u32 %v347, 4294901760
    %v3674 = vsub.f32 %v347, %v3673
    %v3675 = vand.u32 %v3674, 4294901760
    %3676 = vmatprep.mubr.f32.mxu0 %v3675
    %v3677 = vand.u32 %v343, 4294901760
    %v3678 = vsub.f32 %v343, %v3677
    %v3679 = vand.u32 %v3678, 4294901760
    %3680 = vmatmul.mubr.f32.gmra.mrb[0].mxu0 %v3679
    %v3681 = vpop.f32.mrb[0].mxu0
    %v3682 = vadd.f32 %v3571, %v3681
    %v3683 = vpop.f32.mrb[0].mxu0
    %v3684 = vadd.f32 %v3573, %v3683
    %3685 = vdwg.mxu0
    %v3686 = vand.u32 %v40, 4294901760
    %v3687 = vsub.f32 %v40, %v3686
    %v3688 = vand.u32 %v3687, 4294901760
    %3689 = vmatprep.subr.mxu0 %v3688
    %v3690 = vand.u32 %v39, 4294901760
    %v3691 = vsub.f32 %v39, %v3690
    %v3692 = vand.u32 %v3691, 4294901760
    %3693 = vmatpush1.msra.mxu0 %v3692
    %v3694 = vand.u32 %v54, 4294901760
    %v3695 = vsub.f32 %v54, %v3694
    %v3696 = vand.u32 %v3695, 4294901760
    %3697 = vmatprep.subr.mxu0 %v3696
    %v3698 = vand.u32 %v53, 4294901760
    %v3699 = vsub.f32 %v53, %v3698
    %v3700 = vand.u32 %v3699, 4294901760
    %3701 = vmatpush1.msra.mxu0 %v3700
    %v3702 = vand.u32 %v68, 4294901760
    %v3703 = vsub.f32 %v68, %v3702
    %v3704 = vand.u32 %v3703, 4294901760
    %3705 = vmatprep.subr.mxu0 %v3704
    %v3706 = vand.u32 %v67, 4294901760
    %v3707 = vsub.f32 %v67, %v3706
    %v3708 = vand.u32 %v3707, 4294901760
    %3709 = vmatpush1.msra.mxu0 %v3708
    %v3710 = vand.u32 %v82, 4294901760
    %v3711 = vsub.f32 %v82, %v3710
    %v3712 = vand.u32 %v3711, 4294901760
    %3713 = vmatprep.subr.mxu0 %v3712
    %v3714 = vand.u32 %v81, 4294901760
    %v3715 = vsub.f32 %v81, %v3714
    %v3716 = vand.u32 %v3715, 4294901760
    %3717 = vmatpush1.msra.mxu0 %v3716
    %v3718 = vand.u32 %v96, 4294901760
    %v3719 = vsub.f32 %v96, %v3718
    %v3720 = vand.u32 %v3719, 4294901760
    %3721 = vmatprep.subr.mxu0 %v3720
    %v3722 = vand.u32 %v95, 4294901760
    %v3723 = vsub.f32 %v95, %v3722
    %v3724 = vand.u32 %v3723, 4294901760
    %3725 = vmatpush1.msra.mxu0 %v3724
    %v3726 = vand.u32 %v110, 4294901760
    %v3727 = vsub.f32 %v110, %v3726
    %v3728 = vand.u32 %v3727, 4294901760
    %3729 = vmatprep.subr.mxu0 %v3728
    %v3730 = vand.u32 %v109, 4294901760
    %v3731 = vsub.f32 %v109, %v3730
    %v3732 = vand.u32 %v3731, 4294901760
    %3733 = vmatpush1.msra.mxu0 %v3732
    %v3734 = vand.u32 %v124, 4294901760
    %v3735 = vsub.f32 %v124, %v3734
    %v3736 = vand.u32 %v3735, 4294901760
    %3737 = vmatprep.subr.mxu0 %v3736
    %v3738 = vand.u32 %v123, 4294901760
    %v3739 = vsub.f32 %v123, %v3738
    %v3740 = vand.u32 %v3739, 4294901760
    %3741 = vmatpush1.msra.mxu0 %v3740
    %v3742 = vand.u32 %v138, 4294901760
    %v3743 = vsub.f32 %v138, %v3742
    %v3744 = vand.u32 %v3743, 4294901760
    %3745 = vmatprep.subr.mxu0 %v3744
    %v3746 = vand.u32 %v137, 4294901760
    %v3747 = vsub.f32 %v137, %v3746
    %v3748 = vand.u32 %v3747, 4294901760
    %3749 = vmatpush1.msra.mxu0 %v3748
    %v3750 = vand.u32 %v152, 4294901760
    %v3751 = vsub.f32 %v152, %v3750
    %v3752 = vand.u32 %v3751, 4294901760
    %3753 = vmatprep.subr.mxu0 %v3752
    %v3754 = vand.u32 %v151, 4294901760
    %v3755 = vsub.f32 %v151, %v3754
    %v3756 = vand.u32 %v3755, 4294901760
    %3757 = vmatpush1.msra.mxu0 %v3756
    %v3758 = vand.u32 %v166, 4294901760
    %v3759 = vsub.f32 %v166, %v3758
    %v3760 = vand.u32 %v3759, 4294901760
    %3761 = vmatprep.subr.mxu0 %v3760
    %v3762 = vand.u32 %v165, 4294901760
    %v3763 = vsub.f32 %v165, %v3762
    %v3764 = vand.u32 %v3763, 4294901760
    %3765 = vmatpush1.msra.mxu0 %v3764
    %v3766 = vand.u32 %v180, 4294901760
    %v3767 = vsub.f32 %v180, %v3766
    %v3768 = vand.u32 %v3767, 4294901760
    %3769 = vmatprep.subr.mxu0 %v3768
    %v3770 = vand.u32 %v179, 4294901760
    %v3771 = vsub.f32 %v179, %v3770
    %v3772 = vand.u32 %v3771, 4294901760
    %3773 = vmatpush1.msra.mxu0 %v3772
    %v3774 = vand.u32 %v194, 4294901760
    %v3775 = vsub.f32 %v194, %v3774
    %v3776 = vand.u32 %v3775, 4294901760
    %3777 = vmatprep.subr.mxu0 %v3776
    %v3778 = vand.u32 %v193, 4294901760
    %v3779 = vsub.f32 %v193, %v3778
    %v3780 = vand.u32 %v3779, 4294901760
    %3781 = vmatpush1.msra.mxu0 %v3780
    %v3782 = vand.u32 %v208, 4294901760
    %v3783 = vsub.f32 %v208, %v3782
    %v3784 = vand.u32 %v3783, 4294901760
    %3785 = vmatprep.subr.mxu0 %v3784
    %v3786 = vand.u32 %v207, 4294901760
    %v3787 = vsub.f32 %v207, %v3786
    %v3788 = vand.u32 %v3787, 4294901760
    %3789 = vmatpush1.msra.mxu0 %v3788
    %v3790 = vand.u32 %v222, 4294901760
    %v3791 = vsub.f32 %v222, %v3790
    %v3792 = vand.u32 %v3791, 4294901760
    %3793 = vmatprep.subr.mxu0 %v3792
    %v3794 = vand.u32 %v221, 4294901760
    %v3795 = vsub.f32 %v221, %v3794
    %v3796 = vand.u32 %v3795, 4294901760
    %3797 = vmatpush1.msra.mxu0 %v3796
    %v3798 = vand.u32 %v236, 4294901760
    %v3799 = vsub.f32 %v236, %v3798
    %v3800 = vand.u32 %v3799, 4294901760
    %3801 = vmatprep.subr.mxu0 %v3800
    %v3802 = vand.u32 %v235, 4294901760
    %v3803 = vsub.f32 %v235, %v3802
    %v3804 = vand.u32 %v3803, 4294901760
    %3805 = vmatpush1.msra.mxu0 %v3804
    %v3806 = vand.u32 %v250, 4294901760
    %v3807 = vsub.f32 %v250, %v3806
    %v3808 = vand.u32 %v3807, 4294901760
    %3809 = vmatprep.subr.mxu0 %v3808
    %v3810 = vand.u32 %v249, 4294901760
    %v3811 = vsub.f32 %v249, %v3810
    %v3812 = vand.u32 %v3811, 4294901760
    %3813 = vmatpush1.msra.mxu0 %v3812
    %v3814 = vand.u32 %v372, 4294901760
    %v3815 = vsub.f32 %v372, %v3814
    %v3816 = vand.u32 %v3815, 4294901760
    %3817 = vmatprep.subr.mxu0 %v3816
    %v3818 = vand.u32 %v369, 4294901760
    %v3819 = vsub.f32 %v369, %v3818
    %v3820 = vand.u32 %v3819, 4294901760
    %3821 = vmatpush1.msra.mxu0 %v3820
    %3822 = vmatprep.subr.mxu0 0.0
    %3823 = vmatpush1.msra.mxu0 0.0
    %3824 = vmatprep.subr.mxu0 0.0
    %3825 = vmatpush1.msra.mxu0 0.0
    %3826 = vmatprep.subr.mxu0 0.0
    %3827 = vmatpush1.msra.mxu0 0.0
    %3828 = vmatprep.subr.mxu0 0.0
    %3829 = vmatpush1.msra.mxu0 0.0
    %3830 = vmatprep.subr.mxu0 0.0
    %3831 = vmatpush1.msra.mxu0 0.0
    %3832 = vmatprep.subr.mxu0 0.0
    %3833 = vmatpush1.msra.mxu0 0.0
    %3834 = vmatprep.subr.mxu0 0.0
    %3835 = vmatpush1.msra.mxu0 0.0
    %3836 = vmatprep.subr.mxu0 0.0
    %3837 = vmatpush1.msra.mxu0 0.0
    %3838 = vmatprep.subr.mxu0 0.0
    %3839 = vmatpush1.msra.mxu0 0.0
    %3840 = vmatprep.subr.mxu0 0.0
    %3841 = vmatpush1.msra.mxu0 0.0
    %3842 = vmatprep.subr.mxu0 0.0
    %3843 = vmatpush1.msra.mxu0 0.0
    %3844 = vmatprep.subr.mxu0 0.0
    %3845 = vmatpush1.msra.mxu0 0.0
    %3846 = vmatprep.subr.mxu0 0.0
    %3847 = vmatpush1.msra.mxu0 0.0
    %3848 = vmatprep.subr.mxu0 0.0
    %3849 = vmatpush1.msra.mxu0 0.0
    %3850 = vmatprep.subr.mxu0 0.0
    %3851 = vmatpush1.msra.mxu0 0.0
    %v3852 = vand.u32 %v347, 4294901760
    %3853 = vmatprep.mubr.f32.mxu0 %v3852
    %v3854 = vand.u32 %v343, 4294901760
    %3855 = vmatmul.mubr.f32.gmra.mrb[0].mxu0 %v3854
    %v3856 = vpop.f32.mrb[0].mxu0
    %v3857 = vadd.f32 %v3682, %v3856
    %v3858 = vpop.f32.mrb[0].mxu0
    %v3859 = vadd.f32 %v3684, %v3858
    %3860 = vdwg.mxu0
    %v3861 = vand.u32 %v40, 4294901760
    %3862 = vmatprep.subr.mxu0 %v3861
    %v3863 = vand.u32 %v39, 4294901760
    %3864 = vmatpush1.msra.mxu0 %v3863
    %v3865 = vand.u32 %v54, 4294901760
    %3866 = vmatprep.subr.mxu0 %v3865
    %v3867 = vand.u32 %v53, 4294901760
    %3868 = vmatpush1.msra.mxu0 %v3867
    %v3869 = vand.u32 %v68, 4294901760
    %3870 = vmatprep.subr.mxu0 %v3869
    %v3871 = vand.u32 %v67, 4294901760
    %3872 = vmatpush1.msra.mxu0 %v3871
    %v3873 = vand.u32 %v82, 4294901760
    %3874 = vmatprep.subr.mxu0 %v3873
    %v3875 = vand.u32 %v81, 4294901760
    %3876 = vmatpush1.msra.mxu0 %v3875
    %v3877 = vand.u32 %v96, 4294901760
    %3878 = vmatprep.subr.mxu0 %v3877
    %v3879 = vand.u32 %v95, 4294901760
    %3880 = vmatpush1.msra.mxu0 %v3879
    %v3881 = vand.u32 %v110, 4294901760
    %3882 = vmatprep.subr.mxu0 %v3881
    %v3883 = vand.u32 %v109, 4294901760
    %3884 = vmatpush1.msra.mxu0 %v3883
    %v3885 = vand.u32 %v124, 4294901760
    %3886 = vmatprep.subr.mxu0 %v3885
    %v3887 = vand.u32 %v123, 4294901760
    %3888 = vmatpush1.msra.mxu0 %v3887
    %v3889 = vand.u32 %v138, 4294901760
    %3890 = vmatprep.subr.mxu0 %v3889
    %v3891 = vand.u32 %v137, 4294901760
    %3892 = vmatpush1.msra.mxu0 %v3891
    %v3893 = vand.u32 %v152, 4294901760
    %3894 = vmatprep.subr.mxu0 %v3893
    %v3895 = vand.u32 %v151, 4294901760
    %3896 = vmatpush1.msra.mxu0 %v3895
    %v3897 = vand.u32 %v166, 4294901760
    %3898 = vmatprep.subr.mxu0 %v3897
    %v3899 = vand.u32 %v165, 4294901760
    %3900 = vmatpush1.msra.mxu0 %v3899
    %v3901 = vand.u32 %v180, 4294901760
    %3902 = vmatprep.subr.mxu0 %v3901
    %v3903 = vand.u32 %v179, 4294901760
    %3904 = vmatpush1.msra.mxu0 %v3903
    %v3905 = vand.u32 %v194, 4294901760
    %3906 = vmatprep.subr.mxu0 %v3905
    %v3907 = vand.u32 %v193, 4294901760
    %3908 = vmatpush1.msra.mxu0 %v3907
    %v3909 = vand.u32 %v208, 4294901760
    %3910 = vmatprep.subr.mxu0 %v3909
    %v3911 = vand.u32 %v207, 4294901760
    %3912 = vmatpush1.msra.mxu0 %v3911
    %v3913 = vand.u32 %v222, 4294901760
    %3914 = vmatprep.subr.mxu0 %v3913
    %v3915 = vand.u32 %v221, 4294901760
    %3916 = vmatpush1.msra.mxu0 %v3915
    %v3917 = vand.u32 %v236, 4294901760
    %3918 = vmatprep.subr.mxu0 %v3917
    %v3919 = vand.u32 %v235, 4294901760
    %3920 = vmatpush1.msra.mxu0 %v3919
    %v3921 = vand.u32 %v250, 4294901760
    %3922 = vmatprep.subr.mxu0 %v3921
    %v3923 = vand.u32 %v249, 4294901760
    %3924 = vmatpush1.msra.mxu0 %v3923
    %v3925 = vand.u32 %v372, 4294901760
    %3926 = vmatprep.subr.mxu0 %v3925
    %v3927 = vand.u32 %v369, 4294901760
    %3928 = vmatpush1.msra.mxu0 %v3927
    %3929 = vmatprep.subr.mxu0 0.0
    %3930 = vmatpush1.msra.mxu0 0.0
    %3931 = vmatprep.subr.mxu0 0.0
    %3932 = vmatpush1.msra.mxu0 0.0
    %3933 = vmatprep.subr.mxu0 0.0
    %3934 = vmatpush1.msra.mxu0 0.0
    %3935 = vmatprep.subr.mxu0 0.0
    %3936 = vmatpush1.msra.mxu0 0.0
    %3937 = vmatprep.subr.mxu0 0.0
    %3938 = vmatpush1.msra.mxu0 0.0
    %3939 = vmatprep.subr.mxu0 0.0
    %3940 = vmatpush1.msra.mxu0 0.0
    %3941 = vmatprep.subr.mxu0 0.0
    %3942 = vmatpush1.msra.mxu0 0.0
    %3943 = vmatprep.subr.mxu0 0.0
    %3944 = vmatpush1.msra.mxu0 0.0
    %3945 = vmatprep.subr.mxu0 0.0
    %3946 = vmatpush1.msra.mxu0 0.0
    %3947 = vmatprep.subr.mxu0 0.0
    %3948 = vmatpush1.msra.mxu0 0.0
    %3949 = vmatprep.subr.mxu0 0.0
    %3950 = vmatpush1.msra.mxu0 0.0
    %3951 = vmatprep.subr.mxu0 0.0
    %3952 = vmatpush1.msra.mxu0 0.0
    %3953 = vmatprep.subr.mxu0 0.0
    %3954 = vmatpush1.msra.mxu0 0.0
    %3955 = vmatprep.subr.mxu0 0.0
    %3956 = vmatpush1.msra.mxu0 0.0
    %3957 = vmatprep.subr.mxu0 0.0
    %3958 = vmatpush1.msra.mxu0 0.0
    %v3959 = vand.u32 %v347, 4294901760
    %3960 = vmatprep.mubr.f32.mxu0 %v3959
    %v3961 = vand.u32 %v343, 4294901760
    %3962 = vmatmul.mubr.f32.gmra.mrb[0].mxu0 %v3961
    %v3963 = vpop.f32.mrb[0].mxu0
    %v3964 = vadd.f32 %v3857, %v3963
    %v3965 = vpop.f32.mrb[0].mxu0
    %v3966 = vadd.f32 %v3859, %v3965
    %3967 = vdwg.mxu0
    %v3968 = vand.u32 %v42, 4294901760
    %3969 = vmatprep.subr.mxu0 %v3968
    %v3970 = vand.u32 %v41, 4294901760
    %3971 = vmatpush1.msra.mxu0 %v3970
    %v3972 = vand.u32 %v56, 4294901760
    %3973 = vmatprep.subr.mxu0 %v3972
    %v3974 = vand.u32 %v55, 4294901760
    %3975 = vmatpush1.msra.mxu0 %v3974
    %v3976 = vand.u32 %v70, 4294901760
    %3977 = vmatprep.subr.mxu0 %v3976
    %v3978 = vand.u32 %v69, 4294901760
    %3979 = vmatpush1.msra.mxu0 %v3978
    %v3980 = vand.u32 %v84, 4294901760
    %3981 = vmatprep.subr.mxu0 %v3980
    %v3982 = vand.u32 %v83, 4294901760
    %3983 = vmatpush1.msra.mxu0 %v3982
    %v3984 = vand.u32 %v98, 4294901760
    %3985 = vmatprep.subr.mxu0 %v3984
    %v3986 = vand.u32 %v97, 4294901760
    %3987 = vmatpush1.msra.mxu0 %v3986
    %v3988 = vand.u32 %v112, 4294901760
    %3989 = vmatprep.subr.mxu0 %v3988
    %v3990 = vand.u32 %v111, 4294901760
    %3991 = vmatpush1.msra.mxu0 %v3990
    %v3992 = vand.u32 %v126, 4294901760
    %3993 = vmatprep.subr.mxu0 %v3992
    %v3994 = vand.u32 %v125, 4294901760
    %3995 = vmatpush1.msra.mxu0 %v3994
    %v3996 = vand.u32 %v140, 4294901760
    %3997 = vmatprep.subr.mxu0 %v3996
    %v3998 = vand.u32 %v139, 4294901760
    %3999 = vmatpush1.msra.mxu0 %v3998
    %v4000 = vand.u32 %v154, 4294901760
    %4001 = vmatprep.subr.mxu0 %v4000
    %v4002 = vand.u32 %v153, 4294901760
    %4003 = vmatpush1.msra.mxu0 %v4002
    %v4004 = vand.u32 %v168, 4294901760
    %4005 = vmatprep.subr.mxu0 %v4004
    %v4006 = vand.u32 %v167, 4294901760
    %4007 = vmatpush1.msra.mxu0 %v4006
    %v4008 = vand.u32 %v182, 4294901760
    %4009 = vmatprep.subr.mxu0 %v4008
    %v4010 = vand.u32 %v181, 4294901760
    %4011 = vmatpush1.msra.mxu0 %v4010
    %v4012 = vand.u32 %v196, 4294901760
    %4013 = vmatprep.subr.mxu0 %v4012
    %v4014 = vand.u32 %v195, 4294901760
    %4015 = vmatpush1.msra.mxu0 %v4014
    %v4016 = vand.u32 %v210, 4294901760
    %4017 = vmatprep.subr.mxu0 %v4016
    %v4018 = vand.u32 %v209, 4294901760
    %4019 = vmatpush1.msra.mxu0 %v4018
    %v4020 = vand.u32 %v224, 4294901760
    %4021 = vmatprep.subr.mxu0 %v4020
    %v4022 = vand.u32 %v223, 4294901760
    %4023 = vmatpush1.msra.mxu0 %v4022
    %v4024 = vand.u32 %v238, 4294901760
    %4025 = vmatprep.subr.mxu0 %v4024
    %v4026 = vand.u32 %v237, 4294901760
    %4027 = vmatpush1.msra.mxu0 %v4026
    %v4028 = vand.u32 %v252, 4294901760
    %4029 = vmatprep.subr.mxu0 %v4028
    %v4030 = vand.u32 %v251, 4294901760
    %4031 = vmatpush1.msra.mxu0 %v4030
    %v4032 = vand.u32 %v378, 4294901760
    %4033 = vmatprep.subr.mxu0 %v4032
    %v4034 = vand.u32 %v375, 4294901760
    %4035 = vmatpush1.msra.mxu0 %v4034
    %4036 = vmatprep.subr.mxu0 0.0
    %4037 = vmatpush1.msra.mxu0 0.0
    %4038 = vmatprep.subr.mxu0 0.0
    %4039 = vmatpush1.msra.mxu0 0.0
    %4040 = vmatprep.subr.mxu0 0.0
    %4041 = vmatpush1.msra.mxu0 0.0
    %4042 = vmatprep.subr.mxu0 0.0
    %4043 = vmatpush1.msra.mxu0 0.0
    %4044 = vmatprep.subr.mxu0 0.0
    %4045 = vmatpush1.msra.mxu0 0.0
    %4046 = vmatprep.subr.mxu0 0.0
    %4047 = vmatpush1.msra.mxu0 0.0
    %4048 = vmatprep.subr.mxu0 0.0
    %4049 = vmatpush1.msra.mxu0 0.0
    %4050 = vmatprep.subr.mxu0 0.0
    %4051 = vmatpush1.msra.mxu0 0.0
    %4052 = vmatprep.subr.mxu0 0.0
    %4053 = vmatpush1.msra.mxu0 0.0
    %4054 = vmatprep.subr.mxu0 0.0
    %4055 = vmatpush1.msra.mxu0 0.0
    %4056 = vmatprep.subr.mxu0 0.0
    %4057 = vmatpush1.msra.mxu0 0.0
    %4058 = vmatprep.subr.mxu0 0.0
    %4059 = vmatpush1.msra.mxu0 0.0
    %4060 = vmatprep.subr.mxu0 0.0
    %4061 = vmatpush1.msra.mxu0 0.0
    %4062 = vmatprep.subr.mxu0 0.0
    %4063 = vmatpush1.msra.mxu0 0.0
    %4064 = vmatprep.subr.mxu0 0.0
    %4065 = vmatpush1.msra.mxu0 0.0
    %v4066 = vand.u32 %v347, 4294901760
    %v4067 = vsub.f32 %v347, %v4066
    %v4068 = vand.u32 %v4067, 4294901760
    %v4069 = vsub.f32 %v4067, %v4068
    %v4070 = vand.u32 %v4069, 4294901760
    %4071 = vmatprep.mubr.f32.mxu0 %v4070
    %v4072 = vand.u32 %v343, 4294901760
    %v4073 = vsub.f32 %v343, %v4072
    %v4074 = vand.u32 %v4073, 4294901760
    %v4075 = vsub.f32 %v4073, %v4074
    %v4076 = vand.u32 %v4075, 4294901760
    %4077 = vmatmul.mubr.f32.gmra.mrb[0].mxu0 %v4076
    %v4078 = vpop.f32.mrb[0].mxu0
    %v4079 = vadd.f32 0.0, %v4078
    %v4080 = vpop.f32.mrb[0].mxu0
    %v4081 = vadd.f32 0.0, %v4080
    %4082 = vdwg.mxu0
    %v4083 = vand.u32 %v42, 4294901760
    %v4084 = vsub.f32 %v42, %v4083
    %v4085 = vand.u32 %v4084, 4294901760
    %v4086 = vsub.f32 %v4084, %v4085
    %v4087 = vand.u32 %v4086, 4294901760
    %4088 = vmatprep.subr.mxu0 %v4087
    %v4089 = vand.u32 %v41, 4294901760
    %v4090 = vsub.f32 %v41, %v4089
    %v4091 = vand.u32 %v4090, 4294901760
    %v4092 = vsub.f32 %v4090, %v4091
    %v4093 = vand.u32 %v4092, 4294901760
    %4094 = vmatpush1.msra.mxu0 %v4093
    %v4095 = vand.u32 %v56, 4294901760
    %v4096 = vsub.f32 %v56, %v4095
    %v4097 = vand.u32 %v4096, 4294901760
    %v4098 = vsub.f32 %v4096, %v4097
    %v4099 = vand.u32 %v4098, 4294901760
    %4100 = vmatprep.subr.mxu0 %v4099
    %v4101 = vand.u32 %v55, 4294901760
    %v4102 = vsub.f32 %v55, %v4101
    %v4103 = vand.u32 %v4102, 4294901760
    %v4104 = vsub.f32 %v4102, %v4103
    %v4105 = vand.u32 %v4104, 4294901760
    %4106 = vmatpush1.msra.mxu0 %v4105
    %v4107 = vand.u32 %v70, 4294901760
    %v4108 = vsub.f32 %v70, %v4107
    %v4109 = vand.u32 %v4108, 4294901760
    %v4110 = vsub.f32 %v4108, %v4109
    %v4111 = vand.u32 %v4110, 4294901760
    %4112 = vmatprep.subr.mxu0 %v4111
    %v4113 = vand.u32 %v69, 4294901760
    %v4114 = vsub.f32 %v69, %v4113
    %v4115 = vand.u32 %v4114, 4294901760
    %v4116 = vsub.f32 %v4114, %v4115
    %v4117 = vand.u32 %v4116, 4294901760
    %4118 = vmatpush1.msra.mxu0 %v4117
    %v4119 = vand.u32 %v84, 4294901760
    %v4120 = vsub.f32 %v84, %v4119
    %v4121 = vand.u32 %v4120, 4294901760
    %v4122 = vsub.f32 %v4120, %v4121
    %v4123 = vand.u32 %v4122, 4294901760
    %4124 = vmatprep.subr.mxu0 %v4123
    %v4125 = vand.u32 %v83, 4294901760
    %v4126 = vsub.f32 %v83, %v4125
    %v4127 = vand.u32 %v4126, 4294901760
    %v4128 = vsub.f32 %v4126, %v4127
    %v4129 = vand.u32 %v4128, 4294901760
    %4130 = vmatpush1.msra.mxu0 %v4129
    %v4131 = vand.u32 %v98, 4294901760
    %v4132 = vsub.f32 %v98, %v4131
    %v4133 = vand.u32 %v4132, 4294901760
    %v4134 = vsub.f32 %v4132, %v4133
    %v4135 = vand.u32 %v4134, 4294901760
    %4136 = vmatprep.subr.mxu0 %v4135
    %v4137 = vand.u32 %v97, 4294901760
    %v4138 = vsub.f32 %v97, %v4137
    %v4139 = vand.u32 %v4138, 4294901760
    %v4140 = vsub.f32 %v4138, %v4139
    %v4141 = vand.u32 %v4140, 4294901760
    %4142 = vmatpush1.msra.mxu0 %v4141
    %v4143 = vand.u32 %v112, 4294901760
    %v4144 = vsub.f32 %v112, %v4143
    %v4145 = vand.u32 %v4144, 4294901760
    %v4146 = vsub.f32 %v4144, %v4145
    %v4147 = vand.u32 %v4146, 4294901760
    %4148 = vmatprep.subr.mxu0 %v4147
    %v4149 = vand.u32 %v111, 4294901760
    %v4150 = vsub.f32 %v111, %v4149
    %v4151 = vand.u32 %v4150, 4294901760
    %v4152 = vsub.f32 %v4150, %v4151
    %v4153 = vand.u32 %v4152, 4294901760
    %4154 = vmatpush1.msra.mxu0 %v4153
    %v4155 = vand.u32 %v126, 4294901760
    %v4156 = vsub.f32 %v126, %v4155
    %v4157 = vand.u32 %v4156, 4294901760
    %v4158 = vsub.f32 %v4156, %v4157
    %v4159 = vand.u32 %v4158, 4294901760
    %4160 = vmatprep.subr.mxu0 %v4159
    %v4161 = vand.u32 %v125, 4294901760
    %v4162 = vsub.f32 %v125, %v4161
    %v4163 = vand.u32 %v4162, 4294901760
    %v4164 = vsub.f32 %v4162, %v4163
    %v4165 = vand.u32 %v4164, 4294901760
    %4166 = vmatpush1.msra.mxu0 %v4165
    %v4167 = vand.u32 %v140, 4294901760
    %v4168 = vsub.f32 %v140, %v4167
    %v4169 = vand.u32 %v4168, 4294901760
    %v4170 = vsub.f32 %v4168, %v4169
    %v4171 = vand.u32 %v4170, 4294901760
    %4172 = vmatprep.subr.mxu0 %v4171
    %v4173 = vand.u32 %v139, 4294901760
    %v4174 = vsub.f32 %v139, %v4173
    %v4175 = vand.u32 %v4174, 4294901760
    %v4176 = vsub.f32 %v4174, %v4175
    %v4177 = vand.u32 %v4176, 4294901760
    %4178 = vmatpush1.msra.mxu0 %v4177
    %v4179 = vand.u32 %v154, 4294901760
    %v4180 = vsub.f32 %v154, %v4179
    %v4181 = vand.u32 %v4180, 4294901760
    %v4182 = vsub.f32 %v4180, %v4181
    %v4183 = vand.u32 %v4182, 4294901760
    %4184 = vmatprep.subr.mxu0 %v4183
    %v4185 = vand.u32 %v153, 4294901760
    %v4186 = vsub.f32 %v153, %v4185
    %v4187 = vand.u32 %v4186, 4294901760
    %v4188 = vsub.f32 %v4186, %v4187
    %v4189 = vand.u32 %v4188, 4294901760
    %4190 = vmatpush1.msra.mxu0 %v4189
    %v4191 = vand.u32 %v168, 4294901760
    %v4192 = vsub.f32 %v168, %v4191
    %v4193 = vand.u32 %v4192, 4294901760
    %v4194 = vsub.f32 %v4192, %v4193
    %v4195 = vand.u32 %v4194, 4294901760
    %4196 = vmatprep.subr.mxu0 %v4195
    %v4197 = vand.u32 %v167, 4294901760
    %v4198 = vsub.f32 %v167, %v4197
    %v4199 = vand.u32 %v4198, 4294901760
    %v4200 = vsub.f32 %v4198, %v4199
    %v4201 = vand.u32 %v4200, 4294901760
    %4202 = vmatpush1.msra.mxu0 %v4201
    %v4203 = vand.u32 %v182, 4294901760
    %v4204 = vsub.f32 %v182, %v4203
    %v4205 = vand.u32 %v4204, 4294901760
    %v4206 = vsub.f32 %v4204, %v4205
    %v4207 = vand.u32 %v4206, 4294901760
    %4208 = vmatprep.subr.mxu0 %v4207
    %v4209 = vand.u32 %v181, 4294901760
    %v4210 = vsub.f32 %v181, %v4209
    %v4211 = vand.u32 %v4210, 4294901760
    %v4212 = vsub.f32 %v4210, %v4211
    %v4213 = vand.u32 %v4212, 4294901760
    %4214 = vmatpush1.msra.mxu0 %v4213
    %v4215 = vand.u32 %v196, 4294901760
    %v4216 = vsub.f32 %v196, %v4215
    %v4217 = vand.u32 %v4216, 4294901760
    %v4218 = vsub.f32 %v4216, %v4217
    %v4219 = vand.u32 %v4218, 4294901760
    %4220 = vmatprep.subr.mxu0 %v4219
    %v4221 = vand.u32 %v195, 4294901760
    %v4222 = vsub.f32 %v195, %v4221
    %v4223 = vand.u32 %v4222, 4294901760
    %v4224 = vsub.f32 %v4222, %v4223
    %v4225 = vand.u32 %v4224, 4294901760
    %4226 = vmatpush1.msra.mxu0 %v4225
    %v4227 = vand.u32 %v210, 4294901760
    %v4228 = vsub.f32 %v210, %v4227
    %v4229 = vand.u32 %v4228, 4294901760
    %v4230 = vsub.f32 %v4228, %v4229
    %v4231 = vand.u32 %v4230, 4294901760
    %4232 = vmatprep.subr.mxu0 %v4231
    %v4233 = vand.u32 %v209, 4294901760
    %v4234 = vsub.f32 %v209, %v4233
    %v4235 = vand.u32 %v4234, 4294901760
    %v4236 = vsub.f32 %v4234, %v4235
    %v4237 = vand.u32 %v4236, 4294901760
    %4238 = vmatpush1.msra.mxu0 %v4237
    %v4239 = vand.u32 %v224, 4294901760
    %v4240 = vsub.f32 %v224, %v4239
    %v4241 = vand.u32 %v4240, 4294901760
    %v4242 = vsub.f32 %v4240, %v4241
    %v4243 = vand.u32 %v4242, 4294901760
    %4244 = vmatprep.subr.mxu0 %v4243
    %v4245 = vand.u32 %v223, 4294901760
    %v4246 = vsub.f32 %v223, %v4245
    %v4247 = vand.u32 %v4246, 4294901760
    %v4248 = vsub.f32 %v4246, %v4247
    %v4249 = vand.u32 %v4248, 4294901760
    %4250 = vmatpush1.msra.mxu0 %v4249
    %v4251 = vand.u32 %v238, 4294901760
    %v4252 = vsub.f32 %v238, %v4251
    %v4253 = vand.u32 %v4252, 4294901760
    %v4254 = vsub.f32 %v4252, %v4253
    %v4255 = vand.u32 %v4254, 4294901760
    %4256 = vmatprep.subr.mxu0 %v4255
    %v4257 = vand.u32 %v237, 4294901760
    %v4258 = vsub.f32 %v237, %v4257
    %v4259 = vand.u32 %v4258, 4294901760
    %v4260 = vsub.f32 %v4258, %v4259
    %v4261 = vand.u32 %v4260, 4294901760
    %4262 = vmatpush1.msra.mxu0 %v4261
    %v4263 = vand.u32 %v252, 4294901760
    %v4264 = vsub.f32 %v252, %v4263
    %v4265 = vand.u32 %v4264, 4294901760
    %v4266 = vsub.f32 %v4264, %v4265
    %v4267 = vand.u32 %v4266, 4294901760
    %4268 = vmatprep.subr.mxu0 %v4267
    %v4269 = vand.u32 %v251, 4294901760
    %v4270 = vsub.f32 %v251, %v4269
    %v4271 = vand.u32 %v4270, 4294901760
    %v4272 = vsub.f32 %v4270, %v4271
    %v4273 = vand.u32 %v4272, 4294901760
    %4274 = vmatpush1.msra.mxu0 %v4273
    %v4275 = vand.u32 %v378, 4294901760
    %v4276 = vsub.f32 %v378, %v4275
    %v4277 = vand.u32 %v4276, 4294901760
    %v4278 = vsub.f32 %v4276, %v4277
    %v4279 = vand.u32 %v4278, 4294901760
    %4280 = vmatprep.subr.mxu0 %v4279
    %v4281 = vand.u32 %v375, 4294901760
    %v4282 = vsub.f32 %v375, %v4281
    %v4283 = vand.u32 %v4282, 4294901760
    %v4284 = vsub.f32 %v4282, %v4283
    %v4285 = vand.u32 %v4284, 4294901760
    %4286 = vmatpush1.msra.mxu0 %v4285
    %4287 = vmatprep.subr.mxu0 0.0
    %4288 = vmatpush1.msra.mxu0 0.0
    %4289 = vmatprep.subr.mxu0 0.0
    %4290 = vmatpush1.msra.mxu0 0.0
    %4291 = vmatprep.subr.mxu0 0.0
    %4292 = vmatpush1.msra.mxu0 0.0
    %4293 = vmatprep.subr.mxu0 0.0
    %4294 = vmatpush1.msra.mxu0 0.0
    %4295 = vmatprep.subr.mxu0 0.0
    %4296 = vmatpush1.msra.mxu0 0.0
    %4297 = vmatprep.subr.mxu0 0.0
    %4298 = vmatpush1.msra.mxu0 0.0
    %4299 = vmatprep.subr.mxu0 0.0
    %4300 = vmatpush1.msra.mxu0 0.0
    %4301 = vmatprep.subr.mxu0 0.0
    %4302 = vmatpush1.msra.mxu0 0.0
    %4303 = vmatprep.subr.mxu0 0.0
    %4304 = vmatpush1.msra.mxu0 0.0
    %4305 = vmatprep.subr.mxu0 0.0
    %4306 = vmatpush1.msra.mxu0 0.0
    %4307 = vmatprep.subr.mxu0 0.0
    %4308 = vmatpush1.msra.mxu0 0.0
    %4309 = vmatprep.subr.mxu0 0.0
    %4310 = vmatpush1.msra.mxu0 0.0
    %4311 = vmatprep.subr.mxu0 0.0
    %4312 = vmatpush1.msra.mxu0 0.0
    %4313 = vmatprep.subr.mxu0 0.0
    %4314 = vmatpush1.msra.mxu0 0.0
    %4315 = vmatprep.subr.mxu0 0.0
    %4316 = vmatpush1.msra.mxu0 0.0
    %v4317 = vand.u32 %v347, 4294901760
    %4318 = vmatprep.mubr.f32.mxu0 %v4317
    %v4319 = vand.u32 %v343, 4294901760
    %4320 = vmatmul.mubr.f32.gmra.mrb[0].mxu0 %v4319
    %v4321 = vpop.f32.mrb[0].mxu0
    %v4322 = vadd.f32 %v4079, %v4321
    %v4323 = vpop.f32.mrb[0].mxu0
    %v4324 = vadd.f32 %v4081, %v4323
    %4325 = vdwg.mxu0
    %v4326 = vand.u32 %v42, 4294901760
    %v4327 = vsub.f32 %v42, %v4326
    %4328 = vmatprep.subr.mxu0 %v4327
    %v4329 = vand.u32 %v41, 4294901760
    %v4330 = vsub.f32 %v41, %v4329
    %4331 = vmatpush1.msra.mxu0 %v4330
    %v4332 = vand.u32 %v56, 4294901760
    %v4333 = vsub.f32 %v56, %v4332
    %4334 = vmatprep.subr.mxu0 %v4333
    %v4335 = vand.u32 %v55, 4294901760
    %v4336 = vsub.f32 %v55, %v4335
    %4337 = vmatpush1.msra.mxu0 %v4336
    %v4338 = vand.u32 %v70, 4294901760
    %v4339 = vsub.f32 %v70, %v4338
    %4340 = vmatprep.subr.mxu0 %v4339
    %v4341 = vand.u32 %v69, 4294901760
    %v4342 = vsub.f32 %v69, %v4341
    %4343 = vmatpush1.msra.mxu0 %v4342
    %v4344 = vand.u32 %v84, 4294901760
    %v4345 = vsub.f32 %v84, %v4344
    %4346 = vmatprep.subr.mxu0 %v4345
    %v4347 = vand.u32 %v83, 4294901760
    %v4348 = vsub.f32 %v83, %v4347
    %4349 = vmatpush1.msra.mxu0 %v4348
    %v4350 = vand.u32 %v98, 4294901760
    %v4351 = vsub.f32 %v98, %v4350
    %4352 = vmatprep.subr.mxu0 %v4351
    %v4353 = vand.u32 %v97, 4294901760
    %v4354 = vsub.f32 %v97, %v4353
    %4355 = vmatpush1.msra.mxu0 %v4354
    %v4356 = vand.u32 %v112, 4294901760
    %v4357 = vsub.f32 %v112, %v4356
    %4358 = vmatprep.subr.mxu0 %v4357
    %v4359 = vand.u32 %v111, 4294901760
    %v4360 = vsub.f32 %v111, %v4359
    %4361 = vmatpush1.msra.mxu0 %v4360
    %v4362 = vand.u32 %v126, 4294901760
    %v4363 = vsub.f32 %v126, %v4362
    %4364 = vmatprep.subr.mxu0 %v4363
    %v4365 = vand.u32 %v125, 4294901760
    %v4366 = vsub.f32 %v125, %v4365
    %4367 = vmatpush1.msra.mxu0 %v4366
    %v4368 = vand.u32 %v140, 4294901760
    %v4369 = vsub.f32 %v140, %v4368
    %4370 = vmatprep.subr.mxu0 %v4369
    %v4371 = vand.u32 %v139, 4294901760
    %v4372 = vsub.f32 %v139, %v4371
    %4373 = vmatpush1.msra.mxu0 %v4372
    %v4374 = vand.u32 %v154, 4294901760
    %v4375 = vsub.f32 %v154, %v4374
    %4376 = vmatprep.subr.mxu0 %v4375
    %v4377 = vand.u32 %v153, 4294901760
    %v4378 = vsub.f32 %v153, %v4377
    %4379 = vmatpush1.msra.mxu0 %v4378
    %v4380 = vand.u32 %v168, 4294901760
    %v4381 = vsub.f32 %v168, %v4380
    %4382 = vmatprep.subr.mxu0 %v4381
    %v4383 = vand.u32 %v167, 4294901760
    %v4384 = vsub.f32 %v167, %v4383
    %4385 = vmatpush1.msra.mxu0 %v4384
    %v4386 = vand.u32 %v182, 4294901760
    %v4387 = vsub.f32 %v182, %v4386
    %4388 = vmatprep.subr.mxu0 %v4387
    %v4389 = vand.u32 %v181, 4294901760
    %v4390 = vsub.f32 %v181, %v4389
    %4391 = vmatpush1.msra.mxu0 %v4390
    %v4392 = vand.u32 %v196, 4294901760
    %v4393 = vsub.f32 %v196, %v4392
    %4394 = vmatprep.subr.mxu0 %v4393
    %v4395 = vand.u32 %v195, 4294901760
    %v4396 = vsub.f32 %v195, %v4395
    %4397 = vmatpush1.msra.mxu0 %v4396
    %v4398 = vand.u32 %v210, 4294901760
    %v4399 = vsub.f32 %v210, %v4398
    %4400 = vmatprep.subr.mxu0 %v4399
    %v4401 = vand.u32 %v209, 4294901760
    %v4402 = vsub.f32 %v209, %v4401
    %4403 = vmatpush1.msra.mxu0 %v4402
    %v4404 = vand.u32 %v224, 4294901760
    %v4405 = vsub.f32 %v224, %v4404
    %4406 = vmatprep.subr.mxu0 %v4405
    %v4407 = vand.u32 %v223, 4294901760
    %v4408 = vsub.f32 %v223, %v4407
    %4409 = vmatpush1.msra.mxu0 %v4408
    %v4410 = vand.u32 %v238, 4294901760
    %v4411 = vsub.f32 %v238, %v4410
    %4412 = vmatprep.subr.mxu0 %v4411
    %v4413 = vand.u32 %v237, 4294901760
    %v4414 = vsub.f32 %v237, %v4413
    %4415 = vmatpush1.msra.mxu0 %v4414
    %v4416 = vand.u32 %v252, 4294901760
    %v4417 = vsub.f32 %v252, %v4416
    %4418 = vmatprep.subr.mxu0 %v4417
    %v4419 = vand.u32 %v251, 4294901760
    %v4420 = vsub.f32 %v251, %v4419
    %4421 = vmatpush1.msra.mxu0 %v4420
    %v4422 = vand.u32 %v378, 4294901760
    %v4423 = vsub.f32 %v378, %v4422
    %4424 = vmatprep.subr.mxu0 %v4423
    %v4425 = vand.u32 %v375, 4294901760
    %v4426 = vsub.f32 %v375, %v4425
    %4427 = vmatpush1.msra.mxu0 %v4426
    %4428 = vmatprep.subr.mxu0 0.0
    %4429 = vmatpush1.msra.mxu0 0.0
    %4430 = vmatprep.subr.mxu0 0.0
    %4431 = vmatpush1.msra.mxu0 0.0
    %4432 = vmatprep.subr.mxu0 0.0
    %4433 = vmatpush1.msra.mxu0 0.0
    %4434 = vmatprep.subr.mxu0 0.0
    %4435 = vmatpush1.msra.mxu0 0.0
    %4436 = vmatprep.subr.mxu0 0.0
    %4437 = vmatpush1.msra.mxu0 0.0
    %4438 = vmatprep.subr.mxu0 0.0
    %4439 = vmatpush1.msra.mxu0 0.0
    %4440 = vmatprep.subr.mxu0 0.0
    %4441 = vmatpush1.msra.mxu0 0.0
    %4442 = vmatprep.subr.mxu0 0.0
    %4443 = vmatpush1.msra.mxu0 0.0
    %4444 = vmatprep.subr.mxu0 0.0
    %4445 = vmatpush1.msra.mxu0 0.0
    %4446 = vmatprep.subr.mxu0 0.0
    %4447 = vmatpush1.msra.mxu0 0.0
    %4448 = vmatprep.subr.mxu0 0.0
    %4449 = vmatpush1.msra.mxu0 0.0
    %4450 = vmatprep.subr.mxu0 0.0
    %4451 = vmatpush1.msra.mxu0 0.0
    %4452 = vmatprep.subr.mxu0 0.0
    %4453 = vmatpush1.msra.mxu0 0.0
    %4454 = vmatprep.subr.mxu0 0.0
    %4455 = vmatpush1.msra.mxu0 0.0
    %4456 = vmatprep.subr.mxu0 0.0
    %4457 = vmatpush1.msra.mxu0 0.0
    %v4458 = vand.u32 %v347, 4294901760
    %v4459 = vsub.f32 %v347, %v4458
    %4460 = vmatprep.mubr.f32.mxu0 %v4459
    %v4461 = vand.u32 %v343, 4294901760
    %v4462 = vsub.f32 %v343, %v4461
    %4463 = vmatmul.mubr.f32.gmra.mrb[0].mxu0 %v4462
    %v4464 = vpop.f32.mrb[0].mxu0
    %v4465 = vadd.f32 %v4322, %v4464
    %v4466 = vpop.f32.mrb[0].mxu0
    %v4467 = vadd.f32 %v4324, %v4466
    %4468 = vdwg.mxu0
    %v4469 = vand.u32 %v42, 4294901760
    %4470 = vmatprep.subr.mxu0 %v4469
    %v4471 = vand.u32 %v41, 4294901760
    %4472 = vmatpush1.msra.mxu0 %v4471
    %v4473 = vand.u32 %v56, 4294901760
    %4474 = vmatprep.subr.mxu0 %v4473
    %v4475 = vand.u32 %v55, 4294901760
    %4476 = vmatpush1.msra.mxu0 %v4475
    %v4477 = vand.u32 %v70, 4294901760
    %4478 = vmatprep.subr.mxu0 %v4477
    %v4479 = vand.u32 %v69, 4294901760
    %4480 = vmatpush1.msra.mxu0 %v4479
    %v4481 = vand.u32 %v84, 4294901760
    %4482 = vmatprep.subr.mxu0 %v4481
    %v4483 = vand.u32 %v83, 4294901760
    %4484 = vmatpush1.msra.mxu0 %v4483
    %v4485 = vand.u32 %v98, 4294901760
    %4486 = vmatprep.subr.mxu0 %v4485
    %v4487 = vand.u32 %v97, 4294901760
    %4488 = vmatpush1.msra.mxu0 %v4487
    %v4489 = vand.u32 %v112, 4294901760
    %4490 = vmatprep.subr.mxu0 %v4489
    %v4491 = vand.u32 %v111, 4294901760
    %4492 = vmatpush1.msra.mxu0 %v4491
    %v4493 = vand.u32 %v126, 4294901760
    %4494 = vmatprep.subr.mxu0 %v4493
    %v4495 = vand.u32 %v125, 4294901760
    %4496 = vmatpush1.msra.mxu0 %v4495
    %v4497 = vand.u32 %v140, 4294901760
    %4498 = vmatprep.subr.mxu0 %v4497
    %v4499 = vand.u32 %v139, 4294901760
    %4500 = vmatpush1.msra.mxu0 %v4499
    %v4501 = vand.u32 %v154, 4294901760
    %4502 = vmatprep.subr.mxu0 %v4501
    %v4503 = vand.u32 %v153, 4294901760
    %4504 = vmatpush1.msra.mxu0 %v4503
    %v4505 = vand.u32 %v168, 4294901760
    %4506 = vmatprep.subr.mxu0 %v4505
    %v4507 = vand.u32 %v167, 4294901760
    %4508 = vmatpush1.msra.mxu0 %v4507
    %v4509 = vand.u32 %v182, 4294901760
    %4510 = vmatprep.subr.mxu0 %v4509
    %v4511 = vand.u32 %v181, 4294901760
    %4512 = vmatpush1.msra.mxu0 %v4511
    %v4513 = vand.u32 %v196, 4294901760
    %4514 = vmatprep.subr.mxu0 %v4513
    %v4515 = vand.u32 %v195, 4294901760
    %4516 = vmatpush1.msra.mxu0 %v4515
    %v4517 = vand.u32 %v210, 4294901760
    %4518 = vmatprep.subr.mxu0 %v4517
    %v4519 = vand.u32 %v209, 4294901760
    %4520 = vmatpush1.msra.mxu0 %v4519
    %v4521 = vand.u32 %v224, 4294901760
    %4522 = vmatprep.subr.mxu0 %v4521
    %v4523 = vand.u32 %v223, 4294901760
    %4524 = vmatpush1.msra.mxu0 %v4523
    %v4525 = vand.u32 %v238, 4294901760
    %4526 = vmatprep.subr.mxu0 %v4525
    %v4527 = vand.u32 %v237, 4294901760
    %4528 = vmatpush1.msra.mxu0 %v4527
    %v4529 = vand.u32 %v252, 4294901760
    %4530 = vmatprep.subr.mxu0 %v4529
    %v4531 = vand.u32 %v251, 4294901760
    %4532 = vmatpush1.msra.mxu0 %v4531
    %v4533 = vand.u32 %v378, 4294901760
    %4534 = vmatprep.subr.mxu0 %v4533
    %v4535 = vand.u32 %v375, 4294901760
    %4536 = vmatpush1.msra.mxu0 %v4535
    %4537 = vmatprep.subr.mxu0 0.0
    %4538 = vmatpush1.msra.mxu0 0.0
    %4539 = vmatprep.subr.mxu0 0.0
    %4540 = vmatpush1.msra.mxu0 0.0
    %4541 = vmatprep.subr.mxu0 0.0
    %4542 = vmatpush1.msra.mxu0 0.0
    %4543 = vmatprep.subr.mxu0 0.0
    %4544 = vmatpush1.msra.mxu0 0.0
    %4545 = vmatprep.subr.mxu0 0.0
    %4546 = vmatpush1.msra.mxu0 0.0
    %4547 = vmatprep.subr.mxu0 0.0
    %4548 = vmatpush1.msra.mxu0 0.0
    %4549 = vmatprep.subr.mxu0 0.0
    %4550 = vmatpush1.msra.mxu0 0.0
    %4551 = vmatprep.subr.mxu0 0.0
    %4552 = vmatpush1.msra.mxu0 0.0
    %4553 = vmatprep.subr.mxu0 0.0
    %4554 = vmatpush1.msra.mxu0 0.0
    %4555 = vmatprep.subr.mxu0 0.0
    %4556 = vmatpush1.msra.mxu0 0.0
    %4557 = vmatprep.subr.mxu0 0.0
    %4558 = vmatpush1.msra.mxu0 0.0
    %4559 = vmatprep.subr.mxu0 0.0
    %4560 = vmatpush1.msra.mxu0 0.0
    %4561 = vmatprep.subr.mxu0 0.0
    %4562 = vmatpush1.msra.mxu0 0.0
    %4563 = vmatprep.subr.mxu0 0.0
    %4564 = vmatpush1.msra.mxu0 0.0
    %4565 = vmatprep.subr.mxu0 0.0
    %4566 = vmatpush1.msra.mxu0 0.0
    %v4567 = vand.u32 %v347, 4294901760
    %v4568 = vsub.f32 %v347, %v4567
    %v4569 = vand.u32 %v4568, 4294901760
    %4570 = vmatprep.mubr.f32.mxu0 %v4569
    %v4571 = vand.u32 %v343, 4294901760
    %v4572 = vsub.f32 %v343, %v4571
    %v4573 = vand.u32 %v4572, 4294901760
    %4574 = vmatmul.mubr.f32.gmra.mrb[0].mxu0 %v4573
    %v4575 = vpop.f32.mrb[0].mxu0
    %v4576 = vadd.f32 %v4465, %v4575
    %v4577 = vpop.f32.mrb[0].mxu0
    %v4578 = vadd.f32 %v4467, %v4577
    %4579 = vdwg.mxu0
    %v4580 = vand.u32 %v42, 4294901760
    %v4581 = vsub.f32 %v42, %v4580
    %v4582 = vand.u32 %v4581, 4294901760
    %4583 = vmatprep.subr.mxu0 %v4582
    %v4584 = vand.u32 %v41, 4294901760
    %v4585 = vsub.f32 %v41, %v4584
    %v4586 = vand.u32 %v4585, 4294901760
    %4587 = vmatpush1.msra.mxu0 %v4586
    %v4588 = vand.u32 %v56, 4294901760
    %v4589 = vsub.f32 %v56, %v4588
    %v4590 = vand.u32 %v4589, 4294901760
    %4591 = vmatprep.subr.mxu0 %v4590
    %v4592 = vand.u32 %v55, 4294901760
    %v4593 = vsub.f32 %v55, %v4592
    %v4594 = vand.u32 %v4593, 4294901760
    %4595 = vmatpush1.msra.mxu0 %v4594
    %v4596 = vand.u32 %v70, 4294901760
    %v4597 = vsub.f32 %v70, %v4596
    %v4598 = vand.u32 %v4597, 4294901760
    %4599 = vmatprep.subr.mxu0 %v4598
    %v4600 = vand.u32 %v69, 4294901760
    %v4601 = vsub.f32 %v69, %v4600
    %v4602 = vand.u32 %v4601, 4294901760
    %4603 = vmatpush1.msra.mxu0 %v4602
    %v4604 = vand.u32 %v84, 4294901760
    %v4605 = vsub.f32 %v84, %v4604
    %v4606 = vand.u32 %v4605, 4294901760
    %4607 = vmatprep.subr.mxu0 %v4606
    %v4608 = vand.u32 %v83, 4294901760
    %v4609 = vsub.f32 %v83, %v4608
    %v4610 = vand.u32 %v4609, 4294901760
    %4611 = vmatpush1.msra.mxu0 %v4610
    %v4612 = vand.u32 %v98, 4294901760
    %v4613 = vsub.f32 %v98, %v4612
    %v4614 = vand.u32 %v4613, 4294901760
    %4615 = vmatprep.subr.mxu0 %v4614
    %v4616 = vand.u32 %v97, 4294901760
    %v4617 = vsub.f32 %v97, %v4616
    %v4618 = vand.u32 %v4617, 4294901760
    %4619 = vmatpush1.msra.mxu0 %v4618
    %v4620 = vand.u32 %v112, 4294901760
    %v4621 = vsub.f32 %v112, %v4620
    %v4622 = vand.u32 %v4621, 4294901760
    %4623 = vmatprep.subr.mxu0 %v4622
    %v4624 = vand.u32 %v111, 4294901760
    %v4625 = vsub.f32 %v111, %v4624
    %v4626 = vand.u32 %v4625, 4294901760
    %4627 = vmatpush1.msra.mxu0 %v4626
    %v4628 = vand.u32 %v126, 4294901760
    %v4629 = vsub.f32 %v126, %v4628
    %v4630 = vand.u32 %v4629, 4294901760
    %4631 = vmatprep.subr.mxu0 %v4630
    %v4632 = vand.u32 %v125, 4294901760
    %v4633 = vsub.f32 %v125, %v4632
    %v4634 = vand.u32 %v4633, 4294901760
    %4635 = vmatpush1.msra.mxu0 %v4634
    %v4636 = vand.u32 %v140, 4294901760
    %v4637 = vsub.f32 %v140, %v4636
    %v4638 = vand.u32 %v4637, 4294901760
    %4639 = vmatprep.subr.mxu0 %v4638
    %v4640 = vand.u32 %v139, 4294901760
    %v4641 = vsub.f32 %v139, %v4640
    %v4642 = vand.u32 %v4641, 4294901760
    %4643 = vmatpush1.msra.mxu0 %v4642
    %v4644 = vand.u32 %v154, 4294901760
    %v4645 = vsub.f32 %v154, %v4644
    %v4646 = vand.u32 %v4645, 4294901760
    %4647 = vmatprep.subr.mxu0 %v4646
    %v4648 = vand.u32 %v153, 4294901760
    %v4649 = vsub.f32 %v153, %v4648
    %v4650 = vand.u32 %v4649, 4294901760
    %4651 = vmatpush1.msra.mxu0 %v4650
    %v4652 = vand.u32 %v168, 4294901760
    %v4653 = vsub.f32 %v168, %v4652
    %v4654 = vand.u32 %v4653, 4294901760
    %4655 = vmatprep.subr.mxu0 %v4654
    %v4656 = vand.u32 %v167, 4294901760
    %v4657 = vsub.f32 %v167, %v4656
    %v4658 = vand.u32 %v4657, 4294901760
    %4659 = vmatpush1.msra.mxu0 %v4658
    %v4660 = vand.u32 %v182, 4294901760
    %v4661 = vsub.f32 %v182, %v4660
    %v4662 = vand.u32 %v4661, 4294901760
    %4663 = vmatprep.subr.mxu0 %v4662
    %v4664 = vand.u32 %v181, 4294901760
    %v4665 = vsub.f32 %v181, %v4664
    %v4666 = vand.u32 %v4665, 4294901760
    %4667 = vmatpush1.msra.mxu0 %v4666
    %v4668 = vand.u32 %v196, 4294901760
    %v4669 = vsub.f32 %v196, %v4668
    %v4670 = vand.u32 %v4669, 4294901760
    %4671 = vmatprep.subr.mxu0 %v4670
    %v4672 = vand.u32 %v195, 4294901760
    %v4673 = vsub.f32 %v195, %v4672
    %v4674 = vand.u32 %v4673, 4294901760
    %4675 = vmatpush1.msra.mxu0 %v4674
    %v4676 = vand.u32 %v210, 4294901760
    %v4677 = vsub.f32 %v210, %v4676
    %v4678 = vand.u32 %v4677, 4294901760
    %4679 = vmatprep.subr.mxu0 %v4678
    %v4680 = vand.u32 %v209, 4294901760
    %v4681 = vsub.f32 %v209, %v4680
    %v4682 = vand.u32 %v4681, 4294901760
    %4683 = vmatpush1.msra.mxu0 %v4682
    %v4684 = vand.u32 %v224, 4294901760
    %v4685 = vsub.f32 %v224, %v4684
    %v4686 = vand.u32 %v4685, 4294901760
    %4687 = vmatprep.subr.mxu0 %v4686
    %v4688 = vand.u32 %v223, 4294901760
    %v4689 = vsub.f32 %v223, %v4688
    %v4690 = vand.u32 %v4689, 4294901760
    %4691 = vmatpush1.msra.mxu0 %v4690
    %v4692 = vand.u32 %v238, 4294901760
    %v4693 = vsub.f32 %v238, %v4692
    %v4694 = vand.u32 %v4693, 4294901760
    %4695 = vmatprep.subr.mxu0 %v4694
    %v4696 = vand.u32 %v237, 4294901760
    %v4697 = vsub.f32 %v237, %v4696
    %v4698 = vand.u32 %v4697, 4294901760
    %4699 = vmatpush1.msra.mxu0 %v4698
    %v4700 = vand.u32 %v252, 4294901760
    %v4701 = vsub.f32 %v252, %v4700
    %v4702 = vand.u32 %v4701, 4294901760
    %4703 = vmatprep.subr.mxu0 %v4702
    %v4704 = vand.u32 %v251, 4294901760
    %v4705 = vsub.f32 %v251, %v4704
    %v4706 = vand.u32 %v4705, 4294901760
    %4707 = vmatpush1.msra.mxu0 %v4706
    %v4708 = vand.u32 %v378, 4294901760
    %v4709 = vsub.f32 %v378, %v4708
    %v4710 = vand.u32 %v4709, 4294901760
    %4711 = vmatprep.subr.mxu0 %v4710
    %v4712 = vand.u32 %v375, 4294901760
    %v4713 = vsub.f32 %v375, %v4712
    %v4714 = vand.u32 %v4713, 4294901760
    %4715 = vmatpush1.msra.mxu0 %v4714
    %4716 = vmatprep.subr.mxu0 0.0
    %4717 = vmatpush1.msra.mxu0 0.0
    %4718 = vmatprep.subr.mxu0 0.0
    %4719 = vmatpush1.msra.mxu0 0.0
    %4720 = vmatprep.subr.mxu0 0.0
    %4721 = vmatpush1.msra.mxu0 0.0
    %4722 = vmatprep.subr.mxu0 0.0
    %4723 = vmatpush1.msra.mxu0 0.0
    %4724 = vmatprep.subr.mxu0 0.0
    %4725 = vmatpush1.msra.mxu0 0.0
    %4726 = vmatprep.subr.mxu0 0.0
    %4727 = vmatpush1.msra.mxu0 0.0
    %4728 = vmatprep.subr.mxu0 0.0
    %4729 = vmatpush1.msra.mxu0 0.0
    %4730 = vmatprep.subr.mxu0 0.0
    %4731 = vmatpush1.msra.mxu0 0.0
    %4732 = vmatprep.subr.mxu0 0.0
    %4733 = vmatpush1.msra.mxu0 0.0
    %4734 = vmatprep.subr.mxu0 0.0
    %4735 = vmatpush1.msra.mxu0 0.0
    %4736 = vmatprep.subr.mxu0 0.0
    %4737 = vmatpush1.msra.mxu0 0.0
    %4738 = vmatprep.subr.mxu0 0.0
    %4739 = vmatpush1.msra.mxu0 0.0
    %4740 = vmatprep.subr.mxu0 0.0
    %4741 = vmatpush1.msra.mxu0 0.0
    %4742 = vmatprep.subr.mxu0 0.0
    %4743 = vmatpush1.msra.mxu0 0.0
    %4744 = vmatprep.subr.mxu0 0.0
    %4745 = vmatpush1.msra.mxu0 0.0
    %v4746 = vand.u32 %v347, 4294901760
    %4747 = vmatprep.mubr.f32.mxu0 %v4746
    %v4748 = vand.u32 %v343, 4294901760
    %4749 = vmatmul.mubr.f32.gmra.mrb[0].mxu0 %v4748
    %v4750 = vpop.f32.mrb[0].mxu0
    %v4751 = vadd.f32 %v4576, %v4750
    %v4752 = vpop.f32.mrb[0].mxu0
    %v4753 = vadd.f32 %v4578, %v4752
    %4754 = vdwg.mxu0
    %v4755 = vand.u32 %v42, 4294901760
    %4756 = vmatprep.subr.mxu0 %v4755
    %v4757 = vand.u32 %v41, 4294901760
    %4758 = vmatpush1.msra.mxu0 %v4757
    %v4759 = vand.u32 %v56, 4294901760
    %4760 = vmatprep.subr.mxu0 %v4759
    %v4761 = vand.u32 %v55, 4294901760
    %4762 = vmatpush1.msra.mxu0 %v4761
    %v4763 = vand.u32 %v70, 4294901760
    %4764 = vmatprep.subr.mxu0 %v4763
    %v4765 = vand.u32 %v69, 4294901760
    %4766 = vmatpush1.msra.mxu0 %v4765
    %v4767 = vand.u32 %v84, 4294901760
    %4768 = vmatprep.subr.mxu0 %v4767
    %v4769 = vand.u32 %v83, 4294901760
    %4770 = vmatpush1.msra.mxu0 %v4769
    %v4771 = vand.u32 %v98, 4294901760
    %4772 = vmatprep.subr.mxu0 %v4771
    %v4773 = vand.u32 %v97, 4294901760
    %4774 = vmatpush1.msra.mxu0 %v4773
    %v4775 = vand.u32 %v112, 4294901760
    %4776 = vmatprep.subr.mxu0 %v4775
    %v4777 = vand.u32 %v111, 4294901760
    %4778 = vmatpush1.msra.mxu0 %v4777
    %v4779 = vand.u32 %v126, 4294901760
    %4780 = vmatprep.subr.mxu0 %v4779
    %v4781 = vand.u32 %v125, 4294901760
    %4782 = vmatpush1.msra.mxu0 %v4781
    %v4783 = vand.u32 %v140, 4294901760
    %4784 = vmatprep.subr.mxu0 %v4783
    %v4785 = vand.u32 %v139, 4294901760
    %4786 = vmatpush1.msra.mxu0 %v4785
    %v4787 = vand.u32 %v154, 4294901760
    %4788 = vmatprep.subr.mxu0 %v4787
    %v4789 = vand.u32 %v153, 4294901760
    %4790 = vmatpush1.msra.mxu0 %v4789
    %v4791 = vand.u32 %v168, 4294901760
    %4792 = vmatprep.subr.mxu0 %v4791
    %v4793 = vand.u32 %v167, 4294901760
    %4794 = vmatpush1.msra.mxu0 %v4793
    %v4795 = vand.u32 %v182, 4294901760
    %4796 = vmatprep.subr.mxu0 %v4795
    %v4797 = vand.u32 %v181, 4294901760
    %4798 = vmatpush1.msra.mxu0 %v4797
    %v4799 = vand.u32 %v196, 4294901760
    %4800 = vmatprep.subr.mxu0 %v4799
    %v4801 = vand.u32 %v195, 4294901760
    %4802 = vmatpush1.msra.mxu0 %v4801
    %v4803 = vand.u32 %v210, 4294901760
    %4804 = vmatprep.subr.mxu0 %v4803
    %v4805 = vand.u32 %v209, 4294901760
    %4806 = vmatpush1.msra.mxu0 %v4805
    %v4807 = vand.u32 %v224, 4294901760
    %4808 = vmatprep.subr.mxu0 %v4807
    %v4809 = vand.u32 %v223, 4294901760
    %4810 = vmatpush1.msra.mxu0 %v4809
    %v4811 = vand.u32 %v238, 4294901760
    %4812 = vmatprep.subr.mxu0 %v4811
    %v4813 = vand.u32 %v237, 4294901760
    %4814 = vmatpush1.msra.mxu0 %v4813
    %v4815 = vand.u32 %v252, 4294901760
    %4816 = vmatprep.subr.mxu0 %v4815
    %v4817 = vand.u32 %v251, 4294901760
    %4818 = vmatpush1.msra.mxu0 %v4817
    %v4819 = vand.u32 %v378, 4294901760
    %4820 = vmatprep.subr.mxu0 %v4819
    %v4821 = vand.u32 %v375, 4294901760
    %4822 = vmatpush1.msra.mxu0 %v4821
    %4823 = vmatprep.subr.mxu0 0.0
    %4824 = vmatpush1.msra.mxu0 0.0
    %4825 = vmatprep.subr.mxu0 0.0
    %4826 = vmatpush1.msra.mxu0 0.0
    %4827 = vmatprep.subr.mxu0 0.0
    %4828 = vmatpush1.msra.mxu0 0.0
    %4829 = vmatprep.subr.mxu0 0.0
    %4830 = vmatpush1.msra.mxu0 0.0
    %4831 = vmatprep.subr.mxu0 0.0
    %4832 = vmatpush1.msra.mxu0 0.0
    %4833 = vmatprep.subr.mxu0 0.0
    %4834 = vmatpush1.msra.mxu0 0.0
    %4835 = vmatprep.subr.mxu0 0.0
    %4836 = vmatpush1.msra.mxu0 0.0
    %4837 = vmatprep.subr.mxu0 0.0
    %4838 = vmatpush1.msra.mxu0 0.0
    %4839 = vmatprep.subr.mxu0 0.0
    %4840 = vmatpush1.msra.mxu0 0.0
    %4841 = vmatprep.subr.mxu0 0.0
    %4842 = vmatpush1.msra.mxu0 0.0
    %4843 = vmatprep.subr.mxu0 0.0
    %4844 = vmatpush1.msra.mxu0 0.0
    %4845 = vmatprep.subr.mxu0 0.0
    %4846 = vmatpush1.msra.mxu0 0.0
    %4847 = vmatprep.subr.mxu0 0.0
    %4848 = vmatpush1.msra.mxu0 0.0
    %4849 = vmatprep.subr.mxu0 0.0
    %4850 = vmatpush1.msra.mxu0 0.0
    %4851 = vmatprep.subr.mxu0 0.0
    %4852 = vmatpush1.msra.mxu0 0.0
    %v4853 = vand.u32 %v347, 4294901760
    %4854 = vmatprep.mubr.f32.mxu0 %v4853
    %v4855 = vand.u32 %v343, 4294901760
    %4856 = vmatmul.mubr.f32.gmra.mrb[0].mxu0 %v4855
    %v4857 = vpop.f32.mrb[0].mxu0
    %v4858 = vadd.f32 %v4751, %v4857
    %v4859 = vpop.f32.mrb[0].mxu0
    %v4860 = vadd.f32 %v4753, %v4859
    %4861 = vdwg.mxu0
    %v4862 = vand.u32 %v44, 4294901760
    %4863 = vmatprep.subr.mxu0 %v4862
    %v4864 = vand.u32 %v43, 4294901760
    %4865 = vmatpush1.msra.mxu0 %v4864
    %v4866 = vand.u32 %v58, 4294901760
    %4867 = vmatprep.subr.mxu0 %v4866
    %v4868 = vand.u32 %v57, 4294901760
    %4869 = vmatpush1.msra.mxu0 %v4868
    %v4870 = vand.u32 %v72, 4294901760
    %4871 = vmatprep.subr.mxu0 %v4870
    %v4872 = vand.u32 %v71, 4294901760
    %4873 = vmatpush1.msra.mxu0 %v4872
    %v4874 = vand.u32 %v86, 4294901760
    %4875 = vmatprep.subr.mxu0 %v4874
    %v4876 = vand.u32 %v85, 4294901760
    %4877 = vmatpush1.msra.mxu0 %v4876
    %v4878 = vand.u32 %v100, 4294901760
    %4879 = vmatprep.subr.mxu0 %v4878
    %v4880 = vand.u32 %v99, 4294901760
    %4881 = vmatpush1.msra.mxu0 %v4880
    %v4882 = vand.u32 %v114, 4294901760
    %4883 = vmatprep.subr.mxu0 %v4882
    %v4884 = vand.u32 %v113, 4294901760
    %4885 = vmatpush1.msra.mxu0 %v4884
    %v4886 = vand.u32 %v128, 4294901760
    %4887 = vmatprep.subr.mxu0 %v4886
    %v4888 = vand.u32 %v127, 4294901760
    %4889 = vmatpush1.msra.mxu0 %v4888
    %v4890 = vand.u32 %v142, 4294901760
    %4891 = vmatprep.subr.mxu0 %v4890
    %v4892 = vand.u32 %v141, 4294901760
    %4893 = vmatpush1.msra.mxu0 %v4892
    %v4894 = vand.u32 %v156, 4294901760
    %4895 = vmatprep.subr.mxu0 %v4894
    %v4896 = vand.u32 %v155, 4294901760
    %4897 = vmatpush1.msra.mxu0 %v4896
    %v4898 = vand.u32 %v170, 4294901760
    %4899 = vmatprep.subr.mxu0 %v4898
    %v4900 = vand.u32 %v169, 4294901760
    %4901 = vmatpush1.msra.mxu0 %v4900
    %v4902 = vand.u32 %v184, 4294901760
    %4903 = vmatprep.subr.mxu0 %v4902
    %v4904 = vand.u32 %v183, 4294901760
    %4905 = vmatpush1.msra.mxu0 %v4904
    %v4906 = vand.u32 %v198, 4294901760
    %4907 = vmatprep.subr.mxu0 %v4906
    %v4908 = vand.u32 %v197, 4294901760
    %4909 = vmatpush1.msra.mxu0 %v4908
    %v4910 = vand.u32 %v212, 4294901760
    %4911 = vmatprep.subr.mxu0 %v4910
    %v4912 = vand.u32 %v211, 4294901760
    %4913 = vmatpush1.msra.mxu0 %v4912
    %v4914 = vand.u32 %v226, 4294901760
    %4915 = vmatprep.subr.mxu0 %v4914
    %v4916 = vand.u32 %v225, 4294901760
    %4917 = vmatpush1.msra.mxu0 %v4916
    %v4918 = vand.u32 %v240, 4294901760
    %4919 = vmatprep.subr.mxu0 %v4918
    %v4920 = vand.u32 %v239, 4294901760
    %4921 = vmatpush1.msra.mxu0 %v4920
    %v4922 = vand.u32 %v254, 4294901760
    %4923 = vmatprep.subr.mxu0 %v4922
    %v4924 = vand.u32 %v253, 4294901760
    %4925 = vmatpush1.msra.mxu0 %v4924
    %v4926 = vand.u32 %v384, 4294901760
    %4927 = vmatprep.subr.mxu0 %v4926
    %v4928 = vand.u32 %v381, 4294901760
    %4929 = vmatpush1.msra.mxu0 %v4928
    %4930 = vmatprep.subr.mxu0 0.0
    %4931 = vmatpush1.msra.mxu0 0.0
    %4932 = vmatprep.subr.mxu0 0.0
    %4933 = vmatpush1.msra.mxu0 0.0
    %4934 = vmatprep.subr.mxu0 0.0
    %4935 = vmatpush1.msra.mxu0 0.0
    %4936 = vmatprep.subr.mxu0 0.0
    %4937 = vmatpush1.msra.mxu0 0.0
    %4938 = vmatprep.subr.mxu0 0.0
    %4939 = vmatpush1.msra.mxu0 0.0
    %4940 = vmatprep.subr.mxu0 0.0
    %4941 = vmatpush1.msra.mxu0 0.0
    %4942 = vmatprep.subr.mxu0 0.0
    %4943 = vmatpush1.msra.mxu0 0.0
    %4944 = vmatprep.subr.mxu0 0.0
    %4945 = vmatpush1.msra.mxu0 0.0
    %4946 = vmatprep.subr.mxu0 0.0
    %4947 = vmatpush1.msra.mxu0 0.0
    %4948 = vmatprep.subr.mxu0 0.0
    %4949 = vmatpush1.msra.mxu0 0.0
    %4950 = vmatprep.subr.mxu0 0.0
    %4951 = vmatpush1.msra.mxu0 0.0
    %4952 = vmatprep.subr.mxu0 0.0
    %4953 = vmatpush1.msra.mxu0 0.0
    %4954 = vmatprep.subr.mxu0 0.0
    %4955 = vmatpush1.msra.mxu0 0.0
    %4956 = vmatprep.subr.mxu0 0.0
    %4957 = vmatpush1.msra.mxu0 0.0
    %4958 = vmatprep.subr.mxu0 0.0
    %4959 = vmatpush1.msra.mxu0 0.0
    %v4960 = vand.u32 %v347, 4294901760
    %v4961 = vsub.f32 %v347, %v4960
    %v4962 = vand.u32 %v4961, 4294901760
    %v4963 = vsub.f32 %v4961, %v4962
    %v4964 = vand.u32 %v4963, 4294901760
    %4965 = vmatprep.mubr.f32.mxu0 %v4964
    %v4966 = vand.u32 %v343, 4294901760
    %v4967 = vsub.f32 %v343, %v4966
    %v4968 = vand.u32 %v4967, 4294901760
    %v4969 = vsub.f32 %v4967, %v4968
    %v4970 = vand.u32 %v4969, 4294901760
    %4971 = vmatmul.mubr.f32.gmra.mrb[0].mxu0 %v4970
    %v4972 = vpop.f32.mrb[0].mxu0
    %v4973 = vadd.f32 0.0, %v4972
    %v4974 = vpop.f32.mrb[0].mxu0
    %v4975 = vadd.f32 0.0, %v4974
    %4976 = vdwg.mxu0
    %v4977 = vand.u32 %v44, 4294901760
    %v4978 = vsub.f32 %v44, %v4977
    %v4979 = vand.u32 %v4978, 4294901760
    %v4980 = vsub.f32 %v4978, %v4979
    %v4981 = vand.u32 %v4980, 4294901760
    %4982 = vmatprep.subr.mxu0 %v4981
    %v4983 = vand.u32 %v43, 4294901760
    %v4984 = vsub.f32 %v43, %v4983
    %v4985 = vand.u32 %v4984, 4294901760
    %v4986 = vsub.f32 %v4984, %v4985
    %v4987 = vand.u32 %v4986, 4294901760
    %4988 = vmatpush1.msra.mxu0 %v4987
    %v4989 = vand.u32 %v58, 4294901760
    %v4990 = vsub.f32 %v58, %v4989
    %v4991 = vand.u32 %v4990, 4294901760
    %v4992 = vsub.f32 %v4990, %v4991
    %v4993 = vand.u32 %v4992, 4294901760
    %4994 = vmatprep.subr.mxu0 %v4993
    %v4995 = vand.u32 %v57, 4294901760
    %v4996 = vsub.f32 %v57, %v4995
    %v4997 = vand.u32 %v4996, 4294901760
    %v4998 = vsub.f32 %v4996, %v4997
    %v4999 = vand.u32 %v4998, 4294901760
    %5000 = vmatpush1.msra.mxu0 %v4999
    %v5001 = vand.u32 %v72, 4294901760
    %v5002 = vsub.f32 %v72, %v5001
    %v5003 = vand.u32 %v5002, 4294901760
    %v5004 = vsub.f32 %v5002, %v5003
    %v5005 = vand.u32 %v5004, 4294901760
    %5006 = vmatprep.subr.mxu0 %v5005
    %v5007 = vand.u32 %v71, 4294901760
    %v5008 = vsub.f32 %v71, %v5007
    %v5009 = vand.u32 %v5008, 4294901760
    %v5010 = vsub.f32 %v5008, %v5009
    %v5011 = vand.u32 %v5010, 4294901760
    %5012 = vmatpush1.msra.mxu0 %v5011
    %v5013 = vand.u32 %v86, 4294901760
    %v5014 = vsub.f32 %v86, %v5013
    %v5015 = vand.u32 %v5014, 4294901760
    %v5016 = vsub.f32 %v5014, %v5015
    %v5017 = vand.u32 %v5016, 4294901760
    %5018 = vmatprep.subr.mxu0 %v5017
    %v5019 = vand.u32 %v85, 4294901760
    %v5020 = vsub.f32 %v85, %v5019
    %v5021 = vand.u32 %v5020, 4294901760
    %v5022 = vsub.f32 %v5020, %v5021
    %v5023 = vand.u32 %v5022, 4294901760
    %5024 = vmatpush1.msra.mxu0 %v5023
    %v5025 = vand.u32 %v100, 4294901760
    %v5026 = vsub.f32 %v100, %v5025
    %v5027 = vand.u32 %v5026, 4294901760
    %v5028 = vsub.f32 %v5026, %v5027
    %v5029 = vand.u32 %v5028, 4294901760
    %5030 = vmatprep.subr.mxu0 %v5029
    %v5031 = vand.u32 %v99, 4294901760
    %v5032 = vsub.f32 %v99, %v5031
    %v5033 = vand.u32 %v5032, 4294901760
    %v5034 = vsub.f32 %v5032, %v5033
    %v5035 = vand.u32 %v5034, 4294901760
    %5036 = vmatpush1.msra.mxu0 %v5035
    %v5037 = vand.u32 %v114, 4294901760
    %v5038 = vsub.f32 %v114, %v5037
    %v5039 = vand.u32 %v5038, 4294901760
    %v5040 = vsub.f32 %v5038, %v5039
    %v5041 = vand.u32 %v5040, 4294901760
    %5042 = vmatprep.subr.mxu0 %v5041
    %v5043 = vand.u32 %v113, 4294901760
    %v5044 = vsub.f32 %v113, %v5043
    %v5045 = vand.u32 %v5044, 4294901760
    %v5046 = vsub.f32 %v5044, %v5045
    %v5047 = vand.u32 %v5046, 4294901760
    %5048 = vmatpush1.msra.mxu0 %v5047
    %v5049 = vand.u32 %v128, 4294901760
    %v5050 = vsub.f32 %v128, %v5049
    %v5051 = vand.u32 %v5050, 4294901760
    %v5052 = vsub.f32 %v5050, %v5051
    %v5053 = vand.u32 %v5052, 4294901760
    %5054 = vmatprep.subr.mxu0 %v5053
    %v5055 = vand.u32 %v127, 4294901760
    %v5056 = vsub.f32 %v127, %v5055
    %v5057 = vand.u32 %v5056, 4294901760
    %v5058 = vsub.f32 %v5056, %v5057
    %v5059 = vand.u32 %v5058, 4294901760
    %5060 = vmatpush1.msra.mxu0 %v5059
    %v5061 = vand.u32 %v142, 4294901760
    %v5062 = vsub.f32 %v142, %v5061
    %v5063 = vand.u32 %v5062, 4294901760
    %v5064 = vsub.f32 %v5062, %v5063
    %v5065 = vand.u32 %v5064, 4294901760
    %5066 = vmatprep.subr.mxu0 %v5065
    %v5067 = vand.u32 %v141, 4294901760
    %v5068 = vsub.f32 %v141, %v5067
    %v5069 = vand.u32 %v5068, 4294901760
    %v5070 = vsub.f32 %v5068, %v5069
    %v5071 = vand.u32 %v5070, 4294901760
    %5072 = vmatpush1.msra.mxu0 %v5071
    %v5073 = vand.u32 %v156, 4294901760
    %v5074 = vsub.f32 %v156, %v5073
    %v5075 = vand.u32 %v5074, 4294901760
    %v5076 = vsub.f32 %v5074, %v5075
    %v5077 = vand.u32 %v5076, 4294901760
    %5078 = vmatprep.subr.mxu0 %v5077
    %v5079 = vand.u32 %v155, 4294901760
    %v5080 = vsub.f32 %v155, %v5079
    %v5081 = vand.u32 %v5080, 4294901760
    %v5082 = vsub.f32 %v5080, %v5081
    %v5083 = vand.u32 %v5082, 4294901760
    %5084 = vmatpush1.msra.mxu0 %v5083
    %v5085 = vand.u32 %v170, 4294901760
    %v5086 = vsub.f32 %v170, %v5085
    %v5087 = vand.u32 %v5086, 4294901760
    %v5088 = vsub.f32 %v5086, %v5087
    %v5089 = vand.u32 %v5088, 4294901760
    %5090 = vmatprep.subr.mxu0 %v5089
    %v5091 = vand.u32 %v169, 4294901760
    %v5092 = vsub.f32 %v169, %v5091
    %v5093 = vand.u32 %v5092, 4294901760
    %v5094 = vsub.f32 %v5092, %v5093
    %v5095 = vand.u32 %v5094, 4294901760
    %5096 = vmatpush1.msra.mxu0 %v5095
    %v5097 = vand.u32 %v184, 4294901760
    %v5098 = vsub.f32 %v184, %v5097
    %v5099 = vand.u32 %v5098, 4294901760
    %v5100 = vsub.f32 %v5098, %v5099
    %v5101 = vand.u32 %v5100, 4294901760
    %5102 = vmatprep.subr.mxu0 %v5101
    %v5103 = vand.u32 %v183, 4294901760
    %v5104 = vsub.f32 %v183, %v5103
    %v5105 = vand.u32 %v5104, 4294901760
    %v5106 = vsub.f32 %v5104, %v5105
    %v5107 = vand.u32 %v5106, 4294901760
    %5108 = vmatpush1.msra.mxu0 %v5107
    %v5109 = vand.u32 %v198, 4294901760
    %v5110 = vsub.f32 %v198, %v5109
    %v5111 = vand.u32 %v5110, 4294901760
    %v5112 = vsub.f32 %v5110, %v5111
    %v5113 = vand.u32 %v5112, 4294901760
    %5114 = vmatprep.subr.mxu0 %v5113
    %v5115 = vand.u32 %v197, 4294901760
    %v5116 = vsub.f32 %v197, %v5115
    %v5117 = vand.u32 %v5116, 4294901760
    %v5118 = vsub.f32 %v5116, %v5117
    %v5119 = vand.u32 %v5118, 4294901760
    %5120 = vmatpush1.msra.mxu0 %v5119
    %v5121 = vand.u32 %v212, 4294901760
    %v5122 = vsub.f32 %v212, %v5121
    %v5123 = vand.u32 %v5122, 4294901760
    %v5124 = vsub.f32 %v5122, %v5123
    %v5125 = vand.u32 %v5124, 4294901760
    %5126 = vmatprep.subr.mxu0 %v5125
    %v5127 = vand.u32 %v211, 4294901760
    %v5128 = vsub.f32 %v211, %v5127
    %v5129 = vand.u32 %v5128, 4294901760
    %v5130 = vsub.f32 %v5128, %v5129
    %v5131 = vand.u32 %v5130, 4294901760
    %5132 = vmatpush1.msra.mxu0 %v5131
    %v5133 = vand.u32 %v226, 4294901760
    %v5134 = vsub.f32 %v226, %v5133
    %v5135 = vand.u32 %v5134, 4294901760
    %v5136 = vsub.f32 %v5134, %v5135
    %v5137 = vand.u32 %v5136, 4294901760
    %5138 = vmatprep.subr.mxu0 %v5137
    %v5139 = vand.u32 %v225, 4294901760
    %v5140 = vsub.f32 %v225, %v5139
    %v5141 = vand.u32 %v5140, 4294901760
    %v5142 = vsub.f32 %v5140, %v5141
    %v5143 = vand.u32 %v5142, 4294901760
    %5144 = vmatpush1.msra.mxu0 %v5143
    %v5145 = vand.u32 %v240, 4294901760
    %v5146 = vsub.f32 %v240, %v5145
    %v5147 = vand.u32 %v5146, 4294901760
    %v5148 = vsub.f32 %v5146, %v5147
    %v5149 = vand.u32 %v5148, 4294901760
    %5150 = vmatprep.subr.mxu0 %v5149
    %v5151 = vand.u32 %v239, 4294901760
    %v5152 = vsub.f32 %v239, %v5151
    %v5153 = vand.u32 %v5152, 4294901760
    %v5154 = vsub.f32 %v5152, %v5153
    %v5155 = vand.u32 %v5154, 4294901760
    %5156 = vmatpush1.msra.mxu0 %v5155
    %v5157 = vand.u32 %v254, 4294901760
    %v5158 = vsub.f32 %v254, %v5157
    %v5159 = vand.u32 %v5158, 4294901760
    %v5160 = vsub.f32 %v5158, %v5159
    %v5161 = vand.u32 %v5160, 4294901760
    %5162 = vmatprep.subr.mxu0 %v5161
    %v5163 = vand.u32 %v253, 4294901760
    %v5164 = vsub.f32 %v253, %v5163
    %v5165 = vand.u32 %v5164, 4294901760
    %v5166 = vsub.f32 %v5164, %v5165
    %v5167 = vand.u32 %v5166, 4294901760
    %5168 = vmatpush1.msra.mxu0 %v5167
    %v5169 = vand.u32 %v384, 4294901760
    %v5170 = vsub.f32 %v384, %v5169
    %v5171 = vand.u32 %v5170, 4294901760
    %v5172 = vsub.f32 %v5170, %v5171
    %v5173 = vand.u32 %v5172, 4294901760
    %5174 = vmatprep.subr.mxu0 %v5173
    %v5175 = vand.u32 %v381, 4294901760
    %v5176 = vsub.f32 %v381, %v5175
    %v5177 = vand.u32 %v5176, 4294901760
    %v5178 = vsub.f32 %v5176, %v5177
    %v5179 = vand.u32 %v5178, 4294901760
    %5180 = vmatpush1.msra.mxu0 %v5179
    %5181 = vmatprep.subr.mxu0 0.0
    %5182 = vmatpush1.msra.mxu0 0.0
    %5183 = vmatprep.subr.mxu0 0.0
    %5184 = vmatpush1.msra.mxu0 0.0
    %5185 = vmatprep.subr.mxu0 0.0
    %5186 = vmatpush1.msra.mxu0 0.0
    %5187 = vmatprep.subr.mxu0 0.0
    %5188 = vmatpush1.msra.mxu0 0.0
    %5189 = vmatprep.subr.mxu0 0.0
    %5190 = vmatpush1.msra.mxu0 0.0
    %5191 = vmatprep.subr.mxu0 0.0
    %5192 = vmatpush1.msra.mxu0 0.0
    %5193 = vmatprep.subr.mxu0 0.0
    %5194 = vmatpush1.msra.mxu0 0.0
    %5195 = vmatprep.subr.mxu0 0.0
    %5196 = vmatpush1.msra.mxu0 0.0
    %5197 = vmatprep.subr.mxu0 0.0
    %5198 = vmatpush1.msra.mxu0 0.0
    %5199 = vmatprep.subr.mxu0 0.0
    %5200 = vmatpush1.msra.mxu0 0.0
    %5201 = vmatprep.subr.mxu0 0.0
    %5202 = vmatpush1.msra.mxu0 0.0
    %5203 = vmatprep.subr.mxu0 0.0
    %5204 = vmatpush1.msra.mxu0 0.0
    %5205 = vmatprep.subr.mxu0 0.0
    %5206 = vmatpush1.msra.mxu0 0.0
    %5207 = vmatprep.subr.mxu0 0.0
    %5208 = vmatpush1.msra.mxu0 0.0
    %5209 = vmatprep.subr.mxu0 0.0
    %5210 = vmatpush1.msra.mxu0 0.0
    %v5211 = vand.u32 %v347, 4294901760
    %5212 = vmatprep.mubr.f32.mxu0 %v5211
    %v5213 = vand.u32 %v343, 4294901760
    %5214 = vmatmul.mubr.f32.gmra.mrb[0].mxu0 %v5213
    %v5215 = vpop.f32.mrb[0].mxu0
    %v5216 = vadd.f32 %v4973, %v5215
    %v5217 = vpop.f32.mrb[0].mxu0
    %v5218 = vadd.f32 %v4975, %v5217
    %5219 = vdwg.mxu0
    %v5220 = vand.u32 %v44, 4294901760
    %v5221 = vsub.f32 %v44, %v5220
    %5222 = vmatprep.subr.mxu0 %v5221
    %v5223 = vand.u32 %v43, 4294901760
    %v5224 = vsub.f32 %v43, %v5223
    %5225 = vmatpush1.msra.mxu0 %v5224
    %v5226 = vand.u32 %v58, 4294901760
    %v5227 = vsub.f32 %v58, %v5226
    %5228 = vmatprep.subr.mxu0 %v5227
    %v5229 = vand.u32 %v57, 4294901760
    %v5230 = vsub.f32 %v57, %v5229
    %5231 = vmatpush1.msra.mxu0 %v5230
    %v5232 = vand.u32 %v72, 4294901760
    %v5233 = vsub.f32 %v72, %v5232
    %5234 = vmatprep.subr.mxu0 %v5233
    %v5235 = vand.u32 %v71, 4294901760
    %v5236 = vsub.f32 %v71, %v5235
    %5237 = vmatpush1.msra.mxu0 %v5236
    %v5238 = vand.u32 %v86, 4294901760
    %v5239 = vsub.f32 %v86, %v5238
    %5240 = vmatprep.subr.mxu0 %v5239
    %v5241 = vand.u32 %v85, 4294901760
    %v5242 = vsub.f32 %v85, %v5241
    %5243 = vmatpush1.msra.mxu0 %v5242
    %v5244 = vand.u32 %v100, 4294901760
    %v5245 = vsub.f32 %v100, %v5244
    %5246 = vmatprep.subr.mxu0 %v5245
    %v5247 = vand.u32 %v99, 4294901760
    %v5248 = vsub.f32 %v99, %v5247
    %5249 = vmatpush1.msra.mxu0 %v5248
    %v5250 = vand.u32 %v114, 4294901760
    %v5251 = vsub.f32 %v114, %v5250
    %5252 = vmatprep.subr.mxu0 %v5251
    %v5253 = vand.u32 %v113, 4294901760
    %v5254 = vsub.f32 %v113, %v5253
    %5255 = vmatpush1.msra.mxu0 %v5254
    %v5256 = vand.u32 %v128, 4294901760
    %v5257 = vsub.f32 %v128, %v5256
    %5258 = vmatprep.subr.mxu0 %v5257
    %v5259 = vand.u32 %v127, 4294901760
    %v5260 = vsub.f32 %v127, %v5259
    %5261 = vmatpush1.msra.mxu0 %v5260
    %v5262 = vand.u32 %v142, 4294901760
    %v5263 = vsub.f32 %v142, %v5262
    %5264 = vmatprep.subr.mxu0 %v5263
    %v5265 = vand.u32 %v141, 4294901760
    %v5266 = vsub.f32 %v141, %v5265
    %5267 = vmatpush1.msra.mxu0 %v5266
    %v5268 = vand.u32 %v156, 4294901760
    %v5269 = vsub.f32 %v156, %v5268
    %5270 = vmatprep.subr.mxu0 %v5269
    %v5271 = vand.u32 %v155, 4294901760
    %v5272 = vsub.f32 %v155, %v5271
    %5273 = vmatpush1.msra.mxu0 %v5272
    %v5274 = vand.u32 %v170, 4294901760
    %v5275 = vsub.f32 %v170, %v5274
    %5276 = vmatprep.subr.mxu0 %v5275
    %v5277 = vand.u32 %v169, 4294901760
    %v5278 = vsub.f32 %v169, %v5277
    %5279 = vmatpush1.msra.mxu0 %v5278
    %v5280 = vand.u32 %v184, 4294901760
    %v5281 = vsub.f32 %v184, %v5280
    %5282 = vmatprep.subr.mxu0 %v5281
    %v5283 = vand.u32 %v183, 4294901760
    %v5284 = vsub.f32 %v183, %v5283
    %5285 = vmatpush1.msra.mxu0 %v5284
    %v5286 = vand.u32 %v198, 4294901760
    %v5287 = vsub.f32 %v198, %v5286
    %5288 = vmatprep.subr.mxu0 %v5287
    %v5289 = vand.u32 %v197, 4294901760
    %v5290 = vsub.f32 %v197, %v5289
    %5291 = vmatpush1.msra.mxu0 %v5290
    %v5292 = vand.u32 %v212, 4294901760
    %v5293 = vsub.f32 %v212, %v5292
    %5294 = vmatprep.subr.mxu0 %v5293
    %v5295 = vand.u32 %v211, 4294901760
    %v5296 = vsub.f32 %v211, %v5295
    %5297 = vmatpush1.msra.mxu0 %v5296
    %v5298 = vand.u32 %v226, 4294901760
    %v5299 = vsub.f32 %v226, %v5298
    %5300 = vmatprep.subr.mxu0 %v5299
    %v5301 = vand.u32 %v225, 4294901760
    %v5302 = vsub.f32 %v225, %v5301
    %5303 = vmatpush1.msra.mxu0 %v5302
    %v5304 = vand.u32 %v240, 4294901760
    %v5305 = vsub.f32 %v240, %v5304
    %5306 = vmatprep.subr.mxu0 %v5305
    %v5307 = vand.u32 %v239, 4294901760
    %v5308 = vsub.f32 %v239, %v5307
    %5309 = vmatpush1.msra.mxu0 %v5308
    %v5310 = vand.u32 %v254, 4294901760
    %v5311 = vsub.f32 %v254, %v5310
    %5312 = vmatprep.subr.mxu0 %v5311
    %v5313 = vand.u32 %v253, 4294901760
    %v5314 = vsub.f32 %v253, %v5313
    %5315 = vmatpush1.msra.mxu0 %v5314
    %v5316 = vand.u32 %v384, 4294901760
    %v5317 = vsub.f32 %v384, %v5316
    %5318 = vmatprep.subr.mxu0 %v5317
    %v5319 = vand.u32 %v381, 4294901760
    %v5320 = vsub.f32 %v381, %v5319
    %5321 = vmatpush1.msra.mxu0 %v5320
    %5322 = vmatprep.subr.mxu0 0.0
    %5323 = vmatpush1.msra.mxu0 0.0
    %5324 = vmatprep.subr.mxu0 0.0
    %5325 = vmatpush1.msra.mxu0 0.0
    %5326 = vmatprep.subr.mxu0 0.0
    %5327 = vmatpush1.msra.mxu0 0.0
    %5328 = vmatprep.subr.mxu0 0.0
    %5329 = vmatpush1.msra.mxu0 0.0
    %5330 = vmatprep.subr.mxu0 0.0
    %5331 = vmatpush1.msra.mxu0 0.0
    %5332 = vmatprep.subr.mxu0 0.0
    %5333 = vmatpush1.msra.mxu0 0.0
    %5334 = vmatprep.subr.mxu0 0.0
    %5335 = vmatpush1.msra.mxu0 0.0
    %5336 = vmatprep.subr.mxu0 0.0
    %5337 = vmatpush1.msra.mxu0 0.0
    %5338 = vmatprep.subr.mxu0 0.0
    %5339 = vmatpush1.msra.mxu0 0.0
    %5340 = vmatprep.subr.mxu0 0.0
    %5341 = vmatpush1.msra.mxu0 0.0
    %5342 = vmatprep.subr.mxu0 0.0
    %5343 = vmatpush1.msra.mxu0 0.0
    %5344 = vmatprep.subr.mxu0 0.0
    %5345 = vmatpush1.msra.mxu0 0.0
    %5346 = vmatprep.subr.mxu0 0.0
    %5347 = vmatpush1.msra.mxu0 0.0
    %5348 = vmatprep.subr.mxu0 0.0
    %5349 = vmatpush1.msra.mxu0 0.0
    %5350 = vmatprep.subr.mxu0 0.0
    %5351 = vmatpush1.msra.mxu0 0.0
    %v5352 = vand.u32 %v347, 4294901760
    %v5353 = vsub.f32 %v347, %v5352
    %5354 = vmatprep.mubr.f32.mxu0 %v5353
    %v5355 = vand.u32 %v343, 4294901760
    %v5356 = vsub.f32 %v343, %v5355
    %5357 = vmatmul.mubr.f32.gmra.mrb[0].mxu0 %v5356
    %v5358 = vpop.f32.mrb[0].mxu0
    %v5359 = vadd.f32 %v5216, %v5358
    %v5360 = vpop.f32.mrb[0].mxu0
    %v5361 = vadd.f32 %v5218, %v5360
    %5362 = vdwg.mxu0
    %v5363 = vand.u32 %v44, 4294901760
    %5364 = vmatprep.subr.mxu0 %v5363
    %v5365 = vand.u32 %v43, 4294901760
    %5366 = vmatpush1.msra.mxu0 %v5365
    %v5367 = vand.u32 %v58, 4294901760
    %5368 = vmatprep.subr.mxu0 %v5367
    %v5369 = vand.u32 %v57, 4294901760
    %5370 = vmatpush1.msra.mxu0 %v5369
    %v5371 = vand.u32 %v72, 4294901760
    %5372 = vmatprep.subr.mxu0 %v5371
    %v5373 = vand.u32 %v71, 4294901760
    %5374 = vmatpush1.msra.mxu0 %v5373
    %v5375 = vand.u32 %v86, 4294901760
    %5376 = vmatprep.subr.mxu0 %v5375
    %v5377 = vand.u32 %v85, 4294901760
    %5378 = vmatpush1.msra.mxu0 %v5377
    %v5379 = vand.u32 %v100, 4294901760
    %5380 = vmatprep.subr.mxu0 %v5379
    %v5381 = vand.u32 %v99, 4294901760
    %5382 = vmatpush1.msra.mxu0 %v5381
    %v5383 = vand.u32 %v114, 4294901760
    %5384 = vmatprep.subr.mxu0 %v5383
    %v5385 = vand.u32 %v113, 4294901760
    %5386 = vmatpush1.msra.mxu0 %v5385
    %v5387 = vand.u32 %v128, 4294901760
    %5388 = vmatprep.subr.mxu0 %v5387
    %v5389 = vand.u32 %v127, 4294901760
    %5390 = vmatpush1.msra.mxu0 %v5389
    %v5391 = vand.u32 %v142, 4294901760
    %5392 = vmatprep.subr.mxu0 %v5391
    %v5393 = vand.u32 %v141, 4294901760
    %5394 = vmatpush1.msra.mxu0 %v5393
    %v5395 = vand.u32 %v156, 4294901760
    %5396 = vmatprep.subr.mxu0 %v5395
    %v5397 = vand.u32 %v155, 4294901760
    %5398 = vmatpush1.msra.mxu0 %v5397
    %v5399 = vand.u32 %v170, 4294901760
    %5400 = vmatprep.subr.mxu0 %v5399
    %v5401 = vand.u32 %v169, 4294901760
    %5402 = vmatpush1.msra.mxu0 %v5401
    %v5403 = vand.u32 %v184, 4294901760
    %5404 = vmatprep.subr.mxu0 %v5403
    %v5405 = vand.u32 %v183, 4294901760
    %5406 = vmatpush1.msra.mxu0 %v5405
    %v5407 = vand.u32 %v198, 4294901760
    %5408 = vmatprep.subr.mxu0 %v5407
    %v5409 = vand.u32 %v197, 4294901760
    %5410 = vmatpush1.msra.mxu0 %v5409
    %v5411 = vand.u32 %v212, 4294901760
    %5412 = vmatprep.subr.mxu0 %v5411
    %v5413 = vand.u32 %v211, 4294901760
    %5414 = vmatpush1.msra.mxu0 %v5413
    %v5415 = vand.u32 %v226, 4294901760
    %5416 = vmatprep.subr.mxu0 %v5415
    %v5417 = vand.u32 %v225, 4294901760
    %5418 = vmatpush1.msra.mxu0 %v5417
    %v5419 = vand.u32 %v240, 4294901760
    %5420 = vmatprep.subr.mxu0 %v5419
    %v5421 = vand.u32 %v239, 4294901760
    %5422 = vmatpush1.msra.mxu0 %v5421
    %v5423 = vand.u32 %v254, 4294901760
    %5424 = vmatprep.subr.mxu0 %v5423
    %v5425 = vand.u32 %v253, 4294901760
    %5426 = vmatpush1.msra.mxu0 %v5425
    %v5427 = vand.u32 %v384, 4294901760
    %5428 = vmatprep.subr.mxu0 %v5427
    %v5429 = vand.u32 %v381, 4294901760
    %5430 = vmatpush1.msra.mxu0 %v5429
    %5431 = vmatprep.subr.mxu0 0.0
    %5432 = vmatpush1.msra.mxu0 0.0
    %5433 = vmatprep.subr.mxu0 0.0
    %5434 = vmatpush1.msra.mxu0 0.0
    %5435 = vmatprep.subr.mxu0 0.0
    %5436 = vmatpush1.msra.mxu0 0.0
    %5437 = vmatprep.subr.mxu0 0.0
    %5438 = vmatpush1.msra.mxu0 0.0
    %5439 = vmatprep.subr.mxu0 0.0
    %5440 = vmatpush1.msra.mxu0 0.0
    %5441 = vmatprep.subr.mxu0 0.0
    %5442 = vmatpush1.msra.mxu0 0.0
    %5443 = vmatprep.subr.mxu0 0.0
    %5444 = vmatpush1.msra.mxu0 0.0
    %5445 = vmatprep.subr.mxu0 0.0
    %5446 = vmatpush1.msra.mxu0 0.0
    %5447 = vmatprep.subr.mxu0 0.0
    %5448 = vmatpush1.msra.mxu0 0.0
    %5449 = vmatprep.subr.mxu0 0.0
    %5450 = vmatpush1.msra.mxu0 0.0
    %5451 = vmatprep.subr.mxu0 0.0
    %5452 = vmatpush1.msra.mxu0 0.0
    %5453 = vmatprep.subr.mxu0 0.0
    %5454 = vmatpush1.msra.mxu0 0.0
    %5455 = vmatprep.subr.mxu0 0.0
    %5456 = vmatpush1.msra.mxu0 0.0
    %5457 = vmatprep.subr.mxu0 0.0
    %5458 = vmatpush1.msra.mxu0 0.0
    %5459 = vmatprep.subr.mxu0 0.0
    %5460 = vmatpush1.msra.mxu0 0.0
    %v5461 = vand.u32 %v347, 4294901760
    %v5462 = vsub.f32 %v347, %v5461
    %v5463 = vand.u32 %v5462, 4294901760
    %5464 = vmatprep.mubr.f32.mxu0 %v5463
    %v5465 = vand.u32 %v343, 4294901760
    %v5466 = vsub.f32 %v343, %v5465
    %v5467 = vand.u32 %v5466, 4294901760
    %5468 = vmatmul.mubr.f32.gmra.mrb[0].mxu0 %v5467
    %v5469 = vpop.f32.mrb[0].mxu0
    %v5470 = vadd.f32 %v5359, %v5469
    %v5471 = vpop.f32.mrb[0].mxu0
    %v5472 = vadd.f32 %v5361, %v5471
    %5473 = vdwg.mxu0
    %v5474 = vand.u32 %v44, 4294901760
    %v5475 = vsub.f32 %v44, %v5474
    %v5476 = vand.u32 %v5475, 4294901760
    %5477 = vmatprep.subr.mxu0 %v5476
    %v5478 = vand.u32 %v43, 4294901760
    %v5479 = vsub.f32 %v43, %v5478
    %v5480 = vand.u32 %v5479, 4294901760
    %5481 = vmatpush1.msra.mxu0 %v5480
    %v5482 = vand.u32 %v58, 4294901760
    %v5483 = vsub.f32 %v58, %v5482
    %v5484 = vand.u32 %v5483, 4294901760
    %5485 = vmatprep.subr.mxu0 %v5484
    %v5486 = vand.u32 %v57, 4294901760
    %v5487 = vsub.f32 %v57, %v5486
    %v5488 = vand.u32 %v5487, 4294901760
    %5489 = vmatpush1.msra.mxu0 %v5488
    %v5490 = vand.u32 %v72, 4294901760
    %v5491 = vsub.f32 %v72, %v5490
    %v5492 = vand.u32 %v5491, 4294901760
    %5493 = vmatprep.subr.mxu0 %v5492
    %v5494 = vand.u32 %v71, 4294901760
    %v5495 = vsub.f32 %v71, %v5494
    %v5496 = vand.u32 %v5495, 4294901760
    %5497 = vmatpush1.msra.mxu0 %v5496
    %v5498 = vand.u32 %v86, 4294901760
    %v5499 = vsub.f32 %v86, %v5498
    %v5500 = vand.u32 %v5499, 4294901760
    %5501 = vmatprep.subr.mxu0 %v5500
    %v5502 = vand.u32 %v85, 4294901760
    %v5503 = vsub.f32 %v85, %v5502
    %v5504 = vand.u32 %v5503, 4294901760
    %5505 = vmatpush1.msra.mxu0 %v5504
    %v5506 = vand.u32 %v100, 4294901760
    %v5507 = vsub.f32 %v100, %v5506
    %v5508 = vand.u32 %v5507, 4294901760
    %5509 = vmatprep.subr.mxu0 %v5508
    %v5510 = vand.u32 %v99, 4294901760
    %v5511 = vsub.f32 %v99, %v5510
    %v5512 = vand.u32 %v5511, 4294901760
    %5513 = vmatpush1.msra.mxu0 %v5512
    %v5514 = vand.u32 %v114, 4294901760
    %v5515 = vsub.f32 %v114, %v5514
    %v5516 = vand.u32 %v5515, 4294901760
    %5517 = vmatprep.subr.mxu0 %v5516
    %v5518 = vand.u32 %v113, 4294901760
    %v5519 = vsub.f32 %v113, %v5518
    %v5520 = vand.u32 %v5519, 4294901760
    %5521 = vmatpush1.msra.mxu0 %v5520
    %v5522 = vand.u32 %v128, 4294901760
    %v5523 = vsub.f32 %v128, %v5522
    %v5524 = vand.u32 %v5523, 4294901760
    %5525 = vmatprep.subr.mxu0 %v5524
    %v5526 = vand.u32 %v127, 4294901760
    %v5527 = vsub.f32 %v127, %v5526
    %v5528 = vand.u32 %v5527, 4294901760
    %5529 = vmatpush1.msra.mxu0 %v5528
    %v5530 = vand.u32 %v142, 4294901760
    %v5531 = vsub.f32 %v142, %v5530
    %v5532 = vand.u32 %v5531, 4294901760
    %5533 = vmatprep.subr.mxu0 %v5532
    %v5534 = vand.u32 %v141, 4294901760
    %v5535 = vsub.f32 %v141, %v5534
    %v5536 = vand.u32 %v5535, 4294901760
    %5537 = vmatpush1.msra.mxu0 %v5536
    %v5538 = vand.u32 %v156, 4294901760
    %v5539 = vsub.f32 %v156, %v5538
    %v5540 = vand.u32 %v5539, 4294901760
    %5541 = vmatprep.subr.mxu0 %v5540
    %v5542 = vand.u32 %v155, 4294901760
    %v5543 = vsub.f32 %v155, %v5542
    %v5544 = vand.u32 %v5543, 4294901760
    %5545 = vmatpush1.msra.mxu0 %v5544
    %v5546 = vand.u32 %v170, 4294901760
    %v5547 = vsub.f32 %v170, %v5546
    %v5548 = vand.u32 %v5547, 4294901760
    %5549 = vmatprep.subr.mxu0 %v5548
    %v5550 = vand.u32 %v169, 4294901760
    %v5551 = vsub.f32 %v169, %v5550
    %v5552 = vand.u32 %v5551, 4294901760
    %5553 = vmatpush1.msra.mxu0 %v5552
    %v5554 = vand.u32 %v184, 4294901760
    %v5555 = vsub.f32 %v184, %v5554
    %v5556 = vand.u32 %v5555, 4294901760
    %5557 = vmatprep.subr.mxu0 %v5556
    %v5558 = vand.u32 %v183, 4294901760
    %v5559 = vsub.f32 %v183, %v5558
    %v5560 = vand.u32 %v5559, 4294901760
    %5561 = vmatpush1.msra.mxu0 %v5560
    %v5562 = vand.u32 %v198, 4294901760
    %v5563 = vsub.f32 %v198, %v5562
    %v5564 = vand.u32 %v5563, 4294901760
    %5565 = vmatprep.subr.mxu0 %v5564
    %v5566 = vand.u32 %v197, 4294901760
    %v5567 = vsub.f32 %v197, %v5566
    %v5568 = vand.u32 %v5567, 4294901760
    %5569 = vmatpush1.msra.mxu0 %v5568
    %v5570 = vand.u32 %v212, 4294901760
    %v5571 = vsub.f32 %v212, %v5570
    %v5572 = vand.u32 %v5571, 4294901760
    %5573 = vmatprep.subr.mxu0 %v5572
    %v5574 = vand.u32 %v211, 4294901760
    %v5575 = vsub.f32 %v211, %v5574
    %v5576 = vand.u32 %v5575, 4294901760
    %5577 = vmatpush1.msra.mxu0 %v5576
    %v5578 = vand.u32 %v226, 4294901760
    %v5579 = vsub.f32 %v226, %v5578
    %v5580 = vand.u32 %v5579, 4294901760
    %5581 = vmatprep.subr.mxu0 %v5580
    %v5582 = vand.u32 %v225, 4294901760
    %v5583 = vsub.f32 %v225, %v5582
    %v5584 = vand.u32 %v5583, 4294901760
    %5585 = vmatpush1.msra.mxu0 %v5584
    %v5586 = vand.u32 %v240, 4294901760
    %v5587 = vsub.f32 %v240, %v5586
    %v5588 = vand.u32 %v5587, 4294901760
    %5589 = vmatprep.subr.mxu0 %v5588
    %v5590 = vand.u32 %v239, 4294901760
    %v5591 = vsub.f32 %v239, %v5590
    %v5592 = vand.u32 %v5591, 4294901760
    %5593 = vmatpush1.msra.mxu0 %v5592
    %v5594 = vand.u32 %v254, 4294901760
    %v5595 = vsub.f32 %v254, %v5594
    %v5596 = vand.u32 %v5595, 4294901760
    %5597 = vmatprep.subr.mxu0 %v5596
    %v5598 = vand.u32 %v253, 4294901760
    %v5599 = vsub.f32 %v253, %v5598
    %v5600 = vand.u32 %v5599, 4294901760
    %5601 = vmatpush1.msra.mxu0 %v5600
    %v5602 = vand.u32 %v384, 4294901760
    %v5603 = vsub.f32 %v384, %v5602
    %v5604 = vand.u32 %v5603, 4294901760
    %5605 = vmatprep.subr.mxu0 %v5604
    %v5606 = vand.u32 %v381, 4294901760
    %v5607 = vsub.f32 %v381, %v5606
    %v5608 = vand.u32 %v5607, 4294901760
    %5609 = vmatpush1.msra.mxu0 %v5608
    %5610 = vmatprep.subr.mxu0 0.0
    %5611 = vmatpush1.msra.mxu0 0.0
    %5612 = vmatprep.subr.mxu0 0.0
    %5613 = vmatpush1.msra.mxu0 0.0
    %5614 = vmatprep.subr.mxu0 0.0
    %5615 = vmatpush1.msra.mxu0 0.0
    %5616 = vmatprep.subr.mxu0 0.0
    %5617 = vmatpush1.msra.mxu0 0.0
    %5618 = vmatprep.subr.mxu0 0.0
    %5619 = vmatpush1.msra.mxu0 0.0
    %5620 = vmatprep.subr.mxu0 0.0
    %5621 = vmatpush1.msra.mxu0 0.0
    %5622 = vmatprep.subr.mxu0 0.0
    %5623 = vmatpush1.msra.mxu0 0.0
    %5624 = vmatprep.subr.mxu0 0.0
    %5625 = vmatpush1.msra.mxu0 0.0
    %5626 = vmatprep.subr.mxu0 0.0
    %5627 = vmatpush1.msra.mxu0 0.0
    %5628 = vmatprep.subr.mxu0 0.0
    %5629 = vmatpush1.msra.mxu0 0.0
    %5630 = vmatprep.subr.mxu0 0.0
    %5631 = vmatpush1.msra.mxu0 0.0
    %5632 = vmatprep.subr.mxu0 0.0
    %5633 = vmatpush1.msra.mxu0 0.0
    %5634 = vmatprep.subr.mxu0 0.0
    %5635 = vmatpush1.msra.mxu0 0.0
    %5636 = vmatprep.subr.mxu0 0.0
    %5637 = vmatpush1.msra.mxu0 0.0
    %5638 = vmatprep.subr.mxu0 0.0
    %5639 = vmatpush1.msra.mxu0 0.0
    %v5640 = vand.u32 %v347, 4294901760
    %5641 = vmatprep.mubr.f32.mxu0 %v5640
    %v5642 = vand.u32 %v343, 4294901760
    %5643 = vmatmul.mubr.f32.gmra.mrb[0].mxu0 %v5642
    %v5644 = vpop.f32.mrb[0].mxu0
    %v5645 = vadd.f32 %v5470, %v5644
    %v5646 = vpop.f32.mrb[0].mxu0
    %v5647 = vadd.f32 %v5472, %v5646
    %5648 = vdwg.mxu0
    %v5649 = vand.u32 %v44, 4294901760
    %5650 = vmatprep.subr.mxu0 %v5649
    %v5651 = vand.u32 %v43, 4294901760
    %5652 = vmatpush1.msra.mxu0 %v5651
    %v5653 = vand.u32 %v58, 4294901760
    %5654 = vmatprep.subr.mxu0 %v5653
    %v5655 = vand.u32 %v57, 4294901760
    %5656 = vmatpush1.msra.mxu0 %v5655
    %v5657 = vand.u32 %v72, 4294901760
    %5658 = vmatprep.subr.mxu0 %v5657
    %v5659 = vand.u32 %v71, 4294901760
    %5660 = vmatpush1.msra.mxu0 %v5659
    %v5661 = vand.u32 %v86, 4294901760
    %5662 = vmatprep.subr.mxu0 %v5661
    %v5663 = vand.u32 %v85, 4294901760
    %5664 = vmatpush1.msra.mxu0 %v5663
    %v5665 = vand.u32 %v100, 4294901760
    %5666 = vmatprep.subr.mxu0 %v5665
    %v5667 = vand.u32 %v99, 4294901760
    %5668 = vmatpush1.msra.mxu0 %v5667
    %v5669 = vand.u32 %v114, 4294901760
    %5670 = vmatprep.subr.mxu0 %v5669
    %v5671 = vand.u32 %v113, 4294901760
    %5672 = vmatpush1.msra.mxu0 %v5671
    %v5673 = vand.u32 %v128, 4294901760
    %5674 = vmatprep.subr.mxu0 %v5673
    %v5675 = vand.u32 %v127, 4294901760
    %5676 = vmatpush1.msra.mxu0 %v5675
    %v5677 = vand.u32 %v142, 4294901760
    %5678 = vmatprep.subr.mxu0 %v5677
    %v5679 = vand.u32 %v141, 4294901760
    %5680 = vmatpush1.msra.mxu0 %v5679
    %v5681 = vand.u32 %v156, 4294901760
    %5682 = vmatprep.subr.mxu0 %v5681
    %v5683 = vand.u32 %v155, 4294901760
    %5684 = vmatpush1.msra.mxu0 %v5683
    %v5685 = vand.u32 %v170, 4294901760
    %5686 = vmatprep.subr.mxu0 %v5685
    %v5687 = vand.u32 %v169, 4294901760
    %5688 = vmatpush1.msra.mxu0 %v5687
    %v5689 = vand.u32 %v184, 4294901760
    %5690 = vmatprep.subr.mxu0 %v5689
    %v5691 = vand.u32 %v183, 4294901760
    %5692 = vmatpush1.msra.mxu0 %v5691
    %v5693 = vand.u32 %v198, 4294901760
    %5694 = vmatprep.subr.mxu0 %v5693
    %v5695 = vand.u32 %v197, 4294901760
    %5696 = vmatpush1.msra.mxu0 %v5695
    %v5697 = vand.u32 %v212, 4294901760
    %5698 = vmatprep.subr.mxu0 %v5697
    %v5699 = vand.u32 %v211, 4294901760
    %5700 = vmatpush1.msra.mxu0 %v5699
    %v5701 = vand.u32 %v226, 4294901760
    %5702 = vmatprep.subr.mxu0 %v5701
    %v5703 = vand.u32 %v225, 4294901760
    %5704 = vmatpush1.msra.mxu0 %v5703
    %v5705 = vand.u32 %v240, 4294901760
    %5706 = vmatprep.subr.mxu0 %v5705
    %v5707 = vand.u32 %v239, 4294901760
    %5708 = vmatpush1.msra.mxu0 %v5707
    %v5709 = vand.u32 %v254, 4294901760
    %5710 = vmatprep.subr.mxu0 %v5709
    %v5711 = vand.u32 %v253, 4294901760
    %5712 = vmatpush1.msra.mxu0 %v5711
    %v5713 = vand.u32 %v384, 4294901760
    %5714 = vmatprep.subr.mxu0 %v5713
    %v5715 = vand.u32 %v381, 4294901760
    %5716 = vmatpush1.msra.mxu0 %v5715
    %5717 = vmatprep.subr.mxu0 0.0
    %5718 = vmatpush1.msra.mxu0 0.0
    %5719 = vmatprep.subr.mxu0 0.0
    %5720 = vmatpush1.msra.mxu0 0.0
    %5721 = vmatprep.subr.mxu0 0.0
    %5722 = vmatpush1.msra.mxu0 0.0
    %5723 = vmatprep.subr.mxu0 0.0
    %5724 = vmatpush1.msra.mxu0 0.0
    %5725 = vmatprep.subr.mxu0 0.0
    %5726 = vmatpush1.msra.mxu0 0.0
    %5727 = vmatprep.subr.mxu0 0.0
    %5728 = vmatpush1.msra.mxu0 0.0
    %5729 = vmatprep.subr.mxu0 0.0
    %5730 = vmatpush1.msra.mxu0 0.0
    %5731 = vmatprep.subr.mxu0 0.0
    %5732 = vmatpush1.msra.mxu0 0.0
    %5733 = vmatprep.subr.mxu0 0.0
    %5734 = vmatpush1.msra.mxu0 0.0
    %5735 = vmatprep.subr.mxu0 0.0
    %5736 = vmatpush1.msra.mxu0 0.0
    %5737 = vmatprep.subr.mxu0 0.0
    %5738 = vmatpush1.msra.mxu0 0.0
    %5739 = vmatprep.subr.mxu0 0.0
    %5740 = vmatpush1.msra.mxu0 0.0
    %5741 = vmatprep.subr.mxu0 0.0
    %5742 = vmatpush1.msra.mxu0 0.0
    %5743 = vmatprep.subr.mxu0 0.0
    %5744 = vmatpush1.msra.mxu0 0.0
    %5745 = vmatprep.subr.mxu0 0.0
    %5746 = vmatpush1.msra.mxu0 0.0
    %v5747 = vand.u32 %v347, 4294901760
    %5748 = vmatprep.mubr.f32.mxu0 %v5747
    %v5749 = vand.u32 %v343, 4294901760
    %5750 = vmatmul.mubr.f32.gmra.mrb[0].mxu0 %v5749
    %v5751 = vpop.f32.mrb[0].mxu0
    %v5752 = vadd.f32 %v5645, %v5751
    %v5753 = vpop.f32.mrb[0].mxu0
    %v5754 = vadd.f32 %v5647, %v5753
    %5755 = vdwg.mxu0
    %v5756 = vand.u32 %v46, 4294901760
    %5757 = vmatprep.subr.mxu0 %v5756
    %v5758 = vand.u32 %v45, 4294901760
    %5759 = vmatpush1.msra.mxu0 %v5758
    %v5760 = vand.u32 %v60, 4294901760
    %5761 = vmatprep.subr.mxu0 %v5760
    %v5762 = vand.u32 %v59, 4294901760
    %5763 = vmatpush1.msra.mxu0 %v5762
    %v5764 = vand.u32 %v74, 4294901760
    %5765 = vmatprep.subr.mxu0 %v5764
    %v5766 = vand.u32 %v73, 4294901760
    %5767 = vmatpush1.msra.mxu0 %v5766
    %v5768 = vand.u32 %v88, 4294901760
    %5769 = vmatprep.subr.mxu0 %v5768
    %v5770 = vand.u32 %v87, 4294901760
    %5771 = vmatpush1.msra.mxu0 %v5770
    %v5772 = vand.u32 %v102, 4294901760
    %5773 = vmatprep.subr.mxu0 %v5772
    %v5774 = vand.u32 %v101, 4294901760
    %5775 = vmatpush1.msra.mxu0 %v5774
    %v5776 = vand.u32 %v116, 4294901760
    %5777 = vmatprep.subr.mxu0 %v5776
    %v5778 = vand.u32 %v115, 4294901760
    %5779 = vmatpush1.msra.mxu0 %v5778
    %v5780 = vand.u32 %v130, 4294901760
    %5781 = vmatprep.subr.mxu0 %v5780
    %v5782 = vand.u32 %v129, 4294901760
    %5783 = vmatpush1.msra.mxu0 %v5782
    %v5784 = vand.u32 %v144, 4294901760
    %5785 = vmatprep.subr.mxu0 %v5784
    %v5786 = vand.u32 %v143, 4294901760
    %5787 = vmatpush1.msra.mxu0 %v5786
    %v5788 = vand.u32 %v158, 4294901760
    %5789 = vmatprep.subr.mxu0 %v5788
    %v5790 = vand.u32 %v157, 4294901760
    %5791 = vmatpush1.msra.mxu0 %v5790
    %v5792 = vand.u32 %v172, 4294901760
    %5793 = vmatprep.subr.mxu0 %v5792
    %v5794 = vand.u32 %v171, 4294901760
    %5795 = vmatpush1.msra.mxu0 %v5794
    %v5796 = vand.u32 %v186, 4294901760
    %5797 = vmatprep.subr.mxu0 %v5796
    %v5798 = vand.u32 %v185, 4294901760
    %5799 = vmatpush1.msra.mxu0 %v5798
    %v5800 = vand.u32 %v200, 4294901760
    %5801 = vmatprep.subr.mxu0 %v5800
    %v5802 = vand.u32 %v199, 4294901760
    %5803 = vmatpush1.msra.mxu0 %v5802
    %v5804 = vand.u32 %v214, 4294901760
    %5805 = vmatprep.subr.mxu0 %v5804
    %v5806 = vand.u32 %v213, 4294901760
    %5807 = vmatpush1.msra.mxu0 %v5806
    %v5808 = vand.u32 %v228, 4294901760
    %5809 = vmatprep.subr.mxu0 %v5808
    %v5810 = vand.u32 %v227, 4294901760
    %5811 = vmatpush1.msra.mxu0 %v5810
    %v5812 = vand.u32 %v242, 4294901760
    %5813 = vmatprep.subr.mxu0 %v5812
    %v5814 = vand.u32 %v241, 4294901760
    %5815 = vmatpush1.msra.mxu0 %v5814
    %v5816 = vand.u32 %v256, 4294901760
    %5817 = vmatprep.subr.mxu0 %v5816
    %v5818 = vand.u32 %v255, 4294901760
    %5819 = vmatpush1.msra.mxu0 %v5818
    %v5820 = vand.u32 %v390, 4294901760
    %5821 = vmatprep.subr.mxu0 %v5820
    %v5822 = vand.u32 %v387, 4294901760
    %5823 = vmatpush1.msra.mxu0 %v5822
    %5824 = vmatprep.subr.mxu0 0.0
    %5825 = vmatpush1.msra.mxu0 0.0
    %5826 = vmatprep.subr.mxu0 0.0
    %5827 = vmatpush1.msra.mxu0 0.0
    %5828 = vmatprep.subr.mxu0 0.0
    %5829 = vmatpush1.msra.mxu0 0.0
    %5830 = vmatprep.subr.mxu0 0.0
    %5831 = vmatpush1.msra.mxu0 0.0
    %5832 = vmatprep.subr.mxu0 0.0
    %5833 = vmatpush1.msra.mxu0 0.0
    %5834 = vmatprep.subr.mxu0 0.0
    %5835 = vmatpush1.msra.mxu0 0.0
    %5836 = vmatprep.subr.mxu0 0.0
    %5837 = vmatpush1.msra.mxu0 0.0
    %5838 = vmatprep.subr.mxu0 0.0
    %5839 = vmatpush1.msra.mxu0 0.0
    %5840 = vmatprep.subr.mxu0 0.0
    %5841 = vmatpush1.msra.mxu0 0.0
    %5842 = vmatprep.subr.mxu0 0.0
    %5843 = vmatpush1.msra.mxu0 0.0
    %5844 = vmatprep.subr.mxu0 0.0
    %5845 = vmatpush1.msra.mxu0 0.0
    %5846 = vmatprep.subr.mxu0 0.0
    %5847 = vmatpush1.msra.mxu0 0.0
    %5848 = vmatprep.subr.mxu0 0.0
    %5849 = vmatpush1.msra.mxu0 0.0
    %5850 = vmatprep.subr.mxu0 0.0
    %5851 = vmatpush1.msra.mxu0 0.0
    %5852 = vmatprep.subr.mxu0 0.0
    %5853 = vmatpush1.msra.mxu0 0.0
    %v5854 = vand.u32 %v347, 4294901760
    %v5855 = vsub.f32 %v347, %v5854
    %v5856 = vand.u32 %v5855, 4294901760
    %v5857 = vsub.f32 %v5855, %v5856
    %v5858 = vand.u32 %v5857, 4294901760
    %5859 = vmatprep.mubr.f32.mxu0 %v5858
    %v5860 = vand.u32 %v343, 4294901760
    %v5861 = vsub.f32 %v343, %v5860
    %v5862 = vand.u32 %v5861, 4294901760
    %v5863 = vsub.f32 %v5861, %v5862
    %v5864 = vand.u32 %v5863, 4294901760
    %5865 = vmatmul.mubr.f32.gmra.mrb[0].mxu0 %v5864
    %v5866 = vpop.f32.mrb[0].mxu0
    %v5867 = vadd.f32 0.0, %v5866
    %v5868 = vpop.f32.mrb[0].mxu0
    %v5869 = vadd.f32 0.0, %v5868
    %5870 = vdwg.mxu0
    %v5871 = vand.u32 %v46, 4294901760
    %v5872 = vsub.f32 %v46, %v5871
    %v5873 = vand.u32 %v5872, 4294901760
    %v5874 = vsub.f32 %v5872, %v5873
    %v5875 = vand.u32 %v5874, 4294901760
    %5876 = vmatprep.subr.mxu0 %v5875
    %v5877 = vand.u32 %v45, 4294901760
    %v5878 = vsub.f32 %v45, %v5877
    %v5879 = vand.u32 %v5878, 4294901760
    %v5880 = vsub.f32 %v5878, %v5879
    %v5881 = vand.u32 %v5880, 4294901760
    %5882 = vmatpush1.msra.mxu0 %v5881
    %v5883 = vand.u32 %v60, 4294901760
    %v5884 = vsub.f32 %v60, %v5883
    %v5885 = vand.u32 %v5884, 4294901760
    %v5886 = vsub.f32 %v5884, %v5885
    %v5887 = vand.u32 %v5886, 4294901760
    %5888 = vmatprep.subr.mxu0 %v5887
    %v5889 = vand.u32 %v59, 4294901760
    %v5890 = vsub.f32 %v59, %v5889
    %v5891 = vand.u32 %v5890, 4294901760
    %v5892 = vsub.f32 %v5890, %v5891
    %v5893 = vand.u32 %v5892, 4294901760
    %5894 = vmatpush1.msra.mxu0 %v5893
    %v5895 = vand.u32 %v74, 4294901760
    %v5896 = vsub.f32 %v74, %v5895
    %v5897 = vand.u32 %v5896, 4294901760
    %v5898 = vsub.f32 %v5896, %v5897
    %v5899 = vand.u32 %v5898, 4294901760
    %5900 = vmatprep.subr.mxu0 %v5899
    %v5901 = vand.u32 %v73, 4294901760
    %v5902 = vsub.f32 %v73, %v5901
    %v5903 = vand.u32 %v5902, 4294901760
    %v5904 = vsub.f32 %v5902, %v5903
    %v5905 = vand.u32 %v5904, 4294901760
    %5906 = vmatpush1.msra.mxu0 %v5905
    %v5907 = vand.u32 %v88, 4294901760
    %v5908 = vsub.f32 %v88, %v5907
    %v5909 = vand.u32 %v5908, 4294901760
    %v5910 = vsub.f32 %v5908, %v5909
    %v5911 = vand.u32 %v5910, 4294901760
    %5912 = vmatprep.subr.mxu0 %v5911
    %v5913 = vand.u32 %v87, 4294901760
    %v5914 = vsub.f32 %v87, %v5913
    %v5915 = vand.u32 %v5914, 4294901760
    %v5916 = vsub.f32 %v5914, %v5915
    %v5917 = vand.u32 %v5916, 4294901760
    %5918 = vmatpush1.msra.mxu0 %v5917
    %v5919 = vand.u32 %v102, 4294901760
    %v5920 = vsub.f32 %v102, %v5919
    %v5921 = vand.u32 %v5920, 4294901760
    %v5922 = vsub.f32 %v5920, %v5921
    %v5923 = vand.u32 %v5922, 4294901760
    %5924 = vmatprep.subr.mxu0 %v5923
    %v5925 = vand.u32 %v101, 4294901760
    %v5926 = vsub.f32 %v101, %v5925
    %v5927 = vand.u32 %v5926, 4294901760
    %v5928 = vsub.f32 %v5926, %v5927
    %v5929 = vand.u32 %v5928, 4294901760
    %5930 = vmatpush1.msra.mxu0 %v5929
    %v5931 = vand.u32 %v116, 4294901760
    %v5932 = vsub.f32 %v116, %v5931
    %v5933 = vand.u32 %v5932, 4294901760
    %v5934 = vsub.f32 %v5932, %v5933
    %v5935 = vand.u32 %v5934, 4294901760
    %5936 = vmatprep.subr.mxu0 %v5935
    %v5937 = vand.u32 %v115, 4294901760
    %v5938 = vsub.f32 %v115, %v5937
    %v5939 = vand.u32 %v5938, 4294901760
    %v5940 = vsub.f32 %v5938, %v5939
    %v5941 = vand.u32 %v5940, 4294901760
    %5942 = vmatpush1.msra.mxu0 %v5941
    %v5943 = vand.u32 %v130, 4294901760
    %v5944 = vsub.f32 %v130, %v5943
    %v5945 = vand.u32 %v5944, 4294901760
    %v5946 = vsub.f32 %v5944, %v5945
    %v5947 = vand.u32 %v5946, 4294901760
    %5948 = vmatprep.subr.mxu0 %v5947
    %v5949 = vand.u32 %v129, 4294901760
    %v5950 = vsub.f32 %v129, %v5949
    %v5951 = vand.u32 %v5950, 4294901760
    %v5952 = vsub.f32 %v5950, %v5951
    %v5953 = vand.u32 %v5952, 4294901760
    %5954 = vmatpush1.msra.mxu0 %v5953
    %v5955 = vand.u32 %v144, 4294901760
    %v5956 = vsub.f32 %v144, %v5955
    %v5957 = vand.u32 %v5956, 4294901760
    %v5958 = vsub.f32 %v5956, %v5957
    %v5959 = vand.u32 %v5958, 4294901760
    %5960 = vmatprep.subr.mxu0 %v5959
    %v5961 = vand.u32 %v143, 4294901760
    %v5962 = vsub.f32 %v143, %v5961
    %v5963 = vand.u32 %v5962, 4294901760
    %v5964 = vsub.f32 %v5962, %v5963
    %v5965 = vand.u32 %v5964, 4294901760
    %5966 = vmatpush1.msra.mxu0 %v5965
    %v5967 = vand.u32 %v158, 4294901760
    %v5968 = vsub.f32 %v158, %v5967
    %v5969 = vand.u32 %v5968, 4294901760
    %v5970 = vsub.f32 %v5968, %v5969
    %v5971 = vand.u32 %v5970, 4294901760
    %5972 = vmatprep.subr.mxu0 %v5971
    %v5973 = vand.u32 %v157, 4294901760
    %v5974 = vsub.f32 %v157, %v5973
    %v5975 = vand.u32 %v5974, 4294901760
    %v5976 = vsub.f32 %v5974, %v5975
    %v5977 = vand.u32 %v5976, 4294901760
    %5978 = vmatpush1.msra.mxu0 %v5977
    %v5979 = vand.u32 %v172, 4294901760
    %v5980 = vsub.f32 %v172, %v5979
    %v5981 = vand.u32 %v5980, 4294901760
    %v5982 = vsub.f32 %v5980, %v5981
    %v5983 = vand.u32 %v5982, 4294901760
    %5984 = vmatprep.subr.mxu0 %v5983
    %v5985 = vand.u32 %v171, 4294901760
    %v5986 = vsub.f32 %v171, %v5985
    %v5987 = vand.u32 %v5986, 4294901760
    %v5988 = vsub.f32 %v5986, %v5987
    %v5989 = vand.u32 %v5988, 4294901760
    %5990 = vmatpush1.msra.mxu0 %v5989
    %v5991 = vand.u32 %v186, 4294901760
    %v5992 = vsub.f32 %v186, %v5991
    %v5993 = vand.u32 %v5992, 4294901760
    %v5994 = vsub.f32 %v5992, %v5993
    %v5995 = vand.u32 %v5994, 4294901760
    %5996 = vmatprep.subr.mxu0 %v5995
    %v5997 = vand.u32 %v185, 4294901760
    %v5998 = vsub.f32 %v185, %v5997
    %v5999 = vand.u32 %v5998, 4294901760
    %v6000 = vsub.f32 %v5998, %v5999
    %v6001 = vand.u32 %v6000, 4294901760
    %6002 = vmatpush1.msra.mxu0 %v6001
    %v6003 = vand.u32 %v200, 4294901760
    %v6004 = vsub.f32 %v200, %v6003
    %v6005 = vand.u32 %v6004, 4294901760
    %v6006 = vsub.f32 %v6004, %v6005
    %v6007 = vand.u32 %v6006, 4294901760
    %6008 = vmatprep.subr.mxu0 %v6007
    %v6009 = vand.u32 %v199, 4294901760
    %v6010 = vsub.f32 %v199, %v6009
    %v6011 = vand.u32 %v6010, 4294901760
    %v6012 = vsub.f32 %v6010, %v6011
    %v6013 = vand.u32 %v6012, 4294901760
    %6014 = vmatpush1.msra.mxu0 %v6013
    %v6015 = vand.u32 %v214, 4294901760
    %v6016 = vsub.f32 %v214, %v6015
    %v6017 = vand.u32 %v6016, 4294901760
    %v6018 = vsub.f32 %v6016, %v6017
    %v6019 = vand.u32 %v6018, 4294901760
    %6020 = vmatprep.subr.mxu0 %v6019
    %v6021 = vand.u32 %v213, 4294901760
    %v6022 = vsub.f32 %v213, %v6021
    %v6023 = vand.u32 %v6022, 4294901760
    %v6024 = vsub.f32 %v6022, %v6023
    %v6025 = vand.u32 %v6024, 4294901760
    %6026 = vmatpush1.msra.mxu0 %v6025
    %v6027 = vand.u32 %v228, 4294901760
    %v6028 = vsub.f32 %v228, %v6027
    %v6029 = vand.u32 %v6028, 4294901760
    %v6030 = vsub.f32 %v6028, %v6029
    %v6031 = vand.u32 %v6030, 4294901760
    %6032 = vmatprep.subr.mxu0 %v6031
    %v6033 = vand.u32 %v227, 4294901760
    %v6034 = vsub.f32 %v227, %v6033
    %v6035 = vand.u32 %v6034, 4294901760
    %v6036 = vsub.f32 %v6034, %v6035
    %v6037 = vand.u32 %v6036, 4294901760
    %6038 = vmatpush1.msra.mxu0 %v6037
    %v6039 = vand.u32 %v242, 4294901760
    %v6040 = vsub.f32 %v242, %v6039
    %v6041 = vand.u32 %v6040, 4294901760
    %v6042 = vsub.f32 %v6040, %v6041
    %v6043 = vand.u32 %v6042, 4294901760
    %6044 = vmatprep.subr.mxu0 %v6043
    %v6045 = vand.u32 %v241, 4294901760
    %v6046 = vsub.f32 %v241, %v6045
    %v6047 = vand.u32 %v6046, 4294901760
    %v6048 = vsub.f32 %v6046, %v6047
    %v6049 = vand.u32 %v6048, 4294901760
    %6050 = vmatpush1.msra.mxu0 %v6049
    %v6051 = vand.u32 %v256, 4294901760
    %v6052 = vsub.f32 %v256, %v6051
    %v6053 = vand.u32 %v6052, 4294901760
    %v6054 = vsub.f32 %v6052, %v6053
    %v6055 = vand.u32 %v6054, 4294901760
    %6056 = vmatprep.subr.mxu0 %v6055
    %v6057 = vand.u32 %v255, 4294901760
    %v6058 = vsub.f32 %v255, %v6057
    %v6059 = vand.u32 %v6058, 4294901760
    %v6060 = vsub.f32 %v6058, %v6059
    %v6061 = vand.u32 %v6060, 4294901760
    %6062 = vmatpush1.msra.mxu0 %v6061
    %v6063 = vand.u32 %v390, 4294901760
    %v6064 = vsub.f32 %v390, %v6063
    %v6065 = vand.u32 %v6064, 4294901760
    %v6066 = vsub.f32 %v6064, %v6065
    %v6067 = vand.u32 %v6066, 4294901760
    %6068 = vmatprep.subr.mxu0 %v6067
    %v6069 = vand.u32 %v387, 4294901760
    %v6070 = vsub.f32 %v387, %v6069
    %v6071 = vand.u32 %v6070, 4294901760
    %v6072 = vsub.f32 %v6070, %v6071
    %v6073 = vand.u32 %v6072, 4294901760
    %6074 = vmatpush1.msra.mxu0 %v6073
    %6075 = vmatprep.subr.mxu0 0.0
    %6076 = vmatpush1.msra.mxu0 0.0
    %6077 = vmatprep.subr.mxu0 0.0
    %6078 = vmatpush1.msra.mxu0 0.0
    %6079 = vmatprep.subr.mxu0 0.0
    %6080 = vmatpush1.msra.mxu0 0.0
    %6081 = vmatprep.subr.mxu0 0.0
    %6082 = vmatpush1.msra.mxu0 0.0
    %6083 = vmatprep.subr.mxu0 0.0
    %6084 = vmatpush1.msra.mxu0 0.0
    %6085 = vmatprep.subr.mxu0 0.0
    %6086 = vmatpush1.msra.mxu0 0.0
    %6087 = vmatprep.subr.mxu0 0.0
    %6088 = vmatpush1.msra.mxu0 0.0
    %6089 = vmatprep.subr.mxu0 0.0
    %6090 = vmatpush1.msra.mxu0 0.0
    %6091 = vmatprep.subr.mxu0 0.0
    %6092 = vmatpush1.msra.mxu0 0.0
    %6093 = vmatprep.subr.mxu0 0.0
    %6094 = vmatpush1.msra.mxu0 0.0
    %6095 = vmatprep.subr.mxu0 0.0
    %6096 = vmatpush1.msra.mxu0 0.0
    %6097 = vmatprep.subr.mxu0 0.0
    %6098 = vmatpush1.msra.mxu0 0.0
    %6099 = vmatprep.subr.mxu0 0.0
    %6100 = vmatpush1.msra.mxu0 0.0
    %6101 = vmatprep.subr.mxu0 0.0
    %6102 = vmatpush1.msra.mxu0 0.0
    %6103 = vmatprep.subr.mxu0 0.0
    %6104 = vmatpush1.msra.mxu0 0.0
    %v6105 = vand.u32 %v347, 4294901760
    %6106 = vmatprep.mubr.f32.mxu0 %v6105
    %v6107 = vand.u32 %v343, 4294901760
    %6108 = vmatmul.mubr.f32.gmra.mrb[0].mxu0 %v6107
    %v6109 = vpop.f32.mrb[0].mxu0
    %v6110 = vadd.f32 %v5867, %v6109
    %v6111 = vpop.f32.mrb[0].mxu0
    %v6112 = vadd.f32 %v5869, %v6111
    %6113 = vdwg.mxu0
    %v6114 = vand.u32 %v46, 4294901760
    %v6115 = vsub.f32 %v46, %v6114
    %6116 = vmatprep.subr.mxu0 %v6115
    %v6117 = vand.u32 %v45, 4294901760
    %v6118 = vsub.f32 %v45, %v6117
    %6119 = vmatpush1.msra.mxu0 %v6118
    %v6120 = vand.u32 %v60, 4294901760
    %v6121 = vsub.f32 %v60, %v6120
    %6122 = vmatprep.subr.mxu0 %v6121
    %v6123 = vand.u32 %v59, 4294901760
    %v6124 = vsub.f32 %v59, %v6123
    %6125 = vmatpush1.msra.mxu0 %v6124
    %v6126 = vand.u32 %v74, 4294901760
    %v6127 = vsub.f32 %v74, %v6126
    %6128 = vmatprep.subr.mxu0 %v6127
    %v6129 = vand.u32 %v73, 4294901760
    %v6130 = vsub.f32 %v73, %v6129
    %6131 = vmatpush1.msra.mxu0 %v6130
    %v6132 = vand.u32 %v88, 4294901760
    %v6133 = vsub.f32 %v88, %v6132
    %6134 = vmatprep.subr.mxu0 %v6133
    %v6135 = vand.u32 %v87, 4294901760
    %v6136 = vsub.f32 %v87, %v6135
    %6137 = vmatpush1.msra.mxu0 %v6136
    %v6138 = vand.u32 %v102, 4294901760
    %v6139 = vsub.f32 %v102, %v6138
    %6140 = vmatprep.subr.mxu0 %v6139
    %v6141 = vand.u32 %v101, 4294901760
    %v6142 = vsub.f32 %v101, %v6141
    %6143 = vmatpush1.msra.mxu0 %v6142
    %v6144 = vand.u32 %v116, 4294901760
    %v6145 = vsub.f32 %v116, %v6144
    %6146 = vmatprep.subr.mxu0 %v6145
    %v6147 = vand.u32 %v115, 4294901760
    %v6148 = vsub.f32 %v115, %v6147
    %6149 = vmatpush1.msra.mxu0 %v6148
    %v6150 = vand.u32 %v130, 4294901760
    %v6151 = vsub.f32 %v130, %v6150
    %6152 = vmatprep.subr.mxu0 %v6151
    %v6153 = vand.u32 %v129, 4294901760
    %v6154 = vsub.f32 %v129, %v6153
    %6155 = vmatpush1.msra.mxu0 %v6154
    %v6156 = vand.u32 %v144, 4294901760
    %v6157 = vsub.f32 %v144, %v6156
    %6158 = vmatprep.subr.mxu0 %v6157
    %v6159 = vand.u32 %v143, 4294901760
    %v6160 = vsub.f32 %v143, %v6159
    %6161 = vmatpush1.msra.mxu0 %v6160
    %v6162 = vand.u32 %v158, 4294901760
    %v6163 = vsub.f32 %v158, %v6162
    %6164 = vmatprep.subr.mxu0 %v6163
    %v6165 = vand.u32 %v157, 4294901760
    %v6166 = vsub.f32 %v157, %v6165
    %6167 = vmatpush1.msra.mxu0 %v6166
    %v6168 = vand.u32 %v172, 4294901760
    %v6169 = vsub.f32 %v172, %v6168
    %6170 = vmatprep.subr.mxu0 %v6169
    %v6171 = vand.u32 %v171, 4294901760
    %v6172 = vsub.f32 %v171, %v6171
    %6173 = vmatpush1.msra.mxu0 %v6172
    %v6174 = vand.u32 %v186, 4294901760
    %v6175 = vsub.f32 %v186, %v6174
    %6176 = vmatprep.subr.mxu0 %v6175
    %v6177 = vand.u32 %v185, 4294901760
    %v6178 = vsub.f32 %v185, %v6177
    %6179 = vmatpush1.msra.mxu0 %v6178
    %v6180 = vand.u32 %v200, 4294901760
    %v6181 = vsub.f32 %v200, %v6180
    %6182 = vmatprep.subr.mxu0 %v6181
    %v6183 = vand.u32 %v199, 4294901760
    %v6184 = vsub.f32 %v199, %v6183
    %6185 = vmatpush1.msra.mxu0 %v6184
    %v6186 = vand.u32 %v214, 4294901760
    %v6187 = vsub.f32 %v214, %v6186
    %6188 = vmatprep.subr.mxu0 %v6187
    %v6189 = vand.u32 %v213, 4294901760
    %v6190 = vsub.f32 %v213, %v6189
    %6191 = vmatpush1.msra.mxu0 %v6190
    %v6192 = vand.u32 %v228, 4294901760
    %v6193 = vsub.f32 %v228, %v6192
    %6194 = vmatprep.subr.mxu0 %v6193
    %v6195 = vand.u32 %v227, 4294901760
    %v6196 = vsub.f32 %v227, %v6195
    %6197 = vmatpush1.msra.mxu0 %v6196
    %v6198 = vand.u32 %v242, 4294901760
    %v6199 = vsub.f32 %v242, %v6198
    %6200 = vmatprep.subr.mxu0 %v6199
    %v6201 = vand.u32 %v241, 4294901760
    %v6202 = vsub.f32 %v241, %v6201
    %6203 = vmatpush1.msra.mxu0 %v6202
    %v6204 = vand.u32 %v256, 4294901760
    %v6205 = vsub.f32 %v256, %v6204
    %6206 = vmatprep.subr.mxu0 %v6205
    %v6207 = vand.u32 %v255, 4294901760
    %v6208 = vsub.f32 %v255, %v6207
    %6209 = vmatpush1.msra.mxu0 %v6208
    %v6210 = vand.u32 %v390, 4294901760
    %v6211 = vsub.f32 %v390, %v6210
    %6212 = vmatprep.subr.mxu0 %v6211
    %v6213 = vand.u32 %v387, 4294901760
    %v6214 = vsub.f32 %v387, %v6213
    %6215 = vmatpush1.msra.mxu0 %v6214
    %6216 = vmatprep.subr.mxu0 0.0
    %6217 = vmatpush1.msra.mxu0 0.0
    %6218 = vmatprep.subr.mxu0 0.0
    %6219 = vmatpush1.msra.mxu0 0.0
    %6220 = vmatprep.subr.mxu0 0.0
    %6221 = vmatpush1.msra.mxu0 0.0
    %6222 = vmatprep.subr.mxu0 0.0
    %6223 = vmatpush1.msra.mxu0 0.0
    %6224 = vmatprep.subr.mxu0 0.0
    %6225 = vmatpush1.msra.mxu0 0.0
    %6226 = vmatprep.subr.mxu0 0.0
    %6227 = vmatpush1.msra.mxu0 0.0
    %6228 = vmatprep.subr.mxu0 0.0
    %6229 = vmatpush1.msra.mxu0 0.0
    %6230 = vmatprep.subr.mxu0 0.0
    %6231 = vmatpush1.msra.mxu0 0.0
    %6232 = vmatprep.subr.mxu0 0.0
    %6233 = vmatpush1.msra.mxu0 0.0
    %6234 = vmatprep.subr.mxu0 0.0
    %6235 = vmatpush1.msra.mxu0 0.0
    %6236 = vmatprep.subr.mxu0 0.0
    %6237 = vmatpush1.msra.mxu0 0.0
    %6238 = vmatprep.subr.mxu0 0.0
    %6239 = vmatpush1.msra.mxu0 0.0
    %6240 = vmatprep.subr.mxu0 0.0
    %6241 = vmatpush1.msra.mxu0 0.0
    %6242 = vmatprep.subr.mxu0 0.0
    %6243 = vmatpush1.msra.mxu0 0.0
    %6244 = vmatprep.subr.mxu0 0.0
    %6245 = vmatpush1.msra.mxu0 0.0
    %v6246 = vand.u32 %v347, 4294901760
    %v6247 = vsub.f32 %v347, %v6246
    %6248 = vmatprep.mubr.f32.mxu0 %v6247
    %v6249 = vand.u32 %v343, 4294901760
    %v6250 = vsub.f32 %v343, %v6249
    %6251 = vmatmul.mubr.f32.gmra.mrb[0].mxu0 %v6250
    %v6252 = vpop.f32.mrb[0].mxu0
    %v6253 = vadd.f32 %v6110, %v6252
    %v6254 = vpop.f32.mrb[0].mxu0
    %v6255 = vadd.f32 %v6112, %v6254
    %6256 = vdwg.mxu0
    %v6257 = vand.u32 %v46, 4294901760
    %6258 = vmatprep.subr.mxu0 %v6257
    %v6259 = vand.u32 %v45, 4294901760
    %6260 = vmatpush1.msra.mxu0 %v6259
    %v6261 = vand.u32 %v60, 4294901760
    %6262 = vmatprep.subr.mxu0 %v6261
    %v6263 = vand.u32 %v59, 4294901760
    %6264 = vmatpush1.msra.mxu0 %v6263
    %v6265 = vand.u32 %v74, 4294901760
    %6266 = vmatprep.subr.mxu0 %v6265
    %v6267 = vand.u32 %v73, 4294901760
    %6268 = vmatpush1.msra.mxu0 %v6267
    %v6269 = vand.u32 %v88, 4294901760
    %6270 = vmatprep.subr.mxu0 %v6269
    %v6271 = vand.u32 %v87, 4294901760
    %6272 = vmatpush1.msra.mxu0 %v6271
    %v6273 = vand.u32 %v102, 4294901760
    %6274 = vmatprep.subr.mxu0 %v6273
    %v6275 = vand.u32 %v101, 4294901760
    %6276 = vmatpush1.msra.mxu0 %v6275
    %v6277 = vand.u32 %v116, 4294901760
    %6278 = vmatprep.subr.mxu0 %v6277
    %v6279 = vand.u32 %v115, 4294901760
    %6280 = vmatpush1.msra.mxu0 %v6279
    %v6281 = vand.u32 %v130, 4294901760
    %6282 = vmatprep.subr.mxu0 %v6281
    %v6283 = vand.u32 %v129, 4294901760
    %6284 = vmatpush1.msra.mxu0 %v6283
    %v6285 = vand.u32 %v144, 4294901760
    %6286 = vmatprep.subr.mxu0 %v6285
    %v6287 = vand.u32 %v143, 4294901760
    %6288 = vmatpush1.msra.mxu0 %v6287
    %v6289 = vand.u32 %v158, 4294901760
    %6290 = vmatprep.subr.mxu0 %v6289
    %v6291 = vand.u32 %v157, 4294901760
    %6292 = vmatpush1.msra.mxu0 %v6291
    %v6293 = vand.u32 %v172, 4294901760
    %6294 = vmatprep.subr.mxu0 %v6293
    %v6295 = vand.u32 %v171, 4294901760
    %6296 = vmatpush1.msra.mxu0 %v6295
    %v6297 = vand.u32 %v186, 4294901760
    %6298 = vmatprep.subr.mxu0 %v6297
    %v6299 = vand.u32 %v185, 4294901760
    %6300 = vmatpush1.msra.mxu0 %v6299
    %v6301 = vand.u32 %v200, 4294901760
    %6302 = vmatprep.subr.mxu0 %v6301
    %v6303 = vand.u32 %v199, 4294901760
    %6304 = vmatpush1.msra.mxu0 %v6303
    %v6305 = vand.u32 %v214, 4294901760
    %6306 = vmatprep.subr.mxu0 %v6305
    %v6307 = vand.u32 %v213, 4294901760
    %6308 = vmatpush1.msra.mxu0 %v6307
    %v6309 = vand.u32 %v228, 4294901760
    %6310 = vmatprep.subr.mxu0 %v6309
    %v6311 = vand.u32 %v227, 4294901760
    %6312 = vmatpush1.msra.mxu0 %v6311
    %v6313 = vand.u32 %v242, 4294901760
    %6314 = vmatprep.subr.mxu0 %v6313
    %v6315 = vand.u32 %v241, 4294901760
    %6316 = vmatpush1.msra.mxu0 %v6315
    %v6317 = vand.u32 %v256, 4294901760
    %6318 = vmatprep.subr.mxu0 %v6317
    %v6319 = vand.u32 %v255, 4294901760
    %6320 = vmatpush1.msra.mxu0 %v6319
    %v6321 = vand.u32 %v390, 4294901760
    %6322 = vmatprep.subr.mxu0 %v6321
    %v6323 = vand.u32 %v387, 4294901760
    %6324 = vmatpush1.msra.mxu0 %v6323
    %6325 = vmatprep.subr.mxu0 0.0
    %6326 = vmatpush1.msra.mxu0 0.0
    %6327 = vmatprep.subr.mxu0 0.0
    %6328 = vmatpush1.msra.mxu0 0.0
    %6329 = vmatprep.subr.mxu0 0.0
    %6330 = vmatpush1.msra.mxu0 0.0
    %6331 = vmatprep.subr.mxu0 0.0
    %6332 = vmatpush1.msra.mxu0 0.0
    %6333 = vmatprep.subr.mxu0 0.0
    %6334 = vmatpush1.msra.mxu0 0.0
    %6335 = vmatprep.subr.mxu0 0.0
    %6336 = vmatpush1.msra.mxu0 0.0
    %6337 = vmatprep.subr.mxu0 0.0
    %6338 = vmatpush1.msra.mxu0 0.0
    %6339 = vmatprep.subr.mxu0 0.0
    %6340 = vmatpush1.msra.mxu0 0.0
    %6341 = vmatprep.subr.mxu0 0.0
    %6342 = vmatpush1.msra.mxu0 0.0
    %6343 = vmatprep.subr.mxu0 0.0
    %6344 = vmatpush1.msra.mxu0 0.0
    %6345 = vmatprep.subr.mxu0 0.0
    %6346 = vmatpush1.msra.mxu0 0.0
    %6347 = vmatprep.subr.mxu0 0.0
    %6348 = vmatpush1.msra.mxu0 0.0
    %6349 = vmatprep.subr.mxu0 0.0
    %6350 = vmatpush1.msra.mxu0 0.0
    %6351 = vmatprep.subr.mxu0 0.0
    %6352 = vmatpush1.msra.mxu0 0.0
    %6353 = vmatprep.subr.mxu0 0.0
    %6354 = vmatpush1.msra.mxu0 0.0
    %v6355 = vand.u32 %v347, 4294901760
    %v6356 = vsub.f32 %v347, %v6355
    %v6357 = vand.u32 %v6356, 4294901760
    %6358 = vmatprep.mubr.f32.mxu0 %v6357
    %v6359 = vand.u32 %v343, 4294901760
    %v6360 = vsub.f32 %v343, %v6359
    %v6361 = vand.u32 %v6360, 4294901760
    %6362 = vmatmul.mubr.f32.gmra.mrb[0].mxu0 %v6361
    %v6363 = vpop.f32.mrb[0].mxu0
    %v6364 = vadd.f32 %v6253, %v6363
    %v6365 = vpop.f32.mrb[0].mxu0
    %v6366 = vadd.f32 %v6255, %v6365
    %6367 = vdwg.mxu0
    %v6368 = vand.u32 %v46, 4294901760
    %v6369 = vsub.f32 %v46, %v6368
    %v6370 = vand.u32 %v6369, 4294901760
    %6371 = vmatprep.subr.mxu0 %v6370
    %v6372 = vand.u32 %v45, 4294901760
    %v6373 = vsub.f32 %v45, %v6372
    %v6374 = vand.u32 %v6373, 4294901760
    %6375 = vmatpush1.msra.mxu0 %v6374
    %v6376 = vand.u32 %v60, 4294901760
    %v6377 = vsub.f32 %v60, %v6376
    %v6378 = vand.u32 %v6377, 4294901760
    %6379 = vmatprep.subr.mxu0 %v6378
    %v6380 = vand.u32 %v59, 4294901760
    %v6381 = vsub.f32 %v59, %v6380
    %v6382 = vand.u32 %v6381, 4294901760
    %6383 = vmatpush1.msra.mxu0 %v6382
    %v6384 = vand.u32 %v74, 4294901760
    %v6385 = vsub.f32 %v74, %v6384
    %v6386 = vand.u32 %v6385, 4294901760
    %6387 = vmatprep.subr.mxu0 %v6386
    %v6388 = vand.u32 %v73, 4294901760
    %v6389 = vsub.f32 %v73, %v6388
    %v6390 = vand.u32 %v6389, 4294901760
    %6391 = vmatpush1.msra.mxu0 %v6390
    %v6392 = vand.u32 %v88, 4294901760
    %v6393 = vsub.f32 %v88, %v6392
    %v6394 = vand.u32 %v6393, 4294901760
    %6395 = vmatprep.subr.mxu0 %v6394
    %v6396 = vand.u32 %v87, 4294901760
    %v6397 = vsub.f32 %v87, %v6396
    %v6398 = vand.u32 %v6397, 4294901760
    %6399 = vmatpush1.msra.mxu0 %v6398
    %v6400 = vand.u32 %v102, 4294901760
    %v6401 = vsub.f32 %v102, %v6400
    %v6402 = vand.u32 %v6401, 4294901760
    %6403 = vmatprep.subr.mxu0 %v6402
    %v6404 = vand.u32 %v101, 4294901760
    %v6405 = vsub.f32 %v101, %v6404
    %v6406 = vand.u32 %v6405, 4294901760
    %6407 = vmatpush1.msra.mxu0 %v6406
    %v6408 = vand.u32 %v116, 4294901760
    %v6409 = vsub.f32 %v116, %v6408
    %v6410 = vand.u32 %v6409, 4294901760
    %6411 = vmatprep.subr.mxu0 %v6410
    %v6412 = vand.u32 %v115, 4294901760
    %v6413 = vsub.f32 %v115, %v6412
    %v6414 = vand.u32 %v6413, 4294901760
    %6415 = vmatpush1.msra.mxu0 %v6414
    %v6416 = vand.u32 %v130, 4294901760
    %v6417 = vsub.f32 %v130, %v6416
    %v6418 = vand.u32 %v6417, 4294901760
    %6419 = vmatprep.subr.mxu0 %v6418
    %v6420 = vand.u32 %v129, 4294901760
    %v6421 = vsub.f32 %v129, %v6420
    %v6422 = vand.u32 %v6421, 4294901760
    %6423 = vmatpush1.msra.mxu0 %v6422
    %v6424 = vand.u32 %v144, 4294901760
    %v6425 = vsub.f32 %v144, %v6424
    %v6426 = vand.u32 %v6425, 4294901760
    %6427 = vmatprep.subr.mxu0 %v6426
    %v6428 = vand.u32 %v143, 4294901760
    %v6429 = vsub.f32 %v143, %v6428
    %v6430 = vand.u32 %v6429, 4294901760
    %6431 = vmatpush1.msra.mxu0 %v6430
    %v6432 = vand.u32 %v158, 4294901760
    %v6433 = vsub.f32 %v158, %v6432
    %v6434 = vand.u32 %v6433, 4294901760
    %6435 = vmatprep.subr.mxu0 %v6434
    %v6436 = vand.u32 %v157, 4294901760
    %v6437 = vsub.f32 %v157, %v6436
    %v6438 = vand.u32 %v6437, 4294901760
    %6439 = vmatpush1.msra.mxu0 %v6438
    %v6440 = vand.u32 %v172, 4294901760
    %v6441 = vsub.f32 %v172, %v6440
    %v6442 = vand.u32 %v6441, 4294901760
    %6443 = vmatprep.subr.mxu0 %v6442
    %v6444 = vand.u32 %v171, 4294901760
    %v6445 = vsub.f32 %v171, %v6444
    %v6446 = vand.u32 %v6445, 4294901760
    %6447 = vmatpush1.msra.mxu0 %v6446
    %v6448 = vand.u32 %v186, 4294901760
    %v6449 = vsub.f32 %v186, %v6448
    %v6450 = vand.u32 %v6449, 4294901760
    %6451 = vmatprep.subr.mxu0 %v6450
    %v6452 = vand.u32 %v185, 4294901760
    %v6453 = vsub.f32 %v185, %v6452
    %v6454 = vand.u32 %v6453, 4294901760
    %6455 = vmatpush1.msra.mxu0 %v6454
    %v6456 = vand.u32 %v200, 4294901760
    %v6457 = vsub.f32 %v200, %v6456
    %v6458 = vand.u32 %v6457, 4294901760
    %6459 = vmatprep.subr.mxu0 %v6458
    %v6460 = vand.u32 %v199, 4294901760
    %v6461 = vsub.f32 %v199, %v6460
    %v6462 = vand.u32 %v6461, 4294901760
    %6463 = vmatpush1.msra.mxu0 %v6462
    %v6464 = vand.u32 %v214, 4294901760
    %v6465 = vsub.f32 %v214, %v6464
    %v6466 = vand.u32 %v6465, 4294901760
    %6467 = vmatprep.subr.mxu0 %v6466
    %v6468 = vand.u32 %v213, 4294901760
    %v6469 = vsub.f32 %v213, %v6468
    %v6470 = vand.u32 %v6469, 4294901760
    %6471 = vmatpush1.msra.mxu0 %v6470
    %v6472 = vand.u32 %v228, 4294901760
    %v6473 = vsub.f32 %v228, %v6472
    %v6474 = vand.u32 %v6473, 4294901760
    %6475 = vmatprep.subr.mxu0 %v6474
    %v6476 = vand.u32 %v227, 4294901760
    %v6477 = vsub.f32 %v227, %v6476
    %v6478 = vand.u32 %v6477, 4294901760
    %6479 = vmatpush1.msra.mxu0 %v6478
    %v6480 = vand.u32 %v242, 4294901760
    %v6481 = vsub.f32 %v242, %v6480
    %v6482 = vand.u32 %v6481, 4294901760
    %6483 = vmatprep.subr.mxu0 %v6482
    %v6484 = vand.u32 %v241, 4294901760
    %v6485 = vsub.f32 %v241, %v6484
    %v6486 = vand.u32 %v6485, 4294901760
    %6487 = vmatpush1.msra.mxu0 %v6486
    %v6488 = vand.u32 %v256, 4294901760
    %v6489 = vsub.f32 %v256, %v6488
    %v6490 = vand.u32 %v6489, 4294901760
    %6491 = vmatprep.subr.mxu0 %v6490
    %v6492 = vand.u32 %v255, 4294901760
    %v6493 = vsub.f32 %v255, %v6492
    %v6494 = vand.u32 %v6493, 4294901760
    %6495 = vmatpush1.msra.mxu0 %v6494
    %v6496 = vand.u32 %v390, 4294901760
    %v6497 = vsub.f32 %v390, %v6496
    %v6498 = vand.u32 %v6497, 4294901760
    %6499 = vmatprep.subr.mxu0 %v6498
    %v6500 = vand.u32 %v387, 4294901760
    %v6501 = vsub.f32 %v387, %v6500
    %v6502 = vand.u32 %v6501, 4294901760
    %6503 = vmatpush1.msra.mxu0 %v6502
    %6504 = vmatprep.subr.mxu0 0.0
    %6505 = vmatpush1.msra.mxu0 0.0
    %6506 = vmatprep.subr.mxu0 0.0
    %6507 = vmatpush1.msra.mxu0 0.0
    %6508 = vmatprep.subr.mxu0 0.0
    %6509 = vmatpush1.msra.mxu0 0.0
    %6510 = vmatprep.subr.mxu0 0.0
    %6511 = vmatpush1.msra.mxu0 0.0
    %6512 = vmatprep.subr.mxu0 0.0
    %6513 = vmatpush1.msra.mxu0 0.0
    %6514 = vmatprep.subr.mxu0 0.0
    %6515 = vmatpush1.msra.mxu0 0.0
    %6516 = vmatprep.subr.mxu0 0.0
    %6517 = vmatpush1.msra.mxu0 0.0
    %6518 = vmatprep.subr.mxu0 0.0
    %6519 = vmatpush1.msra.mxu0 0.0
    %6520 = vmatprep.subr.mxu0 0.0
    %6521 = vmatpush1.msra.mxu0 0.0
    %6522 = vmatprep.subr.mxu0 0.0
    %6523 = vmatpush1.msra.mxu0 0.0
    %6524 = vmatprep.subr.mxu0 0.0
    %6525 = vmatpush1.msra.mxu0 0.0
    %6526 = vmatprep.subr.mxu0 0.0
    %6527 = vmatpush1.msra.mxu0 0.0
    %6528 = vmatprep.subr.mxu0 0.0
    %6529 = vmatpush1.msra.mxu0 0.0
    %6530 = vmatprep.subr.mxu0 0.0
    %6531 = vmatpush1.msra.mxu0 0.0
    %6532 = vmatprep.subr.mxu0 0.0
    %6533 = vmatpush1.msra.mxu0 0.0
    %v6534 = vand.u32 %v347, 4294901760
    %6535 = vmatprep.mubr.f32.mxu0 %v6534
    %v6536 = vand.u32 %v343, 4294901760
    %6537 = vmatmul.mubr.f32.gmra.mrb[0].mxu0 %v6536
    %v6538 = vpop.f32.mrb[0].mxu0
    %v6539 = vadd.f32 %v6364, %v6538
    %v6540 = vpop.f32.mrb[0].mxu0
    %v6541 = vadd.f32 %v6366, %v6540
    %6542 = vdwg.mxu0
    %v6543 = vand.u32 %v46, 4294901760
    %6544 = vmatprep.subr.mxu0 %v6543
    %v6545 = vand.u32 %v45, 4294901760
    %6546 = vmatpush1.msra.mxu0 %v6545
    %v6547 = vand.u32 %v60, 4294901760
    %6548 = vmatprep.subr.mxu0 %v6547
    %v6549 = vand.u32 %v59, 4294901760
    %6550 = vmatpush1.msra.mxu0 %v6549
    %v6551 = vand.u32 %v74, 4294901760
    %6552 = vmatprep.subr.mxu0 %v6551
    %v6553 = vand.u32 %v73, 4294901760
    %6554 = vmatpush1.msra.mxu0 %v6553
    %v6555 = vand.u32 %v88, 4294901760
    %6556 = vmatprep.subr.mxu0 %v6555
    %v6557 = vand.u32 %v87, 4294901760
    %6558 = vmatpush1.msra.mxu0 %v6557
    %v6559 = vand.u32 %v102, 4294901760
    %6560 = vmatprep.subr.mxu0 %v6559
    %v6561 = vand.u32 %v101, 4294901760
    %6562 = vmatpush1.msra.mxu0 %v6561
    %v6563 = vand.u32 %v116, 4294901760
    %6564 = vmatprep.subr.mxu0 %v6563
    %v6565 = vand.u32 %v115, 4294901760
    %6566 = vmatpush1.msra.mxu0 %v6565
    %v6567 = vand.u32 %v130, 4294901760
    %6568 = vmatprep.subr.mxu0 %v6567
    %v6569 = vand.u32 %v129, 4294901760
    %6570 = vmatpush1.msra.mxu0 %v6569
    %v6571 = vand.u32 %v144, 4294901760
    %6572 = vmatprep.subr.mxu0 %v6571
    %v6573 = vand.u32 %v143, 4294901760
    %6574 = vmatpush1.msra.mxu0 %v6573
    %v6575 = vand.u32 %v158, 4294901760
    %6576 = vmatprep.subr.mxu0 %v6575
    %v6577 = vand.u32 %v157, 4294901760
    %6578 = vmatpush1.msra.mxu0 %v6577
    %v6579 = vand.u32 %v172, 4294901760
    %6580 = vmatprep.subr.mxu0 %v6579
    %v6581 = vand.u32 %v171, 4294901760
    %6582 = vmatpush1.msra.mxu0 %v6581
    %v6583 = vand.u32 %v186, 4294901760
    %6584 = vmatprep.subr.mxu0 %v6583
    %v6585 = vand.u32 %v185, 4294901760
    %6586 = vmatpush1.msra.mxu0 %v6585
    %v6587 = vand.u32 %v200, 4294901760
    %6588 = vmatprep.subr.mxu0 %v6587
    %v6589 = vand.u32 %v199, 4294901760
    %6590 = vmatpush1.msra.mxu0 %v6589
    %v6591 = vand.u32 %v214, 4294901760
    %6592 = vmatprep.subr.mxu0 %v6591
    %v6593 = vand.u32 %v213, 4294901760
    %6594 = vmatpush1.msra.mxu0 %v6593
    %v6595 = vand.u32 %v228, 4294901760
    %6596 = vmatprep.subr.mxu0 %v6595
    %v6597 = vand.u32 %v227, 4294901760
    %6598 = vmatpush1.msra.mxu0 %v6597
    %v6599 = vand.u32 %v242, 4294901760
    %6600 = vmatprep.subr.mxu0 %v6599
    %v6601 = vand.u32 %v241, 4294901760
    %6602 = vmatpush1.msra.mxu0 %v6601
    %v6603 = vand.u32 %v256, 4294901760
    %6604 = vmatprep.subr.mxu0 %v6603
    %v6605 = vand.u32 %v255, 4294901760
    %6606 = vmatpush1.msra.mxu0 %v6605
    %v6607 = vand.u32 %v390, 4294901760
    %6608 = vmatprep.subr.mxu0 %v6607
    %v6609 = vand.u32 %v387, 4294901760
    %6610 = vmatpush1.msra.mxu0 %v6609
    %6611 = vmatprep.subr.mxu0 0.0
    %6612 = vmatpush1.msra.mxu0 0.0
    %6613 = vmatprep.subr.mxu0 0.0
    %6614 = vmatpush1.msra.mxu0 0.0
    %6615 = vmatprep.subr.mxu0 0.0
    %6616 = vmatpush1.msra.mxu0 0.0
    %6617 = vmatprep.subr.mxu0 0.0
    %6618 = vmatpush1.msra.mxu0 0.0
    %6619 = vmatprep.subr.mxu0 0.0
    %6620 = vmatpush1.msra.mxu0 0.0
    %6621 = vmatprep.subr.mxu0 0.0
    %6622 = vmatpush1.msra.mxu0 0.0
    %6623 = vmatprep.subr.mxu0 0.0
    %6624 = vmatpush1.msra.mxu0 0.0
    %6625 = vmatprep.subr.mxu0 0.0
    %6626 = vmatpush1.msra.mxu0 0.0
    %6627 = vmatprep.subr.mxu0 0.0
    %6628 = vmatpush1.msra.mxu0 0.0
    %6629 = vmatprep.subr.mxu0 0.0
    %6630 = vmatpush1.msra.mxu0 0.0
    %6631 = vmatprep.subr.mxu0 0.0
    %6632 = vmatpush1.msra.mxu0 0.0
    %6633 = vmatprep.subr.mxu0 0.0
    %6634 = vmatpush1.msra.mxu0 0.0
    %6635 = vmatprep.subr.mxu0 0.0
    %6636 = vmatpush1.msra.mxu0 0.0
    %6637 = vmatprep.subr.mxu0 0.0
    %6638 = vmatpush1.msra.mxu0 0.0
    %6639 = vmatprep.subr.mxu0 0.0
    %6640 = vmatpush1.msra.mxu0 0.0
    %v6641 = vand.u32 %v347, 4294901760
    %6642 = vmatprep.mubr.f32.mxu0 %v6641
    %v6643 = vand.u32 %v343, 4294901760
    %6644 = vmatmul.mubr.f32.gmra.mrb[0].mxu0 %v6643
    %v6645 = vpop.f32.mrb[0].mxu0
    %v6646 = vadd.f32 %v6539, %v6645
    %v6647 = vpop.f32.mrb[0].mxu0
    %v6648 = vadd.f32 %v6541, %v6647
    %6649 = vdwg.mxu0
    %v6650 = vand.u32 2147483647, %v1282
    %vm6651 = vcmp.le.f32.partialorder %v6650, 0.7853982
    %vm6652 = vcmp.lt.s32.totalorder %v1282, 0
    %v6653 = vand.u32 %v1282, 2139095040
    %v6654 = vshrl.u32 %v6653, 23
    %v6655 = vsub.s32 %v6654, 127
    %v6656 = vand.u32 2147483647, %v1282
    %v6657 = vand.u32 %v6656, 8388607
    %v6658 = vor.u32 %v6657, 8388608
    %v6659 = vsub.s32 0, %v6658
    %v6660 = vadd.s32 %v6655, 1
    %vm6661 = vcmp.gt.s32.totalorder %v6660, 0
    %v6662 = vsel %vm6661, %v6660, 0
    %v6663 = vshrl.u32 %v6662, 5
    %v6664 = vand.u32 %v6662, 31
    %v6665 = vsub.s32 32, %v6664
    %v6666 = vshrl.u32 683565275, %v6665
    %v6667 = vshll.u32 683565275, %v6664
    %v6668 = vshrl.u32 2475754826, %v6665
    %v6669 = vor.u32 %v6667, %v6668
    %v6670 = vshll.u32 2475754826, %v6664
    %v6671 = vshrl.u32 2131351028, %v6665
    %v6672 = vor.u32 %v6670, %v6671
    %v6673 = vshll.u32 2131351028, %v6664
    %v6674 = vshrl.u32 2102212464, %v6665
    %v6675 = vor.u32 %v6673, %v6674
    %v6676 = vshll.u32 2102212464, %v6664
    %v6677 = vshrl.u32 920167782, %v6665
    %v6678 = vor.u32 %v6676, %v6677
    %v6679 = vshll.u32 920167782, %v6664
    %v6680 = vshrl.u32 1326507024, %v6665
    %v6681 = vor.u32 %v6679, %v6680
    %vm6682 = vcmp.lt.s32.totalorder %v6663, 1
    %vm6683 = vcmp.lt.s32.totalorder %v6663, 2
    %vm6684 = vcmp.lt.s32.totalorder %v6663, 3
    %vm6685 = vcmp.lt.s32.totalorder %v6663, 4
    %v6686 = vsel %vm6682, %v6666, %v6669
    %v6687 = vsel %vm6685, %v6675, 2102212464
    %v6688 = vsel %vm6684, %v6672, %v6687
    %v6689 = vsel %vm6683, %v6686, %v6688
    %v6690 = vsel %vm6682, %v6669, %v6672
    %v6691 = vsel %vm6685, %v6678, 920167782
    %v6692 = vsel %vm6684, %v6675, %v6691
    %v6693 = vsel %vm6683, %v6690, %v6692
    %v6694 = vsel %vm6682, %v6672, %v6675
    %v6695 = vsel %vm6685, %v6681, 1326507024
    %v6696 = vsel %vm6684, %v6678, %v6695
    %v6697 = vsel %vm6683, %v6694, %v6696
    %v6698 = vshll.u32 %v6658, 8
    %v6699 = vmul.u32.u64.compose %v6698, %v6697
    %v6700 = vextract.low.u32 %v6699
    %v6701 = vextract.high.u32 %v6699
    %v6702 = vmul.u32.u64.compose %v6698, %v6693
    %v6703 = vextract.low.u32 %v6702
    %v6704 = vextract.high.u32 %v6702
    %v6705 = vmul.u32 %v6698, %v6689
    %v6706 = vadd.s32 %v6701, %v6703
    %vm6707 = vc.u32 %v6701, %v6703
    %v6708 = vadd.s32 %v6704, 1
    %v6709 = vsel %vm6707, %v6708, %v6704
    %v6710 = vadd.s32 %v6705, %v6709
    %v6711 = vadd.s32 %v6710, 536870912
    %v6712 = vshrl.u32 %v6711, 30
    %v6713 = vshll.u32 %v6712, 30
    %v6714 = vsub.s32 %v6710, %v6713
    %vm6715 = vcmp.lt.s32.totalorder %v6714, 0
    %v6716 = vsub.s32 0, %v6714
    %v6717 = vsel %vm6715, %v6716, %v6714
    %v6718 = vclz %v6717
    %v6719 = vsub.s32 %v6718, 2
    %vm6720 = vcmp.gt.s32.totalorder 0, %v6719
    %v6721 = vsel %vm6720, 0, %v6719
    %v6722 = vsub.s32 32, %v6721
    %v6723 = vshll.u32 %v6714, %v6721
    %v6724 = vshrl.u32 %v6706, %v6722
    %v6725 = vor.u32 %v6723, %v6724
    %v6726 = vsub.s32 4294967266, %v6721
    %v6727 = vadd.s32 %v6726, 127
    %v6728 = vshll.u32 %v6727, 23
    %v6729 = vor.u32 4788187, %v6728
    %v6730 = vand.u32 2147483647, %v6729
    %v6732 = vcvt.s32.f32 %v6725
    %v6733 = vmul.f32 %v6732, %v6730
    %v6734 = vxor.u32 %v6733, 2147483648
    %v6735 = vsel %vm6652, %v6734, %v6733
    %v6736 = vsub.s32 4, %v6712
    %v6737 = vsel %vm6652, %v6736, %v6712
    %v6738 = vsel %vm6651, %v1282, %v6735
    %v6739 = vsel %vm6651, 0, %v6737
    %v6740 = vcosq.f32.pop %v6738
    %v6741 = vsinq.f32.pop %v6738
    %vm6742 = vweird.f32 %v1282
    %v6743 = vadd.s32 %v6739, 3
    %v6744 = vand.u32 %v6743, 3
    %vm6745 = vcmp.lt.s32.totalorder %v6744, 2
    %vm6746 = vcmp.eq.s32.totalorder %v6744, 0
    %v6747 = vxor.u32 %v6741, 2147483648
    %v6748 = vsel %vm6746, %v6740, %v6747
    %vm6749 = vcmp.eq.s32.totalorder %v6744, 2
    %v6750 = vxor.u32 %v6740, 2147483648
    %v6751 = vsel %vm6749, %v6750, %v6741
    %v6752 = vsel %vm6745, %v6748, %v6751
    %v6753 = vsel %vm6742, nan, %v6752
    %v6754 = vand.u32 2147483647, %v1284
    %vm6755 = vcmp.le.f32.partialorder %v6754, 0.7853982
    %vm6756 = vcmp.lt.s32.totalorder %v1284, 0
    %v6757 = vand.u32 %v1284, 2139095040
    %v6758 = vshrl.u32 %v6757, 23
    %v6759 = vsub.s32 %v6758, 127
    %v6760 = vand.u32 2147483647, %v1284
    %v6761 = vand.u32 %v6760, 8388607
    %v6762 = vor.u32 %v6761, 8388608
    %v6763 = vsub.s32 0, %v6762
    %v6764 = vadd.s32 %v6759, 1
    %vm6765 = vcmp.gt.s32.totalorder %v6764, 0
    %v6766 = vsel %vm6765, %v6764, 0
    %v6767 = vshrl.u32 %v6766, 5
    %v6768 = vand.u32 %v6766, 31
    %v6769 = vsub.s32 32, %v6768
    %v6770 = vshrl.u32 683565275, %v6769
    %v6771 = vshll.u32 683565275, %v6768
    %v6772 = vshrl.u32 2475754826, %v6769
    %v6773 = vor.u32 %v6771, %v6772
    %v6774 = vshll.u32 2475754826, %v6768
    %v6775 = vshrl.u32 2131351028, %v6769
    %v6776 = vor.u32 %v6774, %v6775
    %v6777 = vshll.u32 2131351028, %v6768
    %v6778 = vshrl.u32 2102212464, %v6769
    %v6779 = vor.u32 %v6777, %v6778
    %v6780 = vshll.u32 2102212464, %v6768
    %v6781 = vshrl.u32 920167782, %v6769
    %v6782 = vor.u32 %v6780, %v6781
    %v6783 = vshll.u32 920167782, %v6768
    %v6784 = vshrl.u32 1326507024, %v6769
    %v6785 = vor.u32 %v6783, %v6784
    %vm6786 = vcmp.lt.s32.totalorder %v6767, 1
    %vm6787 = vcmp.lt.s32.totalorder %v6767, 2
    %vm6788 = vcmp.lt.s32.totalorder %v6767, 3
    %vm6789 = vcmp.lt.s32.totalorder %v6767, 4
    %v6790 = vsel %vm6786, %v6770, %v6773
    %v6791 = vsel %vm6789, %v6779, 2102212464
    %v6792 = vsel %vm6788, %v6776, %v6791
    %v6793 = vsel %vm6787, %v6790, %v6792
    %v6794 = vsel %vm6786, %v6773, %v6776
    %v6795 = vsel %vm6789, %v6782, 920167782
    %v6796 = vsel %vm6788, %v6779, %v6795
    %v6797 = vsel %vm6787, %v6794, %v6796
    %v6798 = vsel %vm6786, %v6776, %v6779
    %v6799 = vsel %vm6789, %v6785, 1326507024
    %v6800 = vsel %vm6788, %v6782, %v6799
    %v6801 = vsel %vm6787, %v6798, %v6800
    %v6802 = vshll.u32 %v6762, 8
    %v6803 = vmul.u32.u64.compose %v6802, %v6801
    %v6804 = vextract.low.u32 %v6803
    %v6805 = vextract.high.u32 %v6803
    %v6806 = vmul.u32.u64.compose %v6802, %v6797
    %v6807 = vextract.low.u32 %v6806
    %v6808 = vextract.high.u32 %v6806
    %v6809 = vmul.u32 %v6802, %v6793
    %v6810 = vadd.s32 %v6805, %v6807
    %vm6811 = vc.u32 %v6805, %v6807
    %v6812 = vadd.s32 %v6808, 1
    %v6813 = vsel %vm6811, %v6812, %v6808
    %v6814 = vadd.s32 %v6809, %v6813
    %v6815 = vadd.s32 %v6814, 536870912
    %v6816 = vshrl.u32 %v6815, 30
    %v6817 = vshll.u32 %v6816, 30
    %v6818 = vsub.s32 %v6814, %v6817
    %vm6819 = vcmp.lt.s32.totalorder %v6818, 0
    %v6820 = vsub.s32 0, %v6818
    %v6821 = vsel %vm6819, %v6820, %v6818
    %v6822 = vclz %v6821
    %v6823 = vsub.s32 %v6822, 2
    %vm6824 = vcmp.gt.s32.totalorder 0, %v6823
    %v6825 = vsel %vm6824, 0, %v6823
    %v6826 = vsub.s32 32, %v6825
    %v6827 = vshll.u32 %v6818, %v6825
    %v6828 = vshrl.u32 %v6810, %v6826
    %v6829 = vor.u32 %v6827, %v6828
    %v6830 = vsub.s32 4294967266, %v6825
    %v6831 = vadd.s32 %v6830, 127
    %v6832 = vshll.u32 %v6831, 23
    %v6833 = vor.u32 4788187, %v6832
    %v6834 = vand.u32 2147483647, %v6833
    %v6836 = vcvt.s32.f32 %v6829
    %v6837 = vmul.f32 %v6836, %v6834
    %v6838 = vxor.u32 %v6837, 2147483648
    %v6839 = vsel %vm6756, %v6838, %v6837
    %v6840 = vsub.s32 4, %v6816
    %v6841 = vsel %vm6756, %v6840, %v6816
    %v6842 = vsel %vm6755, %v1284, %v6839
    %v6843 = vsel %vm6755, 0, %v6841
    %v6844 = vcosq.f32.pop %v6842
    %v6845 = vsinq.f32.pop %v6842
    %vm6846 = vweird.f32 %v1284
    %v6847 = vadd.s32 %v6843, 3
    %v6848 = vand.u32 %v6847, 3
    %vm6849 = vcmp.lt.s32.totalorder %v6848, 2
    %vm6850 = vcmp.eq.s32.totalorder %v6848, 0
    %v6851 = vxor.u32 %v6845, 2147483648
    %v6852 = vsel %vm6850, %v6844, %v6851
    %vm6853 = vcmp.eq.s32.totalorder %v6848, 2
    %v6854 = vxor.u32 %v6844, 2147483648
    %v6855 = vsel %vm6853, %v6854, %v6845
    %v6856 = vsel %vm6849, %v6852, %v6855
    %v6857 = vsel %vm6846, nan, %v6856
    %v6858 = vand.u32 2147483647, %v2176
    %vm6859 = vcmp.le.f32.partialorder %v6858, 0.7853982
    %vm6860 = vcmp.lt.s32.totalorder %v2176, 0
    %v6861 = vand.u32 %v2176, 2139095040
    %v6862 = vshrl.u32 %v6861, 23
    %v6863 = vsub.s32 %v6862, 127
    %v6864 = vand.u32 2147483647, %v2176
    %v6865 = vand.u32 %v6864, 8388607
    %v6866 = vor.u32 %v6865, 8388608
    %v6867 = vsub.s32 0, %v6866
    %v6868 = vadd.s32 %v6863, 1
    %vm6869 = vcmp.gt.s32.totalorder %v6868, 0
    %v6870 = vsel %vm6869, %v6868, 0
    %v6871 = vshrl.u32 %v6870, 5
    %v6872 = vand.u32 %v6870, 31
    %v6873 = vsub.s32 32, %v6872
    %v6874 = vshrl.u32 683565275, %v6873
    %v6875 = vshll.u32 683565275, %v6872
    %v6876 = vshrl.u32 2475754826, %v6873
    %v6877 = vor.u32 %v6875, %v6876
    %v6878 = vshll.u32 2475754826, %v6872
    %v6879 = vshrl.u32 2131351028, %v6873
    %v6880 = vor.u32 %v6878, %v6879
    %v6881 = vshll.u32 2131351028, %v6872
    %v6882 = vshrl.u32 2102212464, %v6873
    %v6883 = vor.u32 %v6881, %v6882
    %v6884 = vshll.u32 2102212464, %v6872
    %v6885 = vshrl.u32 920167782, %v6873
    %v6886 = vor.u32 %v6884, %v6885
    %v6887 = vshll.u32 920167782, %v6872
    %v6888 = vshrl.u32 1326507024, %v6873
    %v6889 = vor.u32 %v6887, %v6888
    %vm6890 = vcmp.lt.s32.totalorder %v6871, 1
    %vm6891 = vcmp.lt.s32.totalorder %v6871, 2
    %vm6892 = vcmp.lt.s32.totalorder %v6871, 3
    %vm6893 = vcmp.lt.s32.totalorder %v6871, 4
    %v6894 = vsel %vm6890, %v6874, %v6877
    %v6895 = vsel %vm6893, %v6883, 2102212464
    %v6896 = vsel %vm6892, %v6880, %v6895
    %v6897 = vsel %vm6891, %v6894, %v6896
    %v6898 = vsel %vm6890, %v6877, %v6880
    %v6899 = vsel %vm6893, %v6886, 920167782
    %v6900 = vsel %vm6892, %v6883, %v6899
    %v6901 = vsel %vm6891, %v6898, %v6900
    %v6902 = vsel %vm6890, %v6880, %v6883
    %v6903 = vsel %vm6893, %v6889, 1326507024
    %v6904 = vsel %vm6892, %v6886, %v6903
    %v6905 = vsel %vm6891, %v6902, %v6904
    %v6906 = vshll.u32 %v6866, 8
    %v6907 = vmul.u32.u64.compose %v6906, %v6905
    %v6908 = vextract.low.u32 %v6907
    %v6909 = vextract.high.u32 %v6907
    %v6910 = vmul.u32.u64.compose %v6906, %v6901
    %v6911 = vextract.low.u32 %v6910
    %v6912 = vextract.high.u32 %v6910
    %v6913 = vmul.u32 %v6906, %v6897
    %v6914 = vadd.s32 %v6909, %v6911
    %vm6915 = vc.u32 %v6909, %v6911
    %v6916 = vadd.s32 %v6912, 1
    %v6917 = vsel %vm6915, %v6916, %v6912
    %v6918 = vadd.s32 %v6913, %v6917
    %v6919 = vadd.s32 %v6918, 536870912
    %v6920 = vshrl.u32 %v6919, 30
    %v6921 = vshll.u32 %v6920, 30
    %v6922 = vsub.s32 %v6918, %v6921
    %vm6923 = vcmp.lt.s32.totalorder %v6922, 0
    %v6924 = vsub.s32 0, %v6922
    %v6925 = vsel %vm6923, %v6924, %v6922
    %v6926 = vclz %v6925
    %v6927 = vsub.s32 %v6926, 2
    %vm6928 = vcmp.gt.s32.totalorder 0, %v6927
    %v6929 = vsel %vm6928, 0, %v6927
    %v6930 = vsub.s32 32, %v6929
    %v6931 = vshll.u32 %v6922, %v6929
    %v6932 = vshrl.u32 %v6914, %v6930
    %v6933 = vor.u32 %v6931, %v6932
    %v6934 = vsub.s32 4294967266, %v6929
    %v6935 = vadd.s32 %v6934, 127
    %v6936 = vshll.u32 %v6935, 23
    %v6937 = vor.u32 4788187, %v6936
    %v6938 = vand.u32 2147483647, %v6937
    %v6940 = vcvt.s32.f32 %v6933
    %v6941 = vmul.f32 %v6940, %v6938
    %v6942 = vxor.u32 %v6941, 2147483648
    %v6943 = vsel %vm6860, %v6942, %v6941
    %v6944 = vsub.s32 4, %v6920
    %v6945 = vsel %vm6860, %v6944, %v6920
    %v6946 = vsel %vm6859, %v2176, %v6943
    %v6947 = vsel %vm6859, 0, %v6945
    %v6948 = vcosq.f32.pop %v6946
    %v6949 = vsinq.f32.pop %v6946
    %vm6950 = vweird.f32 %v2176
    %v6951 = vadd.s32 %v6947, 3
    %v6952 = vand.u32 %v6951, 3
    %vm6953 = vcmp.lt.s32.totalorder %v6952, 2
    %vm6954 = vcmp.eq.s32.totalorder %v6952, 0
    %v6955 = vxor.u32 %v6949, 2147483648
    %v6956 = vsel %vm6954, %v6948, %v6955
    %vm6957 = vcmp.eq.s32.totalorder %v6952, 2
    %v6958 = vxor.u32 %v6948, 2147483648
    %v6959 = vsel %vm6957, %v6958, %v6949
    %v6960 = vsel %vm6953, %v6956, %v6959
    %v6961 = vsel %vm6950, nan, %v6960
    %v6962 = vand.u32 2147483647, %v2178
    %vm6963 = vcmp.le.f32.partialorder %v6962, 0.7853982
    %vm6964 = vcmp.lt.s32.totalorder %v2178, 0
    %v6965 = vand.u32 %v2178, 2139095040
    %v6966 = vshrl.u32 %v6965, 23
    %v6967 = vsub.s32 %v6966, 127
    %v6968 = vand.u32 2147483647, %v2178
    %v6969 = vand.u32 %v6968, 8388607
    %v6970 = vor.u32 %v6969, 8388608
    %v6971 = vsub.s32 0, %v6970
    %v6972 = vadd.s32 %v6967, 1
    %vm6973 = vcmp.gt.s32.totalorder %v6972, 0
    %v6974 = vsel %vm6973, %v6972, 0
    %v6975 = vshrl.u32 %v6974, 5
    %v6976 = vand.u32 %v6974, 31
    %v6977 = vsub.s32 32, %v6976
    %v6978 = vshrl.u32 683565275, %v6977
    %v6979 = vshll.u32 683565275, %v6976
    %v6980 = vshrl.u32 2475754826, %v6977
    %v6981 = vor.u32 %v6979, %v6980
    %v6982 = vshll.u32 2475754826, %v6976
    %v6983 = vshrl.u32 2131351028, %v6977
    %v6984 = vor.u32 %v6982, %v6983
    %v6985 = vshll.u32 2131351028, %v6976
    %v6986 = vshrl.u32 2102212464, %v6977
    %v6987 = vor.u32 %v6985, %v6986
    %v6988 = vshll.u32 2102212464, %v6976
    %v6989 = vshrl.u32 920167782, %v6977
    %v6990 = vor.u32 %v6988, %v6989
    %v6991 = vshll.u32 920167782, %v6976
    %v6992 = vshrl.u32 1326507024, %v6977
    %v6993 = vor.u32 %v6991, %v6992
    %vm6994 = vcmp.lt.s32.totalorder %v6975, 1
    %vm6995 = vcmp.lt.s32.totalorder %v6975, 2
    %vm6996 = vcmp.lt.s32.totalorder %v6975, 3
    %vm6997 = vcmp.lt.s32.totalorder %v6975, 4
    %v6998 = vsel %vm6994, %v6978, %v6981
    %v6999 = vsel %vm6997, %v6987, 2102212464
    %v7000 = vsel %vm6996, %v6984, %v6999
    %v7001 = vsel %vm6995, %v6998, %v7000
    %v7002 = vsel %vm6994, %v6981, %v6984
    %v7003 = vsel %vm6997, %v6990, 920167782
    %v7004 = vsel %vm6996, %v6987, %v7003
    %v7005 = vsel %vm6995, %v7002, %v7004
    %v7006 = vsel %vm6994, %v6984, %v6987
    %v7007 = vsel %vm6997, %v6993, 1326507024
    %v7008 = vsel %vm6996, %v6990, %v7007
    %v7009 = vsel %vm6995, %v7006, %v7008
    %v7010 = vshll.u32 %v6970, 8
    %v7011 = vmul.u32.u64.compose %v7010, %v7009
    %v7012 = vextract.low.u32 %v7011
    %v7013 = vextract.high.u32 %v7011
    %v7014 = vmul.u32.u64.compose %v7010, %v7005
    %v7015 = vextract.low.u32 %v7014
    %v7016 = vextract.high.u32 %v7014
    %v7017 = vmul.u32 %v7010, %v7001
    %v7018 = vadd.s32 %v7013, %v7015
    %vm7019 = vc.u32 %v7013, %v7015
    %v7020 = vadd.s32 %v7016, 1
    %v7021 = vsel %vm7019, %v7020, %v7016
    %v7022 = vadd.s32 %v7017, %v7021
    %v7023 = vadd.s32 %v7022, 536870912
    %v7024 = vshrl.u32 %v7023, 30
    %v7025 = vshll.u32 %v7024, 30
    %v7026 = vsub.s32 %v7022, %v7025
    %vm7027 = vcmp.lt.s32.totalorder %v7026, 0
    %v7028 = vsub.s32 0, %v7026
    %v7029 = vsel %vm7027, %v7028, %v7026
    %v7030 = vclz %v7029
    %v7031 = vsub.s32 %v7030, 2
    %vm7032 = vcmp.gt.s32.totalorder 0, %v7031
    %v7033 = vsel %vm7032, 0, %v7031
    %v7034 = vsub.s32 32, %v7033
    %v7035 = vshll.u32 %v7026, %v7033
    %v7036 = vshrl.u32 %v7018, %v7034
    %v7037 = vor.u32 %v7035, %v7036
    %v7038 = vsub.s32 4294967266, %v7033
    %v7039 = vadd.s32 %v7038, 127
    %v7040 = vshll.u32 %v7039, 23
    %v7041 = vor.u32 4788187, %v7040
    %v7042 = vand.u32 2147483647, %v7041
    %v7044 = vcvt.s32.f32 %v7037
    %v7045 = vmul.f32 %v7044, %v7042
    %v7046 = vxor.u32 %v7045, 2147483648
    %v7047 = vsel %vm6964, %v7046, %v7045
    %v7048 = vsub.s32 4, %v7024
    %v7049 = vsel %vm6964, %v7048, %v7024
    %v7050 = vsel %vm6963, %v2178, %v7047
    %v7051 = vsel %vm6963, 0, %v7049
    %v7052 = vcosq.f32.pop %v7050
    %v7053 = vsinq.f32.pop %v7050
    %vm7054 = vweird.f32 %v2178
    %v7055 = vadd.s32 %v7051, 3
    %v7056 = vand.u32 %v7055, 3
    %vm7057 = vcmp.lt.s32.totalorder %v7056, 2
    %vm7058 = vcmp.eq.s32.totalorder %v7056, 0
    %v7059 = vxor.u32 %v7053, 2147483648
    %v7060 = vsel %vm7058, %v7052, %v7059
    %vm7061 = vcmp.eq.s32.totalorder %v7056, 2
    %v7062 = vxor.u32 %v7052, 2147483648
    %v7063 = vsel %vm7061, %v7062, %v7053
    %v7064 = vsel %vm7057, %v7060, %v7063
    %v7065 = vsel %vm7054, nan, %v7064
    %v7066 = vand.u32 2147483647, %v3070
    %vm7067 = vcmp.le.f32.partialorder %v7066, 0.7853982
    %vm7068 = vcmp.lt.s32.totalorder %v3070, 0
    %v7069 = vand.u32 %v3070, 2139095040
    %v7070 = vshrl.u32 %v7069, 23
    %v7071 = vsub.s32 %v7070, 127
    %v7072 = vand.u32 2147483647, %v3070
    %v7073 = vand.u32 %v7072, 8388607
    %v7074 = vor.u32 %v7073, 8388608
    %v7075 = vsub.s32 0, %v7074
    %v7076 = vadd.s32 %v7071, 1
    %vm7077 = vcmp.gt.s32.totalorder %v7076, 0
    %v7078 = vsel %vm7077, %v7076, 0
    %v7079 = vshrl.u32 %v7078, 5
    %v7080 = vand.u32 %v7078, 31
    %v7081 = vsub.s32 32, %v7080
    %v7082 = vshrl.u32 683565275, %v7081
    %v7083 = vshll.u32 683565275, %v7080
    %v7084 = vshrl.u32 2475754826, %v7081
    %v7085 = vor.u32 %v7083, %v7084
    %v7086 = vshll.u32 2475754826, %v7080
    %v7087 = vshrl.u32 2131351028, %v7081
    %v7088 = vor.u32 %v7086, %v7087
    %v7089 = vshll.u32 2131351028, %v7080
    %v7090 = vshrl.u32 2102212464, %v7081
    %v7091 = vor.u32 %v7089, %v7090
    %v7092 = vshll.u32 2102212464, %v7080
    %v7093 = vshrl.u32 920167782, %v7081
    %v7094 = vor.u32 %v7092, %v7093
    %v7095 = vshll.u32 920167782, %v7080
    %v7096 = vshrl.u32 1326507024, %v7081
    %v7097 = vor.u32 %v7095, %v7096
    %vm7098 = vcmp.lt.s32.totalorder %v7079, 1
    %vm7099 = vcmp.lt.s32.totalorder %v7079, 2
    %vm7100 = vcmp.lt.s32.totalorder %v7079, 3
    %vm7101 = vcmp.lt.s32.totalorder %v7079, 4
    %v7102 = vsel %vm7098, %v7082, %v7085
    %v7103 = vsel %vm7101, %v7091, 2102212464
    %v7104 = vsel %vm7100, %v7088, %v7103
    %v7105 = vsel %vm7099, %v7102, %v7104
    %v7106 = vsel %vm7098, %v7085, %v7088
    %v7107 = vsel %vm7101, %v7094, 920167782
    %v7108 = vsel %vm7100, %v7091, %v7107
    %v7109 = vsel %vm7099, %v7106, %v7108
    %v7110 = vsel %vm7098, %v7088, %v7091
    %v7111 = vsel %vm7101, %v7097, 1326507024
    %v7112 = vsel %vm7100, %v7094, %v7111
    %v7113 = vsel %vm7099, %v7110, %v7112
    %v7114 = vshll.u32 %v7074, 8
    %v7115 = vmul.u32.u64.compose %v7114, %v7113
    %v7116 = vextract.low.u32 %v7115
    %v7117 = vextract.high.u32 %v7115
    %v7118 = vmul.u32.u64.compose %v7114, %v7109
    %v7119 = vextract.low.u32 %v7118
    %v7120 = vextract.high.u32 %v7118
    %v7121 = vmul.u32 %v7114, %v7105
    %v7122 = vadd.s32 %v7117, %v7119
    %vm7123 = vc.u32 %v7117, %v7119
    %v7124 = vadd.s32 %v7120, 1
    %v7125 = vsel %vm7123, %v7124, %v7120
    %v7126 = vadd.s32 %v7121, %v7125
    %v7127 = vadd.s32 %v7126, 536870912
    %v7128 = vshrl.u32 %v7127, 30
    %v7129 = vshll.u32 %v7128, 30
    %v7130 = vsub.s32 %v7126, %v7129
    %vm7131 = vcmp.lt.s32.totalorder %v7130, 0
    %v7132 = vsub.s32 0, %v7130
    %v7133 = vsel %vm7131, %v7132, %v7130
    %v7134 = vclz %v7133
    %v7135 = vsub.s32 %v7134, 2
    %vm7136 = vcmp.gt.s32.totalorder 0, %v7135
    %v7137 = vsel %vm7136, 0, %v7135
    %v7138 = vsub.s32 32, %v7137
    %v7139 = vshll.u32 %v7130, %v7137
    %v7140 = vshrl.u32 %v7122, %v7138
    %v7141 = vor.u32 %v7139, %v7140
    %v7142 = vsub.s32 4294967266, %v7137
    %v7143 = vadd.s32 %v7142, 127
    %v7144 = vshll.u32 %v7143, 23
    %v7145 = vor.u32 4788187, %v7144
    %v7146 = vand.u32 2147483647, %v7145
    %v7148 = vcvt.s32.f32 %v7141
    %v7149 = vmul.f32 %v7148, %v7146
    %v7150 = vxor.u32 %v7149, 2147483648
    %v7151 = vsel %vm7068, %v7150, %v7149
    %v7152 = vsub.s32 4, %v7128
    %v7153 = vsel %vm7068, %v7152, %v7128
    %v7154 = vsel %vm7067, %v3070, %v7151
    %v7155 = vsel %vm7067, 0, %v7153
    %v7156 = vcosq.f32.pop %v7154
    %v7157 = vsinq.f32.pop %v7154
    %vm7158 = vweird.f32 %v3070
    %v7159 = vadd.s32 %v7155, 3
    %v7160 = vand.u32 %v7159, 3
    %vm7161 = vcmp.lt.s32.totalorder %v7160, 2
    %vm7162 = vcmp.eq.s32.totalorder %v7160, 0
    %v7163 = vxor.u32 %v7157, 2147483648
    %v7164 = vsel %vm7162, %v7156, %v7163
    %vm7165 = vcmp.eq.s32.totalorder %v7160, 2
    %v7166 = vxor.u32 %v7156, 2147483648
    %v7167 = vsel %vm7165, %v7166, %v7157
    %v7168 = vsel %vm7161, %v7164, %v7167
    %v7169 = vsel %vm7158, nan, %v7168
    %v7170 = vand.u32 2147483647, %v3072
    %vm7171 = vcmp.le.f32.partialorder %v7170, 0.7853982
    %vm7172 = vcmp.lt.s32.totalorder %v3072, 0
    %v7173 = vand.u32 %v3072, 2139095040
    %v7174 = vshrl.u32 %v7173, 23
    %v7175 = vsub.s32 %v7174, 127
    %v7176 = vand.u32 2147483647, %v3072
    %v7177 = vand.u32 %v7176, 8388607
    %v7178 = vor.u32 %v7177, 8388608
    %v7179 = vsub.s32 0, %v7178
    %v7180 = vadd.s32 %v7175, 1
    %vm7181 = vcmp.gt.s32.totalorder %v7180, 0
    %v7182 = vsel %vm7181, %v7180, 0
    %v7183 = vshrl.u32 %v7182, 5
    %v7184 = vand.u32 %v7182, 31
    %v7185 = vsub.s32 32, %v7184
    %v7186 = vshrl.u32 683565275, %v7185
    %v7187 = vshll.u32 683565275, %v7184
    %v7188 = vshrl.u32 2475754826, %v7185
    %v7189 = vor.u32 %v7187, %v7188
    %v7190 = vshll.u32 2475754826, %v7184
    %v7191 = vshrl.u32 2131351028, %v7185
    %v7192 = vor.u32 %v7190, %v7191
    %v7193 = vshll.u32 2131351028, %v7184
    %v7194 = vshrl.u32 2102212464, %v7185
    %v7195 = vor.u32 %v7193, %v7194
    %v7196 = vshll.u32 2102212464, %v7184
    %v7197 = vshrl.u32 920167782, %v7185
    %v7198 = vor.u32 %v7196, %v7197
    %v7199 = vshll.u32 920167782, %v7184
    %v7200 = vshrl.u32 1326507024, %v7185
    %v7201 = vor.u32 %v7199, %v7200
    %vm7202 = vcmp.lt.s32.totalorder %v7183, 1
    %vm7203 = vcmp.lt.s32.totalorder %v7183, 2
    %vm7204 = vcmp.lt.s32.totalorder %v7183, 3
    %vm7205 = vcmp.lt.s32.totalorder %v7183, 4
    %v7206 = vsel %vm7202, %v7186, %v7189
    %v7207 = vsel %vm7205, %v7195, 2102212464
    %v7208 = vsel %vm7204, %v7192, %v7207
    %v7209 = vsel %vm7203, %v7206, %v7208
    %v7210 = vsel %vm7202, %v7189, %v7192
    %v7211 = vsel %vm7205, %v7198, 920167782
    %v7212 = vsel %vm7204, %v7195, %v7211
    %v7213 = vsel %vm7203, %v7210, %v7212
    %v7214 = vsel %vm7202, %v7192, %v7195
    %v7215 = vsel %vm7205, %v7201, 1326507024
    %v7216 = vsel %vm7204, %v7198, %v7215
    %v7217 = vsel %vm7203, %v7214, %v7216
    %v7218 = vshll.u32 %v7178, 8
    %v7219 = vmul.u32.u64.compose %v7218, %v7217
    %v7220 = vextract.low.u32 %v7219
    %v7221 = vextract.high.u32 %v7219
    %v7222 = vmul.u32.u64.compose %v7218, %v7213
    %v7223 = vextract.low.u32 %v7222
    %v7224 = vextract.high.u32 %v7222
    %v7225 = vmul.u32 %v7218, %v7209
    %v7226 = vadd.s32 %v7221, %v7223
    %vm7227 = vc.u32 %v7221, %v7223
    %v7228 = vadd.s32 %v7224, 1
    %v7229 = vsel %vm7227, %v7228, %v7224
    %v7230 = vadd.s32 %v7225, %v7229
    %v7231 = vadd.s32 %v7230, 536870912
    %v7232 = vshrl.u32 %v7231, 30
    %v7233 = vshll.u32 %v7232, 30
    %v7234 = vsub.s32 %v7230, %v7233
    %vm7235 = vcmp.lt.s32.totalorder %v7234, 0
    %v7236 = vsub.s32 0, %v7234
    %v7237 = vsel %vm7235, %v7236, %v7234
    %v7238 = vclz %v7237
    %v7239 = vsub.s32 %v7238, 2
    %vm7240 = vcmp.gt.s32.totalorder 0, %v7239
    %v7241 = vsel %vm7240, 0, %v7239
    %v7242 = vsub.s32 32, %v7241
    %v7243 = vshll.u32 %v7234, %v7241
    %v7244 = vshrl.u32 %v7226, %v7242
    %v7245 = vor.u32 %v7243, %v7244
    %v7246 = vsub.s32 4294967266, %v7241
    %v7247 = vadd.s32 %v7246, 127
    %v7248 = vshll.u32 %v7247, 23
    %v7249 = vor.u32 4788187, %v7248
    %v7250 = vand.u32 2147483647, %v7249
    %v7252 = vcvt.s32.f32 %v7245
    %v7253 = vmul.f32 %v7252, %v7250
    %v7254 = vxor.u32 %v7253, 2147483648
    %v7255 = vsel %vm7172, %v7254, %v7253
    %v7256 = vsub.s32 4, %v7232
    %v7257 = vsel %vm7172, %v7256, %v7232
    %v7258 = vsel %vm7171, %v3072, %v7255
    %v7259 = vsel %vm7171, 0, %v7257
    %v7260 = vcosq.f32.pop %v7258
    %v7261 = vsinq.f32.pop %v7258
    %vm7262 = vweird.f32 %v3072
    %v7263 = vadd.s32 %v7259, 3
    %v7264 = vand.u32 %v7263, 3
    %vm7265 = vcmp.lt.s32.totalorder %v7264, 2
    %vm7266 = vcmp.eq.s32.totalorder %v7264, 0
    %v7267 = vxor.u32 %v7261, 2147483648
    %v7268 = vsel %vm7266, %v7260, %v7267
    %vm7269 = vcmp.eq.s32.totalorder %v7264, 2
    %v7270 = vxor.u32 %v7260, 2147483648
    %v7271 = vsel %vm7269, %v7270, %v7261
    %v7272 = vsel %vm7265, %v7268, %v7271
    %v7273 = vsel %vm7262, nan, %v7272
    %v7274 = vand.u32 2147483647, %v3964
    %vm7275 = vcmp.le.f32.partialorder %v7274, 0.7853982
    %vm7276 = vcmp.lt.s32.totalorder %v3964, 0
    %v7277 = vand.u32 %v3964, 2139095040
    %v7278 = vshrl.u32 %v7277, 23
    %v7279 = vsub.s32 %v7278, 127
    %v7280 = vand.u32 2147483647, %v3964
    %v7281 = vand.u32 %v7280, 8388607
    %v7282 = vor.u32 %v7281, 8388608
    %v7283 = vsub.s32 0, %v7282
    %v7284 = vadd.s32 %v7279, 1
    %vm7285 = vcmp.gt.s32.totalorder %v7284, 0
    %v7286 = vsel %vm7285, %v7284, 0
    %v7287 = vshrl.u32 %v7286, 5
    %v7288 = vand.u32 %v7286, 31
    %v7289 = vsub.s32 32, %v7288
    %v7290 = vshrl.u32 683565275, %v7289
    %v7291 = vshll.u32 683565275, %v7288
    %v7292 = vshrl.u32 2475754826, %v7289
    %v7293 = vor.u32 %v7291, %v7292
    %v7294 = vshll.u32 2475754826, %v7288
    %v7295 = vshrl.u32 2131351028, %v7289
    %v7296 = vor.u32 %v7294, %v7295
    %v7297 = vshll.u32 2131351028, %v7288
    %v7298 = vshrl.u32 2102212464, %v7289
    %v7299 = vor.u32 %v7297, %v7298
    %v7300 = vshll.u32 2102212464, %v7288
    %v7301 = vshrl.u32 920167782, %v7289
    %v7302 = vor.u32 %v7300, %v7301
    %v7303 = vshll.u32 920167782, %v7288
    %v7304 = vshrl.u32 1326507024, %v7289
    %v7305 = vor.u32 %v7303, %v7304
    %vm7306 = vcmp.lt.s32.totalorder %v7287, 1
    %vm7307 = vcmp.lt.s32.totalorder %v7287, 2
    %vm7308 = vcmp.lt.s32.totalorder %v7287, 3
    %vm7309 = vcmp.lt.s32.totalorder %v7287, 4
    %v7310 = vsel %vm7306, %v7290, %v7293
    %v7311 = vsel %vm7309, %v7299, 2102212464
    %v7312 = vsel %vm7308, %v7296, %v7311
    %v7313 = vsel %vm7307, %v7310, %v7312
    %v7314 = vsel %vm7306, %v7293, %v7296
    %v7315 = vsel %vm7309, %v7302, 920167782
    %v7316 = vsel %vm7308, %v7299, %v7315
    %v7317 = vsel %vm7307, %v7314, %v7316
    %v7318 = vsel %vm7306, %v7296, %v7299
    %v7319 = vsel %vm7309, %v7305, 1326507024
    %v7320 = vsel %vm7308, %v7302, %v7319
    %v7321 = vsel %vm7307, %v7318, %v7320
    %v7322 = vshll.u32 %v7282, 8
    %v7323 = vmul.u32.u64.compose %v7322, %v7321
    %v7324 = vextract.low.u32 %v7323
    %v7325 = vextract.high.u32 %v7323
    %v7326 = vmul.u32.u64.compose %v7322, %v7317
    %v7327 = vextract.low.u32 %v7326
    %v7328 = vextract.high.u32 %v7326
    %v7329 = vmul.u32 %v7322, %v7313
    %v7330 = vadd.s32 %v7325, %v7327
    %vm7331 = vc.u32 %v7325, %v7327
    %v7332 = vadd.s32 %v7328, 1
    %v7333 = vsel %vm7331, %v7332, %v7328
    %v7334 = vadd.s32 %v7329, %v7333
    %v7335 = vadd.s32 %v7334, 536870912
    %v7336 = vshrl.u32 %v7335, 30
    %v7337 = vshll.u32 %v7336, 30
    %v7338 = vsub.s32 %v7334, %v7337
    %vm7339 = vcmp.lt.s32.totalorder %v7338, 0
    %v7340 = vsub.s32 0, %v7338
    %v7341 = vsel %vm7339, %v7340, %v7338
    %v7342 = vclz %v7341
    %v7343 = vsub.s32 %v7342, 2
    %vm7344 = vcmp.gt.s32.totalorder 0, %v7343
    %v7345 = vsel %vm7344, 0, %v7343
    %v7346 = vsub.s32 32, %v7345
    %v7347 = vshll.u32 %v7338, %v7345
    %v7348 = vshrl.u32 %v7330, %v7346
    %v7349 = vor.u32 %v7347, %v7348
    %v7350 = vsub.s32 4294967266, %v7345
    %v7351 = vadd.s32 %v7350, 127
    %v7352 = vshll.u32 %v7351, 23
    %v7353 = vor.u32 4788187, %v7352
    %v7354 = vand.u32 2147483647, %v7353
    %v7356 = vcvt.s32.f32 %v7349
    %v7357 = vmul.f32 %v7356, %v7354
    %v7358 = vxor.u32 %v7357, 2147483648
    %v7359 = vsel %vm7276, %v7358, %v7357
    %v7360 = vsub.s32 4, %v7336
    %v7361 = vsel %vm7276, %v7360, %v7336
    %v7362 = vsel %vm7275, %v3964, %v7359
    %v7363 = vsel %vm7275, 0, %v7361
    %v7364 = vcosq.f32.pop %v7362
    %v7365 = vsinq.f32.pop %v7362
    %vm7366 = vweird.f32 %v3964
    %v7367 = vadd.s32 %v7363, 3
    %v7368 = vand.u32 %v7367, 3
    %vm7369 = vcmp.lt.s32.totalorder %v7368, 2
    %vm7370 = vcmp.eq.s32.totalorder %v7368, 0
    %v7371 = vxor.u32 %v7365, 2147483648
    %v7372 = vsel %vm7370, %v7364, %v7371
    %vm7373 = vcmp.eq.s32.totalorder %v7368, 2
    %v7374 = vxor.u32 %v7364, 2147483648
    %v7375 = vsel %vm7373, %v7374, %v7365
    %v7376 = vsel %vm7369, %v7372, %v7375
    %v7377 = vsel %vm7366, nan, %v7376
    %v7378 = vand.u32 2147483647, %v3966
    %vm7379 = vcmp.le.f32.partialorder %v7378, 0.7853982
    %vm7380 = vcmp.lt.s32.totalorder %v3966, 0
    %v7381 = vand.u32 %v3966, 2139095040
    %v7382 = vshrl.u32 %v7381, 23
    %v7383 = vsub.s32 %v7382, 127
    %v7384 = vand.u32 2147483647, %v3966
    %v7385 = vand.u32 %v7384, 8388607
    %v7386 = vor.u32 %v7385, 8388608
    %v7387 = vsub.s32 0, %v7386
    %v7388 = vadd.s32 %v7383, 1
    %vm7389 = vcmp.gt.s32.totalorder %v7388, 0
    %v7390 = vsel %vm7389, %v7388, 0
    %v7391 = vshrl.u32 %v7390, 5
    %v7392 = vand.u32 %v7390, 31
    %v7393 = vsub.s32 32, %v7392
    %v7394 = vshrl.u32 683565275, %v7393
    %v7395 = vshll.u32 683565275, %v7392
    %v7396 = vshrl.u32 2475754826, %v7393
    %v7397 = vor.u32 %v7395, %v7396
    %v7398 = vshll.u32 2475754826, %v7392
    %v7399 = vshrl.u32 2131351028, %v7393
    %v7400 = vor.u32 %v7398, %v7399
    %v7401 = vshll.u32 2131351028, %v7392
    %v7402 = vshrl.u32 2102212464, %v7393
    %v7403 = vor.u32 %v7401, %v7402
    %v7404 = vshll.u32 2102212464, %v7392
    %v7405 = vshrl.u32 920167782, %v7393
    %v7406 = vor.u32 %v7404, %v7405
    %v7407 = vshll.u32 920167782, %v7392
    %v7408 = vshrl.u32 1326507024, %v7393
    %v7409 = vor.u32 %v7407, %v7408
    %vm7410 = vcmp.lt.s32.totalorder %v7391, 1
    %vm7411 = vcmp.lt.s32.totalorder %v7391, 2
    %vm7412 = vcmp.lt.s32.totalorder %v7391, 3
    %vm7413 = vcmp.lt.s32.totalorder %v7391, 4
    %v7414 = vsel %vm7410, %v7394, %v7397
    %v7415 = vsel %vm7413, %v7403, 2102212464
    %v7416 = vsel %vm7412, %v7400, %v7415
    %v7417 = vsel %vm7411, %v7414, %v7416
    %v7418 = vsel %vm7410, %v7397, %v7400
    %v7419 = vsel %vm7413, %v7406, 920167782
    %v7420 = vsel %vm7412, %v7403, %v7419
    %v7421 = vsel %vm7411, %v7418, %v7420
    %v7422 = vsel %vm7410, %v7400, %v7403
    %v7423 = vsel %vm7413, %v7409, 1326507024
    %v7424 = vsel %vm7412, %v7406, %v7423
    %v7425 = vsel %vm7411, %v7422, %v7424
    %v7426 = vshll.u32 %v7386, 8
    %v7427 = vmul.u32.u64.compose %v7426, %v7425
    %v7428 = vextract.low.u32 %v7427
    %v7429 = vextract.high.u32 %v7427
    %v7430 = vmul.u32.u64.compose %v7426, %v7421
    %v7431 = vextract.low.u32 %v7430
    %v7432 = vextract.high.u32 %v7430
    %v7433 = vmul.u32 %v7426, %v7417
    %v7434 = vadd.s32 %v7429, %v7431
    %vm7435 = vc.u32 %v7429, %v7431
    %v7436 = vadd.s32 %v7432, 1
    %v7437 = vsel %vm7435, %v7436, %v7432
    %v7438 = vadd.s32 %v7433, %v7437
    %v7439 = vadd.s32 %v7438, 536870912
    %v7440 = vshrl.u32 %v7439, 30
    %v7441 = vshll.u32 %v7440, 30
    %v7442 = vsub.s32 %v7438, %v7441
    %vm7443 = vcmp.lt.s32.totalorder %v7442, 0
    %v7444 = vsub.s32 0, %v7442
    %v7445 = vsel %vm7443, %v7444, %v7442
    %v7446 = vclz %v7445
    %v7447 = vsub.s32 %v7446, 2
    %vm7448 = vcmp.gt.s32.totalorder 0, %v7447
    %v7449 = vsel %vm7448, 0, %v7447
    %v7450 = vsub.s32 32, %v7449
    %v7451 = vshll.u32 %v7442, %v7449
    %v7452 = vshrl.u32 %v7434, %v7450
    %v7453 = vor.u32 %v7451, %v7452
    %v7454 = vsub.s32 4294967266, %v7449
    %v7455 = vadd.s32 %v7454, 127
    %v7456 = vshll.u32 %v7455, 23
    %v7457 = vor.u32 4788187, %v7456
    %v7458 = vand.u32 2147483647, %v7457
    %v7460 = vcvt.s32.f32 %v7453
    %v7461 = vmul.f32 %v7460, %v7458
    %v7462 = vxor.u32 %v7461, 2147483648
    %v7463 = vsel %vm7380, %v7462, %v7461
    %v7464 = vsub.s32 4, %v7440
    %v7465 = vsel %vm7380, %v7464, %v7440
    %v7466 = vsel %vm7379, %v3966, %v7463
    %v7467 = vsel %vm7379, 0, %v7465
    %v7468 = vcosq.f32.pop %v7466
    %v7469 = vsinq.f32.pop %v7466
    %vm7470 = vweird.f32 %v3966
    %v7471 = vadd.s32 %v7467, 3
    %v7472 = vand.u32 %v7471, 3
    %vm7473 = vcmp.lt.s32.totalorder %v7472, 2
    %vm7474 = vcmp.eq.s32.totalorder %v7472, 0
    %v7475 = vxor.u32 %v7469, 2147483648
    %v7476 = vsel %vm7474, %v7468, %v7475
    %vm7477 = vcmp.eq.s32.totalorder %v7472, 2
    %v7478 = vxor.u32 %v7468, 2147483648
    %v7479 = vsel %vm7477, %v7478, %v7469
    %v7480 = vsel %vm7473, %v7476, %v7479
    %v7481 = vsel %vm7470, nan, %v7480
    %v7482 = vand.u32 2147483647, %v4858
    %vm7483 = vcmp.le.f32.partialorder %v7482, 0.7853982
    %vm7484 = vcmp.lt.s32.totalorder %v4858, 0
    %v7485 = vand.u32 %v4858, 2139095040
    %v7486 = vshrl.u32 %v7485, 23
    %v7487 = vsub.s32 %v7486, 127
    %v7488 = vand.u32 2147483647, %v4858
    %v7489 = vand.u32 %v7488, 8388607
    %v7490 = vor.u32 %v7489, 8388608
    %v7491 = vsub.s32 0, %v7490
    %v7492 = vadd.s32 %v7487, 1
    %vm7493 = vcmp.gt.s32.totalorder %v7492, 0
    %v7494 = vsel %vm7493, %v7492, 0
    %v7495 = vshrl.u32 %v7494, 5
    %v7496 = vand.u32 %v7494, 31
    %v7497 = vsub.s32 32, %v7496
    %v7498 = vshrl.u32 683565275, %v7497
    %v7499 = vshll.u32 683565275, %v7496
    %v7500 = vshrl.u32 2475754826, %v7497
    %v7501 = vor.u32 %v7499, %v7500
    %v7502 = vshll.u32 2475754826, %v7496
    %v7503 = vshrl.u32 2131351028, %v7497
    %v7504 = vor.u32 %v7502, %v7503
    %v7505 = vshll.u32 2131351028, %v7496
    %v7506 = vshrl.u32 2102212464, %v7497
    %v7507 = vor.u32 %v7505, %v7506
    %v7508 = vshll.u32 2102212464, %v7496
    %v7509 = vshrl.u32 920167782, %v7497
    %v7510 = vor.u32 %v7508, %v7509
    %v7511 = vshll.u32 920167782, %v7496
    %v7512 = vshrl.u32 1326507024, %v7497
    %v7513 = vor.u32 %v7511, %v7512
    %vm7514 = vcmp.lt.s32.totalorder %v7495, 1
    %vm7515 = vcmp.lt.s32.totalorder %v7495, 2
    %vm7516 = vcmp.lt.s32.totalorder %v7495, 3
    %vm7517 = vcmp.lt.s32.totalorder %v7495, 4
    %v7518 = vsel %vm7514, %v7498, %v7501
    %v7519 = vsel %vm7517, %v7507, 2102212464
    %v7520 = vsel %vm7516, %v7504, %v7519
    %v7521 = vsel %vm7515, %v7518, %v7520
    %v7522 = vsel %vm7514, %v7501, %v7504
    %v7523 = vsel %vm7517, %v7510, 920167782
    %v7524 = vsel %vm7516, %v7507, %v7523
    %v7525 = vsel %vm7515, %v7522, %v7524
    %v7526 = vsel %vm7514, %v7504, %v7507
    %v7527 = vsel %vm7517, %v7513, 1326507024
    %v7528 = vsel %vm7516, %v7510, %v7527
    %v7529 = vsel %vm7515, %v7526, %v7528
    %v7530 = vshll.u32 %v7490, 8
    %v7531 = vmul.u32.u64.compose %v7530, %v7529
    %v7532 = vextract.low.u32 %v7531
    %v7533 = vextract.high.u32 %v7531
    %v7534 = vmul.u32.u64.compose %v7530, %v7525
    %v7535 = vextract.low.u32 %v7534
    %v7536 = vextract.high.u32 %v7534
    %v7537 = vmul.u32 %v7530, %v7521
    %v7538 = vadd.s32 %v7533, %v7535
    %vm7539 = vc.u32 %v7533, %v7535
    %v7540 = vadd.s32 %v7536, 1
    %v7541 = vsel %vm7539, %v7540, %v7536
    %v7542 = vadd.s32 %v7537, %v7541
    %v7543 = vadd.s32 %v7542, 536870912
    %v7544 = vshrl.u32 %v7543, 30
    %v7545 = vshll.u32 %v7544, 30
    %v7546 = vsub.s32 %v7542, %v7545
    %vm7547 = vcmp.lt.s32.totalorder %v7546, 0
    %v7548 = vsub.s32 0, %v7546
    %v7549 = vsel %vm7547, %v7548, %v7546
    %v7550 = vclz %v7549
    %v7551 = vsub.s32 %v7550, 2
    %vm7552 = vcmp.gt.s32.totalorder 0, %v7551
    %v7553 = vsel %vm7552, 0, %v7551
    %v7554 = vsub.s32 32, %v7553
    %v7555 = vshll.u32 %v7546, %v7553
    %v7556 = vshrl.u32 %v7538, %v7554
    %v7557 = vor.u32 %v7555, %v7556
    %v7558 = vsub.s32 4294967266, %v7553
    %v7559 = vadd.s32 %v7558, 127
    %v7560 = vshll.u32 %v7559, 23
    %v7561 = vor.u32 4788187, %v7560
    %v7562 = vand.u32 2147483647, %v7561
    %v7564 = vcvt.s32.f32 %v7557
    %v7565 = vmul.f32 %v7564, %v7562
    %v7566 = vxor.u32 %v7565, 2147483648
    %v7567 = vsel %vm7484, %v7566, %v7565
    %v7568 = vsub.s32 4, %v7544
    %v7569 = vsel %vm7484, %v7568, %v7544
    %v7570 = vsel %vm7483, %v4858, %v7567
    %v7571 = vsel %vm7483, 0, %v7569
    %v7572 = vcosq.f32.pop %v7570
    %v7573 = vsinq.f32.pop %v7570
    %vm7574 = vweird.f32 %v4858
    %v7575 = vadd.s32 %v7571, 3
    %v7576 = vand.u32 %v7575, 3
    %vm7577 = vcmp.lt.s32.totalorder %v7576, 2
    %vm7578 = vcmp.eq.s32.totalorder %v7576, 0
    %v7579 = vxor.u32 %v7573, 2147483648
    %v7580 = vsel %vm7578, %v7572, %v7579
    %vm7581 = vcmp.eq.s32.totalorder %v7576, 2
    %v7582 = vxor.u32 %v7572, 2147483648
    %v7583 = vsel %vm7581, %v7582, %v7573
    %v7584 = vsel %vm7577, %v7580, %v7583
    %v7585 = vsel %vm7574, nan, %v7584
    %v7586 = vand.u32 2147483647, %v4860
    %vm7587 = vcmp.le.f32.partialorder %v7586, 0.7853982
    %vm7588 = vcmp.lt.s32.totalorder %v4860, 0
    %v7589 = vand.u32 %v4860, 2139095040
    %v7590 = vshrl.u32 %v7589, 23
    %v7591 = vsub.s32 %v7590, 127
    %v7592 = vand.u32 2147483647, %v4860
    %v7593 = vand.u32 %v7592, 8388607
    %v7594 = vor.u32 %v7593, 8388608
    %v7595 = vsub.s32 0, %v7594
    %v7596 = vadd.s32 %v7591, 1
    %vm7597 = vcmp.gt.s32.totalorder %v7596, 0
    %v7598 = vsel %vm7597, %v7596, 0
    %v7599 = vshrl.u32 %v7598, 5
    %v7600 = vand.u32 %v7598, 31
    %v7601 = vsub.s32 32, %v7600
    %v7602 = vshrl.u32 683565275, %v7601
    %v7603 = vshll.u32 683565275, %v7600
    %v7604 = vshrl.u32 2475754826, %v7601
    %v7605 = vor.u32 %v7603, %v7604
    %v7606 = vshll.u32 2475754826, %v7600
    %v7607 = vshrl.u32 2131351028, %v7601
    %v7608 = vor.u32 %v7606, %v7607
    %v7609 = vshll.u32 2131351028, %v7600
    %v7610 = vshrl.u32 2102212464, %v7601
    %v7611 = vor.u32 %v7609, %v7610
    %v7612 = vshll.u32 2102212464, %v7600
    %v7613 = vshrl.u32 920167782, %v7601
    %v7614 = vor.u32 %v7612, %v7613
    %v7615 = vshll.u32 920167782, %v7600
    %v7616 = vshrl.u32 1326507024, %v7601
    %v7617 = vor.u32 %v7615, %v7616
    %vm7618 = vcmp.lt.s32.totalorder %v7599, 1
    %vm7619 = vcmp.lt.s32.totalorder %v7599, 2
    %vm7620 = vcmp.lt.s32.totalorder %v7599, 3
    %vm7621 = vcmp.lt.s32.totalorder %v7599, 4
    %v7622 = vsel %vm7618, %v7602, %v7605
    %v7623 = vsel %vm7621, %v7611, 2102212464
    %v7624 = vsel %vm7620, %v7608, %v7623
    %v7625 = vsel %vm7619, %v7622, %v7624
    %v7626 = vsel %vm7618, %v7605, %v7608
    %v7627 = vsel %vm7621, %v7614, 920167782
    %v7628 = vsel %vm7620, %v7611, %v7627
    %v7629 = vsel %vm7619, %v7626, %v7628
    %v7630 = vsel %vm7618, %v7608, %v7611
    %v7631 = vsel %vm7621, %v7617, 1326507024
    %v7632 = vsel %vm7620, %v7614, %v7631
    %v7633 = vsel %vm7619, %v7630, %v7632
    %v7634 = vshll.u32 %v7594, 8
    %v7635 = vmul.u32.u64.compose %v7634, %v7633
    %v7636 = vextract.low.u32 %v7635
    %v7637 = vextract.high.u32 %v7635
    %v7638 = vmul.u32.u64.compose %v7634, %v7629
    %v7639 = vextract.low.u32 %v7638
    %v7640 = vextract.high.u32 %v7638
    %v7641 = vmul.u32 %v7634, %v7625
    %v7642 = vadd.s32 %v7637, %v7639
    %vm7643 = vc.u32 %v7637, %v7639
    %v7644 = vadd.s32 %v7640, 1
    %v7645 = vsel %vm7643, %v7644, %v7640
    %v7646 = vadd.s32 %v7641, %v7645
    %v7647 = vadd.s32 %v7646, 536870912
    %v7648 = vshrl.u32 %v7647, 30
    %v7649 = vshll.u32 %v7648, 30
    %v7650 = vsub.s32 %v7646, %v7649
    %vm7651 = vcmp.lt.s32.totalorder %v7650, 0
    %v7652 = vsub.s32 0, %v7650
    %v7653 = vsel %vm7651, %v7652, %v7650
    %v7654 = vclz %v7653
    %v7655 = vsub.s32 %v7654, 2
    %vm7656 = vcmp.gt.s32.totalorder 0, %v7655
    %v7657 = vsel %vm7656, 0, %v7655
    %v7658 = vsub.s32 32, %v7657
    %v7659 = vshll.u32 %v7650, %v7657
    %v7660 = vshrl.u32 %v7642, %v7658
    %v7661 = vor.u32 %v7659, %v7660
    %v7662 = vsub.s32 4294967266, %v7657
    %v7663 = vadd.s32 %v7662, 127
    %v7664 = vshll.u32 %v7663, 23
    %v7665 = vor.u32 4788187, %v7664
    %v7666 = vand.u32 2147483647, %v7665
    %v7668 = vcvt.s32.f32 %v7661
    %v7669 = vmul.f32 %v7668, %v7666
    %v7670 = vxor.u32 %v7669, 2147483648
    %v7671 = vsel %vm7588, %v7670, %v7669
    %v7672 = vsub.s32 4, %v7648
    %v7673 = vsel %vm7588, %v7672, %v7648
    %v7674 = vsel %vm7587, %v4860, %v7671
    %v7675 = vsel %vm7587, 0, %v7673
    %v7676 = vcosq.f32.pop %v7674
    %v7677 = vsinq.f32.pop %v7674
    %vm7678 = vweird.f32 %v4860
    %v7679 = vadd.s32 %v7675, 3
    %v7680 = vand.u32 %v7679, 3
    %vm7681 = vcmp.lt.s32.totalorder %v7680, 2
    %vm7682 = vcmp.eq.s32.totalorder %v7680, 0
    %v7683 = vxor.u32 %v7677, 2147483648
    %v7684 = vsel %vm7682, %v7676, %v7683
    %vm7685 = vcmp.eq.s32.totalorder %v7680, 2
    %v7686 = vxor.u32 %v7676, 2147483648
    %v7687 = vsel %vm7685, %v7686, %v7677
    %v7688 = vsel %vm7681, %v7684, %v7687
    %v7689 = vsel %vm7678, nan, %v7688
    %v7690 = vand.u32 2147483647, %v5752
    %vm7691 = vcmp.le.f32.partialorder %v7690, 0.7853982
    %vm7692 = vcmp.lt.s32.totalorder %v5752, 0
    %v7693 = vand.u32 %v5752, 2139095040
    %v7694 = vshrl.u32 %v7693, 23
    %v7695 = vsub.s32 %v7694, 127
    %v7696 = vand.u32 2147483647, %v5752
    %v7697 = vand.u32 %v7696, 8388607
    %v7698 = vor.u32 %v7697, 8388608
    %v7699 = vsub.s32 0, %v7698
    %v7700 = vadd.s32 %v7695, 1
    %vm7701 = vcmp.gt.s32.totalorder %v7700, 0
    %v7702 = vsel %vm7701, %v7700, 0
    %v7703 = vshrl.u32 %v7702, 5
    %v7704 = vand.u32 %v7702, 31
    %v7705 = vsub.s32 32, %v7704
    %v7706 = vshrl.u32 683565275, %v7705
    %v7707 = vshll.u32 683565275, %v7704
    %v7708 = vshrl.u32 2475754826, %v7705
    %v7709 = vor.u32 %v7707, %v7708
    %v7710 = vshll.u32 2475754826, %v7704
    %v7711 = vshrl.u32 2131351028, %v7705
    %v7712 = vor.u32 %v7710, %v7711
    %v7713 = vshll.u32 2131351028, %v7704
    %v7714 = vshrl.u32 2102212464, %v7705
    %v7715 = vor.u32 %v7713, %v7714
    %v7716 = vshll.u32 2102212464, %v7704
    %v7717 = vshrl.u32 920167782, %v7705
    %v7718 = vor.u32 %v7716, %v7717
    %v7719 = vshll.u32 920167782, %v7704
    %v7720 = vshrl.u32 1326507024, %v7705
    %v7721 = vor.u32 %v7719, %v7720
    %vm7722 = vcmp.lt.s32.totalorder %v7703, 1
    %vm7723 = vcmp.lt.s32.totalorder %v7703, 2
    %vm7724 = vcmp.lt.s32.totalorder %v7703, 3
    %vm7725 = vcmp.lt.s32.totalorder %v7703, 4
    %v7726 = vsel %vm7722, %v7706, %v7709
    %v7727 = vsel %vm7725, %v7715, 2102212464
    %v7728 = vsel %vm7724, %v7712, %v7727
    %v7729 = vsel %vm7723, %v7726, %v7728
    %v7730 = vsel %vm7722, %v7709, %v7712
    %v7731 = vsel %vm7725, %v7718, 920167782
    %v7732 = vsel %vm7724, %v7715, %v7731
    %v7733 = vsel %vm7723, %v7730, %v7732
    %v7734 = vsel %vm7722, %v7712, %v7715
    %v7735 = vsel %vm7725, %v7721, 1326507024
    %v7736 = vsel %vm7724, %v7718, %v7735
    %v7737 = vsel %vm7723, %v7734, %v7736
    %v7738 = vshll.u32 %v7698, 8
    %v7739 = vmul.u32.u64.compose %v7738, %v7737
    %v7740 = vextract.low.u32 %v7739
    %v7741 = vextract.high.u32 %v7739
    %v7742 = vmul.u32.u64.compose %v7738, %v7733
    %v7743 = vextract.low.u32 %v7742
    %v7744 = vextract.high.u32 %v7742
    %v7745 = vmul.u32 %v7738, %v7729
    %v7746 = vadd.s32 %v7741, %v7743
    %vm7747 = vc.u32 %v7741, %v7743
    %v7748 = vadd.s32 %v7744, 1
    %v7749 = vsel %vm7747, %v7748, %v7744
    %v7750 = vadd.s32 %v7745, %v7749
    %v7751 = vadd.s32 %v7750, 536870912
    %v7752 = vshrl.u32 %v7751, 30
    %v7753 = vshll.u32 %v7752, 30
    %v7754 = vsub.s32 %v7750, %v7753
    %vm7755 = vcmp.lt.s32.totalorder %v7754, 0
    %v7756 = vsub.s32 0, %v7754
    %v7757 = vsel %vm7755, %v7756, %v7754
    %v7758 = vclz %v7757
    %v7759 = vsub.s32 %v7758, 2
    %vm7760 = vcmp.gt.s32.totalorder 0, %v7759
    %v7761 = vsel %vm7760, 0, %v7759
    %v7762 = vsub.s32 32, %v7761
    %v7763 = vshll.u32 %v7754, %v7761
    %v7764 = vshrl.u32 %v7746, %v7762
    %v7765 = vor.u32 %v7763, %v7764
    %v7766 = vsub.s32 4294967266, %v7761
    %v7767 = vadd.s32 %v7766, 127
    %v7768 = vshll.u32 %v7767, 23
    %v7769 = vor.u32 4788187, %v7768
    %v7770 = vand.u32 2147483647, %v7769
    %v7772 = vcvt.s32.f32 %v7765
    %v7773 = vmul.f32 %v7772, %v7770
    %v7774 = vxor.u32 %v7773, 2147483648
    %v7775 = vsel %vm7692, %v7774, %v7773
    %v7776 = vsub.s32 4, %v7752
    %v7777 = vsel %vm7692, %v7776, %v7752
    %v7778 = vsel %vm7691, %v5752, %v7775
    %v7779 = vsel %vm7691, 0, %v7777
    %v7780 = vcosq.f32.pop %v7778
    %v7781 = vsinq.f32.pop %v7778
    %vm7782 = vweird.f32 %v5752
    %v7783 = vadd.s32 %v7779, 3
    %v7784 = vand.u32 %v7783, 3
    %vm7785 = vcmp.lt.s32.totalorder %v7784, 2
    %vm7786 = vcmp.eq.s32.totalorder %v7784, 0
    %v7787 = vxor.u32 %v7781, 2147483648
    %v7788 = vsel %vm7786, %v7780, %v7787
    %vm7789 = vcmp.eq.s32.totalorder %v7784, 2
    %v7790 = vxor.u32 %v7780, 2147483648
    %v7791 = vsel %vm7789, %v7790, %v7781
    %v7792 = vsel %vm7785, %v7788, %v7791
    %v7793 = vsel %vm7782, nan, %v7792
    %v7794 = vand.u32 2147483647, %v5754
    %vm7795 = vcmp.le.f32.partialorder %v7794, 0.7853982
    %vm7796 = vcmp.lt.s32.totalorder %v5754, 0
    %v7797 = vand.u32 %v5754, 2139095040
    %v7798 = vshrl.u32 %v7797, 23
    %v7799 = vsub.s32 %v7798, 127
    %v7800 = vand.u32 2147483647, %v5754
    %v7801 = vand.u32 %v7800, 8388607
    %v7802 = vor.u32 %v7801, 8388608
    %v7803 = vsub.s32 0, %v7802
    %v7804 = vadd.s32 %v7799, 1
    %vm7805 = vcmp.gt.s32.totalorder %v7804, 0
    %v7806 = vsel %vm7805, %v7804, 0
    %v7807 = vshrl.u32 %v7806, 5
    %v7808 = vand.u32 %v7806, 31
    %v7809 = vsub.s32 32, %v7808
    %v7810 = vshrl.u32 683565275, %v7809
    %v7811 = vshll.u32 683565275, %v7808
    %v7812 = vshrl.u32 2475754826, %v7809
    %v7813 = vor.u32 %v7811, %v7812
    %v7814 = vshll.u32 2475754826, %v7808
    %v7815 = vshrl.u32 2131351028, %v7809
    %v7816 = vor.u32 %v7814, %v7815
    %v7817 = vshll.u32 2131351028, %v7808
    %v7818 = vshrl.u32 2102212464, %v7809
    %v7819 = vor.u32 %v7817, %v7818
    %v7820 = vshll.u32 2102212464, %v7808
    %v7821 = vshrl.u32 920167782, %v7809
    %v7822 = vor.u32 %v7820, %v7821
    %v7823 = vshll.u32 920167782, %v7808
    %v7824 = vshrl.u32 1326507024, %v7809
    %v7825 = vor.u32 %v7823, %v7824
    %vm7826 = vcmp.lt.s32.totalorder %v7807, 1
    %vm7827 = vcmp.lt.s32.totalorder %v7807, 2
    %vm7828 = vcmp.lt.s32.totalorder %v7807, 3
    %vm7829 = vcmp.lt.s32.totalorder %v7807, 4
    %v7830 = vsel %vm7826, %v7810, %v7813
    %v7831 = vsel %vm7829, %v7819, 2102212464
    %v7832 = vsel %vm7828, %v7816, %v7831
    %v7833 = vsel %vm7827, %v7830, %v7832
    %v7834 = vsel %vm7826, %v7813, %v7816
    %v7835 = vsel %vm7829, %v7822, 920167782
    %v7836 = vsel %vm7828, %v7819, %v7835
    %v7837 = vsel %vm7827, %v7834, %v7836
    %v7838 = vsel %vm7826, %v7816, %v7819
    %v7839 = vsel %vm7829, %v7825, 1326507024
    %v7840 = vsel %vm7828, %v7822, %v7839
    %v7841 = vsel %vm7827, %v7838, %v7840
    %v7842 = vshll.u32 %v7802, 8
    %v7843 = vmul.u32.u64.compose %v7842, %v7841
    %v7844 = vextract.low.u32 %v7843
    %v7845 = vextract.high.u32 %v7843
    %v7846 = vmul.u32.u64.compose %v7842, %v7837
    %v7847 = vextract.low.u32 %v7846
    %v7848 = vextract.high.u32 %v7846
    %v7849 = vmul.u32 %v7842, %v7833
    %v7850 = vadd.s32 %v7845, %v7847
    %vm7851 = vc.u32 %v7845, %v7847
    %v7852 = vadd.s32 %v7848, 1
    %v7853 = vsel %vm7851, %v7852, %v7848
    %v7854 = vadd.s32 %v7849, %v7853
    %v7855 = vadd.s32 %v7854, 536870912
    %v7856 = vshrl.u32 %v7855, 30
    %v7857 = vshll.u32 %v7856, 30
    %v7858 = vsub.s32 %v7854, %v7857
    %vm7859 = vcmp.lt.s32.totalorder %v7858, 0
    %v7860 = vsub.s32 0, %v7858
    %v7861 = vsel %vm7859, %v7860, %v7858
    %v7862 = vclz %v7861
    %v7863 = vsub.s32 %v7862, 2
    %vm7864 = vcmp.gt.s32.totalorder 0, %v7863
    %v7865 = vsel %vm7864, 0, %v7863
    %v7866 = vsub.s32 32, %v7865
    %v7867 = vshll.u32 %v7858, %v7865
    %v7868 = vshrl.u32 %v7850, %v7866
    %v7869 = vor.u32 %v7867, %v7868
    %v7870 = vsub.s32 4294967266, %v7865
    %v7871 = vadd.s32 %v7870, 127
    %v7872 = vshll.u32 %v7871, 23
    %v7873 = vor.u32 4788187, %v7872
    %v7874 = vand.u32 2147483647, %v7873
    %v7876 = vcvt.s32.f32 %v7869
    %v7877 = vmul.f32 %v7876, %v7874
    %v7878 = vxor.u32 %v7877, 2147483648
    %v7879 = vsel %vm7796, %v7878, %v7877
    %v7880 = vsub.s32 4, %v7856
    %v7881 = vsel %vm7796, %v7880, %v7856
    %v7882 = vsel %vm7795, %v5754, %v7879
    %v7883 = vsel %vm7795, 0, %v7881
    %v7884 = vcosq.f32.pop %v7882
    %v7885 = vsinq.f32.pop %v7882
    %vm7886 = vweird.f32 %v5754
    %v7887 = vadd.s32 %v7883, 3
    %v7888 = vand.u32 %v7887, 3
    %vm7889 = vcmp.lt.s32.totalorder %v7888, 2
    %vm7890 = vcmp.eq.s32.totalorder %v7888, 0
    %v7891 = vxor.u32 %v7885, 2147483648
    %v7892 = vsel %vm7890, %v7884, %v7891
    %vm7893 = vcmp.eq.s32.totalorder %v7888, 2
    %v7894 = vxor.u32 %v7884, 2147483648
    %v7895 = vsel %vm7893, %v7894, %v7885
    %v7896 = vsel %vm7889, %v7892, %v7895
    %v7897 = vsel %vm7886, nan, %v7896
    %v7898 = vand.u32 2147483647, %v6646
    %vm7899 = vcmp.le.f32.partialorder %v7898, 0.7853982
    %vm7900 = vcmp.lt.s32.totalorder %v6646, 0
    %v7901 = vand.u32 %v6646, 2139095040
    %v7902 = vshrl.u32 %v7901, 23
    %v7903 = vsub.s32 %v7902, 127
    %v7904 = vand.u32 2147483647, %v6646
    %v7905 = vand.u32 %v7904, 8388607
    %v7906 = vor.u32 %v7905, 8388608
    %v7907 = vsub.s32 0, %v7906
    %v7908 = vadd.s32 %v7903, 1
    %vm7909 = vcmp.gt.s32.totalorder %v7908, 0
    %v7910 = vsel %vm7909, %v7908, 0
    %v7911 = vshrl.u32 %v7910, 5
    %v7912 = vand.u32 %v7910, 31
    %v7913 = vsub.s32 32, %v7912
    %v7914 = vshrl.u32 683565275, %v7913
    %v7915 = vshll.u32 683565275, %v7912
    %v7916 = vshrl.u32 2475754826, %v7913
    %v7917 = vor.u32 %v7915, %v7916
    %v7918 = vshll.u32 2475754826, %v7912
    %v7919 = vshrl.u32 2131351028, %v7913
    %v7920 = vor.u32 %v7918, %v7919
    %v7921 = vshll.u32 2131351028, %v7912
    %v7922 = vshrl.u32 2102212464, %v7913
    %v7923 = vor.u32 %v7921, %v7922
    %v7924 = vshll.u32 2102212464, %v7912
    %v7925 = vshrl.u32 920167782, %v7913
    %v7926 = vor.u32 %v7924, %v7925
    %v7927 = vshll.u32 920167782, %v7912
    %v7928 = vshrl.u32 1326507024, %v7913
    %v7929 = vor.u32 %v7927, %v7928
    %vm7930 = vcmp.lt.s32.totalorder %v7911, 1
    %vm7931 = vcmp.lt.s32.totalorder %v7911, 2
    %vm7932 = vcmp.lt.s32.totalorder %v7911, 3
    %vm7933 = vcmp.lt.s32.totalorder %v7911, 4
    %v7934 = vsel %vm7930, %v7914, %v7917
    %v7935 = vsel %vm7933, %v7923, 2102212464
    %v7936 = vsel %vm7932, %v7920, %v7935
    %v7937 = vsel %vm7931, %v7934, %v7936
    %v7938 = vsel %vm7930, %v7917, %v7920
    %v7939 = vsel %vm7933, %v7926, 920167782
    %v7940 = vsel %vm7932, %v7923, %v7939
    %v7941 = vsel %vm7931, %v7938, %v7940
    %v7942 = vsel %vm7930, %v7920, %v7923
    %v7943 = vsel %vm7933, %v7929, 1326507024
    %v7944 = vsel %vm7932, %v7926, %v7943
    %v7945 = vsel %vm7931, %v7942, %v7944
    %v7946 = vshll.u32 %v7906, 8
    %v7947 = vmul.u32.u64.compose %v7946, %v7945
    %v7948 = vextract.low.u32 %v7947
    %v7949 = vextract.high.u32 %v7947
    %v7950 = vmul.u32.u64.compose %v7946, %v7941
    %v7951 = vextract.low.u32 %v7950
    %v7952 = vextract.high.u32 %v7950
    %v7953 = vmul.u32 %v7946, %v7937
    %v7954 = vadd.s32 %v7949, %v7951
    %vm7955 = vc.u32 %v7949, %v7951
    %v7956 = vadd.s32 %v7952, 1
    %v7957 = vsel %vm7955, %v7956, %v7952
    %v7958 = vadd.s32 %v7953, %v7957
    %v7959 = vadd.s32 %v7958, 536870912
    %v7960 = vshrl.u32 %v7959, 30
    %v7961 = vshll.u32 %v7960, 30
    %v7962 = vsub.s32 %v7958, %v7961
    %vm7963 = vcmp.lt.s32.totalorder %v7962, 0
    %v7964 = vsub.s32 0, %v7962
    %v7965 = vsel %vm7963, %v7964, %v7962
    %v7966 = vclz %v7965
    %v7967 = vsub.s32 %v7966, 2
    %vm7968 = vcmp.gt.s32.totalorder 0, %v7967
    %v7969 = vsel %vm7968, 0, %v7967
    %v7970 = vsub.s32 32, %v7969
    %v7971 = vshll.u32 %v7962, %v7969
    %v7972 = vshrl.u32 %v7954, %v7970
    %v7973 = vor.u32 %v7971, %v7972
    %v7974 = vsub.s32 4294967266, %v7969
    %v7975 = vadd.s32 %v7974, 127
    %v7976 = vshll.u32 %v7975, 23
    %v7977 = vor.u32 4788187, %v7976
    %v7978 = vand.u32 2147483647, %v7977
    %v7980 = vcvt.s32.f32 %v7973
    %v7981 = vmul.f32 %v7980, %v7978
    %v7982 = vxor.u32 %v7981, 2147483648
    %v7983 = vsel %vm7900, %v7982, %v7981
    %v7984 = vsub.s32 4, %v7960
    %v7985 = vsel %vm7900, %v7984, %v7960
    %v7986 = vsel %vm7899, %v6646, %v7983
    %v7987 = vsel %vm7899, 0, %v7985
    %v7988 = vcosq.f32.pop %v7986
    %v7989 = vsinq.f32.pop %v7986
    %vm7990 = vweird.f32 %v6646
    %v7991 = vadd.s32 %v7987, 3
    %v7992 = vand.u32 %v7991, 3
    %vm7993 = vcmp.lt.s32.totalorder %v7992, 2
    %vm7994 = vcmp.eq.s32.totalorder %v7992, 0
    %v7995 = vxor.u32 %v7989, 2147483648
    %v7996 = vsel %vm7994, %v7988, %v7995
    %vm7997 = vcmp.eq.s32.totalorder %v7992, 2
    %v7998 = vxor.u32 %v7988, 2147483648
    %v7999 = vsel %vm7997, %v7998, %v7989
    %v8000 = vsel %vm7993, %v7996, %v7999
    %v8001 = vsel %vm7990, nan, %v8000
    %v8002 = vand.u32 2147483647, %v6648
    %vm8003 = vcmp.le.f32.partialorder %v8002, 0.7853982
    %vm8004 = vcmp.lt.s32.totalorder %v6648, 0
    %v8005 = vand.u32 %v6648, 2139095040
    %v8006 = vshrl.u32 %v8005, 23
    %v8007 = vsub.s32 %v8006, 127
    %v8008 = vand.u32 2147483647, %v6648
    %v8009 = vand.u32 %v8008, 8388607
    %v8010 = vor.u32 %v8009, 8388608
    %v8011 = vsub.s32 0, %v8010
    %v8012 = vadd.s32 %v8007, 1
    %vm8013 = vcmp.gt.s32.totalorder %v8012, 0
    %v8014 = vsel %vm8013, %v8012, 0
    %v8015 = vshrl.u32 %v8014, 5
    %v8016 = vand.u32 %v8014, 31
    %v8017 = vsub.s32 32, %v8016
    %v8018 = vshrl.u32 683565275, %v8017
    %v8019 = vshll.u32 683565275, %v8016
    %v8020 = vshrl.u32 2475754826, %v8017
    %v8021 = vor.u32 %v8019, %v8020
    %v8022 = vshll.u32 2475754826, %v8016
    %v8023 = vshrl.u32 2131351028, %v8017
    %v8024 = vor.u32 %v8022, %v8023
    %v8025 = vshll.u32 2131351028, %v8016
    %v8026 = vshrl.u32 2102212464, %v8017
    %v8027 = vor.u32 %v8025, %v8026
    %v8028 = vshll.u32 2102212464, %v8016
    %v8029 = vshrl.u32 920167782, %v8017
    %v8030 = vor.u32 %v8028, %v8029
    %v8031 = vshll.u32 920167782, %v8016
    %v8032 = vshrl.u32 1326507024, %v8017
    %v8033 = vor.u32 %v8031, %v8032
    %vm8034 = vcmp.lt.s32.totalorder %v8015, 1
    %vm8035 = vcmp.lt.s32.totalorder %v8015, 2
    %vm8036 = vcmp.lt.s32.totalorder %v8015, 3
    %vm8037 = vcmp.lt.s32.totalorder %v8015, 4
    %v8038 = vsel %vm8034, %v8018, %v8021
    %v8039 = vsel %vm8037, %v8027, 2102212464
    %v8040 = vsel %vm8036, %v8024, %v8039
    %v8041 = vsel %vm8035, %v8038, %v8040
    %v8042 = vsel %vm8034, %v8021, %v8024
    %v8043 = vsel %vm8037, %v8030, 920167782
    %v8044 = vsel %vm8036, %v8027, %v8043
    %v8045 = vsel %vm8035, %v8042, %v8044
    %v8046 = vsel %vm8034, %v8024, %v8027
    %v8047 = vsel %vm8037, %v8033, 1326507024
    %v8048 = vsel %vm8036, %v8030, %v8047
    %v8049 = vsel %vm8035, %v8046, %v8048
    %v8050 = vshll.u32 %v8010, 8
    %v8051 = vmul.u32.u64.compose %v8050, %v8049
    %v8052 = vextract.low.u32 %v8051
    %v8053 = vextract.high.u32 %v8051
    %v8054 = vmul.u32.u64.compose %v8050, %v8045
    %v8055 = vextract.low.u32 %v8054
    %v8056 = vextract.high.u32 %v8054
    %v8057 = vmul.u32 %v8050, %v8041
    %v8058 = vadd.s32 %v8053, %v8055
    %vm8059 = vc.u32 %v8053, %v8055
    %v8060 = vadd.s32 %v8056, 1
    %v8061 = vsel %vm8059, %v8060, %v8056
    %v8062 = vadd.s32 %v8057, %v8061
    %v8063 = vadd.s32 %v8062, 536870912
    %v8064 = vshrl.u32 %v8063, 30
    %v8065 = vshll.u32 %v8064, 30
    %v8066 = vsub.s32 %v8062, %v8065
    %vm8067 = vcmp.lt.s32.totalorder %v8066, 0
    %v8068 = vsub.s32 0, %v8066
    %v8069 = vsel %vm8067, %v8068, %v8066
    %v8070 = vclz %v8069
    %v8071 = vsub.s32 %v8070, 2
    %vm8072 = vcmp.gt.s32.totalorder 0, %v8071
    %v8073 = vsel %vm8072, 0, %v8071
    %v8074 = vsub.s32 32, %v8073
    %v8075 = vshll.u32 %v8066, %v8073
    %v8076 = vshrl.u32 %v8058, %v8074
    %v8077 = vor.u32 %v8075, %v8076
    %v8078 = vsub.s32 4294967266, %v8073
    %v8079 = vadd.s32 %v8078, 127
    %v8080 = vshll.u32 %v8079, 23
    %v8081 = vor.u32 4788187, %v8080
    %v8082 = vand.u32 2147483647, %v8081
    %v8084 = vcvt.s32.f32 %v8077
    %v8085 = vmul.f32 %v8084, %v8082
    %v8086 = vxor.u32 %v8085, 2147483648
    %v8087 = vsel %vm8004, %v8086, %v8085
    %v8088 = vsub.s32 4, %v8064
    %v8089 = vsel %vm8004, %v8088, %v8064
    %v8090 = vsel %vm8003, %v6648, %v8087
    %v8091 = vsel %vm8003, 0, %v8089
    %v8092 = vcosq.f32.pop %v8090
    %v8093 = vsinq.f32.pop %v8090
    %vm8094 = vweird.f32 %v6648
    %v8095 = vadd.s32 %v8091, 3
    %v8096 = vand.u32 %v8095, 3
    %vm8097 = vcmp.lt.s32.totalorder %v8096, 2
    %vm8098 = vcmp.eq.s32.totalorder %v8096, 0
    %v8099 = vxor.u32 %v8093, 2147483648
    %v8100 = vsel %vm8098, %v8092, %v8099
    %vm8101 = vcmp.eq.s32.totalorder %v8096, 2
    %v8102 = vxor.u32 %v8092, 2147483648
    %v8103 = vsel %vm8101, %v8102, %v8093
    %v8104 = vsel %vm8097, %v8100, %v8103
    %v8105 = vsel %vm8094, nan, %v8104
    %v8120 = vcombine.low %v6753, %v6857
    %v8121 = vcombine.high %v6753, %v6857
    %v8122 = vcombine.low %v6961, %v7065
    %v8123 = vcombine.high %v6961, %v7065
    %v8124 = vcombine.low %v7169, %v7273
    %v8125 = vcombine.high %v7169, %v7273
    %v8126 = vcombine.low %v7377, %v7481
    %v8127 = vcombine.high %v7377, %v7481
    %v8129 = vunpack.c.l.s4 1966171168
    %v8130 = vunpack.c.0.s8 %v8129
    %v8131 = vlaneseq
    %v8132 = vshrl.u32 %v8131, 7
    %v8133 = vsub.s32 %v8130, %v8132
    %v8134 = vrot.slane %v8120, %v8133
    %v8136 = vunpack.c.l.s4 1966171168
    %v8137 = vunpack.c.0.s8 %v8136
    %v8138 = vlaneseq
    %v8139 = vshrl.u32 %v8138, 7
    %v8140 = vsub.s32 %v8137, %v8139
    %v8141 = vrot.slane %v8121, %v8140
    %v8143 = vunpack.c.l.s4 1966171168
    %v8144 = vunpack.c.0.s8 %v8143
    %v8145 = vlaneseq
    %v8146 = vshrl.u32 %v8145, 7
    %v8147 = vsub.s32 %v8144, %v8146
    %v8148 = vrot.slane %v8122, %v8147
    %v8150 = vunpack.c.l.s4 1966171168
    %v8151 = vunpack.c.0.s8 %v8150
    %v8152 = vlaneseq
    %v8153 = vshrl.u32 %v8152, 7
    %v8154 = vsub.s32 %v8151, %v8153
    %v8155 = vrot.slane %v8123, %v8154
    %v8157 = vunpack.c.l.s4 1966171168
    %v8158 = vunpack.c.0.s8 %v8157
    %v8159 = vlaneseq
    %v8160 = vshrl.u32 %v8159, 7
    %v8161 = vsub.s32 %v8158, %v8160
    %v8162 = vrot.slane %v8124, %v8161
    %v8164 = vunpack.c.l.s4 1966171168
    %v8165 = vunpack.c.0.s8 %v8164
    %v8166 = vlaneseq
    %v8167 = vshrl.u32 %v8166, 7
    %v8168 = vsub.s32 %v8165, %v8167
    %v8169 = vrot.slane %v8125, %v8168
    %v8171 = vunpack.c.l.s4 1966171168
    %v8172 = vunpack.c.0.s8 %v8171
    %v8173 = vlaneseq
    %v8174 = vshrl.u32 %v8173, 7
    %v8175 = vsub.s32 %v8172, %v8174
    %v8176 = vrot.slane %v8126, %v8175
    %v8178 = vunpack.c.l.s4 1966171168
    %v8179 = vunpack.c.0.s8 %v8178
    %v8180 = vlaneseq
    %v8181 = vshrl.u32 %v8180, 7
    %v8182 = vsub.s32 %v8179, %v8181
    %v8183 = vrot.slane %v8127, %v8182
    %v8184 = vcombine.low %v8134, %v8148
    %v8185 = vcombine.high %v8134, %v8148
    %v8186 = vcombine.low %v8141, %v8155
    %v8187 = vcombine.high %v8141, %v8155
    %v8188 = vcombine.low %v8162, %v8176
    %v8189 = vcombine.high %v8162, %v8176
    %v8190 = vcombine.low %v8169, %v8183
    %v8191 = vcombine.high %v8169, %v8183
    %v8193 = vunpack.c.l.s4 1966171168
    %v8194 = vunpack.c.0.s8 %v8193
    %v8195 = vlaneseq
    %v8196 = vshrl.u32 %v8195, 7
    %v8197 = vsub.s32 %v8194, %v8196
    %v8198 = vrot.slane %v8184, %v8197
    %v8200 = vunpack.c.l.s4 1966171168
    %v8201 = vunpack.c.0.s8 %v8200
    %v8202 = vlaneseq
    %v8203 = vshrl.u32 %v8202, 7
    %v8204 = vsub.s32 %v8201, %v8203
    %v8205 = vrot.slane %v8186, %v8204
    %v8207 = vunpack.c.l.s4 1966171168
    %v8208 = vunpack.c.0.s8 %v8207
    %v8209 = vlaneseq
    %v8210 = vshrl.u32 %v8209, 7
    %v8211 = vsub.s32 %v8208, %v8210
    %v8212 = vrot.slane %v8185, %v8211
    %v8214 = vunpack.c.l.s4 1966171168
    %v8215 = vunpack.c.0.s8 %v8214
    %v8216 = vlaneseq
    %v8217 = vshrl.u32 %v8216, 7
    %v8218 = vsub.s32 %v8215, %v8217
    %v8219 = vrot.slane %v8187, %v8218
    %v8221 = vunpack.c.l.s4 1966171168
    %v8222 = vunpack.c.0.s8 %v8221
    %v8223 = vlaneseq
    %v8224 = vshrl.u32 %v8223, 7
    %v8225 = vsub.s32 %v8222, %v8224
    %v8226 = vrot.slane %v8188, %v8225
    %v8228 = vunpack.c.l.s4 1966171168
    %v8229 = vunpack.c.0.s8 %v8228
    %v8230 = vlaneseq
    %v8231 = vshrl.u32 %v8230, 7
    %v8232 = vsub.s32 %v8229, %v8231
    %v8233 = vrot.slane %v8190, %v8232
    %v8235 = vunpack.c.l.s4 1966171168
    %v8236 = vunpack.c.0.s8 %v8235
    %v8237 = vlaneseq
    %v8238 = vshrl.u32 %v8237, 7
    %v8239 = vsub.s32 %v8236, %v8238
    %v8240 = vrot.slane %v8189, %v8239
    %v8242 = vunpack.c.l.s4 1966171168
    %v8243 = vunpack.c.0.s8 %v8242
    %v8244 = vlaneseq
    %v8245 = vshrl.u32 %v8244, 7
    %v8246 = vsub.s32 %v8243, %v8245
    %v8247 = vrot.slane %v8191, %v8246
    %v8248 = vcombine.low %v8198, %v8226
    %v8249 = vcombine.high %v8198, %v8226
    %v8250 = vcombine.low %v8205, %v8233
    %v8251 = vcombine.high %v8205, %v8233
    %v8252 = vcombine.low %v8212, %v8240
    %v8253 = vcombine.high %v8212, %v8240
    %v8254 = vcombine.low %v8219, %v8247
    %v8255 = vcombine.high %v8219, %v8247
    %v8256 = vcombine.low %v7585, %v7689
    %v8257 = vcombine.high %v7585, %v7689
    %v8258 = vcombine.low %v7793, %v7897
    %v8259 = vcombine.high %v7793, %v7897
    %v8260 = vcombine.low %v8001, %v8105
    %v8261 = vcombine.high %v8001, %v8105
    %v8263 = vunpack.c.l.s4 1966171168
    %v8264 = vunpack.c.0.s8 %v8263
    %v8265 = vlaneseq
    %v8266 = vshrl.u32 %v8265, 7
    %v8267 = vsub.s32 %v8264, %v8266
    %v8268 = vrot.slane %v8256, %v8267
    %v8270 = vunpack.c.l.s4 1966171168
    %v8271 = vunpack.c.0.s8 %v8270
    %v8272 = vlaneseq
    %v8273 = vshrl.u32 %v8272, 7
    %v8274 = vsub.s32 %v8271, %v8273
    %v8275 = vrot.slane %v8257, %v8274
    %v8277 = vunpack.c.l.s4 1966171168
    %v8278 = vunpack.c.0.s8 %v8277
    %v8279 = vlaneseq
    %v8280 = vshrl.u32 %v8279, 7
    %v8281 = vsub.s32 %v8278, %v8280
    %v8282 = vrot.slane %v8258, %v8281
    %v8284 = vunpack.c.l.s4 1966171168
    %v8285 = vunpack.c.0.s8 %v8284
    %v8286 = vlaneseq
    %v8287 = vshrl.u32 %v8286, 7
    %v8288 = vsub.s32 %v8285, %v8287
    %v8289 = vrot.slane %v8259, %v8288
    %v8291 = vunpack.c.l.s4 1966171168
    %v8292 = vunpack.c.0.s8 %v8291
    %v8293 = vlaneseq
    %v8294 = vshrl.u32 %v8293, 7
    %v8295 = vsub.s32 %v8292, %v8294
    %v8296 = vrot.slane %v8260, %v8295
    %v8298 = vunpack.c.l.s4 1966171168
    %v8299 = vunpack.c.0.s8 %v8298
    %v8300 = vlaneseq
    %v8301 = vshrl.u32 %v8300, 7
    %v8302 = vsub.s32 %v8299, %v8301
    %v8303 = vrot.slane %v8261, %v8302
    %v8304 = vcombine.low %v8268, %v8282
    %v8305 = vcombine.high %v8268, %v8282
    %v8306 = vcombine.low %v8275, %v8289
    %v8307 = vcombine.high %v8275, %v8289
    %v8308 = vcombine.high %v8296, %v8296
    %v8309 = vcombine.high %v8303, %v8303
    %v8311 = vunpack.c.l.s4 1966171168
    %v8312 = vunpack.c.0.s8 %v8311
    %v8313 = vlaneseq
    %v8314 = vshrl.u32 %v8313, 7
    %v8315 = vsub.s32 %v8312, %v8314
    %v8316 = vrot.slane %v8304, %v8315
    %v8318 = vunpack.c.l.s4 1966171168
    %v8319 = vunpack.c.0.s8 %v8318
    %v8320 = vlaneseq
    %v8321 = vshrl.u32 %v8320, 7
    %v8322 = vsub.s32 %v8319, %v8321
    %v8323 = vrot.slane %v8306, %v8322
    %v8325 = vunpack.c.l.s4 1966171168
    %v8326 = vunpack.c.0.s8 %v8325
    %v8327 = vlaneseq
    %v8328 = vshrl.u32 %v8327, 7
    %v8329 = vsub.s32 %v8326, %v8328
    %v8330 = vrot.slane %v8305, %v8329
    %v8332 = vunpack.c.l.s4 1966171168
    %v8333 = vunpack.c.0.s8 %v8332
    %v8334 = vlaneseq
    %v8335 = vshrl.u32 %v8334, 7
    %v8336 = vsub.s32 %v8333, %v8335
    %v8337 = vrot.slane %v8307, %v8336
    %v8339 = vunpack.c.l.s4 1966171168
    %v8340 = vunpack.c.0.s8 %v8339
    %v8341 = vlaneseq
    %v8342 = vshrl.u32 %v8341, 7
    %v8343 = vsub.s32 %v8340, %v8342
    %v8344 = vrot.slane %v8296, %v8343
    %v8346 = vunpack.c.l.s4 1966171168
    %v8347 = vunpack.c.0.s8 %v8346
    %v8348 = vlaneseq
    %v8349 = vshrl.u32 %v8348, 7
    %v8350 = vsub.s32 %v8347, %v8349
    %v8351 = vrot.slane %v8303, %v8350
    %v8353 = vunpack.c.l.s4 1966171168
    %v8354 = vunpack.c.0.s8 %v8353
    %v8355 = vlaneseq
    %v8356 = vshrl.u32 %v8355, 7
    %v8357 = vsub.s32 %v8354, %v8356
    %v8358 = vrot.slane %v8308, %v8357
    %v8360 = vunpack.c.l.s4 1966171168
    %v8361 = vunpack.c.0.s8 %v8360
    %v8362 = vlaneseq
    %v8363 = vshrl.u32 %v8362, 7
    %v8364 = vsub.s32 %v8361, %v8363
    %v8365 = vrot.slane %v8309, %v8364
    %v8366 = vcombine.low %v8316, %v8344
    %v8367 = vcombine.high %v8316, %v8344
    %v8368 = vcombine.low %v8323, %v8351
    %v8369 = vcombine.high %v8323, %v8351
    %v8370 = vcombine.low %v8330, %v8358
    %v8371 = vcombine.high %v8330, %v8358
    %v8372 = vcombine.low %v8337, %v8365
    %v8373 = vcombine.high %v8337, %v8365
    %8390 = vst [vmem:[#allocation4] sm:$0xff] %v8248
    %v8391 = vlaneseq
    %vm8392 = vcmp.ge.s32.totalorder %v8391, 0
    %vm8393 = vcmp.lt.s32.totalorder %v8391, 768
    %vm8394 = vmand %vm8392, %vm8393
    %8395 = vst.msk [vmem:[#allocation4 + $0x8] sm:$0x3f] %vm8394, %v8366
    %8396 = vst [vmem:[#allocation4 + $0xe] sm:$0xff] %v8252
    %8397 = vst.msk [vmem:[#allocation4 + $0x16] sm:$0x3f] %vm8394, %v8370
    %8398 = vst [vmem:[#allocation4 + $0x1c] sm:$0xff] %v8249
    %8399 = vst.msk [vmem:[#allocation4 + $0x24] sm:$0x3f] %vm8394, %v8367
    %8400 = vst [vmem:[#allocation4 + $0x2a] sm:$0xff] %v8253
    %8401 = vst.msk [vmem:[#allocation4 + $0x32] sm:$0x3f] %vm8394, %v8371
    %8402 = vst [vmem:[#allocation4 + $0x38] sm:$0xff] %v8250
    %8403 = vst.msk [vmem:[#allocation4 + $0x40] sm:$0x3f] %vm8394, %v8368
    %8404 = vst [vmem:[#allocation4 + $0x46] sm:$0xff] %v8254
    %8405 = vst.msk [vmem:[#allocation4 + $0x4e] sm:$0x3f] %vm8394, %v8372
    %8406 = vst [vmem:[#allocation4 + $0x54] sm:$0xff] %v8251
    %8407 = vst.msk [vmem:[#allocation4 + $0x5c] sm:$0x3f] %vm8394, %v8369
    %8408 = vst [vmem:[#allocation4 + $0x62] sm:$0xff] %v8255
    %8409 = vst.msk [vmem:[#allocation4 + $0x6a] sm:$0x3f] %vm8394, %v8373
    // Predicated region
    $region14: #{_frequency_forward_impl.1} parent=1 // pred_check
      _
    $region15: #{_frequency_forward_impl.1} parent=1 // pred_check_branch
      %8411 = sbr.rel (0) target = $region17
    $region16: #{_frequency_forward_impl.1} parent=1 // pred_region
      // Predicated region
      $region18: #{_frequency_forward_impl.1} parent=16 // pred_check
        _
      $region19: #{_frequency_forward_impl.1} parent=16 // pred_check_branch
        %8413 = sbr.rel (0) target = $region21
      $region20: #{_frequency_forward_impl.1} parent=16 // pred_region
        // Predicated region
        $region22: #{_frequency_forward_impl.1} parent=20 // pred_check
          _
        $region23: #{_frequency_forward_impl.1} parent=20 // pred_check_branch
          %8415 = sbr.rel (0) target = $region25
        $region24: #{_frequency_forward_impl.1} parent=20 // pred_region
          %s8416 = scalar_lea.vmem [#allocation4], 8
          %s8417 = scalar_lea.vmem %s2, 8
          loop: start=0, step=1, limit=1
          $region26: #{_frequency_forward_impl.1} parent=24 // loop_pre_header
            _
          $region27: #{_frequency_forward_impl.1} parent=24 // loop_header
            %s8419 = sphi 0, %s8423
            %p8420 = scmp.ge.s32.totalorder %s8419, 1
            %s8424 = sphi [#allocation4], [#allocation4]
            %s8425 = sphi %s2, %s2
          $region28: #{_frequency_forward_impl.1} parent=24 // loop_header_branch
            %8422 = sbr.rel (%p8420) target = $region32
          $region29: #{_frequency_forward_impl.1} parent=24 // loop_body
            %v8426 = vld [vmem:[%s8424] sm:$0xff]
            %8427 = vst [vmem:[%s8425] sm:$0xff] %v8426
          $region30: #{_frequency_forward_impl.1} parent=24 // loop_footer
            %s8423 = sadd.s32 1, %s8419
          $region31: #{_frequency_forward_impl.1} parent=24 // loop_footer_branch
            %8418 = sbr.rel target = $region27
          $region32: #{_frequency_forward_impl.1} parent=24 // loop_exit
            _
          loop: start=0, step=1, limit=1
          $region33: #{_frequency_forward_impl.1} parent=24 // loop_pre_header
            _
          $region34: #{_frequency_forward_impl.1} parent=24 // loop_header
            %s8430 = sphi 0, %s8434
            %p8431 = scmp.ge.s32.totalorder %s8430, 1
            %s8435 = sphi %s8416, %s8416
            %s8436 = sphi %s8417, %s8417
          $region35: #{_frequency_forward_impl.1} parent=24 // loop_header_branch
            %8433 = sbr.rel (%p8431) target = $region39
          $region36: #{_frequency_forward_impl.1} parent=24 // loop_body
            %v8437 = vld [vmem:[%s8435] sm:$0x3f]
            %8438 = vst [vmem:[%s8436] sm:$0x3f] %v8437
          $region37: #{_frequency_forward_impl.1} parent=24 // loop_footer
            %s8434 = sadd.s32 1, %s8430
          $region38: #{_frequency_forward_impl.1} parent=24 // loop_footer_branch
            %8429 = sbr.rel target = $region34
          $region39: #{_frequency_forward_impl.1} parent=24 // loop_exit
            _
        $region25: #{_frequency_forward_impl.1} parent=20 // pred_fallthru
          _
      $region21: #{_frequency_forward_impl.1} parent=16 // pred_fallthru
        _
      %8439 = vnop
    $region17: #{_frequency_forward_impl.1} parent=1 // pred_fallthru
      _
    // Predicated region
    $region40: #{_frequency_forward_impl.1} parent=1 // pred_check
      _
    $region41: #{_frequency_forward_impl.1} parent=1 // pred_check_branch
      %8441 = sbr.rel (0) target = $region43
    $region42: #{_frequency_forward_impl.1} parent=1 // pred_region
      _
    $region43: #{_frequency_forward_impl.1} parent=1 // pred_fallthru
      _
    %8442 = vsyncpa [#allocation3], 1

</llo_original>
